<compile_context>
chip_gen: v6e
topology: v6e:2x2x1
jax: 0.10.0
libtpu: 0.0.40
codegen_flags: <defaults>
</compile_context>

<pallas_src>
import functools

import jax
import jax.numpy as jnp
from jax.experimental import pallas as pl
from jax.experimental.pallas import tpu as pltpu


def _round_up(x, m):
    return (x + m - 1) // m * m


def _bn_fold(bn, eps=1e-5):
    scale = bn["gamma"] / jnp.sqrt(bn["var"] + eps)
    bias = bn["beta"] - bn["mean"] * scale
    return scale, bias


# --------------------------------------------------------------------------
# Fused tiled matmul kernel (all convolutions route through this)
# --------------------------------------------------------------------------

def _make_mm_kernel(has_pre, has_post, post_relu, pass_cols):
    def kernel(*refs):
        it = iter(refs)
        x_ref = next(it)
        w_ref = next(it)
        pre_s = pre_b = post_s = post_b = p_ref = None
        if has_pre:
            pre_s, pre_b = next(it), next(it)
        if has_post:
            post_s, post_b = next(it), next(it)
        if pass_cols:
            p_ref = next(it)
        o_ref = next(it)
        acc_ref = next(it)

        k = pl.program_id(2)

        @pl.when(k == 0)
        def _init():
            acc_ref[...] = jnp.zeros_like(acc_ref)

        x = x_ref[...]
        if has_pre:                      # fused BN+ReLU of the previous layer
            x = jnp.maximum(x * pre_s[...] + pre_b[...], 0.0)
        acc_ref[...] += jnp.dot(x.astype(jnp.bfloat16), w_ref[...],
                                preferred_element_type=jnp.float32)

        @pl.when(k == pl.num_programs(2) - 1)
        def _finalize():
            y = acc_ref[...]
            if has_post:                 # fused BN(+ReLU) of the next layer
                y = y * post_s[...] + post_b[...]
                if post_relu:
                    y = jnp.maximum(y, 0.0)
            if pass_cols:                # fused dense-connectivity concat
                o_ref[:, :pass_cols] = p_ref[...].astype(o_ref.dtype)
                o_ref[:, pass_cols:] = y.astype(o_ref.dtype)
            else:
                o_ref[...] = y.astype(o_ref.dtype)

    return kernel


def fused_matmul(x2d, w2d, *, pre=None, post=None, post_relu=False,
                 passthrough=None):
    """relu(x*pre_s+pre_b) @ w, optional (*post_s+post_b, relu) epilogue,
    optional [passthrough | result] concat written lane-dense."""
    M, K = x2d.shape
    N = w2d.shape[1]
    has_pre = pre is not None
    has_post = post is not None
    pass_cols = 0 if passthrough is None else passthrough.shape[1]

    # Tile sizes: full K/N blocks when small (constraint-legal), tiled otherwise.
    tm = 256 if M > 256 else _round_up(M, 8)
    tk = K if K <= 1024 else 512
    tn = N if N <= 512 else 256
    Mp, Kp, Np = _round_up(M, tm), _round_up(K, tk), _round_up(N, tn)
    if pass_cols:
        assert Np == N and tn == N  # concat fusion requires single N tile

    xin = x2d if has_pre else x2d.astype(jnp.bfloat16)   # halve DMA when no BN prologue
    if (Mp, Kp) != (M, K):
        xin = jnp.pad(xin, ((0, Mp - M), (0, Kp - K)))
    win = w2d.astype(jnp.bfloat16)
    if (Kp, Np) != (K, N):
        win = jnp.pad(win, ((0, Kp - K), (0, Np - N)))

    inputs = [xin, win]
    in_specs = [pl.BlockSpec((tm, tk), lambda i, j, k: (i, k)),
                pl.BlockSpec((tk, tn), lambda i, j, k: (k, j))]
    if has_pre:
        s, b = pre
        s = jnp.pad(s, (0, Kp - K)).reshape(1, Kp)
        b = jnp.pad(b, (0, Kp - K)).reshape(1, Kp)
        inputs += [s, b]
        in_specs += [pl.BlockSpec((1, tk), lambda i, j, k: (0, k)),
                     pl.BlockSpec((1, tk), lambda i, j, k: (0, k))]
    if has_post:
        s, b = post
        s = jnp.pad(s, (0, Np - N)).reshape(1, Np)
        b = jnp.pad(b, (0, Np - N)).reshape(1, Np)
        inputs += [s, b]
        in_specs += [pl.BlockSpec((1, tn), lambda i, j, k: (0, j)),
                     pl.BlockSpec((1, tn), lambda i, j, k: (0, j))]
    if pass_cols:
        pthr = passthrough
        if Mp != M:
            pthr = jnp.pad(pthr, ((0, Mp - M), (0, 0)))
        inputs.append(pthr)
        in_specs.append(pl.BlockSpec((tm, pass_cols), lambda i, j, k: (i, 0)))

    if pass_cols:
        out_cols = pass_cols + N
        out_spec = pl.BlockSpec((tm, out_cols), lambda i, j, k: (i, 0))
    else:
        out_cols = Np
        out_spec = pl.BlockSpec((tm, tn), lambda i, j, k: (i, j))

    out = pl.pallas_call(
        _make_mm_kernel(has_pre, has_post, post_relu, pass_cols),
        out_shape=jax.ShapeDtypeStruct((Mp, out_cols), jnp.float32),
        grid_spec=pltpu.PrefetchScalarGridSpec(
            num_scalar_prefetch=0,
            grid=(Mp // tm, Np // tn, Kp // tk),
            in_specs=in_specs,
            out_specs=out_spec,
            scratch_shapes=[pltpu.VMEM((tm, tn), jnp.float32)]),
        compiler_params=pltpu.CompilerParams(
            dimension_semantics=("parallel", "parallel", "arbitrary"),
            vmem_limit_bytes=32 * 1024 * 1024),
    )(*inputs)

    total = pass_cols + N
    if Mp != M or out_cols != total:
        out = out[:M, :total]
    return out


# --------------------------------------------------------------------------
# Standalone BN+ReLU (only used for the final norm5) — tiled over rows
# --------------------------------------------------------------------------

def _bn_relu_kernel(x_ref, s_ref, b_ref, o_ref):
    o_ref[...] = jnp.maximum(x_ref[...] * s_ref[...] + b_ref[...], 0.0)


def bn_relu(x, bn):
    B, H, W, C = x.shape
    s, b = _bn_fold(bn)
    M = B * H * W
    tm = 512 if M > 512 else _round_up(M, 8)
    Mp = _round_up(M, tm)
    x2 = x.reshape(M, C)
    if Mp != M:
        x2 = jnp.pad(x2, ((0, Mp - M), (0, 0)))
    y = pl.pallas_call(
        _bn_relu_kernel,
        out_shape=jax.ShapeDtypeStruct((Mp, C), jnp.float32),
        grid_spec=pltpu.PrefetchScalarGridSpec(
            num_scalar_prefetch=0,
            grid=(Mp // tm,),
            in_specs=[pl.BlockSpec((tm, C), lambda i: (i, 0)),
                      pl.BlockSpec((1, C), lambda i: (0, 0)),
                      pl.BlockSpec((1, C), lambda i: (0, 0))],
            out_specs=pl.BlockSpec((tm, C), lambda i: (i, 0))),
        compiler_params=pltpu.CompilerParams(
            dimension_semantics=("parallel",)),
    )(x2, s.reshape(1, C), b.reshape(1, C))
    return y[:M].reshape(B, H, W, C)


# --------------------------------------------------------------------------
# Pooling: tap-grid reduction kernel (taps on the trailing "arbitrary" axis)
# --------------------------------------------------------------------------

def _pool_kernel(x_ref, o_ref, acc_ref, *, op, scale):
    t = pl.program_id(1)

    @pl.when(t == 0)
    def _init():
        acc_ref[...] = jnp.full_like(acc_ref, -jnp.inf if op == "max" else 0.0)

    if op == "max":
        acc_ref[...] = jnp.maximum(acc_ref[...], x_ref[0])
    else:
        acc_ref[...] += x_ref[0]

    @pl.when(t == pl.num_programs(1) - 1)
    def _finalize():
        o_ref[...] = acc_ref[...] if scale == 1.0 else acc_ref[...] * scale


def _window_slices(x, kh, kw, stride, pad, pad_value):
    B, H, W, C = x.shape
    xp = x if pad == 0 else jnp.pad(
        x, ((0, 0), (pad, pad), (pad, pad), (0, 0)), constant_values=pad_value)
    Ho = (H + 2 * pad - kh) // stride + 1
    Wo = (W + 2 * pad - kw) // stride + 1
    slices = [xp[:, di:di + stride * Ho:stride, dj:dj + stride * Wo:stride, :]
              for di in range(kh) for dj in range(kw)]
    return slices, (B, Ho, Wo)


def pool2d(x, k, stride, pad, op):
    C = x.shape[-1]
    pad_val = -jnp.inf if op == "max" else 0.0
    slices, (B, Ho, Wo) = _window_slices(x, k, k, stride, pad, pad_val)
    taps = k * k
    M = B * Ho * Wo
    win = jnp.stack(slices, axis=0).reshape(taps, M, C)   # taps-major layout
    tm = 512 if M > 512 else _round_up(M, 8)
    Mp = _round_up(M, tm)
    if Mp != M:
        win = jnp.pad(win, ((0, 0), (0, Mp - M), (0, 0)))
    scale = 1.0 if op == "max" else 1.0 / taps
    y = pl.pallas_call(
        functools.partial(_pool_kernel, op=op, scale=scale),
        out_shape=jax.ShapeDtypeStruct((Mp, C), jnp.float32),
        grid_spec=pltpu.PrefetchScalarGridSpec(
            num_scalar_prefetch=0,
            grid=(Mp // tm, taps),
            in_specs=[pl.BlockSpec((1, tm, C), lambda i, t: (t, i, 0))],
            out_specs=pl.BlockSpec((tm, C), lambda i, t: (i, 0)),
            scratch_shapes=[pltpu.VMEM((tm, C), jnp.float32)]),
        compiler_params=pltpu.CompilerParams(
            dimension_semantics=("parallel", "arbitrary")),
    )(win)
    return y[:M].reshape(B, Ho, Wo, C)


# --------------------------------------------------------------------------
# Convolution wrapper (NHWC; weights in PyTorch [Cout, Cin, kh, kw] layout)
# --------------------------------------------------------------------------

def conv2d(x, w, *, stride=1, pad=0, pre=None, post=None, post_relu=False,
           passthrough2d=None):
    cout, cin, kh, kw = w.shape
    B, H, W, C = x.shape
    if kh == 1 and kw == 1 and stride == 1 and pad == 0:
        Ho, Wo = H, W
        taps = 1
        x2d = x.reshape(B * H * W, C)          # 1x1 conv: no im2col, pure reshape
    else:
        slices, (B, Ho, Wo) = _window_slices(x, kh, kw, stride, pad, 0.0)
        taps = kh * kw
        x2d = jnp.stack(slices, axis=3).reshape(B * Ho * Wo, taps * C)
    w2d = jnp.transpose(w, (2, 3, 1, 0)).reshape(taps * cin, cout)

    pre_sb = None
    if pre is not None:                         # fold preceding BN into prologue
        s, b = _bn_fold(pre)
        if taps > 1:
            s, b = jnp.tile(s, taps), jnp.tile(b, taps)
        pre_sb = (s, b)
    post_sb = _bn_fold(post) if post is not None else None

    y = fused_matmul(x2d, w2d, pre=pre_sb, post=post_sb, post_relu=post_relu,
                     passthrough=passthrough2d)
    return y.reshape(B, Ho, Wo, -1)


# --------------------------------------------------------------------------
# DenseNet building blocks (torchvision structure: _DenseLayer / _Transition)
# --------------------------------------------------------------------------

def dense_layer(x, lp):
    B, H, W, C = x.shape
    # norm1 + relu1 + conv1(1x1) + norm2 + relu2 : single fused kernel
    h1 = conv2d(x, lp["conv1"], pre=lp["norm1"], post=lp["norm2"],
                post_relu=True)
    # conv2(3x3, pad=1) fused with the dense-connectivity concat [x, new]
    return conv2d(h1, lp["conv2"], stride=1, pad=1,
                  passthrough2d=x.reshape(B * H * W, C))


def e_densenet_forward(params, x_nchw):
    x = jnp.transpose(x_nchw, (0, 2, 3, 1))                  # NCHW -> NHWC
    x = conv2d(x, params["conv0"], stride=2, pad=3,
               post=params["norm0"], post_relu=True)         # conv0+norm0+relu0
    x = pool2d(x, 3, 2, 1, "max")                            # pool0

    outs = []
    for bi in range(4):
        for lp in params["blocks"][bi]:                      # dense block
            x = dense_layer(x, lp)
        if bi < 3:
            t = params["trans"][bi]
            xb = conv2d(x, t["conv"], pre=t["norm"])         # norm+relu+1x1 conv
            outs.append(xb)                                  # x_block{1,2,3}
            x = pool2d(xb, 2, 2, 0, "mean")                  # transition avg-pool
        else:
            outs.append(bn_relu(x, params["norm5"]))         # x_block4
    # return NCHW like the PyTorch module
    return tuple(jnp.transpose(o, (0, 3, 1, 2)) for o in outs)


# --------------------------------------------------------------------------
# Deterministic synthetic parameters (small DenseNet config)
# --------------------------------------------------------------------------

def init_params(key, in_ch=3, num_init=16, growth=8, bn_size=4,
                blocks=(2, 2, 2, 2)):
    keys = iter(jax.random.split(key, 256))
    nk = lambda: next(keys)

    def conv_w(cout, cin, k):
        return 0.1 * jax.random.normal(nk(), (cout, cin, k, k), jnp.float32)

    def bn(c):
        return dict(
            gamma=1.0 + 0.1 * jax.random.normal(nk(), (c,), jnp.float32),
            beta=0.1 * jax.random.normal(nk(), (c,), jnp.float32),
            mean=0.1 * jax.random.normal(nk(), (c,), jnp.float32),
            var=1.0 + 0.1 * jax.random.uniform(nk(), (c,), jnp.float32),
        )

    p = dict(conv0=conv_w(num_init, in_ch, 7), norm0=bn(num_init),
             blocks=[], trans=[])
    c = num_init
    for bi, n_layers in enumerate(blocks):
        layers = []
        for li in range(n_layers):
            cin = c + li * growth
            layers.append(dict(
                norm1=bn(cin),
                conv1=conv_w(bn_size * growth, cin, 1),
                norm2=bn(bn_size * growth),
                conv2=conv_w(growth, bn_size * growth, 3),
            ))
        p["blocks"].append(layers)
        c += n_layers * growth
        if bi < len(blocks) - 1:
            p["trans"].append(dict(norm=bn(c), conv=conv_w(c // 2, c, 1)))
            c //= 2
    p["norm5"] = bn(c)
    return p


if __name__ == "__main__":
    key = jax.random.PRNGKey(0)
    pkey, xkey = jax.random.split(key)
    params = init_params(pkey)
    x = jax.random.normal(xkey, (2, 3, 32, 32), jnp.float32)

    fwd = jax.jit(e_densenet_forward)
    x_block1, x_block2, x_block3, x_block4 = jax.block_until_ready(fwd(params, x))

    assert x_block1.shape == (2, 16, 8, 8), x_block1.shape
    assert x_block2.shape == (2, 16, 4, 4), x_block2.shape
    assert x_block3.shape == (2, 16, 2, 2), x_block3.shape
    assert x_block4.shape == (2, 32, 1, 1), x_block4.shape
    assert all(bool(jnp.all(jnp.isfinite(o))) for o in
               (x_block1, x_block2, x_block3, x_block4))
    print("KERNEL_OK")
</pallas_src>

<mosaic_0001>
module attributes {stable_mosaic.version = 11 : i64} {
  func.func @kernel(%arg0: i32, %arg1: i32, %arg2: i32, %arg3: memref<256x147xbf16, #tpu.memory_space<vmem>>, %arg4: memref<147x16xbf16, #tpu.memory_space<vmem>>, %arg5: memref<1x16xf32, #tpu.memory_space<vmem>>, %arg6: memref<1x16xf32, #tpu.memory_space<vmem>>, %arg7: memref<256x16xf32, #tpu.memory_space<vmem>>, %arg8: memref<256x16xf32, #tpu.memory_space<vmem>>) attributes {dimension_semantics = [#tpu.dimension_semantics<parallel>, #tpu.dimension_semantics<parallel>, #tpu.dimension_semantics<arbitrary>], iteration_bounds = array<i64: 2, 1, 1>, scalar_prefetch = 0 : i64, scratch_operands = 1 : i64, tpu.core_type = #tpu.core_type<tc>, window_params = [{transform_indices = @transform_0, window_bounds = array<i64: 256, 147>}, {transform_indices = @transform_1, window_bounds = array<i64: 147, 16>}, {transform_indices = @transform_2, window_bounds = array<i64: 1, 16>}, {transform_indices = @transform_3, window_bounds = array<i64: 1, 16>}, {transform_indices = @transform_4, window_bounds = array<i64: 256, 16>}]} {
    %c0_i32 = arith.constant 0 : i32
    %0 = arith.cmpi eq, %arg2, %c0_i32 : i32
    %1 = arith.extui %0 : i1 to i32
    %c0_i32_0 = arith.constant 0 : i32
    %2 = arith.cmpi ne, %1, %c0_i32_0 : i32
    scf.if %2 {
      %cst_10 = arith.constant 0.000000e+00 : f32
      %12 = vector.broadcast %cst_10 : f32 to vector<256x16xf32>
      %c0_11 = arith.constant 0 : index
      %c0_12 = arith.constant 0 : index
      %13 = vector.load %arg8[%c0_11, %c0_12] : memref<256x16xf32, #tpu.memory_space<vmem>>, vector<256x16xf32>
      tpu.vector_store %arg8[%c0_11, %c0_12], %12 {strides = array<i32>} : memref<256x16xf32, #tpu.memory_space<vmem>>, vector<256x16xf32>,
    } else {
    }
    %c0 = arith.constant 0 : index
    %c0_1 = arith.constant 0 : index
    %3 = vector.load %arg3[%c0, %c0_1] : memref<256x147xbf16, #tpu.memory_space<vmem>>, vector<256x147xbf16>
    %c0_2 = arith.constant 0 : index
    %c0_3 = arith.constant 0 : index
    %4 = vector.load %arg8[%c0_2, %c0_3] : memref<256x16xf32, #tpu.memory_space<vmem>>, vector<256x16xf32>
    %c0_4 = arith.constant 0 : index
    %c0_5 = arith.constant 0 : index
    %5 = vector.load %arg4[%c0_4, %c0_5] : memref<147x16xbf16, #tpu.memory_space<vmem>>, vector<147x16xbf16>
    %cst = arith.constant dense<0.000000e+00> : vector<256x16xf32>
    %6 = tpu.matmul %3, %5, %cst {dimension_numbers = #tpu.dot_dimension_numbers<[1], [0], [0], [1], [0, 0, 1, 1], [], []>} : vector<256x147xbf16>, vector<147x16xbf16>, vector<256x16xf32> -> vector<256x16xf32>
    %7 = arith.addf %4, %6 : vector<256x16xf32>
    %c0_6 = arith.constant 0 : index
    %c0_7 = arith.constant 0 : index
    %8 = vector.load %arg8[%c0_6, %c0_7] : memref<256x16xf32, #tpu.memory_space<vmem>>, vector<256x16xf32>
    tpu.vector_store %arg8[%c0_6, %c0_7], %7 {strides = array<i32>} : memref<256x16xf32, #tpu.memory_space<vmem>>, vector<256x16xf32>,
    %c0_i32_8 = arith.constant 0 : i32
    %9 = arith.cmpi eq, %arg2, %c0_i32_8 : i32
    %10 = arith.extui %9 : i1 to i32
    %c0_i32_9 = arith.constant 0 : i32
    %11 = arith.cmpi ne, %10, %c0_i32_9 : i32
    scf.if %11 {
      %c0_10 = arith.constant 0 : index
      %c0_11 = arith.constant 0 : index
      %12 = vector.load %arg8[%c0_10, %c0_11] : memref<256x16xf32, #tpu.memory_space<vmem>>, vector<256x16xf32>
      %c0_12 = arith.constant 0 : index
      %c0_13 = arith.constant 0 : index
      %13 = vector.load %arg5[%c0_12, %c0_13] : memref<1x16xf32, #tpu.memory_space<vmem>>, vector<1x16xf32>
      %14 = vector.broadcast %13 : vector<1x16xf32> to vector<256x16xf32>
      %15 = arith.mulf %12, %14 : vector<256x16xf32>
      %c0_14 = arith.constant 0 : index
      %c0_15 = arith.constant 0 : index
      %16 = vector.load %arg6[%c0_14, %c0_15] : memref<1x16xf32, #tpu.memory_space<vmem>>, vector<1x16xf32>
      %17 = vector.broadcast %16 : vector<1x16xf32> to vector<256x16xf32>
      %18 = arith.addf %15, %17 : vector<256x16xf32>
      %cst_16 = arith.constant 0.000000e+00 : f32
      %19 = vector.broadcast %cst_16 : f32 to vector<256x16xf32>
      %20 = arith.maximumf %18, %19 : vector<256x16xf32>
      %c0_17 = arith.constant 0 : index
      %c0_18 = arith.constant 0 : index
      %21 = vector.load %arg7[%c0_17, %c0_18] : memref<256x16xf32, #tpu.memory_space<vmem>>, vector<256x16xf32>
      tpu.vector_store %arg7[%c0_17, %c0_18], %20 {strides = array<i32>} : memref<256x16xf32, #tpu.memory_space<vmem>>, vector<256x16xf32>,
    } else {
    }
    return
  }
  func.func @transform_0(%arg0: i32, %arg1: i32, %arg2: i32) -> (i32, i32) {
    %c0_i32 = arith.constant 0 : i32
    return %arg0, %arg2 : i32, i32
  }
  func.func @transform_1(%arg0: i32, %arg1: i32, %arg2: i32) -> (i32, i32) {
    %c0_i32 = arith.constant 0 : i32
    return %arg2, %arg1 : i32, i32
  }
  func.func @transform_2(%arg0: i32, %arg1: i32, %arg2: i32) -> (i32, i32) {
    %c0_i32 = arith.constant 0 : i32
    %c0_i32_0 = arith.constant 0 : i32
    return %c0_i32, %arg1 : i32, i32
  }
  func.func @transform_3(%arg0: i32, %arg1: i32, %arg2: i32) -> (i32, i32) {
    %c0_i32 = arith.constant 0 : i32
    %c0_i32_0 = arith.constant 0 : i32
    return %c0_i32, %arg1 : i32, i32
  }
  func.func @transform_4(%arg0: i32, %arg1: i32, %arg2: i32) -> (i32, i32) {
    %c0_i32 = arith.constant 0 : i32
    return %arg0, %arg1 : i32, i32
  }
}

module attributes {stable_mosaic.version = 11 : i64} {
  func.func @_pool_kernel(%arg0: i32, %arg1: i32, %arg2: memref<1x128x16xf32, #tpu.memory_space<vmem>>, %arg3: memref<128x16xf32, #tpu.memory_space<vmem>>, %arg4: memref<128x16xf32, #tpu.memory_space<vmem>>) attributes {dimension_semantics = [#tpu.dimension_semantics<parallel>, #tpu.dimension_semantics<arbitrary>], iteration_bounds = array<i64: 1, 9>, scalar_prefetch = 0 : i64, scratch_operands = 1 : i64, tpu.core_type = #tpu.core_type<tc>, window_params = [{transform_indices = @transform_0, window_bounds = array<i64: 1, 128, 16>}, {transform_indices = @transform_1, window_bounds = array<i64: 128, 16>}]} {
    %c0_i32 = arith.constant 0 : i32
    %0 = arith.cmpi eq, %arg1, %c0_i32 : i32
    %1 = arith.extui %0 : i1 to i32
    %c0_i32_0 = arith.constant 0 : i32
    %2 = arith.cmpi ne, %1, %c0_i32_0 : i32
    scf.if %2 {
      %cst = arith.constant 0xFF800000 : f32
      %11 = vector.broadcast %cst : f32 to vector<128x16xf32>
      %c0_8 = arith.constant 0 : index
      %c0_9 = arith.constant 0 : index
      %12 = vector.load %arg4[%c0_8, %c0_9] : memref<128x16xf32, #tpu.memory_space<vmem>>, vector<128x16xf32>
      tpu.vector_store %arg4[%c0_8, %c0_9], %11 {strides = array<i32>} : memref<128x16xf32, #tpu.memory_space<vmem>>, vector<128x16xf32>,
    } else {
    }
    %c0 = arith.constant 0 : index
    %c0_1 = arith.constant 0 : index
    %3 = vector.load %arg4[%c0, %c0_1] : memref<128x16xf32, #tpu.memory_space<vmem>>, vector<128x16xf32>
    %c0_2 = arith.constant 0 : index
    %c0_3 = arith.constant 0 : index
    %c0_4 = arith.constant 0 : index
    %4 = vector.load %arg2[%c0_2, %c0_3, %c0_4] : memref<1x128x16xf32, #tpu.memory_space<vmem>>, vector<1x128x16xf32>
    %5 = vector.shape_cast %4 : vector<1x128x16xf32> to vector<128x16xf32>
    %6 = arith.maximumf %3, %5 : vector<128x16xf32>
    %c0_5 = arith.constant 0 : index
    %c0_6 = arith.constant 0 : index
    %7 = vector.load %arg4[%c0_5, %c0_6] : memref<128x16xf32, #tpu.memory_space<vmem>>, vector<128x16xf32>
    tpu.vector_store %arg4[%c0_5, %c0_6], %6 {strides = array<i32>} : memref<128x16xf32, #tpu.memory_space<vmem>>, vector<128x16xf32>,
    %c8_i32 = arith.constant 8 : i32
    %8 = arith.cmpi eq, %arg1, %c8_i32 : i32
    %9 = arith.extui %8 : i1 to i32
    %c0_i32_7 = arith.constant 0 : i32
    %10 = arith.cmpi ne, %9, %c0_i32_7 : i32
    scf.if %10 {
      %c0_8 = arith.constant 0 : index
      %c0_9 = arith.constant 0 : index
      %11 = vector.load %arg4[%c0_8, %c0_9] : memref<128x16xf32, #tpu.memory_space<vmem>>, vector<128x16xf32>
      %c0_10 = arith.constant 0 : index
      %c0_11 = arith.constant 0 : index
      %12 = vector.load %arg3[%c0_10, %c0_11] : memref<128x16xf32, #tpu.memory_space<vmem>>, vector<128x16xf32>
      tpu.vector_store %arg3[%c0_10, %c0_11], %11 {strides = array<i32>} : memref<128x16xf32, #tpu.memory_space<vmem>>, vector<128x16xf32>,
    } else {
    }
    return
  }
  func.func @transform_0(%arg0: i32, %arg1: i32) -> (i32, i32, i32) {
    %c0_i32 = arith.constant 0 : i32
    %c0_i32_0 = arith.constant 0 : i32
    return %arg1, %arg0, %c0_i32 : i32, i32, i32
  }
  func.func @transform_1(%arg0: i32, %arg1: i32) -> (i32, i32) {
    %c0_i32 = arith.constant 0 : i32
    %c0_i32_0 = arith.constant 0 : i32
    return %arg0, %c0_i32 : i32, i32
  }
}

module attributes {stable_mosaic.version = 11 : i64} {
  func.func @kernel(%arg0: i32, %arg1: i32, %arg2: i32, %arg3: memref<128x16xf32, #tpu.memory_space<vmem>>, %arg4: memref<16x32xbf16, #tpu.memory_space<vmem>>, %arg5: memref<1x16xf32, #tpu.memory_space<vmem>>, %arg6: memref<1x16xf32, #tpu.memory_space<vmem>>, %arg7: memref<1x32xf32, #tpu.memory_space<vmem>>, %arg8: memref<1x32xf32, #tpu.memory_space<vmem>>, %arg9: memref<128x32xf32, #tpu.memory_space<vmem>>, %arg10: memref<128x32xf32, #tpu.memory_space<vmem>>) attributes {dimension_semantics = [#tpu.dimension_semantics<parallel>, #tpu.dimension_semantics<parallel>, #tpu.dimension_semantics<arbitrary>], iteration_bounds = array<i64: 1, 1, 1>, scalar_prefetch = 0 : i64, scratch_operands = 1 : i64, tpu.core_type = #tpu.core_type<tc>, window_params = [{transform_indices = @transform_0, window_bounds = array<i64: 128, 16>}, {transform_indices = @transform_1, window_bounds = array<i64: 16, 32>}, {transform_indices = @transform_2, window_bounds = array<i64: 1, 16>}, {transform_indices = @transform_3, window_bounds = array<i64: 1, 16>}, {transform_indices = @transform_4, window_bounds = array<i64: 1, 32>}, {transform_indices = @transform_5, window_bounds = array<i64: 1, 32>}, {transform_indices = @transform_6, window_bounds = array<i64: 128, 32>}]} {
    %c0_i32 = arith.constant 0 : i32
    %0 = arith.cmpi eq, %arg2, %c0_i32 : i32
    %1 = arith.extui %0 : i1 to i32
    %c0_i32_0 = arith.constant 0 : i32
    %2 = arith.cmpi ne, %1, %c0_i32_0 : i32
    scf.if %2 {
      %cst_15 = arith.constant 0.000000e+00 : f32
      %21 = vector.broadcast %cst_15 : f32 to vector<128x32xf32>
      %c0_16 = arith.constant 0 : index
      %c0_17 = arith.constant 0 : index
      %22 = vector.load %arg10[%c0_16, %c0_17] : memref<128x32xf32, #tpu.memory_space<vmem>>, vector<128x32xf32>
      tpu.vector_store %arg10[%c0_16, %c0_17], %21 {strides = array<i32>} : memref<128x32xf32, #tpu.memory_space<vmem>>, vector<128x32xf32>,
    } else {
    }
    %c0 = arith.constant 0 : index
    %c0_1 = arith.constant 0 : index
    %3 = vector.load %arg3[%c0, %c0_1] : memref<128x16xf32, #tpu.memory_space<vmem>>, vector<128x16xf32>
    %c0_2 = arith.constant 0 : index
    %c0_3 = arith.constant 0 : index
    %4 = vector.load %arg5[%c0_2, %c0_3] : memref<1x16xf32, #tpu.memory_space<vmem>>, vector<1x16xf32>
    %5 = vector.broadcast %4 : vector<1x16xf32> to vector<128x16xf32>
    %6 = arith.mulf %3, %5 : vector<128x16xf32>
    %c0_4 = arith.constant 0 : index
    %c0_5 = arith.constant 0 : index
    %7 = vector.load %arg6[%c0_4, %c0_5] : memref<1x16xf32, #tpu.memory_space<vmem>>, vector<1x16xf32>
    %8 = vector.broadcast %7 : vector<1x16xf32> to vector<128x16xf32>
    %9 = arith.addf %6, %8 : vector<128x16xf32>
    %cst = arith.constant 0.000000e+00 : f32
    %10 = vector.broadcast %cst : f32 to vector<128x16xf32>
    %11 = arith.maximumf %9, %10 : vector<128x16xf32>
    %c0_6 = arith.constant 0 : index
    %c0_7 = arith.constant 0 : index
    %12 = vector.load %arg10[%c0_6, %c0_7] : memref<128x32xf32, #tpu.memory_space<vmem>>, vector<128x32xf32>
    %13 = arith.truncf %11 : vector<128x16xf32> to vector<128x16xbf16>
    %c0_8 = arith.constant 0 : index
    %c0_9 = arith.constant 0 : index
    %14 = vector.load %arg4[%c0_8, %c0_9] : memref<16x32xbf16, #tpu.memory_space<vmem>>, vector<16x32xbf16>
    %cst_10 = arith.constant dense<0.000000e+00> : vector<128x32xf32>
    %15 = tpu.matmul %13, %14, %cst_10 {dimension_numbers = #tpu.dot_dimension_numbers<[1], [0], [0], [1], [0, 0, 1, 1], [], []>} : vector<128x16xbf16>, vector<16x32xbf16>, vector<128x32xf32> -> vector<128x32xf32>
    %16 = arith.addf %12, %15 : vector<128x32xf32>
    %c0_11 = arith.constant 0 : index
    %c0_12 = arith.constant 0 : index
    %17 = vector.load %arg10[%c0_11, %c0_12] : memref<128x32xf32, #tpu.memory_space<vmem>>, vector<128x32xf32>
    tpu.vector_store %arg10[%c0_11, %c0_12], %16 {strides = array<i32>} : memref<128x32xf32, #tpu.memory_space<vmem>>, vector<128x32xf32>,
    %c0_i32_13 = arith.constant 0 : i32
    %18 = arith.cmpi eq, %arg2, %c0_i32_13 : i32
    %19 = arith.extui %18 : i1 to i32
    %c0_i32_14 = arith.constant 0 : i32
    %20 = arith.cmpi ne, %19, %c0_i32_14 : i32
    scf.if %20 {
      %c0_15 = arith.constant 0 : index
      %c0_16 = arith.constant 0 : index
      %21 = vector.load %arg10[%c0_15, %c0_16] : memref<128x32xf32, #tpu.memory_space<vmem>>, vector<128x32xf32>
      %c0_17 = arith.constant 0 : index
      %c0_18 = arith.constant 0 : index
      %22 = vector.load %arg7[%c0_17, %c0_18] : memref<1x32xf32, #tpu.memory_space<vmem>>, vector<1x32xf32>
      %23 = vector.broadcast %22 : vector<1x32xf32> to vector<128x32xf32>
      %24 = arith.mulf %21, %23 : vector<128x32xf32>
      %c0_19 = arith.constant 0 : index
      %c0_20 = arith.constant 0 : index
      %25 = vector.load %arg8[%c0_19, %c0_20] : memref<1x32xf32, #tpu.memory_space<vmem>>, vector<1x32xf32>
      %26 = vector.broadcast %25 : vector<1x32xf32> to vector<128x32xf32>
      %27 = arith.addf %24, %26 : vector<128x32xf32>
      %cst_21 = arith.constant 0.000000e+00 : f32
      %28 = vector.broadcast %cst_21 : f32 to vector<128x32xf32>
      %29 = arith.maximumf %27, %28 : vector<128x32xf32>
      %c0_22 = arith.constant 0 : index
      %c0_23 = arith.constant 0 : index
      %30 = vector.load %arg9[%c0_22, %c0_23] : memref<128x32xf32, #tpu.memory_space<vmem>>, vector<128x32xf32>
      tpu.vector_store %arg9[%c0_22, %c0_23], %29 {strides = array<i32>} : memref<128x32xf32, #tpu.memory_space<vmem>>, vector<128x32xf32>,
    } else {
    }
    return
  }
  func.func @transform_0(%arg0: i32, %arg1: i32, %arg2: i32) -> (i32, i32) {
    %c0_i32 = arith.constant 0 : i32
    return %arg0, %arg2 : i32, i32
  }
  func.func @transform_1(%arg0: i32, %arg1: i32, %arg2: i32) -> (i32, i32) {
    %c0_i32 = arith.constant 0 : i32
    return %arg2, %arg1 : i32, i32
  }
  func.func @transform_2(%arg0: i32, %arg1: i32, %arg2: i32) -> (i32, i32) {
    %c0_i32 = arith.constant 0 : i32
    %c0_i32_0 = arith.constant 0 : i32
    return %c0_i32, %arg2 : i32, i32
  }
  func.func @transform_3(%arg0: i32, %arg1: i32, %arg2: i32) -> (i32, i32) {
    %c0_i32 = arith.constant 0 : i32
    %c0_i32_0 = arith.constant 0 : i32
    return %c0_i32, %arg2 : i32, i32
  }
  func.func @transform_4(%arg0: i32, %arg1: i32, %arg2: i32) -> (i32, i32) {
    %c0_i32 = arith.constant 0 : i32
    %c0_i32_0 = arith.constant 0 : i32
    return %c0_i32, %arg1 : i32, i32
  }
  func.func @transform_5(%arg0: i32, %arg1: i32, %arg2: i32) -> (i32, i32) {
    %c0_i32 = arith.constant 0 : i32
    %c0_i32_0 = arith.constant 0 : i32
    return %c0_i32, %arg1 : i32, i32
  }
  func.func @transform_6(%arg0: i32, %arg1: i32, %arg2: i32) -> (i32, i32) {
    %c0_i32 = arith.constant 0 : i32
    return %arg0, %arg1 : i32, i32
  }
}

module attributes {stable_mosaic.version = 11 : i64} {
  func.func @kernel(%arg0: i32, %arg1: i32, %arg2: i32, %arg3: memref<128x288xbf16, #tpu.memory_space<vmem>>, %arg4: memref<288x8xbf16, #tpu.memory_space<vmem>>, %arg5: memref<128x16xf32, #tpu.memory_space<vmem>>, %arg6: memref<128x24xf32, #tpu.memory_space<vmem>>, %arg7: memref<128x8xf32, #tpu.memory_space<vmem>>) attributes {dimension_semantics = [#tpu.dimension_semantics<parallel>, #tpu.dimension_semantics<parallel>, #tpu.dimension_semantics<arbitrary>], iteration_bounds = array<i64: 1, 1, 1>, scalar_prefetch = 0 : i64, scratch_operands = 1 : i64, tpu.core_type = #tpu.core_type<tc>, window_params = [{transform_indices = @transform_0, window_bounds = array<i64: 128, 288>}, {transform_indices = @transform_1, window_bounds = array<i64: 288, 8>}, {transform_indices = @transform_2, window_bounds = array<i64: 128, 16>}, {transform_indices = @transform_3, window_bounds = array<i64: 128, 24>}]} {
    %c0_i32 = arith.constant 0 : i32
    %0 = arith.cmpi eq, %arg2, %c0_i32 : i32
    %1 = arith.extui %0 : i1 to i32
    %c0_i32_0 = arith.constant 0 : i32
    %2 = arith.cmpi ne, %1, %c0_i32_0 : i32
    scf.if %2 {
      %cst_10 = arith.constant 0.000000e+00 : f32
      %12 = vector.broadcast %cst_10 : f32 to vector<128x8xf32>
      %c0_11 = arith.constant 0 : index
      %c0_12 = arith.constant 0 : index
      %13 = vector.load %arg7[%c0_11, %c0_12] : memref<128x8xf32, #tpu.memory_space<vmem>>, vector<128x8xf32>
      tpu.vector_store %arg7[%c0_11, %c0_12], %12 {strides = array<i32>} : memref<128x8xf32, #tpu.memory_space<vmem>>, vector<128x8xf32>,
    } else {
    }
    %c0 = arith.constant 0 : index
    %c0_1 = arith.constant 0 : index
    %3 = vector.load %arg3[%c0, %c0_1] : memref<128x288xbf16, #tpu.memory_space<vmem>>, vector<128x288xbf16>
    %c0_2 = arith.constant 0 : index
    %c0_3 = arith.constant 0 : index
    %4 = vector.load %arg7[%c0_2, %c0_3] : memref<128x8xf32, #tpu.memory_space<vmem>>, vector<128x8xf32>
    %c0_4 = arith.constant 0 : index
    %c0_5 = arith.constant 0 : index
    %5 = vector.load %arg4[%c0_4, %c0_5] : memref<288x8xbf16, #tpu.memory_space<vmem>>, vector<288x8xbf16>
    %cst = arith.constant dense<0.000000e+00> : vector<128x8xf32>
    %6 = tpu.matmul %3, %5, %cst {dimension_numbers = #tpu.dot_dimension_numbers<[1], [0], [0], [1], [0, 0, 1, 1], [], []>} : vector<128x288xbf16>, vector<288x8xbf16>, vector<128x8xf32> -> vector<128x8xf32>
    %7 = arith.addf %4, %6 : vector<128x8xf32>
    %c0_6 = arith.constant 0 : index
    %c0_7 = arith.constant 0 : index
    %8 = vector.load %arg7[%c0_6, %c0_7] : memref<128x8xf32, #tpu.memory_space<vmem>>, vector<128x8xf32>
    tpu.vector_store %arg7[%c0_6, %c0_7], %7 {strides = array<i32>} : memref<128x8xf32, #tpu.memory_space<vmem>>, vector<128x8xf32>,
    %c0_i32_8 = arith.constant 0 : i32
    %9 = arith.cmpi eq, %arg2, %c0_i32_8 : i32
    %10 = arith.extui %9 : i1 to i32
    %c0_i32_9 = arith.constant 0 : i32
    %11 = arith.cmpi ne, %10, %c0_i32_9 : i32
    scf.if %11 {
      %c0_10 = arith.constant 0 : index
      %c0_11 = arith.constant 0 : index
      %12 = vector.load %arg7[%c0_10, %c0_11] : memref<128x8xf32, #tpu.memory_space<vmem>>, vector<128x8xf32>
      %c0_12 = arith.constant 0 : index
      %c0_13 = arith.constant 0 : index
      %13 = vector.load %arg5[%c0_12, %c0_13] : memref<128x16xf32, #tpu.memory_space<vmem>>, vector<128x16xf32>
      %c0_14 = arith.constant 0 : index
      %c0_15 = arith.constant 0 : index
      %14 = vector.load %arg6[%c0_14, %c0_15] : memref<128x24xf32, #tpu.memory_space<vmem>>, vector<128x16xf32>
      tpu.vector_store %arg6[%c0_14, %c0_15], %13 {strides = array<i32>} : memref<128x24xf32, #tpu.memory_space<vmem>>, vector<128x16xf32>,
      %c0_16 = arith.constant 0 : index
      %c16 = arith.constant 16 : index
      %15 = vector.load %arg6[%c0_16, %c16] : memref<128x24xf32, #tpu.memory_space<vmem>>, vector<128x8xf32>
      tpu.vector_store %arg6[%c0_16, %c16], %12 {strides = array<i32>} : memref<128x24xf32, #tpu.memory_space<vmem>>, vector<128x8xf32>,
    } else {
    }
    return
  }
  func.func @transform_0(%arg0: i32, %arg1: i32, %arg2: i32) -> (i32, i32) {
    %c0_i32 = arith.constant 0 : i32
    return %arg0, %arg2 : i32, i32
  }
  func.func @transform_1(%arg0: i32, %arg1: i32, %arg2: i32) -> (i32, i32) {
    %c0_i32 = arith.constant 0 : i32
    return %arg2, %arg1 : i32, i32
  }
  func.func @transform_2(%arg0: i32, %arg1: i32, %arg2: i32) -> (i32, i32) {
    %c0_i32 = arith.constant 0 : i32
    %c0_i32_0 = arith.constant 0 : i32
    return %arg0, %c0_i32 : i32, i32
  }
  func.func @transform_3(%arg0: i32, %arg1: i32, %arg2: i32) -> (i32, i32) {
    %c0_i32 = arith.constant 0 : i32
    %c0_i32_0 = arith.constant 0 : i32
    return %arg0, %c0_i32 : i32, i32
  }
}

module attributes {stable_mosaic.version = 11 : i64} {
  func.func @kernel(%arg0: i32, %arg1: i32, %arg2: i32, %arg3: memref<128x24xf32, #tpu.memory_space<vmem>>, %arg4: memref<24x32xbf16, #tpu.memory_space<vmem>>, %arg5: memref<1x24xf32, #tpu.memory_space<vmem>>, %arg6: memref<1x24xf32, #tpu.memory_space<vmem>>, %arg7: memref<1x32xf32, #tpu.memory_space<vmem>>, %arg8: memref<1x32xf32, #tpu.memory_space<vmem>>, %arg9: memref<128x32xf32, #tpu.memory_space<vmem>>, %arg10: memref<128x32xf32, #tpu.memory_space<vmem>>) attributes {dimension_semantics = [#tpu.dimension_semantics<parallel>, #tpu.dimension_semantics<parallel>, #tpu.dimension_semantics<arbitrary>], iteration_bounds = array<i64: 1, 1, 1>, scalar_prefetch = 0 : i64, scratch_operands = 1 : i64, tpu.core_type = #tpu.core_type<tc>, window_params = [{transform_indices = @transform_0, window_bounds = array<i64: 128, 24>}, {transform_indices = @transform_1, window_bounds = array<i64: 24, 32>}, {transform_indices = @transform_2, window_bounds = array<i64: 1, 24>}, {transform_indices = @transform_3, window_bounds = array<i64: 1, 24>}, {transform_indices = @transform_4, window_bounds = array<i64: 1, 32>}, {transform_indices = @transform_5, window_bounds = array<i64: 1, 32>}, {transform_indices = @transform_6, window_bounds = array<i64: 128, 32>}]} {
    %c0_i32 = arith.constant 0 : i32
    %0 = arith.cmpi eq, %arg2, %c0_i32 : i32
    %1 = arith.extui %0 : i1 to i32
    %c0_i32_0 = arith.constant 0 : i32
    %2 = arith.cmpi ne, %1, %c0_i32_0 : i32
    scf.if %2 {
      %cst_15 = arith.constant 0.000000e+00 : f32
      %21 = vector.broadcast %cst_15 : f32 to vector<128x32xf32>
      %c0_16 = arith.constant 0 : index
      %c0_17 = arith.constant 0 : index
      %22 = vector.load %arg10[%c0_16, %c0_17] : memref<128x32xf32, #tpu.memory_space<vmem>>, vector<128x32xf32>
      tpu.vector_store %arg10[%c0_16, %c0_17], %21 {strides = array<i32>} : memref<128x32xf32, #tpu.memory_space<vmem>>, vector<128x32xf32>,
    } else {
    }
    %c0 = arith.constant 0 : index
    %c0_1 = arith.constant 0 : index
    %3 = vector.load %arg3[%c0, %c0_1] : memref<128x24xf32, #tpu.memory_space<vmem>>, vector<128x24xf32>
    %c0_2 = arith.constant 0 : index
    %c0_3 = arith.constant 0 : index
    %4 = vector.load %arg5[%c0_2, %c0_3] : memref<1x24xf32, #tpu.memory_space<vmem>>, vector<1x24xf32>
    %5 = vector.broadcast %4 : vector<1x24xf32> to vector<128x24xf32>
    %6 = arith.mulf %3, %5 : vector<128x24xf32>
    %c0_4 = arith.constant 0 : index
    %c0_5 = arith.constant 0 : index
    %7 = vector.load %arg6[%c0_4, %c0_5] : memref<1x24xf32, #tpu.memory_space<vmem>>, vector<1x24xf32>
    %8 = vector.broadcast %7 : vector<1x24xf32> to vector<128x24xf32>
    %9 = arith.addf %6, %8 : vector<128x24xf32>
    %cst = arith.constant 0.000000e+00 : f32
    %10 = vector.broadcast %cst : f32 to vector<128x24xf32>
    %11 = arith.maximumf %9, %10 : vector<128x24xf32>
    %c0_6 = arith.constant 0 : index
    %c0_7 = arith.constant 0 : index
    %12 = vector.load %arg10[%c0_6, %c0_7] : memref<128x32xf32, #tpu.memory_space<vmem>>, vector<128x32xf32>
    %13 = arith.truncf %11 : vector<128x24xf32> to vector<128x24xbf16>
    %c0_8 = arith.constant 0 : index
    %c0_9 = arith.constant 0 : index
    %14 = vector.load %arg4[%c0_8, %c0_9] : memref<24x32xbf16, #tpu.memory_space<vmem>>, vector<24x32xbf16>
    %cst_10 = arith.constant dense<0.000000e+00> : vector<128x32xf32>
    %15 = tpu.matmul %13, %14, %cst_10 {dimension_numbers = #tpu.dot_dimension_numbers<[1], [0], [0], [1], [0, 0, 1, 1], [], []>} : vector<128x24xbf16>, vector<24x32xbf16>, vector<128x32xf32> -> vector<128x32xf32>
    %16 = arith.addf %12, %15 : vector<128x32xf32>
    %c0_11 = arith.constant 0 : index
    %c0_12 = arith.constant 0 : index
    %17 = vector.load %arg10[%c0_11, %c0_12] : memref<128x32xf32, #tpu.memory_space<vmem>>, vector<128x32xf32>
    tpu.vector_store %arg10[%c0_11, %c0_12], %16 {strides = array<i32>} : memref<128x32xf32, #tpu.memory_space<vmem>>, vector<128x32xf32>,
    %c0_i32_13 = arith.constant 0 : i32
    %18 = arith.cmpi eq, %arg2, %c0_i32_13 : i32
    %19 = arith.extui %18 : i1 to i32
    %c0_i32_14 = arith.constant 0 : i32
    %20 = arith.cmpi ne, %19, %c0_i32_14 : i32
    scf.if %20 {
      %c0_15 = arith.constant 0 : index
      %c0_16 = arith.constant 0 : index
      %21 = vector.load %arg10[%c0_15, %c0_16] : memref<128x32xf32, #tpu.memory_space<vmem>>, vector<128x32xf32>
      %c0_17 = arith.constant 0 : index
      %c0_18 = arith.constant 0 : index
      %22 = vector.load %arg7[%c0_17, %c0_18] : memref<1x32xf32, #tpu.memory_space<vmem>>, vector<1x32xf32>
      %23 = vector.broadcast %22 : vector<1x32xf32> to vector<128x32xf32>
      %24 = arith.mulf %21, %23 : vector<128x32xf32>
      %c0_19 = arith.constant 0 : index
      %c0_20 = arith.constant 0 : index
      %25 = vector.load %arg8[%c0_19, %c0_20] : memref<1x32xf32, #tpu.memory_space<vmem>>, vector<1x32xf32>
      %26 = vector.broadcast %25 : vector<1x32xf32> to vector<128x32xf32>
      %27 = arith.addf %24, %26 : vector<128x32xf32>
      %cst_21 = arith.constant 0.000000e+00 : f32
      %28 = vector.broadcast %cst_21 : f32 to vector<128x32xf32>
      %29 = arith.maximumf %27, %28 : vector<128x32xf32>
      %c0_22 = arith.constant 0 : index
      %c0_23 = arith.constant 0 : index
      %30 = vector.load %arg9[%c0_22, %c0_23] : memref<128x32xf32, #tpu.memory_space<vmem>>, vector<128x32xf32>
      tpu.vector_store %arg9[%c0_22, %c0_23], %29 {strides = array<i32>} : memref<128x32xf32, #tpu.memory_space<vmem>>, vector<128x32xf32>,
    } else {
    }
    return
  }
  func.func @transform_0(%arg0: i32, %arg1: i32, %arg2: i32) -> (i32, i32) {
    %c0_i32 = arith.constant 0 : i32
    return %arg0, %arg2 : i32, i32
  }
  func.func @transform_1(%arg0: i32, %arg1: i32, %arg2: i32) -> (i32, i32) {
    %c0_i32 = arith.constant 0 : i32
    return %arg2, %arg1 : i32, i32
  }
  func.func @transform_2(%arg0: i32, %arg1: i32, %arg2: i32) -> (i32, i32) {
    %c0_i32 = arith.constant 0 : i32
    %c0_i32_0 = arith.constant 0 : i32
    return %c0_i32, %arg2 : i32, i32
  }
  func.func @transform_3(%arg0: i32, %arg1: i32, %arg2: i32) -> (i32, i32) {
    %c0_i32 = arith.constant 0 : i32
    %c0_i32_0 = arith.constant 0 : i32
    return %c0_i32, %arg2 : i32, i32
  }
  func.func @transform_4(%arg0: i32, %arg1: i32, %arg2: i32) -> (i32, i32) {
    %c0_i32 = arith.constant 0 : i32
    %c0_i32_0 = arith.constant 0 : i32
    return %c0_i32, %arg1 : i32, i32
  }
  func.func @transform_5(%arg0: i32, %arg1: i32, %arg2: i32) -> (i32, i32) {
    %c0_i32 = arith.constant 0 : i32
    %c0_i32_0 = arith.constant 0 : i32
    return %c0_i32, %arg1 : i32, i32
  }
  func.func @transform_6(%arg0: i32, %arg1: i32, %arg2: i32) -> (i32, i32) {
    %c0_i32 = arith.constant 0 : i32
    return %arg0, %arg1 : i32, i32
  }
}

module attributes {stable_mosaic.version = 11 : i64} {
  func.func @kernel(%arg0: i32, %arg1: i32, %arg2: i32, %arg3: memref<128x288xbf16, #tpu.memory_space<vmem>>, %arg4: memref<288x8xbf16, #tpu.memory_space<vmem>>, %arg5: memref<128x24xf32, #tpu.memory_space<vmem>>, %arg6: memref<128x32xf32, #tpu.memory_space<vmem>>, %arg7: memref<128x8xf32, #tpu.memory_space<vmem>>) attributes {dimension_semantics = [#tpu.dimension_semantics<parallel>, #tpu.dimension_semantics<parallel>, #tpu.dimension_semantics<arbitrary>], iteration_bounds = array<i64: 1, 1, 1>, scalar_prefetch = 0 : i64, scratch_operands = 1 : i64, tpu.core_type = #tpu.core_type<tc>, window_params = [{transform_indices = @transform_0, window_bounds = array<i64: 128, 288>}, {transform_indices = @transform_1, window_bounds = array<i64: 288, 8>}, {transform_indices = @transform_2, window_bounds = array<i64: 128, 24>}, {transform_indices = @transform_3, window_bounds = array<i64: 128, 32>}]} {
    %c0_i32 = arith.constant 0 : i32
    %0 = arith.cmpi eq, %arg2, %c0_i32 : i32
    %1 = arith.extui %0 : i1 to i32
    %c0_i32_0 = arith.constant 0 : i32
    %2 = arith.cmpi ne, %1, %c0_i32_0 : i32
    scf.if %2 {
      %cst_10 = arith.constant 0.000000e+00 : f32
      %12 = vector.broadcast %cst_10 : f32 to vector<128x8xf32>
      %c0_11 = arith.constant 0 : index
      %c0_12 = arith.constant 0 : index
      %13 = vector.load %arg7[%c0_11, %c0_12] : memref<128x8xf32, #tpu.memory_space<vmem>>, vector<128x8xf32>
      tpu.vector_store %arg7[%c0_11, %c0_12], %12 {strides = array<i32>} : memref<128x8xf32, #tpu.memory_space<vmem>>, vector<128x8xf32>,
    } else {
    }
    %c0 = arith.constant 0 : index
    %c0_1 = arith.constant 0 : index
    %3 = vector.load %arg3[%c0, %c0_1] : memref<128x288xbf16, #tpu.memory_space<vmem>>, vector<128x288xbf16>
    %c0_2 = arith.constant 0 : index
    %c0_3 = arith.constant 0 : index
    %4 = vector.load %arg7[%c0_2, %c0_3] : memref<128x8xf32, #tpu.memory_space<vmem>>, vector<128x8xf32>
    %c0_4 = arith.constant 0 : index
    %c0_5 = arith.constant 0 : index
    %5 = vector.load %arg4[%c0_4, %c0_5] : memref<288x8xbf16, #tpu.memory_space<vmem>>, vector<288x8xbf16>
    %cst = arith.constant dense<0.000000e+00> : vector<128x8xf32>
    %6 = tpu.matmul %3, %5, %cst {dimension_numbers = #tpu.dot_dimension_numbers<[1], [0], [0], [1], [0, 0, 1, 1], [], []>} : vector<128x288xbf16>, vector<288x8xbf16>, vector<128x8xf32> -> vector<128x8xf32>
    %7 = arith.addf %4, %6 : vector<128x8xf32>
    %c0_6 = arith.constant 0 : index
    %c0_7 = arith.constant 0 : index
    %8 = vector.load %arg7[%c0_6, %c0_7] : memref<128x8xf32, #tpu.memory_space<vmem>>, vector<128x8xf32>
    tpu.vector_store %arg7[%c0_6, %c0_7], %7 {strides = array<i32>} : memref<128x8xf32, #tpu.memory_space<vmem>>, vector<128x8xf32>,
    %c0_i32_8 = arith.constant 0 : i32
    %9 = arith.cmpi eq, %arg2, %c0_i32_8 : i32
    %10 = arith.extui %9 : i1 to i32
    %c0_i32_9 = arith.constant 0 : i32
    %11 = arith.cmpi ne, %10, %c0_i32_9 : i32
    scf.if %11 {
      %c0_10 = arith.constant 0 : index
      %c0_11 = arith.constant 0 : index
      %12 = vector.load %arg7[%c0_10, %c0_11] : memref<128x8xf32, #tpu.memory_space<vmem>>, vector<128x8xf32>
      %c0_12 = arith.constant 0 : index
      %c0_13 = arith.constant 0 : index
      %13 = vector.load %arg5[%c0_12, %c0_13] : memref<128x24xf32, #tpu.memory_space<vmem>>, vector<128x24xf32>
      %c0_14 = arith.constant 0 : index
      %c0_15 = arith.constant 0 : index
      %14 = vector.load %arg6[%c0_14, %c0_15] : memref<128x32xf32, #tpu.memory_space<vmem>>, vector<128x24xf32>
      tpu.vector_store %arg6[%c0_14, %c0_15], %13 {strides = array<i32>} : memref<128x32xf32, #tpu.memory_space<vmem>>, vector<128x24xf32>,
      %c0_16 = arith.constant 0 : index
      %c24 = arith.constant 24 : index
      %15 = vector.load %arg6[%c0_16, %c24] : memref<128x32xf32, #tpu.memory_space<vmem>>, vector<128x8xf32>
      tpu.vector_store %arg6[%c0_16, %c24], %12 {strides = array<i32>} : memref<128x32xf32, #tpu.memory_space<vmem>>, vector<128x8xf32>,
    } else {
    }
    return
  }
  func.func @transform_0(%arg0: i32, %arg1: i32, %arg2: i32) -> (i32, i32) {
    %c0_i32 = arith.constant 0 : i32
    return %arg0, %arg2 : i32, i32
  }
  func.func @transform_1(%arg0: i32, %arg1: i32, %arg2: i32) -> (i32, i32) {
    %c0_i32 = arith.constant 0 : i32
    return %arg2, %arg1 : i32, i32
  }
  func.func @transform_2(%arg0: i32, %arg1: i32, %arg2: i32) -> (i32, i32) {
    %c0_i32 = arith.constant 0 : i32
    %c0_i32_0 = arith.constant 0 : i32
    return %arg0, %c0_i32 : i32, i32
  }
  func.func @transform_3(%arg0: i32, %arg1: i32, %arg2: i32) -> (i32, i32) {
    %c0_i32 = arith.constant 0 : i32
    %c0_i32_0 = arith.constant 0 : i32
    return %arg0, %c0_i32 : i32, i32
  }
}

module attributes {stable_mosaic.version = 11 : i64} {
  func.func @kernel(%arg0: i32, %arg1: i32, %arg2: i32, %arg3: memref<128x32xf32, #tpu.memory_space<vmem>>, %arg4: memref<32x16xbf16, #tpu.memory_space<vmem>>, %arg5: memref<1x32xf32, #tpu.memory_space<vmem>>, %arg6: memref<1x32xf32, #tpu.memory_space<vmem>>, %arg7: memref<128x16xf32, #tpu.memory_space<vmem>>, %arg8: memref<128x16xf32, #tpu.memory_space<vmem>>) attributes {dimension_semantics = [#tpu.dimension_semantics<parallel>, #tpu.dimension_semantics<parallel>, #tpu.dimension_semantics<arbitrary>], iteration_bounds = array<i64: 1, 1, 1>, scalar_prefetch = 0 : i64, scratch_operands = 1 : i64, tpu.core_type = #tpu.core_type<tc>, window_params = [{transform_indices = @transform_0, window_bounds = array<i64: 128, 32>}, {transform_indices = @transform_1, window_bounds = array<i64: 32, 16>}, {transform_indices = @transform_2, window_bounds = array<i64: 1, 32>}, {transform_indices = @transform_3, window_bounds = array<i64: 1, 32>}, {transform_indices = @transform_4, window_bounds = array<i64: 128, 16>}]} {
    %c0_i32 = arith.constant 0 : i32
    %0 = arith.cmpi eq, %arg2, %c0_i32 : i32
    %1 = arith.extui %0 : i1 to i32
    %c0_i32_0 = arith.constant 0 : i32
    %2 = arith.cmpi ne, %1, %c0_i32_0 : i32
    scf.if %2 {
      %cst_15 = arith.constant 0.000000e+00 : f32
      %21 = vector.broadcast %cst_15 : f32 to vector<128x16xf32>
      %c0_16 = arith.constant 0 : index
      %c0_17 = arith.constant 0 : index
      %22 = vector.load %arg8[%c0_16, %c0_17] : memref<128x16xf32, #tpu.memory_space<vmem>>, vector<128x16xf32>
      tpu.vector_store %arg8[%c0_16, %c0_17], %21 {strides = array<i32>} : memref<128x16xf32, #tpu.memory_space<vmem>>, vector<128x16xf32>,
    } else {
    }
    %c0 = arith.constant 0 : index
    %c0_1 = arith.constant 0 : index
    %3 = vector.load %arg3[%c0, %c0_1] : memref<128x32xf32, #tpu.memory_space<vmem>>, vector<128x32xf32>
    %c0_2 = arith.constant 0 : index
    %c0_3 = arith.constant 0 : index
    %4 = vector.load %arg5[%c0_2, %c0_3] : memref<1x32xf32, #tpu.memory_space<vmem>>, vector<1x32xf32>
    %5 = vector.broadcast %4 : vector<1x32xf32> to vector<128x32xf32>
    %6 = arith.mulf %3, %5 : vector<128x32xf32>
    %c0_4 = arith.constant 0 : index
    %c0_5 = arith.constant 0 : index
    %7 = vector.load %arg6[%c0_4, %c0_5] : memref<1x32xf32, #tpu.memory_space<vmem>>, vector<1x32xf32>
    %8 = vector.broadcast %7 : vector<1x32xf32> to vector<128x32xf32>
    %9 = arith.addf %6, %8 : vector<128x32xf32>
    %cst = arith.constant 0.000000e+00 : f32
    %10 = vector.broadcast %cst : f32 to vector<128x32xf32>
    %11 = arith.maximumf %9, %10 : vector<128x32xf32>
    %c0_6 = arith.constant 0 : index
    %c0_7 = arith.constant 0 : index
    %12 = vector.load %arg8[%c0_6, %c0_7] : memref<128x16xf32, #tpu.memory_space<vmem>>, vector<128x16xf32>
    %13 = arith.truncf %11 : vector<128x32xf32> to vector<128x32xbf16>
    %c0_8 = arith.constant 0 : index
    %c0_9 = arith.constant 0 : index
    %14 = vector.load %arg4[%c0_8, %c0_9] : memref<32x16xbf16, #tpu.memory_space<vmem>>, vector<32x16xbf16>
    %cst_10 = arith.constant dense<0.000000e+00> : vector<128x16xf32>
    %15 = tpu.matmul %13, %14, %cst_10 {dimension_numbers = #tpu.dot_dimension_numbers<[1], [0], [0], [1], [0, 0, 1, 1], [], []>} : vector<128x32xbf16>, vector<32x16xbf16>, vector<128x16xf32> -> vector<128x16xf32>
    %16 = arith.addf %12, %15 : vector<128x16xf32>
    %c0_11 = arith.constant 0 : index
    %c0_12 = arith.constant 0 : index
    %17 = vector.load %arg8[%c0_11, %c0_12] : memref<128x16xf32, #tpu.memory_space<vmem>>, vector<128x16xf32>
    tpu.vector_store %arg8[%c0_11, %c0_12], %16 {strides = array<i32>} : memref<128x16xf32, #tpu.memory_space<vmem>>, vector<128x16xf32>,
    %c0_i32_13 = arith.constant 0 : i32
    %18 = arith.cmpi eq, %arg2, %c0_i32_13 : i32
    %19 = arith.extui %18 : i1 to i32
    %c0_i32_14 = arith.constant 0 : i32
    %20 = arith.cmpi ne, %19, %c0_i32_14 : i32
    scf.if %20 {
      %c0_15 = arith.constant 0 : index
      %c0_16 = arith.constant 0 : index
      %21 = vector.load %arg8[%c0_15, %c0_16] : memref<128x16xf32, #tpu.memory_space<vmem>>, vector<128x16xf32>
      %c0_17 = arith.constant 0 : index
      %c0_18 = arith.constant 0 : index
      %22 = vector.load %arg7[%c0_17, %c0_18] : memref<128x16xf32, #tpu.memory_space<vmem>>, vector<128x16xf32>
      tpu.vector_store %arg7[%c0_17, %c0_18], %21 {strides = array<i32>} : memref<128x16xf32, #tpu.memory_space<vmem>>, vector<128x16xf32>,
    } else {
    }
    return
  }
  func.func @transform_0(%arg0: i32, %arg1: i32, %arg2: i32) -> (i32, i32) {
    %c0_i32 = arith.constant 0 : i32
    return %arg0, %arg2 : i32, i32
  }
  func.func @transform_1(%arg0: i32, %arg1: i32, %arg2: i32) -> (i32, i32) {
    %c0_i32 = arith.constant 0 : i32
    return %arg2, %arg1 : i32, i32
  }
  func.func @transform_2(%arg0: i32, %arg1: i32, %arg2: i32) -> (i32, i32) {
    %c0_i32 = arith.constant 0 : i32
    %c0_i32_0 = arith.constant 0 : i32
    return %c0_i32, %arg2 : i32, i32
  }
  func.func @transform_3(%arg0: i32, %arg1: i32, %arg2: i32) -> (i32, i32) {
    %c0_i32 = arith.constant 0 : i32
    %c0_i32_0 = arith.constant 0 : i32
    return %c0_i32, %arg2 : i32, i32
  }
  func.func @transform_4(%arg0: i32, %arg1: i32, %arg2: i32) -> (i32, i32) {
    %c0_i32 = arith.constant 0 : i32
    return %arg0, %arg1 : i32, i32
  }
}

module attributes {stable_mosaic.version = 11 : i64} {
  func.func @_pool_kernel(%arg0: i32, %arg1: i32, %arg2: memref<1x32x16xf32, #tpu.memory_space<vmem>>, %arg3: memref<32x16xf32, #tpu.memory_space<vmem>>, %arg4: memref<32x16xf32, #tpu.memory_space<vmem>>) attributes {dimension_semantics = [#tpu.dimension_semantics<parallel>, #tpu.dimension_semantics<arbitrary>], iteration_bounds = array<i64: 1, 4>, scalar_prefetch = 0 : i64, scratch_operands = 1 : i64, tpu.core_type = #tpu.core_type<tc>, window_params = [{transform_indices = @transform_0, window_bounds = array<i64: 1, 32, 16>}, {transform_indices = @transform_1, window_bounds = array<i64: 32, 16>}]} {
    %c0_i32 = arith.constant 0 : i32
    %0 = arith.cmpi eq, %arg1, %c0_i32 : i32
    %1 = arith.extui %0 : i1 to i32
    %c0_i32_0 = arith.constant 0 : i32
    %2 = arith.cmpi ne, %1, %c0_i32_0 : i32
    scf.if %2 {
      %cst = arith.constant 0.000000e+00 : f32
      %11 = vector.broadcast %cst : f32 to vector<32x16xf32>
      %c0_8 = arith.constant 0 : index
      %c0_9 = arith.constant 0 : index
      %12 = vector.load %arg4[%c0_8, %c0_9] : memref<32x16xf32, #tpu.memory_space<vmem>>, vector<32x16xf32>
      tpu.vector_store %arg4[%c0_8, %c0_9], %11 {strides = array<i32>} : memref<32x16xf32, #tpu.memory_space<vmem>>, vector<32x16xf32>,
    } else {
    }
    %c0 = arith.constant 0 : index
    %c0_1 = arith.constant 0 : index
    %3 = vector.load %arg4[%c0, %c0_1] : memref<32x16xf32, #tpu.memory_space<vmem>>, vector<32x16xf32>
    %c0_2 = arith.constant 0 : index
    %c0_3 = arith.constant 0 : index
    %c0_4 = arith.constant 0 : index
    %4 = vector.load %arg2[%c0_2, %c0_3, %c0_4] : memref<1x32x16xf32, #tpu.memory_space<vmem>>, vector<1x32x16xf32>
    %5 = vector.shape_cast %4 : vector<1x32x16xf32> to vector<32x16xf32>
    %6 = arith.addf %3, %5 : vector<32x16xf32>
    %c0_5 = arith.constant 0 : index
    %c0_6 = arith.constant 0 : index
    %7 = vector.load %arg4[%c0_5, %c0_6] : memref<32x16xf32, #tpu.memory_space<vmem>>, vector<32x16xf32>
    tpu.vector_store %arg4[%c0_5, %c0_6], %6 {strides = array<i32>} : memref<32x16xf32, #tpu.memory_space<vmem>>, vector<32x16xf32>,
    %c3_i32 = arith.constant 3 : i32
    %8 = arith.cmpi eq, %arg1, %c3_i32 : i32
    %9 = arith.extui %8 : i1 to i32
    %c0_i32_7 = arith.constant 0 : i32
    %10 = arith.cmpi ne, %9, %c0_i32_7 : i32
    scf.if %10 {
      %c0_8 = arith.constant 0 : index
      %c0_9 = arith.constant 0 : index
      %11 = vector.load %arg4[%c0_8, %c0_9] : memref<32x16xf32, #tpu.memory_space<vmem>>, vector<32x16xf32>
      %cst = arith.constant 2.500000e-01 : f32
      %12 = vector.broadcast %cst : f32 to vector<32x16xf32>
      %13 = arith.mulf %11, %12 : vector<32x16xf32>
      %c0_10 = arith.constant 0 : index
      %c0_11 = arith.constant 0 : index
      %14 = vector.load %arg3[%c0_10, %c0_11] : memref<32x16xf32, #tpu.memory_space<vmem>>, vector<32x16xf32>
      tpu.vector_store %arg3[%c0_10, %c0_11], %13 {strides = array<i32>} : memref<32x16xf32, #tpu.memory_space<vmem>>, vector<32x16xf32>,
    } else {
    }
    return
  }
  func.func @transform_0(%arg0: i32, %arg1: i32) -> (i32, i32, i32) {
    %c0_i32 = arith.constant 0 : i32
    %c0_i32_0 = arith.constant 0 : i32
    return %arg1, %arg0, %c0_i32 : i32, i32, i32
  }
  func.func @transform_1(%arg0: i32, %arg1: i32) -> (i32, i32) {
    %c0_i32 = arith.constant 0 : i32
    %c0_i32_0 = arith.constant 0 : i32
    return %arg0, %c0_i32 : i32, i32
  }
}

module attributes {stable_mosaic.version = 11 : i64} {
  func.func @kernel(%arg0: i32, %arg1: i32, %arg2: i32, %arg3: memref<32x16xf32, #tpu.memory_space<vmem>>, %arg4: memref<16x32xbf16, #tpu.memory_space<vmem>>, %arg5: memref<1x16xf32, #tpu.memory_space<vmem>>, %arg6: memref<1x16xf32, #tpu.memory_space<vmem>>, %arg7: memref<1x32xf32, #tpu.memory_space<vmem>>, %arg8: memref<1x32xf32, #tpu.memory_space<vmem>>, %arg9: memref<32x32xf32, #tpu.memory_space<vmem>>, %arg10: memref<32x32xf32, #tpu.memory_space<vmem>>) attributes {dimension_semantics = [#tpu.dimension_semantics<parallel>, #tpu.dimension_semantics<parallel>, #tpu.dimension_semantics<arbitrary>], iteration_bounds = array<i64: 1, 1, 1>, scalar_prefetch = 0 : i64, scratch_operands = 1 : i64, tpu.core_type = #tpu.core_type<tc>, window_params = [{transform_indices = @transform_0, window_bounds = array<i64: 32, 16>}, {transform_indices = @transform_1, window_bounds = array<i64: 16, 32>}, {transform_indices = @transform_2, window_bounds = array<i64: 1, 16>}, {transform_indices = @transform_3, window_bounds = array<i64: 1, 16>}, {transform_indices = @transform_4, window_bounds = array<i64: 1, 32>}, {transform_indices = @transform_5, window_bounds = array<i64: 1, 32>}, {transform_indices = @transform_6, window_bounds = array<i64: 32, 32>}]} {
    %c0_i32 = arith.constant 0 : i32
    %0 = arith.cmpi eq, %arg2, %c0_i32 : i32
    %1 = arith.extui %0 : i1 to i32
    %c0_i32_0 = arith.constant 0 : i32
    %2 = arith.cmpi ne, %1, %c0_i32_0 : i32
    scf.if %2 {
      %cst_15 = arith.constant 0.000000e+00 : f32
      %21 = vector.broadcast %cst_15 : f32 to vector<32x32xf32>
      %c0_16 = arith.constant 0 : index
      %c0_17 = arith.constant 0 : index
      %22 = vector.load %arg10[%c0_16, %c0_17] : memref<32x32xf32, #tpu.memory_space<vmem>>, vector<32x32xf32>
      tpu.vector_store %arg10[%c0_16, %c0_17], %21 {strides = array<i32>} : memref<32x32xf32, #tpu.memory_space<vmem>>, vector<32x32xf32>,
    } else {
    }
    %c0 = arith.constant 0 : index
    %c0_1 = arith.constant 0 : index
    %3 = vector.load %arg3[%c0, %c0_1] : memref<32x16xf32, #tpu.memory_space<vmem>>, vector<32x16xf32>
    %c0_2 = arith.constant 0 : index
    %c0_3 = arith.constant 0 : index
    %4 = vector.load %arg5[%c0_2, %c0_3] : memref<1x16xf32, #tpu.memory_space<vmem>>, vector<1x16xf32>
    %5 = vector.broadcast %4 : vector<1x16xf32> to vector<32x16xf32>
    %6 = arith.mulf %3, %5 : vector<32x16xf32>
    %c0_4 = arith.constant 0 : index
    %c0_5 = arith.constant 0 : index
    %7 = vector.load %arg6[%c0_4, %c0_5] : memref<1x16xf32, #tpu.memory_space<vmem>>, vector<1x16xf32>
    %8 = vector.broadcast %7 : vector<1x16xf32> to vector<32x16xf32>
    %9 = arith.addf %6, %8 : vector<32x16xf32>
    %cst = arith.constant 0.000000e+00 : f32
    %10 = vector.broadcast %cst : f32 to vector<32x16xf32>
    %11 = arith.maximumf %9, %10 : vector<32x16xf32>
    %c0_6 = arith.constant 0 : index
    %c0_7 = arith.constant 0 : index
    %12 = vector.load %arg10[%c0_6, %c0_7] : memref<32x32xf32, #tpu.memory_space<vmem>>, vector<32x32xf32>
    %13 = arith.truncf %11 : vector<32x16xf32> to vector<32x16xbf16>
    %c0_8 = arith.constant 0 : index
    %c0_9 = arith.constant 0 : index
    %14 = vector.load %arg4[%c0_8, %c0_9] : memref<16x32xbf16, #tpu.memory_space<vmem>>, vector<16x32xbf16>
    %cst_10 = arith.constant dense<0.000000e+00> : vector<32x32xf32>
    %15 = tpu.matmul %13, %14, %cst_10 {dimension_numbers = #tpu.dot_dimension_numbers<[1], [0], [0], [1], [0, 0, 1, 1], [], []>} : vector<32x16xbf16>, vector<16x32xbf16>, vector<32x32xf32> -> vector<32x32xf32>
    %16 = arith.addf %12, %15 : vector<32x32xf32>
    %c0_11 = arith.constant 0 : index
    %c0_12 = arith.constant 0 : index
    %17 = vector.load %arg10[%c0_11, %c0_12] : memref<32x32xf32, #tpu.memory_space<vmem>>, vector<32x32xf32>
    tpu.vector_store %arg10[%c0_11, %c0_12], %16 {strides = array<i32>} : memref<32x32xf32, #tpu.memory_space<vmem>>, vector<32x32xf32>,
    %c0_i32_13 = arith.constant 0 : i32
    %18 = arith.cmpi eq, %arg2, %c0_i32_13 : i32
    %19 = arith.extui %18 : i1 to i32
    %c0_i32_14 = arith.constant 0 : i32
    %20 = arith.cmpi ne, %19, %c0_i32_14 : i32
    scf.if %20 {
      %c0_15 = arith.constant 0 : index
      %c0_16 = arith.constant 0 : index
      %21 = vector.load %arg10[%c0_15, %c0_16] : memref<32x32xf32, #tpu.memory_space<vmem>>, vector<32x32xf32>
      %c0_17 = arith.constant 0 : index
      %c0_18 = arith.constant 0 : index
      %22 = vector.load %arg7[%c0_17, %c0_18] : memref<1x32xf32, #tpu.memory_space<vmem>>, vector<1x32xf32>
      %23 = vector.broadcast %22 : vector<1x32xf32> to vector<32x32xf32>
      %24 = arith.mulf %21, %23 : vector<32x32xf32>
      %c0_19 = arith.constant 0 : index
      %c0_20 = arith.constant 0 : index
      %25 = vector.load %arg8[%c0_19, %c0_20] : memref<1x32xf32, #tpu.memory_space<vmem>>, vector<1x32xf32>
      %26 = vector.broadcast %25 : vector<1x32xf32> to vector<32x32xf32>
      %27 = arith.addf %24, %26 : vector<32x32xf32>
      %cst_21 = arith.constant 0.000000e+00 : f32
      %28 = vector.broadcast %cst_21 : f32 to vector<32x32xf32>
      %29 = arith.maximumf %27, %28 : vector<32x32xf32>
      %c0_22 = arith.constant 0 : index
      %c0_23 = arith.constant 0 : index
      %30 = vector.load %arg9[%c0_22, %c0_23] : memref<32x32xf32, #tpu.memory_space<vmem>>, vector<32x32xf32>
      tpu.vector_store %arg9[%c0_22, %c0_23], %29 {strides = array<i32>} : memref<32x32xf32, #tpu.memory_space<vmem>>, vector<32x32xf32>,
    } else {
    }
    return
  }
  func.func @transform_0(%arg0: i32, %arg1: i32, %arg2: i32) -> (i32, i32) {
    %c0_i32 = arith.constant 0 : i32
    return %arg0, %arg2 : i32, i32
  }
  func.func @transform_1(%arg0: i32, %arg1: i32, %arg2: i32) -> (i32, i32) {
    %c0_i32 = arith.constant 0 : i32
    return %arg2, %arg1 : i32, i32
  }
  func.func @transform_2(%arg0: i32, %arg1: i32, %arg2: i32) -> (i32, i32) {
    %c0_i32 = arith.constant 0 : i32
    %c0_i32_0 = arith.constant 0 : i32
    return %c0_i32, %arg2 : i32, i32
  }
  func.func @transform_3(%arg0: i32, %arg1: i32, %arg2: i32) -> (i32, i32) {
    %c0_i32 = arith.constant 0 : i32
    %c0_i32_0 = arith.constant 0 : i32
    return %c0_i32, %arg2 : i32, i32
  }
  func.func @transform_4(%arg0: i32, %arg1: i32, %arg2: i32) -> (i32, i32) {
    %c0_i32 = arith.constant 0 : i32
    %c0_i32_0 = arith.constant 0 : i32
    return %c0_i32, %arg1 : i32, i32
  }
  func.func @transform_5(%arg0: i32, %arg1: i32, %arg2: i32) -> (i32, i32) {
    %c0_i32 = arith.constant 0 : i32
    %c0_i32_0 = arith.constant 0 : i32
    return %c0_i32, %arg1 : i32, i32
  }
  func.func @transform_6(%arg0: i32, %arg1: i32, %arg2: i32) -> (i32, i32) {
    %c0_i32 = arith.constant 0 : i32
    return %arg0, %arg1 : i32, i32
  }
}

module attributes {stable_mosaic.version = 11 : i64} {
  func.func @kernel(%arg0: i32, %arg1: i32, %arg2: i32, %arg3: memref<32x288xbf16, #tpu.memory_space<vmem>>, %arg4: memref<288x8xbf16, #tpu.memory_space<vmem>>, %arg5: memref<32x16xf32, #tpu.memory_space<vmem>>, %arg6: memref<32x24xf32, #tpu.memory_space<vmem>>, %arg7: memref<32x8xf32, #tpu.memory_space<vmem>>) attributes {dimension_semantics = [#tpu.dimension_semantics<parallel>, #tpu.dimension_semantics<parallel>, #tpu.dimension_semantics<arbitrary>], iteration_bounds = array<i64: 1, 1, 1>, scalar_prefetch = 0 : i64, scratch_operands = 1 : i64, tpu.core_type = #tpu.core_type<tc>, window_params = [{transform_indices = @transform_0, window_bounds = array<i64: 32, 288>}, {transform_indices = @transform_1, window_bounds = array<i64: 288, 8>}, {transform_indices = @transform_2, window_bounds = array<i64: 32, 16>}, {transform_indices = @transform_3, window_bounds = array<i64: 32, 24>}]} {
    %c0_i32 = arith.constant 0 : i32
    %0 = arith.cmpi eq, %arg2, %c0_i32 : i32
    %1 = arith.extui %0 : i1 to i32
    %c0_i32_0 = arith.constant 0 : i32
    %2 = arith.cmpi ne, %1, %c0_i32_0 : i32
    scf.if %2 {
      %cst_10 = arith.constant 0.000000e+00 : f32
      %12 = vector.broadcast %cst_10 : f32 to vector<32x8xf32>
      %c0_11 = arith.constant 0 : index
      %c0_12 = arith.constant 0 : index
      %13 = vector.load %arg7[%c0_11, %c0_12] : memref<32x8xf32, #tpu.memory_space<vmem>>, vector<32x8xf32>
      tpu.vector_store %arg7[%c0_11, %c0_12], %12 {strides = array<i32>} : memref<32x8xf32, #tpu.memory_space<vmem>>, vector<32x8xf32>,
    } else {
    }
    %c0 = arith.constant 0 : index
    %c0_1 = arith.constant 0 : index
    %3 = vector.load %arg3[%c0, %c0_1] : memref<32x288xbf16, #tpu.memory_space<vmem>>, vector<32x288xbf16>
    %c0_2 = arith.constant 0 : index
    %c0_3 = arith.constant 0 : index
    %4 = vector.load %arg7[%c0_2, %c0_3] : memref<32x8xf32, #tpu.memory_space<vmem>>, vector<32x8xf32>
    %c0_4 = arith.constant 0 : index
    %c0_5 = arith.constant 0 : index
    %5 = vector.load %arg4[%c0_4, %c0_5] : memref<288x8xbf16, #tpu.memory_space<vmem>>, vector<288x8xbf16>
    %cst = arith.constant dense<0.000000e+00> : vector<32x8xf32>
    %6 = tpu.matmul %3, %5, %cst {dimension_numbers = #tpu.dot_dimension_numbers<[1], [0], [0], [1], [0, 0, 1, 1], [], []>} : vector<32x288xbf16>, vector<288x8xbf16>, vector<32x8xf32> -> vector<32x8xf32>
    %7 = arith.addf %4, %6 : vector<32x8xf32>
    %c0_6 = arith.constant 0 : index
    %c0_7 = arith.constant 0 : index
    %8 = vector.load %arg7[%c0_6, %c0_7] : memref<32x8xf32, #tpu.memory_space<vmem>>, vector<32x8xf32>
    tpu.vector_store %arg7[%c0_6, %c0_7], %7 {strides = array<i32>} : memref<32x8xf32, #tpu.memory_space<vmem>>, vector<32x8xf32>,
    %c0_i32_8 = arith.constant 0 : i32
    %9 = arith.cmpi eq, %arg2, %c0_i32_8 : i32
    %10 = arith.extui %9 : i1 to i32
    %c0_i32_9 = arith.constant 0 : i32
    %11 = arith.cmpi ne, %10, %c0_i32_9 : i32
    scf.if %11 {
      %c0_10 = arith.constant 0 : index
      %c0_11 = arith.constant 0 : index
      %12 = vector.load %arg7[%c0_10, %c0_11] : memref<32x8xf32, #tpu.memory_space<vmem>>, vector<32x8xf32>
      %c0_12 = arith.constant 0 : index
      %c0_13 = arith.constant 0 : index
      %13 = vector.load %arg5[%c0_12, %c0_13] : memref<32x16xf32, #tpu.memory_space<vmem>>, vector<32x16xf32>
      %c0_14 = arith.constant 0 : index
      %c0_15 = arith.constant 0 : index
      %14 = vector.load %arg6[%c0_14, %c0_15] : memref<32x24xf32, #tpu.memory_space<vmem>>, vector<32x16xf32>
      tpu.vector_store %arg6[%c0_14, %c0_15], %13 {strides = array<i32>} : memref<32x24xf32, #tpu.memory_space<vmem>>, vector<32x16xf32>,
      %c0_16 = arith.constant 0 : index
      %c16 = arith.constant 16 : index
      %15 = vector.load %arg6[%c0_16, %c16] : memref<32x24xf32, #tpu.memory_space<vmem>>, vector<32x8xf32>
      tpu.vector_store %arg6[%c0_16, %c16], %12 {strides = array<i32>} : memref<32x24xf32, #tpu.memory_space<vmem>>, vector<32x8xf32>,
    } else {
    }
    return
  }
  func.func @transform_0(%arg0: i32, %arg1: i32, %arg2: i32) -> (i32, i32) {
    %c0_i32 = arith.constant 0 : i32
    return %arg0, %arg2 : i32, i32
  }
  func.func @transform_1(%arg0: i32, %arg1: i32, %arg2: i32) -> (i32, i32) {
    %c0_i32 = arith.constant 0 : i32
    return %arg2, %arg1 : i32, i32
  }
  func.func @transform_2(%arg0: i32, %arg1: i32, %arg2: i32) -> (i32, i32) {
    %c0_i32 = arith.constant 0 : i32
    %c0_i32_0 = arith.constant 0 : i32
    return %arg0, %c0_i32 : i32, i32
  }
  func.func @transform_3(%arg0: i32, %arg1: i32, %arg2: i32) -> (i32, i32) {
    %c0_i32 = arith.constant 0 : i32
    %c0_i32_0 = arith.constant 0 : i32
    return %arg0, %c0_i32 : i32, i32
  }
}

module attributes {stable_mosaic.version = 11 : i64} {
  func.func @kernel(%arg0: i32, %arg1: i32, %arg2: i32, %arg3: memref<32x24xf32, #tpu.memory_space<vmem>>, %arg4: memref<24x32xbf16, #tpu.memory_space<vmem>>, %arg5: memref<1x24xf32, #tpu.memory_space<vmem>>, %arg6: memref<1x24xf32, #tpu.memory_space<vmem>>, %arg7: memref<1x32xf32, #tpu.memory_space<vmem>>, %arg8: memref<1x32xf32, #tpu.memory_space<vmem>>, %arg9: memref<32x32xf32, #tpu.memory_space<vmem>>, %arg10: memref<32x32xf32, #tpu.memory_space<vmem>>) attributes {dimension_semantics = [#tpu.dimension_semantics<parallel>, #tpu.dimension_semantics<parallel>, #tpu.dimension_semantics<arbitrary>], iteration_bounds = array<i64: 1, 1, 1>, scalar_prefetch = 0 : i64, scratch_operands = 1 : i64, tpu.core_type = #tpu.core_type<tc>, window_params = [{transform_indices = @transform_0, window_bounds = array<i64: 32, 24>}, {transform_indices = @transform_1, window_bounds = array<i64: 24, 32>}, {transform_indices = @transform_2, window_bounds = array<i64: 1, 24>}, {transform_indices = @transform_3, window_bounds = array<i64: 1, 24>}, {transform_indices = @transform_4, window_bounds = array<i64: 1, 32>}, {transform_indices = @transform_5, window_bounds = array<i64: 1, 32>}, {transform_indices = @transform_6, window_bounds = array<i64: 32, 32>}]} {
    %c0_i32 = arith.constant 0 : i32
    %0 = arith.cmpi eq, %arg2, %c0_i32 : i32
    %1 = arith.extui %0 : i1 to i32
    %c0_i32_0 = arith.constant 0 : i32
    %2 = arith.cmpi ne, %1, %c0_i32_0 : i32
    scf.if %2 {
      %cst_15 = arith.constant 0.000000e+00 : f32
      %21 = vector.broadcast %cst_15 : f32 to vector<32x32xf32>
      %c0_16 = arith.constant 0 : index
      %c0_17 = arith.constant 0 : index
      %22 = vector.load %arg10[%c0_16, %c0_17] : memref<32x32xf32, #tpu.memory_space<vmem>>, vector<32x32xf32>
      tpu.vector_store %arg10[%c0_16, %c0_17], %21 {strides = array<i32>} : memref<32x32xf32, #tpu.memory_space<vmem>>, vector<32x32xf32>,
    } else {
    }
    %c0 = arith.constant 0 : index
    %c0_1 = arith.constant 0 : index
    %3 = vector.load %arg3[%c0, %c0_1] : memref<32x24xf32, #tpu.memory_space<vmem>>, vector<32x24xf32>
    %c0_2 = arith.constant 0 : index
    %c0_3 = arith.constant 0 : index
    %4 = vector.load %arg5[%c0_2, %c0_3] : memref<1x24xf32, #tpu.memory_space<vmem>>, vector<1x24xf32>
    %5 = vector.broadcast %4 : vector<1x24xf32> to vector<32x24xf32>
    %6 = arith.mulf %3, %5 : vector<32x24xf32>
    %c0_4 = arith.constant 0 : index
    %c0_5 = arith.constant 0 : index
    %7 = vector.load %arg6[%c0_4, %c0_5] : memref<1x24xf32, #tpu.memory_space<vmem>>, vector<1x24xf32>
    %8 = vector.broadcast %7 : vector<1x24xf32> to vector<32x24xf32>
    %9 = arith.addf %6, %8 : vector<32x24xf32>
    %cst = arith.constant 0.000000e+00 : f32
    %10 = vector.broadcast %cst : f32 to vector<32x24xf32>
    %11 = arith.maximumf %9, %10 : vector<32x24xf32>
    %c0_6 = arith.constant 0 : index
    %c0_7 = arith.constant 0 : index
    %12 = vector.load %arg10[%c0_6, %c0_7] : memref<32x32xf32, #tpu.memory_space<vmem>>, vector<32x32xf32>
    %13 = arith.truncf %11 : vector<32x24xf32> to vector<32x24xbf16>
    %c0_8 = arith.constant 0 : index
    %c0_9 = arith.constant 0 : index
    %14 = vector.load %arg4[%c0_8, %c0_9] : memref<24x32xbf16, #tpu.memory_space<vmem>>, vector<24x32xbf16>
    %cst_10 = arith.constant dense<0.000000e+00> : vector<32x32xf32>
    %15 = tpu.matmul %13, %14, %cst_10 {dimension_numbers = #tpu.dot_dimension_numbers<[1], [0], [0], [1], [0, 0, 1, 1], [], []>} : vector<32x24xbf16>, vector<24x32xbf16>, vector<32x32xf32> -> vector<32x32xf32>
    %16 = arith.addf %12, %15 : vector<32x32xf32>
    %c0_11 = arith.constant 0 : index
    %c0_12 = arith.constant 0 : index
    %17 = vector.load %arg10[%c0_11, %c0_12] : memref<32x32xf32, #tpu.memory_space<vmem>>, vector<32x32xf32>
    tpu.vector_store %arg10[%c0_11, %c0_12], %16 {strides = array<i32>} : memref<32x32xf32, #tpu.memory_space<vmem>>, vector<32x32xf32>,
    %c0_i32_13 = arith.constant 0 : i32
    %18 = arith.cmpi eq, %arg2, %c0_i32_13 : i32
    %19 = arith.extui %18 : i1 to i32
    %c0_i32_14 = arith.constant 0 : i32
    %20 = arith.cmpi ne, %19, %c0_i32_14 : i32
    scf.if %20 {
      %c0_15 = arith.constant 0 : index
      %c0_16 = arith.constant 0 : index
      %21 = vector.load %arg10[%c0_15, %c0_16] : memref<32x32xf32, #tpu.memory_space<vmem>>, vector<32x32xf32>
      %c0_17 = arith.constant 0 : index
      %c0_18 = arith.constant 0 : index
      %22 = vector.load %arg7[%c0_17, %c0_18] : memref<1x32xf32, #tpu.memory_space<vmem>>, vector<1x32xf32>
      %23 = vector.broadcast %22 : vector<1x32xf32> to vector<32x32xf32>
      %24 = arith.mulf %21, %23 : vector<32x32xf32>
      %c0_19 = arith.constant 0 : index
      %c0_20 = arith.constant 0 : index
      %25 = vector.load %arg8[%c0_19, %c0_20] : memref<1x32xf32, #tpu.memory_space<vmem>>, vector<1x32xf32>
      %26 = vector.broadcast %25 : vector<1x32xf32> to vector<32x32xf32>
      %27 = arith.addf %24, %26 : vector<32x32xf32>
      %cst_21 = arith.constant 0.000000e+00 : f32
      %28 = vector.broadcast %cst_21 : f32 to vector<32x32xf32>
      %29 = arith.maximumf %27, %28 : vector<32x32xf32>
      %c0_22 = arith.constant 0 : index
      %c0_23 = arith.constant 0 : index
      %30 = vector.load %arg9[%c0_22, %c0_23] : memref<32x32xf32, #tpu.memory_space<vmem>>, vector<32x32xf32>
      tpu.vector_store %arg9[%c0_22, %c0_23], %29 {strides = array<i32>} : memref<32x32xf32, #tpu.memory_space<vmem>>, vector<32x32xf32>,
    } else {
    }
    return
  }
  func.func @transform_0(%arg0: i32, %arg1: i32, %arg2: i32) -> (i32, i32) {
    %c0_i32 = arith.constant 0 : i32
    return %arg0, %arg2 : i32, i32
  }
  func.func @transform_1(%arg0: i32, %arg1: i32, %arg2: i32) -> (i32, i32) {
    %c0_i32 = arith.constant 0 : i32
    return %arg2, %arg1 : i32, i32
  }
  func.func @transform_2(%arg0: i32, %arg1: i32, %arg2: i32) -> (i32, i32) {
    %c0_i32 = arith.constant 0 : i32
    %c0_i32_0 = arith.constant 0 : i32
    return %c0_i32, %arg2 : i32, i32
  }
  func.func @transform_3(%arg0: i32, %arg1: i32, %arg2: i32) -> (i32, i32) {
    %c0_i32 = arith.constant 0 : i32
    %c0_i32_0 = arith.constant 0 : i32
    return %c0_i32, %arg2 : i32, i32
  }
  func.func @transform_4(%arg0: i32, %arg1: i32, %arg2: i32) -> (i32, i32) {
    %c0_i32 = arith.constant 0 : i32
    %c0_i32_0 = arith.constant 0 : i32
    return %c0_i32, %arg1 : i32, i32
  }
  func.func @transform_5(%arg0: i32, %arg1: i32, %arg2: i32) -> (i32, i32) {
    %c0_i32 = arith.constant 0 : i32
    %c0_i32_0 = arith.constant 0 : i32
    return %c0_i32, %arg1 : i32, i32
  }
  func.func @transform_6(%arg0: i32, %arg1: i32, %arg2: i32) -> (i32, i32) {
    %c0_i32 = arith.constant 0 : i32
    return %arg0, %arg1 : i32, i32
  }
}

module attributes {stable_mosaic.version = 11 : i64} {
  func.func @kernel(%arg0: i32, %arg1: i32, %arg2: i32, %arg3: memref<32x288xbf16, #tpu.memory_space<vmem>>, %arg4: memref<288x8xbf16, #tpu.memory_space<vmem>>, %arg5: memref<32x24xf32, #tpu.memory_space<vmem>>, %arg6: memref<32x32xf32, #tpu.memory_space<vmem>>, %arg7: memref<32x8xf32, #tpu.memory_space<vmem>>) attributes {dimension_semantics = [#tpu.dimension_semantics<parallel>, #tpu.dimension_semantics<parallel>, #tpu.dimension_semantics<arbitrary>], iteration_bounds = array<i64: 1, 1, 1>, scalar_prefetch = 0 : i64, scratch_operands = 1 : i64, tpu.core_type = #tpu.core_type<tc>, window_params = [{transform_indices = @transform_0, window_bounds = array<i64: 32, 288>}, {transform_indices = @transform_1, window_bounds = array<i64: 288, 8>}, {transform_indices = @transform_2, window_bounds = array<i64: 32, 24>}, {transform_indices = @transform_3, window_bounds = array<i64: 32, 32>}]} {
    %c0_i32 = arith.constant 0 : i32
    %0 = arith.cmpi eq, %arg2, %c0_i32 : i32
    %1 = arith.extui %0 : i1 to i32
    %c0_i32_0 = arith.constant 0 : i32
    %2 = arith.cmpi ne, %1, %c0_i32_0 : i32
    scf.if %2 {
      %cst_10 = arith.constant 0.000000e+00 : f32
      %12 = vector.broadcast %cst_10 : f32 to vector<32x8xf32>
      %c0_11 = arith.constant 0 : index
      %c0_12 = arith.constant 0 : index
      %13 = vector.load %arg7[%c0_11, %c0_12] : memref<32x8xf32, #tpu.memory_space<vmem>>, vector<32x8xf32>
      tpu.vector_store %arg7[%c0_11, %c0_12], %12 {strides = array<i32>} : memref<32x8xf32, #tpu.memory_space<vmem>>, vector<32x8xf32>,
    } else {
    }
    %c0 = arith.constant 0 : index
    %c0_1 = arith.constant 0 : index
    %3 = vector.load %arg3[%c0, %c0_1] : memref<32x288xbf16, #tpu.memory_space<vmem>>, vector<32x288xbf16>
    %c0_2 = arith.constant 0 : index
    %c0_3 = arith.constant 0 : index
    %4 = vector.load %arg7[%c0_2, %c0_3] : memref<32x8xf32, #tpu.memory_space<vmem>>, vector<32x8xf32>
    %c0_4 = arith.constant 0 : index
    %c0_5 = arith.constant 0 : index
    %5 = vector.load %arg4[%c0_4, %c0_5] : memref<288x8xbf16, #tpu.memory_space<vmem>>, vector<288x8xbf16>
    %cst = arith.constant dense<0.000000e+00> : vector<32x8xf32>
    %6 = tpu.matmul %3, %5, %cst {dimension_numbers = #tpu.dot_dimension_numbers<[1], [0], [0], [1], [0, 0, 1, 1], [], []>} : vector<32x288xbf16>, vector<288x8xbf16>, vector<32x8xf32> -> vector<32x8xf32>
    %7 = arith.addf %4, %6 : vector<32x8xf32>
    %c0_6 = arith.constant 0 : index
    %c0_7 = arith.constant 0 : index
    %8 = vector.load %arg7[%c0_6, %c0_7] : memref<32x8xf32, #tpu.memory_space<vmem>>, vector<32x8xf32>
    tpu.vector_store %arg7[%c0_6, %c0_7], %7 {strides = array<i32>} : memref<32x8xf32, #tpu.memory_space<vmem>>, vector<32x8xf32>,
    %c0_i32_8 = arith.constant 0 : i32
    %9 = arith.cmpi eq, %arg2, %c0_i32_8 : i32
    %10 = arith.extui %9 : i1 to i32
    %c0_i32_9 = arith.constant 0 : i32
    %11 = arith.cmpi ne, %10, %c0_i32_9 : i32
    scf.if %11 {
      %c0_10 = arith.constant 0 : index
      %c0_11 = arith.constant 0 : index
      %12 = vector.load %arg7[%c0_10, %c0_11] : memref<32x8xf32, #tpu.memory_space<vmem>>, vector<32x8xf32>
      %c0_12 = arith.constant 0 : index
      %c0_13 = arith.constant 0 : index
      %13 = vector.load %arg5[%c0_12, %c0_13] : memref<32x24xf32, #tpu.memory_space<vmem>>, vector<32x24xf32>
      %c0_14 = arith.constant 0 : index
      %c0_15 = arith.constant 0 : index
      %14 = vector.load %arg6[%c0_14, %c0_15] : memref<32x32xf32, #tpu.memory_space<vmem>>, vector<32x24xf32>
      tpu.vector_store %arg6[%c0_14, %c0_15], %13 {strides = array<i32>} : memref<32x32xf32, #tpu.memory_space<vmem>>, vector<32x24xf32>,
      %c0_16 = arith.constant 0 : index
      %c24 = arith.constant 24 : index
      %15 = vector.load %arg6[%c0_16, %c24] : memref<32x32xf32, #tpu.memory_space<vmem>>, vector<32x8xf32>
      tpu.vector_store %arg6[%c0_16, %c24], %12 {strides = array<i32>} : memref<32x32xf32, #tpu.memory_space<vmem>>, vector<32x8xf32>,
    } else {
    }
    return
  }
  func.func @transform_0(%arg0: i32, %arg1: i32, %arg2: i32) -> (i32, i32) {
    %c0_i32 = arith.constant 0 : i32
    return %arg0, %arg2 : i32, i32
  }
  func.func @transform_1(%arg0: i32, %arg1: i32, %arg2: i32) -> (i32, i32) {
    %c0_i32 = arith.constant 0 : i32
    return %arg2, %arg1 : i32, i32
  }
  func.func @transform_2(%arg0: i32, %arg1: i32, %arg2: i32) -> (i32, i32) {
    %c0_i32 = arith.constant 0 : i32
    %c0_i32_0 = arith.constant 0 : i32
    return %arg0, %c0_i32 : i32, i32
  }
  func.func @transform_3(%arg0: i32, %arg1: i32, %arg2: i32) -> (i32, i32) {
    %c0_i32 = arith.constant 0 : i32
    %c0_i32_0 = arith.constant 0 : i32
    return %arg0, %c0_i32 : i32, i32
  }
}

module attributes {stable_mosaic.version = 11 : i64} {
  func.func @kernel(%arg0: i32, %arg1: i32, %arg2: i32, %arg3: memref<32x32xf32, #tpu.memory_space<vmem>>, %arg4: memref<32x16xbf16, #tpu.memory_space<vmem>>, %arg5: memref<1x32xf32, #tpu.memory_space<vmem>>, %arg6: memref<1x32xf32, #tpu.memory_space<vmem>>, %arg7: memref<32x16xf32, #tpu.memory_space<vmem>>, %arg8: memref<32x16xf32, #tpu.memory_space<vmem>>) attributes {dimension_semantics = [#tpu.dimension_semantics<parallel>, #tpu.dimension_semantics<parallel>, #tpu.dimension_semantics<arbitrary>], iteration_bounds = array<i64: 1, 1, 1>, scalar_prefetch = 0 : i64, scratch_operands = 1 : i64, tpu.core_type = #tpu.core_type<tc>, window_params = [{transform_indices = @transform_0, window_bounds = array<i64: 32, 32>}, {transform_indices = @transform_1, window_bounds = array<i64: 32, 16>}, {transform_indices = @transform_2, window_bounds = array<i64: 1, 32>}, {transform_indices = @transform_3, window_bounds = array<i64: 1, 32>}, {transform_indices = @transform_4, window_bounds = array<i64: 32, 16>}]} {
    %c0_i32 = arith.constant 0 : i32
    %0 = arith.cmpi eq, %arg2, %c0_i32 : i32
    %1 = arith.extui %0 : i1 to i32
    %c0_i32_0 = arith.constant 0 : i32
    %2 = arith.cmpi ne, %1, %c0_i32_0 : i32
    scf.if %2 {
      %cst_15 = arith.constant 0.000000e+00 : f32
      %21 = vector.broadcast %cst_15 : f32 to vector<32x16xf32>
      %c0_16 = arith.constant 0 : index
      %c0_17 = arith.constant 0 : index
      %22 = vector.load %arg8[%c0_16, %c0_17] : memref<32x16xf32, #tpu.memory_space<vmem>>, vector<32x16xf32>
      tpu.vector_store %arg8[%c0_16, %c0_17], %21 {strides = array<i32>} : memref<32x16xf32, #tpu.memory_space<vmem>>, vector<32x16xf32>,
    } else {
    }
    %c0 = arith.constant 0 : index
    %c0_1 = arith.constant 0 : index
    %3 = vector.load %arg3[%c0, %c0_1] : memref<32x32xf32, #tpu.memory_space<vmem>>, vector<32x32xf32>
    %c0_2 = arith.constant 0 : index
    %c0_3 = arith.constant 0 : index
    %4 = vector.load %arg5[%c0_2, %c0_3] : memref<1x32xf32, #tpu.memory_space<vmem>>, vector<1x32xf32>
    %5 = vector.broadcast %4 : vector<1x32xf32> to vector<32x32xf32>
    %6 = arith.mulf %3, %5 : vector<32x32xf32>
    %c0_4 = arith.constant 0 : index
    %c0_5 = arith.constant 0 : index
    %7 = vector.load %arg6[%c0_4, %c0_5] : memref<1x32xf32, #tpu.memory_space<vmem>>, vector<1x32xf32>
    %8 = vector.broadcast %7 : vector<1x32xf32> to vector<32x32xf32>
    %9 = arith.addf %6, %8 : vector<32x32xf32>
    %cst = arith.constant 0.000000e+00 : f32
    %10 = vector.broadcast %cst : f32 to vector<32x32xf32>
    %11 = arith.maximumf %9, %10 : vector<32x32xf32>
    %c0_6 = arith.constant 0 : index
    %c0_7 = arith.constant 0 : index
    %12 = vector.load %arg8[%c0_6, %c0_7] : memref<32x16xf32, #tpu.memory_space<vmem>>, vector<32x16xf32>
    %13 = arith.truncf %11 : vector<32x32xf32> to vector<32x32xbf16>
    %c0_8 = arith.constant 0 : index
    %c0_9 = arith.constant 0 : index
    %14 = vector.load %arg4[%c0_8, %c0_9] : memref<32x16xbf16, #tpu.memory_space<vmem>>, vector<32x16xbf16>
    %cst_10 = arith.constant dense<0.000000e+00> : vector<32x16xf32>
    %15 = tpu.matmul %13, %14, %cst_10 {dimension_numbers = #tpu.dot_dimension_numbers<[1], [0], [0], [1], [0, 0, 1, 1], [], []>} : vector<32x32xbf16>, vector<32x16xbf16>, vector<32x16xf32> -> vector<32x16xf32>
    %16 = arith.addf %12, %15 : vector<32x16xf32>
    %c0_11 = arith.constant 0 : index
    %c0_12 = arith.constant 0 : index
    %17 = vector.load %arg8[%c0_11, %c0_12] : memref<32x16xf32, #tpu.memory_space<vmem>>, vector<32x16xf32>
    tpu.vector_store %arg8[%c0_11, %c0_12], %16 {strides = array<i32>} : memref<32x16xf32, #tpu.memory_space<vmem>>, vector<32x16xf32>,
    %c0_i32_13 = arith.constant 0 : i32
    %18 = arith.cmpi eq, %arg2, %c0_i32_13 : i32
    %19 = arith.extui %18 : i1 to i32
    %c0_i32_14 = arith.constant 0 : i32
    %20 = arith.cmpi ne, %19, %c0_i32_14 : i32
    scf.if %20 {
      %c0_15 = arith.constant 0 : index
      %c0_16 = arith.constant 0 : index
      %21 = vector.load %arg8[%c0_15, %c0_16] : memref<32x16xf32, #tpu.memory_space<vmem>>, vector<32x16xf32>
      %c0_17 = arith.constant 0 : index
      %c0_18 = arith.constant 0 : index
      %22 = vector.load %arg7[%c0_17, %c0_18] : memref<32x16xf32, #tpu.memory_space<vmem>>, vector<32x16xf32>
      tpu.vector_store %arg7[%c0_17, %c0_18], %21 {strides = array<i32>} : memref<32x16xf32, #tpu.memory_space<vmem>>, vector<32x16xf32>,
    } else {
    }
    return
  }
  func.func @transform_0(%arg0: i32, %arg1: i32, %arg2: i32) -> (i32, i32) {
    %c0_i32 = arith.constant 0 : i32
    return %arg0, %arg2 : i32, i32
  }
  func.func @transform_1(%arg0: i32, %arg1: i32, %arg2: i32) -> (i32, i32) {
    %c0_i32 = arith.constant 0 : i32
    return %arg2, %arg1 : i32, i32
  }
  func.func @transform_2(%arg0: i32, %arg1: i32, %arg2: i32) -> (i32, i32) {
    %c0_i32 = arith.constant 0 : i32
    %c0_i32_0 = arith.constant 0 : i32
    return %c0_i32, %arg2 : i32, i32
  }
  func.func @transform_3(%arg0: i32, %arg1: i32, %arg2: i32) -> (i32, i32) {
    %c0_i32 = arith.constant 0 : i32
    %c0_i32_0 = arith.constant 0 : i32
    return %c0_i32, %arg2 : i32, i32
  }
  func.func @transform_4(%arg0: i32, %arg1: i32, %arg2: i32) -> (i32, i32) {
    %c0_i32 = arith.constant 0 : i32
    return %arg0, %arg1 : i32, i32
  }
}

module attributes {stable_mosaic.version = 11 : i64} {
  func.func @_pool_kernel(%arg0: i32, %arg1: i32, %arg2: memref<1x8x16xf32, #tpu.memory_space<vmem>>, %arg3: memref<8x16xf32, #tpu.memory_space<vmem>>, %arg4: memref<8x16xf32, #tpu.memory_space<vmem>>) attributes {dimension_semantics = [#tpu.dimension_semantics<parallel>, #tpu.dimension_semantics<arbitrary>], iteration_bounds = array<i64: 1, 4>, scalar_prefetch = 0 : i64, scratch_operands = 1 : i64, tpu.core_type = #tpu.core_type<tc>, window_params = [{transform_indices = @transform_0, window_bounds = array<i64: 1, 8, 16>}, {transform_indices = @transform_1, window_bounds = array<i64: 8, 16>}]} {
    %c0_i32 = arith.constant 0 : i32
    %0 = arith.cmpi eq, %arg1, %c0_i32 : i32
    %1 = arith.extui %0 : i1 to i32
    %c0_i32_0 = arith.constant 0 : i32
    %2 = arith.cmpi ne, %1, %c0_i32_0 : i32
    scf.if %2 {
      %cst = arith.constant 0.000000e+00 : f32
      %11 = vector.broadcast %cst : f32 to vector<8x16xf32>
      %c0_8 = arith.constant 0 : index
      %c0_9 = arith.constant 0 : index
      %12 = vector.load %arg4[%c0_8, %c0_9] : memref<8x16xf32, #tpu.memory_space<vmem>>, vector<8x16xf32>
      tpu.vector_store %arg4[%c0_8, %c0_9], %11 {strides = array<i32>} : memref<8x16xf32, #tpu.memory_space<vmem>>, vector<8x16xf32>,
    } else {
    }
    %c0 = arith.constant 0 : index
    %c0_1 = arith.constant 0 : index
    %3 = vector.load %arg4[%c0, %c0_1] : memref<8x16xf32, #tpu.memory_space<vmem>>, vector<8x16xf32>
    %c0_2 = arith.constant 0 : index
    %c0_3 = arith.constant 0 : index
    %c0_4 = arith.constant 0 : index
    %4 = vector.load %arg2[%c0_2, %c0_3, %c0_4] : memref<1x8x16xf32, #tpu.memory_space<vmem>>, vector<1x8x16xf32>
    %5 = vector.shape_cast %4 : vector<1x8x16xf32> to vector<8x16xf32>
    %6 = arith.addf %3, %5 : vector<8x16xf32>
    %c0_5 = arith.constant 0 : index
    %c0_6 = arith.constant 0 : index
    %7 = vector.load %arg4[%c0_5, %c0_6] : memref<8x16xf32, #tpu.memory_space<vmem>>, vector<8x16xf32>
    tpu.vector_store %arg4[%c0_5, %c0_6], %6 {strides = array<i32>} : memref<8x16xf32, #tpu.memory_space<vmem>>, vector<8x16xf32>,
    %c3_i32 = arith.constant 3 : i32
    %8 = arith.cmpi eq, %arg1, %c3_i32 : i32
    %9 = arith.extui %8 : i1 to i32
    %c0_i32_7 = arith.constant 0 : i32
    %10 = arith.cmpi ne, %9, %c0_i32_7 : i32
    scf.if %10 {
      %c0_8 = arith.constant 0 : index
      %c0_9 = arith.constant 0 : index
      %11 = vector.load %arg4[%c0_8, %c0_9] : memref<8x16xf32, #tpu.memory_space<vmem>>, vector<8x16xf32>
      %cst = arith.constant 2.500000e-01 : f32
      %12 = vector.broadcast %cst : f32 to vector<8x16xf32>
      %13 = arith.mulf %11, %12 : vector<8x16xf32>
      %c0_10 = arith.constant 0 : index
      %c0_11 = arith.constant 0 : index
      %14 = vector.load %arg3[%c0_10, %c0_11] : memref<8x16xf32, #tpu.memory_space<vmem>>, vector<8x16xf32>
      tpu.vector_store %arg3[%c0_10, %c0_11], %13 {strides = array<i32>} : memref<8x16xf32, #tpu.memory_space<vmem>>, vector<8x16xf32>,
    } else {
    }
    return
  }
  func.func @transform_0(%arg0: i32, %arg1: i32) -> (i32, i32, i32) {
    %c0_i32 = arith.constant 0 : i32
    %c0_i32_0 = arith.constant 0 : i32
    return %arg1, %arg0, %c0_i32 : i32, i32, i32
  }
  func.func @transform_1(%arg0: i32, %arg1: i32) -> (i32, i32) {
    %c0_i32 = arith.constant 0 : i32
    %c0_i32_0 = arith.constant 0 : i32
    return %arg0, %c0_i32 : i32, i32
  }
}

module attributes {stable_mosaic.version = 11 : i64} {
  func.func @kernel(%arg0: i32, %arg1: i32, %arg2: i32, %arg3: memref<8x16xf32, #tpu.memory_space<vmem>>, %arg4: memref<16x32xbf16, #tpu.memory_space<vmem>>, %arg5: memref<1x16xf32, #tpu.memory_space<vmem>>, %arg6: memref<1x16xf32, #tpu.memory_space<vmem>>, %arg7: memref<1x32xf32, #tpu.memory_space<vmem>>, %arg8: memref<1x32xf32, #tpu.memory_space<vmem>>, %arg9: memref<8x32xf32, #tpu.memory_space<vmem>>, %arg10: memref<8x32xf32, #tpu.memory_space<vmem>>) attributes {dimension_semantics = [#tpu.dimension_semantics<parallel>, #tpu.dimension_semantics<parallel>, #tpu.dimension_semantics<arbitrary>], iteration_bounds = array<i64: 1, 1, 1>, scalar_prefetch = 0 : i64, scratch_operands = 1 : i64, tpu.core_type = #tpu.core_type<tc>, window_params = [{transform_indices = @transform_0, window_bounds = array<i64: 8, 16>}, {transform_indices = @transform_1, window_bounds = array<i64: 16, 32>}, {transform_indices = @transform_2, window_bounds = array<i64: 1, 16>}, {transform_indices = @transform_3, window_bounds = array<i64: 1, 16>}, {transform_indices = @transform_4, window_bounds = array<i64: 1, 32>}, {transform_indices = @transform_5, window_bounds = array<i64: 1, 32>}, {transform_indices = @transform_6, window_bounds = array<i64: 8, 32>}]} {
    %c0_i32 = arith.constant 0 : i32
    %0 = arith.cmpi eq, %arg2, %c0_i32 : i32
    %1 = arith.extui %0 : i1 to i32
    %c0_i32_0 = arith.constant 0 : i32
    %2 = arith.cmpi ne, %1, %c0_i32_0 : i32
    scf.if %2 {
      %cst_15 = arith.constant 0.000000e+00 : f32
      %21 = vector.broadcast %cst_15 : f32 to vector<8x32xf32>
      %c0_16 = arith.constant 0 : index
      %c0_17 = arith.constant 0 : index
      %22 = vector.load %arg10[%c0_16, %c0_17] : memref<8x32xf32, #tpu.memory_space<vmem>>, vector<8x32xf32>
      tpu.vector_store %arg10[%c0_16, %c0_17], %21 {strides = array<i32>} : memref<8x32xf32, #tpu.memory_space<vmem>>, vector<8x32xf32>,
    } else {
    }
    %c0 = arith.constant 0 : index
    %c0_1 = arith.constant 0 : index
    %3 = vector.load %arg3[%c0, %c0_1] : memref<8x16xf32, #tpu.memory_space<vmem>>, vector<8x16xf32>
    %c0_2 = arith.constant 0 : index
    %c0_3 = arith.constant 0 : index
    %4 = vector.load %arg5[%c0_2, %c0_3] : memref<1x16xf32, #tpu.memory_space<vmem>>, vector<1x16xf32>
    %5 = vector.broadcast %4 : vector<1x16xf32> to vector<8x16xf32>
    %6 = arith.mulf %3, %5 : vector<8x16xf32>
    %c0_4 = arith.constant 0 : index
    %c0_5 = arith.constant 0 : index
    %7 = vector.load %arg6[%c0_4, %c0_5] : memref<1x16xf32, #tpu.memory_space<vmem>>, vector<1x16xf32>
    %8 = vector.broadcast %7 : vector<1x16xf32> to vector<8x16xf32>
    %9 = arith.addf %6, %8 : vector<8x16xf32>
    %cst = arith.constant 0.000000e+00 : f32
    %10 = vector.broadcast %cst : f32 to vector<8x16xf32>
    %11 = arith.maximumf %9, %10 : vector<8x16xf32>
    %c0_6 = arith.constant 0 : index
    %c0_7 = arith.constant 0 : index
    %12 = vector.load %arg10[%c0_6, %c0_7] : memref<8x32xf32, #tpu.memory_space<vmem>>, vector<8x32xf32>
    %13 = arith.truncf %11 : vector<8x16xf32> to vector<8x16xbf16>
    %c0_8 = arith.constant 0 : index
    %c0_9 = arith.constant 0 : index
    %14 = vector.load %arg4[%c0_8, %c0_9] : memref<16x32xbf16, #tpu.memory_space<vmem>>, vector<16x32xbf16>
    %cst_10 = arith.constant dense<0.000000e+00> : vector<8x32xf32>
    %15 = tpu.matmul %13, %14, %cst_10 {dimension_numbers = #tpu.dot_dimension_numbers<[1], [0], [0], [1], [0, 0, 1, 1], [], []>} : vector<8x16xbf16>, vector<16x32xbf16>, vector<8x32xf32> -> vector<8x32xf32>
    %16 = arith.addf %12, %15 : vector<8x32xf32>
    %c0_11 = arith.constant 0 : index
    %c0_12 = arith.constant 0 : index
    %17 = vector.load %arg10[%c0_11, %c0_12] : memref<8x32xf32, #tpu.memory_space<vmem>>, vector<8x32xf32>
    tpu.vector_store %arg10[%c0_11, %c0_12], %16 {strides = array<i32>} : memref<8x32xf32, #tpu.memory_space<vmem>>, vector<8x32xf32>,
    %c0_i32_13 = arith.constant 0 : i32
    %18 = arith.cmpi eq, %arg2, %c0_i32_13 : i32
    %19 = arith.extui %18 : i1 to i32
    %c0_i32_14 = arith.constant 0 : i32
    %20 = arith.cmpi ne, %19, %c0_i32_14 : i32
    scf.if %20 {
      %c0_15 = arith.constant 0 : index
      %c0_16 = arith.constant 0 : index
      %21 = vector.load %arg10[%c0_15, %c0_16] : memref<8x32xf32, #tpu.memory_space<vmem>>, vector<8x32xf32>
      %c0_17 = arith.constant 0 : index
      %c0_18 = arith.constant 0 : index
      %22 = vector.load %arg7[%c0_17, %c0_18] : memref<1x32xf32, #tpu.memory_space<vmem>>, vector<1x32xf32>
      %23 = vector.broadcast %22 : vector<1x32xf32> to vector<8x32xf32>
      %24 = arith.mulf %21, %23 : vector<8x32xf32>
      %c0_19 = arith.constant 0 : index
      %c0_20 = arith.constant 0 : index
      %25 = vector.load %arg8[%c0_19, %c0_20] : memref<1x32xf32, #tpu.memory_space<vmem>>, vector<1x32xf32>
      %26 = vector.broadcast %25 : vector<1x32xf32> to vector<8x32xf32>
      %27 = arith.addf %24, %26 : vector<8x32xf32>
      %cst_21 = arith.constant 0.000000e+00 : f32
      %28 = vector.broadcast %cst_21 : f32 to vector<8x32xf32>
      %29 = arith.maximumf %27, %28 : vector<8x32xf32>
      %c0_22 = arith.constant 0 : index
      %c0_23 = arith.constant 0 : index
      %30 = vector.load %arg9[%c0_22, %c0_23] : memref<8x32xf32, #tpu.memory_space<vmem>>, vector<8x32xf32>
      tpu.vector_store %arg9[%c0_22, %c0_23], %29 {strides = array<i32>} : memref<8x32xf32, #tpu.memory_space<vmem>>, vector<8x32xf32>,
    } else {
    }
    return
  }
  func.func @transform_0(%arg0: i32, %arg1: i32, %arg2: i32) -> (i32, i32) {
    %c0_i32 = arith.constant 0 : i32
    return %arg0, %arg2 : i32, i32
  }
  func.func @transform_1(%arg0: i32, %arg1: i32, %arg2: i32) -> (i32, i32) {
    %c0_i32 = arith.constant 0 : i32
    return %arg2, %arg1 : i32, i32
  }
  func.func @transform_2(%arg0: i32, %arg1: i32, %arg2: i32) -> (i32, i32) {
    %c0_i32 = arith.constant 0 : i32
    %c0_i32_0 = arith.constant 0 : i32
    return %c0_i32, %arg2 : i32, i32
  }
  func.func @transform_3(%arg0: i32, %arg1: i32, %arg2: i32) -> (i32, i32) {
    %c0_i32 = arith.constant 0 : i32
    %c0_i32_0 = arith.constant 0 : i32
    return %c0_i32, %arg2 : i32, i32
  }
  func.func @transform_4(%arg0: i32, %arg1: i32, %arg2: i32) -> (i32, i32) {
    %c0_i32 = arith.constant 0 : i32
    %c0_i32_0 = arith.constant 0 : i32
    return %c0_i32, %arg1 : i32, i32
  }
  func.func @transform_5(%arg0: i32, %arg1: i32, %arg2: i32) -> (i32, i32) {
    %c0_i32 = arith.constant 0 : i32
    %c0_i32_0 = arith.constant 0 : i32
    return %c0_i32, %arg1 : i32, i32
  }
  func.func @transform_6(%arg0: i32, %arg1: i32, %arg2: i32) -> (i32, i32) {
    %c0_i32 = arith.constant 0 : i32
    return %arg0, %arg1 : i32, i32
  }
}

module attributes {stable_mosaic.version = 11 : i64} {
  func.func @kernel(%arg0: i32, %arg1: i32, %arg2: i32, %arg3: memref<8x24xf32, #tpu.memory_space<vmem>>, %arg4: memref<24x32xbf16, #tpu.memory_space<vmem>>, %arg5: memref<1x24xf32, #tpu.memory_space<vmem>>, %arg6: memref<1x24xf32, #tpu.memory_space<vmem>>, %arg7: memref<1x32xf32, #tpu.memory_space<vmem>>, %arg8: memref<1x32xf32, #tpu.memory_space<vmem>>, %arg9: memref<8x32xf32, #tpu.memory_space<vmem>>, %arg10: memref<8x32xf32, #tpu.memory_space<vmem>>) attributes {dimension_semantics = [#tpu.dimension_semantics<parallel>, #tpu.dimension_semantics<parallel>, #tpu.dimension_semantics<arbitrary>], iteration_bounds = array<i64: 1, 1, 1>, scalar_prefetch = 0 : i64, scratch_operands = 1 : i64, tpu.core_type = #tpu.core_type<tc>, window_params = [{transform_indices = @transform_0, window_bounds = array<i64: 8, 24>}, {transform_indices = @transform_1, window_bounds = array<i64: 24, 32>}, {transform_indices = @transform_2, window_bounds = array<i64: 1, 24>}, {transform_indices = @transform_3, window_bounds = array<i64: 1, 24>}, {transform_indices = @transform_4, window_bounds = array<i64: 1, 32>}, {transform_indices = @transform_5, window_bounds = array<i64: 1, 32>}, {transform_indices = @transform_6, window_bounds = array<i64: 8, 32>}]} {
    %c0_i32 = arith.constant 0 : i32
    %0 = arith.cmpi eq, %arg2, %c0_i32 : i32
    %1 = arith.extui %0 : i1 to i32
    %c0_i32_0 = arith.constant 0 : i32
    %2 = arith.cmpi ne, %1, %c0_i32_0 : i32
    scf.if %2 {
      %cst_15 = arith.constant 0.000000e+00 : f32
      %21 = vector.broadcast %cst_15 : f32 to vector<8x32xf32>
      %c0_16 = arith.constant 0 : index
      %c0_17 = arith.constant 0 : index
      %22 = vector.load %arg10[%c0_16, %c0_17] : memref<8x32xf32, #tpu.memory_space<vmem>>, vector<8x32xf32>
      tpu.vector_store %arg10[%c0_16, %c0_17], %21 {strides = array<i32>} : memref<8x32xf32, #tpu.memory_space<vmem>>, vector<8x32xf32>,
    } else {
    }
    %c0 = arith.constant 0 : index
    %c0_1 = arith.constant 0 : index
    %3 = vector.load %arg3[%c0, %c0_1] : memref<8x24xf32, #tpu.memory_space<vmem>>, vector<8x24xf32>
    %c0_2 = arith.constant 0 : index
    %c0_3 = arith.constant 0 : index
    %4 = vector.load %arg5[%c0_2, %c0_3] : memref<1x24xf32, #tpu.memory_space<vmem>>, vector<1x24xf32>
    %5 = vector.broadcast %4 : vector<1x24xf32> to vector<8x24xf32>
    %6 = arith.mulf %3, %5 : vector<8x24xf32>
    %c0_4 = arith.constant 0 : index
    %c0_5 = arith.constant 0 : index
    %7 = vector.load %arg6[%c0_4, %c0_5] : memref<1x24xf32, #tpu.memory_space<vmem>>, vector<1x24xf32>
    %8 = vector.broadcast %7 : vector<1x24xf32> to vector<8x24xf32>
    %9 = arith.addf %6, %8 : vector<8x24xf32>
    %cst = arith.constant 0.000000e+00 : f32
    %10 = vector.broadcast %cst : f32 to vector<8x24xf32>
    %11 = arith.maximumf %9, %10 : vector<8x24xf32>
    %c0_6 = arith.constant 0 : index
    %c0_7 = arith.constant 0 : index
    %12 = vector.load %arg10[%c0_6, %c0_7] : memref<8x32xf32, #tpu.memory_space<vmem>>, vector<8x32xf32>
    %13 = arith.truncf %11 : vector<8x24xf32> to vector<8x24xbf16>
    %c0_8 = arith.constant 0 : index
    %c0_9 = arith.constant 0 : index
    %14 = vector.load %arg4[%c0_8, %c0_9] : memref<24x32xbf16, #tpu.memory_space<vmem>>, vector<24x32xbf16>
    %cst_10 = arith.constant dense<0.000000e+00> : vector<8x32xf32>
    %15 = tpu.matmul %13, %14, %cst_10 {dimension_numbers = #tpu.dot_dimension_numbers<[1], [0], [0], [1], [0, 0, 1, 1], [], []>} : vector<8x24xbf16>, vector<24x32xbf16>, vector<8x32xf32> -> vector<8x32xf32>
    %16 = arith.addf %12, %15 : vector<8x32xf32>
    %c0_11 = arith.constant 0 : index
    %c0_12 = arith.constant 0 : index
    %17 = vector.load %arg10[%c0_11, %c0_12] : memref<8x32xf32, #tpu.memory_space<vmem>>, vector<8x32xf32>
    tpu.vector_store %arg10[%c0_11, %c0_12], %16 {strides = array<i32>} : memref<8x32xf32, #tpu.memory_space<vmem>>, vector<8x32xf32>,
    %c0_i32_13 = arith.constant 0 : i32
    %18 = arith.cmpi eq, %arg2, %c0_i32_13 : i32
    %19 = arith.extui %18 : i1 to i32
    %c0_i32_14 = arith.constant 0 : i32
    %20 = arith.cmpi ne, %19, %c0_i32_14 : i32
    scf.if %20 {
      %c0_15 = arith.constant 0 : index
      %c0_16 = arith.constant 0 : index
      %21 = vector.load %arg10[%c0_15, %c0_16] : memref<8x32xf32, #tpu.memory_space<vmem>>, vector<8x32xf32>
      %c0_17 = arith.constant 0 : index
      %c0_18 = arith.constant 0 : index
      %22 = vector.load %arg7[%c0_17, %c0_18] : memref<1x32xf32, #tpu.memory_space<vmem>>, vector<1x32xf32>
      %23 = vector.broadcast %22 : vector<1x32xf32> to vector<8x32xf32>
      %24 = arith.mulf %21, %23 : vector<8x32xf32>
      %c0_19 = arith.constant 0 : index
      %c0_20 = arith.constant 0 : index
      %25 = vector.load %arg8[%c0_19, %c0_20] : memref<1x32xf32, #tpu.memory_space<vmem>>, vector<1x32xf32>
      %26 = vector.broadcast %25 : vector<1x32xf32> to vector<8x32xf32>
      %27 = arith.addf %24, %26 : vector<8x32xf32>
      %cst_21 = arith.constant 0.000000e+00 : f32
      %28 = vector.broadcast %cst_21 : f32 to vector<8x32xf32>
      %29 = arith.maximumf %27, %28 : vector<8x32xf32>
      %c0_22 = arith.constant 0 : index
      %c0_23 = arith.constant 0 : index
      %30 = vector.load %arg9[%c0_22, %c0_23] : memref<8x32xf32, #tpu.memory_space<vmem>>, vector<8x32xf32>
      tpu.vector_store %arg9[%c0_22, %c0_23], %29 {strides = array<i32>} : memref<8x32xf32, #tpu.memory_space<vmem>>, vector<8x32xf32>,
    } else {
    }
    return
  }
  func.func @transform_0(%arg0: i32, %arg1: i32, %arg2: i32) -> (i32, i32) {
    %c0_i32 = arith.constant 0 : i32
    return %arg0, %arg2 : i32, i32
  }
  func.func @transform_1(%arg0: i32, %arg1: i32, %arg2: i32) -> (i32, i32) {
    %c0_i32 = arith.constant 0 : i32
    return %arg2, %arg1 : i32, i32
  }
  func.func @transform_2(%arg0: i32, %arg1: i32, %arg2: i32) -> (i32, i32) {
    %c0_i32 = arith.constant 0 : i32
    %c0_i32_0 = arith.constant 0 : i32
    return %c0_i32, %arg2 : i32, i32
  }
  func.func @transform_3(%arg0: i32, %arg1: i32, %arg2: i32) -> (i32, i32) {
    %c0_i32 = arith.constant 0 : i32
    %c0_i32_0 = arith.constant 0 : i32
    return %c0_i32, %arg2 : i32, i32
  }
  func.func @transform_4(%arg0: i32, %arg1: i32, %arg2: i32) -> (i32, i32) {
    %c0_i32 = arith.constant 0 : i32
    %c0_i32_0 = arith.constant 0 : i32
    return %c0_i32, %arg1 : i32, i32
  }
  func.func @transform_5(%arg0: i32, %arg1: i32, %arg2: i32) -> (i32, i32) {
    %c0_i32 = arith.constant 0 : i32
    %c0_i32_0 = arith.constant 0 : i32
    return %c0_i32, %arg1 : i32, i32
  }
  func.func @transform_6(%arg0: i32, %arg1: i32, %arg2: i32) -> (i32, i32) {
    %c0_i32 = arith.constant 0 : i32
    return %arg0, %arg1 : i32, i32
  }
}

module attributes {stable_mosaic.version = 11 : i64} {
  func.func @kernel(%arg0: i32, %arg1: i32, %arg2: i32, %arg3: memref<8x288xbf16, #tpu.memory_space<vmem>>, %arg4: memref<288x8xbf16, #tpu.memory_space<vmem>>, %arg5: memref<8x16xf32, #tpu.memory_space<vmem>>, %arg6: memref<8x24xf32, #tpu.memory_space<vmem>>, %arg7: memref<8x8xf32, #tpu.memory_space<vmem>>) attributes {dimension_semantics = [#tpu.dimension_semantics<parallel>, #tpu.dimension_semantics<parallel>, #tpu.dimension_semantics<arbitrary>], iteration_bounds = array<i64: 1, 1, 1>, scalar_prefetch = 0 : i64, scratch_operands = 1 : i64, tpu.core_type = #tpu.core_type<tc>, window_params = [{transform_indices = @transform_0, window_bounds = array<i64: 8, 288>}, {transform_indices = @transform_1, window_bounds = array<i64: 288, 8>}, {transform_indices = @transform_2, window_bounds = array<i64: 8, 16>}, {transform_indices = @transform_3, window_bounds = array<i64: 8, 24>}]} {
    %c0_i32 = arith.constant 0 : i32
    %0 = arith.cmpi eq, %arg2, %c0_i32 : i32
    %1 = arith.extui %0 : i1 to i32
    %c0_i32_0 = arith.constant 0 : i32
    %2 = arith.cmpi ne, %1, %c0_i32_0 : i32
    scf.if %2 {
      %cst_10 = arith.constant 0.000000e+00 : f32
      %12 = vector.broadcast %cst_10 : f32 to vector<8x8xf32>
      %c0_11 = arith.constant 0 : index
      %c0_12 = arith.constant 0 : index
      %13 = vector.load %arg7[%c0_11, %c0_12] : memref<8x8xf32, #tpu.memory_space<vmem>>, vector<8x8xf32>
      tpu.vector_store %arg7[%c0_11, %c0_12], %12 {strides = array<i32>} : memref<8x8xf32, #tpu.memory_space<vmem>>, vector<8x8xf32>,
    } else {
    }
    %c0 = arith.constant 0 : index
    %c0_1 = arith.constant 0 : index
    %3 = vector.load %arg3[%c0, %c0_1] : memref<8x288xbf16, #tpu.memory_space<vmem>>, vector<8x288xbf16>
    %c0_2 = arith.constant 0 : index
    %c0_3 = arith.constant 0 : index
    %4 = vector.load %arg7[%c0_2, %c0_3] : memref<8x8xf32, #tpu.memory_space<vmem>>, vector<8x8xf32>
    %c0_4 = arith.constant 0 : index
    %c0_5 = arith.constant 0 : index
    %5 = vector.load %arg4[%c0_4, %c0_5] : memref<288x8xbf16, #tpu.memory_space<vmem>>, vector<288x8xbf16>
    %cst = arith.constant dense<0.000000e+00> : vector<8x8xf32>
    %6 = tpu.matmul %3, %5, %cst {dimension_numbers = #tpu.dot_dimension_numbers<[1], [0], [0], [1], [0, 0, 1, 1], [], []>} : vector<8x288xbf16>, vector<288x8xbf16>, vector<8x8xf32> -> vector<8x8xf32>
    %7 = arith.addf %4, %6 : vector<8x8xf32>
    %c0_6 = arith.constant 0 : index
    %c0_7 = arith.constant 0 : index
    %8 = vector.load %arg7[%c0_6, %c0_7] : memref<8x8xf32, #tpu.memory_space<vmem>>, vector<8x8xf32>
    tpu.vector_store %arg7[%c0_6, %c0_7], %7 {strides = array<i32>} : memref<8x8xf32, #tpu.memory_space<vmem>>, vector<8x8xf32>,
    %c0_i32_8 = arith.constant 0 : i32
    %9 = arith.cmpi eq, %arg2, %c0_i32_8 : i32
    %10 = arith.extui %9 : i1 to i32
    %c0_i32_9 = arith.constant 0 : i32
    %11 = arith.cmpi ne, %10, %c0_i32_9 : i32
    scf.if %11 {
      %c0_10 = arith.constant 0 : index
      %c0_11 = arith.constant 0 : index
      %12 = vector.load %arg7[%c0_10, %c0_11] : memref<8x8xf32, #tpu.memory_space<vmem>>, vector<8x8xf32>
      %c0_12 = arith.constant 0 : index
      %c0_13 = arith.constant 0 : index
      %13 = vector.load %arg5[%c0_12, %c0_13] : memref<8x16xf32, #tpu.memory_space<vmem>>, vector<8x16xf32>
      %c0_14 = arith.constant 0 : index
      %c0_15 = arith.constant 0 : index
      %14 = vector.load %arg6[%c0_14, %c0_15] : memref<8x24xf32, #tpu.memory_space<vmem>>, vector<8x16xf32>
      tpu.vector_store %arg6[%c0_14, %c0_15], %13 {strides = array<i32>} : memref<8x24xf32, #tpu.memory_space<vmem>>, vector<8x16xf32>,
      %c0_16 = arith.constant 0 : index
      %c16 = arith.constant 16 : index
      %15 = vector.load %arg6[%c0_16, %c16] : memref<8x24xf32, #tpu.memory_space<vmem>>, vector<8x8xf32>
      tpu.vector_store %arg6[%c0_16, %c16], %12 {strides = array<i32>} : memref<8x24xf32, #tpu.memory_space<vmem>>, vector<8x8xf32>,
    } else {
    }
    return
  }
  func.func @transform_0(%arg0: i32, %arg1: i32, %arg2: i32) -> (i32, i32) {
    %c0_i32 = arith.constant 0 : i32
    return %arg0, %arg2 : i32, i32
  }
  func.func @transform_1(%arg0: i32, %arg1: i32, %arg2: i32) -> (i32, i32) {
    %c0_i32 = arith.constant 0 : i32
    return %arg2, %arg1 : i32, i32
  }
  func.func @transform_2(%arg0: i32, %arg1: i32, %arg2: i32) -> (i32, i32) {
    %c0_i32 = arith.constant 0 : i32
    %c0_i32_0 = arith.constant 0 : i32
    return %arg0, %c0_i32 : i32, i32
  }
  func.func @transform_3(%arg0: i32, %arg1: i32, %arg2: i32) -> (i32, i32) {
    %c0_i32 = arith.constant 0 : i32
    %c0_i32_0 = arith.constant 0 : i32
    return %arg0, %c0_i32 : i32, i32
  }
}

module attributes {stable_mosaic.version = 11 : i64} {
  func.func @kernel(%arg0: i32, %arg1: i32, %arg2: i32, %arg3: memref<8x288xbf16, #tpu.memory_space<vmem>>, %arg4: memref<288x8xbf16, #tpu.memory_space<vmem>>, %arg5: memref<8x24xf32, #tpu.memory_space<vmem>>, %arg6: memref<8x32xf32, #tpu.memory_space<vmem>>, %arg7: memref<8x8xf32, #tpu.memory_space<vmem>>) attributes {dimension_semantics = [#tpu.dimension_semantics<parallel>, #tpu.dimension_semantics<parallel>, #tpu.dimension_semantics<arbitrary>], iteration_bounds = array<i64: 1, 1, 1>, scalar_prefetch = 0 : i64, scratch_operands = 1 : i64, tpu.core_type = #tpu.core_type<tc>, window_params = [{transform_indices = @transform_0, window_bounds = array<i64: 8, 288>}, {transform_indices = @transform_1, window_bounds = array<i64: 288, 8>}, {transform_indices = @transform_2, window_bounds = array<i64: 8, 24>}, {transform_indices = @transform_3, window_bounds = array<i64: 8, 32>}]} {
    %c0_i32 = arith.constant 0 : i32
    %0 = arith.cmpi eq, %arg2, %c0_i32 : i32
    %1 = arith.extui %0 : i1 to i32
    %c0_i32_0 = arith.constant 0 : i32
    %2 = arith.cmpi ne, %1, %c0_i32_0 : i32
    scf.if %2 {
      %cst_10 = arith.constant 0.000000e+00 : f32
      %12 = vector.broadcast %cst_10 : f32 to vector<8x8xf32>
      %c0_11 = arith.constant 0 : index
      %c0_12 = arith.constant 0 : index
      %13 = vector.load %arg7[%c0_11, %c0_12] : memref<8x8xf32, #tpu.memory_space<vmem>>, vector<8x8xf32>
      tpu.vector_store %arg7[%c0_11, %c0_12], %12 {strides = array<i32>} : memref<8x8xf32, #tpu.memory_space<vmem>>, vector<8x8xf32>,
    } else {
    }
    %c0 = arith.constant 0 : index
    %c0_1 = arith.constant 0 : index
    %3 = vector.load %arg3[%c0, %c0_1] : memref<8x288xbf16, #tpu.memory_space<vmem>>, vector<8x288xbf16>
    %c0_2 = arith.constant 0 : index
    %c0_3 = arith.constant 0 : index
    %4 = vector.load %arg7[%c0_2, %c0_3] : memref<8x8xf32, #tpu.memory_space<vmem>>, vector<8x8xf32>
    %c0_4 = arith.constant 0 : index
    %c0_5 = arith.constant 0 : index
    %5 = vector.load %arg4[%c0_4, %c0_5] : memref<288x8xbf16, #tpu.memory_space<vmem>>, vector<288x8xbf16>
    %cst = arith.constant dense<0.000000e+00> : vector<8x8xf32>
    %6 = tpu.matmul %3, %5, %cst {dimension_numbers = #tpu.dot_dimension_numbers<[1], [0], [0], [1], [0, 0, 1, 1], [], []>} : vector<8x288xbf16>, vector<288x8xbf16>, vector<8x8xf32> -> vector<8x8xf32>
    %7 = arith.addf %4, %6 : vector<8x8xf32>
    %c0_6 = arith.constant 0 : index
    %c0_7 = arith.constant 0 : index
    %8 = vector.load %arg7[%c0_6, %c0_7] : memref<8x8xf32, #tpu.memory_space<vmem>>, vector<8x8xf32>
    tpu.vector_store %arg7[%c0_6, %c0_7], %7 {strides = array<i32>} : memref<8x8xf32, #tpu.memory_space<vmem>>, vector<8x8xf32>,
    %c0_i32_8 = arith.constant 0 : i32
    %9 = arith.cmpi eq, %arg2, %c0_i32_8 : i32
    %10 = arith.extui %9 : i1 to i32
    %c0_i32_9 = arith.constant 0 : i32
    %11 = arith.cmpi ne, %10, %c0_i32_9 : i32
    scf.if %11 {
      %c0_10 = arith.constant 0 : index
      %c0_11 = arith.constant 0 : index
      %12 = vector.load %arg7[%c0_10, %c0_11] : memref<8x8xf32, #tpu.memory_space<vmem>>, vector<8x8xf32>
      %c0_12 = arith.constant 0 : index
      %c0_13 = arith.constant 0 : index
      %13 = vector.load %arg5[%c0_12, %c0_13] : memref<8x24xf32, #tpu.memory_space<vmem>>, vector<8x24xf32>
      %c0_14 = arith.constant 0 : index
      %c0_15 = arith.constant 0 : index
      %14 = vector.load %arg6[%c0_14, %c0_15] : memref<8x32xf32, #tpu.memory_space<vmem>>, vector<8x24xf32>
      tpu.vector_store %arg6[%c0_14, %c0_15], %13 {strides = array<i32>} : memref<8x32xf32, #tpu.memory_space<vmem>>, vector<8x24xf32>,
      %c0_16 = arith.constant 0 : index
      %c24 = arith.constant 24 : index
      %15 = vector.load %arg6[%c0_16, %c24] : memref<8x32xf32, #tpu.memory_space<vmem>>, vector<8x8xf32>
      tpu.vector_store %arg6[%c0_16, %c24], %12 {strides = array<i32>} : memref<8x32xf32, #tpu.memory_space<vmem>>, vector<8x8xf32>,
    } else {
    }
    return
  }
  func.func @transform_0(%arg0: i32, %arg1: i32, %arg2: i32) -> (i32, i32) {
    %c0_i32 = arith.constant 0 : i32
    return %arg0, %arg2 : i32, i32
  }
  func.func @transform_1(%arg0: i32, %arg1: i32, %arg2: i32) -> (i32, i32) {
    %c0_i32 = arith.constant 0 : i32
    return %arg2, %arg1 : i32, i32
  }
  func.func @transform_2(%arg0: i32, %arg1: i32, %arg2: i32) -> (i32, i32) {
    %c0_i32 = arith.constant 0 : i32
    %c0_i32_0 = arith.constant 0 : i32
    return %arg0, %c0_i32 : i32, i32
  }
  func.func @transform_3(%arg0: i32, %arg1: i32, %arg2: i32) -> (i32, i32) {
    %c0_i32 = arith.constant 0 : i32
    %c0_i32_0 = arith.constant 0 : i32
    return %arg0, %c0_i32 : i32, i32
  }
}

module attributes {stable_mosaic.version = 11 : i64} {
  func.func @kernel(%arg0: i32, %arg1: i32, %arg2: i32, %arg3: memref<8x32xf32, #tpu.memory_space<vmem>>, %arg4: memref<32x16xbf16, #tpu.memory_space<vmem>>, %arg5: memref<1x32xf32, #tpu.memory_space<vmem>>, %arg6: memref<1x32xf32, #tpu.memory_space<vmem>>, %arg7: memref<8x16xf32, #tpu.memory_space<vmem>>, %arg8: memref<8x16xf32, #tpu.memory_space<vmem>>) attributes {dimension_semantics = [#tpu.dimension_semantics<parallel>, #tpu.dimension_semantics<parallel>, #tpu.dimension_semantics<arbitrary>], iteration_bounds = array<i64: 1, 1, 1>, scalar_prefetch = 0 : i64, scratch_operands = 1 : i64, tpu.core_type = #tpu.core_type<tc>, window_params = [{transform_indices = @transform_0, window_bounds = array<i64: 8, 32>}, {transform_indices = @transform_1, window_bounds = array<i64: 32, 16>}, {transform_indices = @transform_2, window_bounds = array<i64: 1, 32>}, {transform_indices = @transform_3, window_bounds = array<i64: 1, 32>}, {transform_indices = @transform_4, window_bounds = array<i64: 8, 16>}]} {
    %c0_i32 = arith.constant 0 : i32
    %0 = arith.cmpi eq, %arg2, %c0_i32 : i32
    %1 = arith.extui %0 : i1 to i32
    %c0_i32_0 = arith.constant 0 : i32
    %2 = arith.cmpi ne, %1, %c0_i32_0 : i32
    scf.if %2 {
      %cst_15 = arith.constant 0.000000e+00 : f32
      %21 = vector.broadcast %cst_15 : f32 to vector<8x16xf32>
      %c0_16 = arith.constant 0 : index
      %c0_17 = arith.constant 0 : index
      %22 = vector.load %arg8[%c0_16, %c0_17] : memref<8x16xf32, #tpu.memory_space<vmem>>, vector<8x16xf32>
      tpu.vector_store %arg8[%c0_16, %c0_17], %21 {strides = array<i32>} : memref<8x16xf32, #tpu.memory_space<vmem>>, vector<8x16xf32>,
    } else {
    }
    %c0 = arith.constant 0 : index
    %c0_1 = arith.constant 0 : index
    %3 = vector.load %arg3[%c0, %c0_1] : memref<8x32xf32, #tpu.memory_space<vmem>>, vector<8x32xf32>
    %c0_2 = arith.constant 0 : index
    %c0_3 = arith.constant 0 : index
    %4 = vector.load %arg5[%c0_2, %c0_3] : memref<1x32xf32, #tpu.memory_space<vmem>>, vector<1x32xf32>
    %5 = vector.broadcast %4 : vector<1x32xf32> to vector<8x32xf32>
    %6 = arith.mulf %3, %5 : vector<8x32xf32>
    %c0_4 = arith.constant 0 : index
    %c0_5 = arith.constant 0 : index
    %7 = vector.load %arg6[%c0_4, %c0_5] : memref<1x32xf32, #tpu.memory_space<vmem>>, vector<1x32xf32>
    %8 = vector.broadcast %7 : vector<1x32xf32> to vector<8x32xf32>
    %9 = arith.addf %6, %8 : vector<8x32xf32>
    %cst = arith.constant 0.000000e+00 : f32
    %10 = vector.broadcast %cst : f32 to vector<8x32xf32>
    %11 = arith.maximumf %9, %10 : vector<8x32xf32>
    %c0_6 = arith.constant 0 : index
    %c0_7 = arith.constant 0 : index
    %12 = vector.load %arg8[%c0_6, %c0_7] : memref<8x16xf32, #tpu.memory_space<vmem>>, vector<8x16xf32>
    %13 = arith.truncf %11 : vector<8x32xf32> to vector<8x32xbf16>
    %c0_8 = arith.constant 0 : index
    %c0_9 = arith.constant 0 : index
    %14 = vector.load %arg4[%c0_8, %c0_9] : memref<32x16xbf16, #tpu.memory_space<vmem>>, vector<32x16xbf16>
    %cst_10 = arith.constant dense<0.000000e+00> : vector<8x16xf32>
    %15 = tpu.matmul %13, %14, %cst_10 {dimension_numbers = #tpu.dot_dimension_numbers<[1], [0], [0], [1], [0, 0, 1, 1], [], []>} : vector<8x32xbf16>, vector<32x16xbf16>, vector<8x16xf32> -> vector<8x16xf32>
    %16 = arith.addf %12, %15 : vector<8x16xf32>
    %c0_11 = arith.constant 0 : index
    %c0_12 = arith.constant 0 : index
    %17 = vector.load %arg8[%c0_11, %c0_12] : memref<8x16xf32, #tpu.memory_space<vmem>>, vector<8x16xf32>
    tpu.vector_store %arg8[%c0_11, %c0_12], %16 {strides = array<i32>} : memref<8x16xf32, #tpu.memory_space<vmem>>, vector<8x16xf32>,
    %c0_i32_13 = arith.constant 0 : i32
    %18 = arith.cmpi eq, %arg2, %c0_i32_13 : i32
    %19 = arith.extui %18 : i1 to i32
    %c0_i32_14 = arith.constant 0 : i32
    %20 = arith.cmpi ne, %19, %c0_i32_14 : i32
    scf.if %20 {
      %c0_15 = arith.constant 0 : index
      %c0_16 = arith.constant 0 : index
      %21 = vector.load %arg8[%c0_15, %c0_16] : memref<8x16xf32, #tpu.memory_space<vmem>>, vector<8x16xf32>
      %c0_17 = arith.constant 0 : index
      %c0_18 = arith.constant 0 : index
      %22 = vector.load %arg7[%c0_17, %c0_18] : memref<8x16xf32, #tpu.memory_space<vmem>>, vector<8x16xf32>
      tpu.vector_store %arg7[%c0_17, %c0_18], %21 {strides = array<i32>} : memref<8x16xf32, #tpu.memory_space<vmem>>, vector<8x16xf32>,
    } else {
    }
    return
  }
  func.func @transform_0(%arg0: i32, %arg1: i32, %arg2: i32) -> (i32, i32) {
    %c0_i32 = arith.constant 0 : i32
    return %arg0, %arg2 : i32, i32
  }
  func.func @transform_1(%arg0: i32, %arg1: i32, %arg2: i32) -> (i32, i32) {
    %c0_i32 = arith.constant 0 : i32
    return %arg2, %arg1 : i32, i32
  }
  func.func @transform_2(%arg0: i32, %arg1: i32, %arg2: i32) -> (i32, i32) {
    %c0_i32 = arith.constant 0 : i32
    %c0_i32_0 = arith.constant 0 : i32
    return %c0_i32, %arg2 : i32, i32
  }
  func.func @transform_3(%arg0: i32, %arg1: i32, %arg2: i32) -> (i32, i32) {
    %c0_i32 = arith.constant 0 : i32
    %c0_i32_0 = arith.constant 0 : i32
    return %c0_i32, %arg2 : i32, i32
  }
  func.func @transform_4(%arg0: i32, %arg1: i32, %arg2: i32) -> (i32, i32) {
    %c0_i32 = arith.constant 0 : i32
    return %arg0, %arg1 : i32, i32
  }
}

module attributes {stable_mosaic.version = 11 : i64} {
  func.func @_bn_relu_kernel(%arg0: i32, %arg1: memref<8x32xf32, #tpu.memory_space<vmem>>, %arg2: memref<1x32xf32, #tpu.memory_space<vmem>>, %arg3: memref<1x32xf32, #tpu.memory_space<vmem>>, %arg4: memref<8x32xf32, #tpu.memory_space<vmem>>) attributes {dimension_semantics = [#tpu.dimension_semantics<parallel>], iteration_bounds = array<i64: 1>, scalar_prefetch = 0 : i64, scratch_operands = 0 : i64, tpu.core_type = #tpu.core_type<tc>, window_params = [{transform_indices = @transform_0, window_bounds = array<i64: 8, 32>}, {pipeline_mode = #tpu.pipeline_mode<synchronous>, transform_indices = @transform_1, window_bounds = array<i64: 1, 32>}, {pipeline_mode = #tpu.pipeline_mode<synchronous>, transform_indices = @transform_2, window_bounds = array<i64: 1, 32>}, {transform_indices = @transform_3, window_bounds = array<i64: 8, 32>}]} {
    %c0 = arith.constant 0 : index
    %c0_0 = arith.constant 0 : index
    %0 = vector.load %arg1[%c0, %c0_0] : memref<8x32xf32, #tpu.memory_space<vmem>>, vector<8x32xf32>
    %c0_1 = arith.constant 0 : index
    %c0_2 = arith.constant 0 : index
    %1 = vector.load %arg2[%c0_1, %c0_2] : memref<1x32xf32, #tpu.memory_space<vmem>>, vector<1x32xf32>
    %2 = vector.broadcast %1 : vector<1x32xf32> to vector<8x32xf32>
    %3 = arith.mulf %0, %2 : vector<8x32xf32>
    %c0_3 = arith.constant 0 : index
    %c0_4 = arith.constant 0 : index
    %4 = vector.load %arg3[%c0_3, %c0_4] : memref<1x32xf32, #tpu.memory_space<vmem>>, vector<1x32xf32>
    %5 = vector.broadcast %4 : vector<1x32xf32> to vector<8x32xf32>
    %6 = arith.addf %3, %5 : vector<8x32xf32>
    %cst = arith.constant 0.000000e+00 : f32
    %7 = vector.broadcast %cst : f32 to vector<8x32xf32>
    %8 = arith.maximumf %6, %7 : vector<8x32xf32>
    %c0_5 = arith.constant 0 : index
    %c0_6 = arith.constant 0 : index
    %9 = vector.load %arg4[%c0_5, %c0_6] : memref<8x32xf32, #tpu.memory_space<vmem>>, vector<8x32xf32>
    tpu.vector_store %arg4[%c0_5, %c0_6], %8 {strides = array<i32>} : memref<8x32xf32, #tpu.memory_space<vmem>>, vector<8x32xf32>,
    return
  }
  func.func @transform_0(%arg0: i32) -> (i32, i32) {
    %c0_i32 = arith.constant 0 : i32
    %c0_i32_0 = arith.constant 0 : i32
    return %arg0, %c0_i32 : i32, i32
  }
  func.func @transform_1(%arg0: i32) -> (i32, i32) {
    %c0_i32 = arith.constant 0 : i32
    %c0_i32_0 = arith.constant 0 : i32
    %c0_i32_1 = arith.constant 0 : i32
    return %c0_i32, %c0_i32_0 : i32, i32
  }
  func.func @transform_2(%arg0: i32) -> (i32, i32) {
    %c0_i32 = arith.constant 0 : i32
    %c0_i32_0 = arith.constant 0 : i32
    %c0_i32_1 = arith.constant 0 : i32
    return %c0_i32, %c0_i32_0 : i32, i32
  }
  func.func @transform_3(%arg0: i32) -> (i32, i32) {
    %c0_i32 = arith.constant 0 : i32
    %c0_i32_0 = arith.constant 0 : i32
    return %arg0, %c0_i32 : i32, i32
  }
}

</mosaic_0001>

<llo_original>
// kernel: e_densenet_forward.25
$region0: #{e_densenet_forward.25}
  #allocation0 [shape = 'u32[]', space=smem, size = 0x4, offset = 0x4, fixed_abs, tag = 'smem constant byte address 0x4 - core index']
  #allocation1 [shape = 'u32[144,128]{1,0:T(1,128)}', space=vmem, size = 0x12000, scoped, tag = 'internal scratch']
  #allocation2 [shape = 'f32[256,16]{1,0:T(8,128)}', space=vmem, size = 0x20000, scoped, tag = 'scratch operand']
  %s0 = inlined_call_operand.vmem [shape: bf16[512,147], index: 0, kind: input, shape index: {}]
  %s1 = inlined_call_operand.vmem [shape: bf16[147,16], index: 1, kind: input, shape index: {}]
  %s2 = inlined_call_operand.vmem [shape: f32[1,16], index: 2, kind: input, shape index: {}]
  %s3 = inlined_call_operand.vmem [shape: f32[1,16], index: 3, kind: input, shape index: {}]
  %s4 = inlined_call_operand.vmem [shape: f32[512,16], index: 4, kind: output, shape index: {}]
  %s5 = sld [smem:[#allocation0]]
  $region57: #{e_densenet_forward.25} parent=0
    _
  %s7 = ssub.s32 1, %s5
  %s8 = scalar_select 0, %s7, %s5
  loop: start=0, step=1, limit=4
  $region2: #{e_densenet_forward.25} parent=0 // loop_pre_header
    _
  $region3: #{e_densenet_forward.25} parent=0 // loop_header
    %s10 = sphi 0, %s14
    %p11 = scmp.ge.s32.totalorder %s10, 4
    %s17 = sphi 0, %s36
    %s18 = sphi 0, %s32
    %s19 = sphi 0, %s28
    %s20 = sphi 0, %s17
    %s21 = sphi 0, %s18
    %s22 = sphi 0, %s19
    %s23 = sphi 0, %s20
    %s24 = sphi 0, %s21
    %s25 = sphi 0, %s22
    %s41 = sphi 0, %s43
    %s44 = sphi 0, %s41
    %s45 = sphi 0, %s44
    %s61 = sphi 0, %s45
    %s69 = sphi 0, %s71
    %s72 = sphi 0, %s69
    %s73 = sphi 0, %s72
    %s89 = sphi 0, %s73
    %s95 = sphi 0, %s97
    %s98 = sphi 0, %s95
    %s99 = sphi 0, %s98
    %s115 = sphi 0, %s99
    %s121 = sphi 0, %s123
    %s124 = sphi 0, %s121
    %s125 = sphi 0, %s124
    %s141 = sphi 0, %s125
    %s149 = sphi 0, %s151
    %s152 = sphi 0, %s149
    %s153 = sphi 0, %s152
    %s169 = sphi 0, %s153
  $region4: #{e_densenet_forward.25} parent=0 // loop_header_branch
    %13 = sbr.rel (%p11) target = $region8
  $region5: #{e_densenet_forward.25} parent=0 // loop_body
    %s15 = ssub.s32 %s10, 1
    %s16 = ssub.s32 %s10, 2
    %s26 = sadd.s32 1, %s19
    %p27 = scmp.ge.s32.totalorder %s26, 1
    %s28 = scalar_select %p27, 0, %s26
    %s29 = sadd.s32 1, %s18
    %s30 = scalar_select %p27, %s29, %s18
    %p31 = scmp.ge.s32.totalorder %s30, 1
    %s32 = scalar_select %p31, 0, %s30
    %s33 = sadd.s32 1, %s17
    %s34 = scalar_select %p31, %s33, %s17
    %p35 = scmp.ge.s32.totalorder %s34, 2
    %s36 = scalar_select %p35, 0, %s34
    %s37 = ssub.s32 %s17, %s36
    %s38 = ssub.s32 %s19, %s28
    %s39 = sor.u32 %s37, %s38
    %p40 = scmp.eq.s32.totalorder %s39, 0
    %s42 = sadd.s32 %s41, 1
    %s43 = scalar_select %p40, %s41, %s42
    %p46 = pneg %p40
    %p47 = scmp.eq.s32.totalorder %s10, 1
    %p48 = por %p46, %p47
    %p49 = scmp.ne.s32.totalorder %s41, %s44
    %p50 = scmp.eq.s32.totalorder %s10, 0
    %p51 = por %p49, %p50
    %p52 = scmp.ne.s32.totalorder %s41, %s44
    %p53 = scmp.eq.s32.totalorder %s15, 1
    %p54 = por %p52, %p53
    %p55 = scmp.ne.s32.totalorder %s44, %s45
    %p56 = scmp.eq.s32.totalorder %s15, 0
    %p57 = por %p55, %p56
    %p58 = scmp.ne.s32.totalorder %s44, %s45
    %p59 = scmp.eq.s32.totalorder %s16, 1
    %p60 = por %p58, %p59
    %p62 = scmp.ne.s32.totalorder %s45, %s61
    %p63 = scmp.eq.s32.totalorder %s16, 0
    %p64 = por %p62, %p63
    %s65 = ssub.s32 %s19, %s28
    %s66 = ssub.s32 %s18, %s32
    %s67 = sor.u32 %s65, %s66
    %p68 = scmp.eq.s32.totalorder %s67, 0
    %s70 = sadd.s32 %s69, 1
    %s71 = scalar_select %p68, %s69, %s70
    %p74 = pneg %p68
    %p75 = scmp.eq.s32.totalorder %s10, 1
    %p76 = por %p74, %p75
    %p77 = scmp.ne.s32.totalorder %s69, %s72
    %p78 = scmp.eq.s32.totalorder %s10, 0
    %p79 = por %p77, %p78
    %p80 = scmp.ne.s32.totalorder %s69, %s72
    %p81 = scmp.eq.s32.totalorder %s15, 1
    %p82 = por %p80, %p81
    %p83 = scmp.ne.s32.totalorder %s72, %s73
    %p84 = scmp.eq.s32.totalorder %s15, 0
    %p85 = por %p83, %p84
    %p86 = scmp.ne.s32.totalorder %s72, %s73
    %p87 = scmp.eq.s32.totalorder %s16, 1
    %p88 = por %p86, %p87
    %p90 = scmp.ne.s32.totalorder %s73, %s89
    %p91 = scmp.eq.s32.totalorder %s16, 0
    %p92 = por %p90, %p91
    %s93 = ssub.s32 %s18, %s32
    %p94 = scmp.eq.s32.totalorder %s93, 0
    %s96 = sadd.s32 %s95, 1
    %s97 = scalar_select %p94, %s95, %s96
    %p100 = pneg %p94
    %p101 = scmp.eq.s32.totalorder %s10, 1
    %p102 = por %p100, %p101
    %p103 = scmp.ne.s32.totalorder %s95, %s98
    %p104 = scmp.eq.s32.totalorder %s10, 0
    %p105 = por %p103, %p104
    %p106 = scmp.ne.s32.totalorder %s95, %s98
    %p107 = scmp.eq.s32.totalorder %s15, 1
    %p108 = por %p106, %p107
    %p109 = scmp.ne.s32.totalorder %s98, %s99
    %p110 = scmp.eq.s32.totalorder %s15, 0
    %p111 = por %p109, %p110
    %p112 = scmp.ne.s32.totalorder %s98, %s99
    %p113 = scmp.eq.s32.totalorder %s16, 1
    %p114 = por %p112, %p113
    %p116 = scmp.ne.s32.totalorder %s99, %s115
    %p117 = scmp.eq.s32.totalorder %s16, 0
    %p118 = por %p116, %p117
    %s119 = ssub.s32 %s18, %s32
    %p120 = scmp.eq.s32.totalorder %s119, 0
    %s122 = sadd.s32 %s121, 1
    %s123 = scalar_select %p120, %s121, %s122
    %p126 = pneg %p120
    %p127 = scmp.eq.s32.totalorder %s10, 1
    %p128 = por %p126, %p127
    %p129 = scmp.ne.s32.totalorder %s121, %s124
    %p130 = scmp.eq.s32.totalorder %s10, 0
    %p131 = por %p129, %p130
    %p132 = scmp.ne.s32.totalorder %s121, %s124
    %p133 = scmp.eq.s32.totalorder %s15, 1
    %p134 = por %p132, %p133
    %p135 = scmp.ne.s32.totalorder %s124, %s125
    %p136 = scmp.eq.s32.totalorder %s15, 0
    %p137 = por %p135, %p136
    %p138 = scmp.ne.s32.totalorder %s124, %s125
    %p139 = scmp.eq.s32.totalorder %s16, 1
    %p140 = por %p138, %p139
    %p142 = scmp.ne.s32.totalorder %s125, %s141
    %p143 = scmp.eq.s32.totalorder %s16, 0
    %p144 = por %p142, %p143
    %s145 = ssub.s32 %s17, %s36
    %s146 = ssub.s32 %s18, %s32
    %s147 = sor.u32 %s145, %s146
    %p148 = scmp.eq.s32.totalorder %s147, 0
    %s150 = sadd.s32 %s149, 1
    %s151 = scalar_select %p148, %s149, %s150
    %p154 = pneg %p148
    %p155 = scmp.eq.s32.totalorder %s10, 1
    %p156 = por %p154, %p155
    %p157 = scmp.ne.s32.totalorder %s149, %s152
    %p158 = scmp.eq.s32.totalorder %s10, 0
    %p159 = por %p157, %p158
    %p160 = scmp.ne.s32.totalorder %s149, %s152
    %p161 = scmp.eq.s32.totalorder %s15, 1
    %p162 = por %p160, %p161
    %p163 = scmp.ne.s32.totalorder %s152, %s153
    %p164 = scmp.eq.s32.totalorder %s15, 0
    %p165 = por %p163, %p164
    %p166 = scmp.ne.s32.totalorder %s152, %s153
    %p167 = scmp.eq.s32.totalorder %s16, 1
    %p168 = por %p166, %p167
    %p170 = scmp.ne.s32.totalorder %s153, %s169
    %p171 = scmp.eq.s32.totalorder %s16, 0
    %p172 = por %p170, %p171
    %p173 = scmp.le.s32.totalorder 1, %s10
    %p174 = scmp.lt.s32.totalorder %s10, 3
    %p175 = pnand %p173, %p174
    %p176 = pneg %p175
    // Predicated region
    $region9: #{e_densenet_forward.25} parent=5 // pred_check
      _
    $region10: #{e_densenet_forward.25} parent=5 // pred_check_branch
      %178 = sbr.rel (%p175) target = $region12
    $region11: #{e_densenet_forward.25} parent=5 // pred_region
      %s179 = ssub.s32 %s10, 1
      // Predicated region
      $region13: #{e_densenet_forward.25} parent=11 // pred_check
        %p180 = pneg %p85
      $region14: #{e_densenet_forward.25} parent=11 // pred_check_branch
        %182 = sbr.rel (%p180) target = $region16
      $region15: #{e_densenet_forward.25} parent=11 // pred_region
        %s183 = smul.u32 19, %s22
        %p184 = scmp.lt.s32.totalorder %s183, 18
        %s185 = scalar_select %p184, %s183, 18
        %p186 = scmp.lt.s32.totalorder %s21, 0
        %s187 = scalar_select %p186, %s21, 0
        %s188 = sadd.s32 %s187, %s185
        %s189 = smul.addr %s188, 4
        %s190 = scalar_lea.vmem %s1, %s189
        %s191 = smul.u32 19, %s22
      $region16: #{e_densenet_forward.25} parent=11 // pred_fallthru
        _
      // Predicated region
      $region17: #{e_densenet_forward.25} parent=11 // pred_check
        %p192 = pneg %p111
      $region18: #{e_densenet_forward.25} parent=11 // pred_check_branch
        %194 = sbr.rel (%p192) target = $region20
      $region19: #{e_densenet_forward.25} parent=11 // pred_region
        %p195 = scmp.lt.s32.totalorder %s21, 0
        %s196 = scalar_select %p195, %s21, 0
        %s197 = scalar_lea.vmem %s2, %s196
      $region20: #{e_densenet_forward.25} parent=11 // pred_fallthru
        _
      // Predicated region
      $region21: #{e_densenet_forward.25} parent=11 // pred_check
        %p198 = pneg %p137
      $region22: #{e_densenet_forward.25} parent=11 // pred_check_branch
        %200 = sbr.rel (%p198) target = $region24
      $region23: #{e_densenet_forward.25} parent=11 // pred_region
        %p201 = scmp.lt.s32.totalorder %s21, 0
        %s202 = scalar_select %p201, %s21, 0
        %s203 = scalar_lea.vmem %s3, %s202
      $region24: #{e_densenet_forward.25} parent=11 // pred_fallthru
        _
    $region12: #{e_densenet_forward.25} parent=5 // pred_fallthru
      _
    %p204 = scmp.lt.s32.totalorder %s10, 2
    // Predicated region
    $region25: #{e_densenet_forward.25} parent=5 // pred_check
      %p205 = pneg %p204
    $region26: #{e_densenet_forward.25} parent=5 // pred_check_branch
      %207 = sbr.rel (%p205) target = $region28
    $region27: #{e_densenet_forward.25} parent=5 // pred_region
      // Predicated region
      $region29: #{e_densenet_forward.25} parent=27 // pred_check
        %p208 = pneg %p51
      $region30: #{e_densenet_forward.25} parent=27 // pred_check_branch
        %210 = sbr.rel (%p208) target = $region32
      $region31: #{e_densenet_forward.25} parent=27 // pred_region
        %s211 = smul.u32 32, %s17
        %s212 = smul.u32 2, %s19
        %p213 = scmp.lt.s32.totalorder %s211, 63
        %s214 = scalar_select %p213, %s211, 63
        %p215 = scmp.lt.s32.totalorder %s212, 1
        %s216 = scalar_select %p215, %s212, 1
        %s217 = smul.addr %s214, 2
        %s218 = sadd.s32 %s216, %s217
        %s219 = smul.addr %s218, 4
        %s220 = scalar_lea.vmem %s0, %s219
        %s221 = smul.u32 32, %s17
        %s222 = smul.u32 2, %s19
      $region32: #{e_densenet_forward.25} parent=27 // pred_fallthru
        _
    $region28: #{e_densenet_forward.25} parent=5 // pred_fallthru
      _
    %p223 = scmp.le.s32.totalorder 1, %s10
    %p224 = scmp.lt.s32.totalorder %s10, 3
    %p225 = pnand %p223, %p224
    %p226 = pneg %p225
    // Predicated region
    $region33: #{e_densenet_forward.25} parent=5 // pred_check
      _
    $region34: #{e_densenet_forward.25} parent=5 // pred_check_branch
      %228 = sbr.rel (%p225) target = $region36
    $region35: #{e_densenet_forward.25} parent=5 // pred_region
      %s229 = ssub.s32 %s10, 1
      %s230 = smul.u32 32, %s20
      %s231 = smul.u32 2, %s22
      %p232 = scmp.lt.s32.totalorder %s230, 63
      %s233 = scalar_select %p232, %s230, 63
      %p234 = scmp.lt.s32.totalorder %s231, 1
      %s235 = scalar_select %p234, %s231, 1
      %s236 = smul.addr %s233, 2
      %s237 = sadd.s32 %s235, %s236
      %s238 = smul.addr %s237, 4
      %s239 = scalar_lea.vmem %s0, %s238
      %p240 = pneg %p57
      %p241 = pneg %p54
      %s242 = smul.u32 19, %s22
      %p243 = scmp.lt.s32.totalorder %s242, 18
      %s244 = scalar_select %p243, %s242, 18
      %p245 = scmp.lt.s32.totalorder %s21, 0
      %s246 = scalar_select %p245, %s21, 0
      %s247 = sadd.s32 %s246, %s244
      %s248 = smul.addr %s247, 4
      %s249 = scalar_lea.vmem %s1, %s248
      %p250 = pneg %p85
      %p251 = pneg %p82
      %p252 = scmp.lt.s32.totalorder %s21, 0
      %s253 = scalar_select %p252, %s21, 0
      %s254 = scalar_lea.vmem %s2, %s253
      %p255 = pneg %p111
      %p256 = pneg %p108
      %p257 = scmp.lt.s32.totalorder %s21, 0
      %s258 = scalar_select %p257, %s21, 0
      %s259 = scalar_lea.vmem %s3, %s258
      %p260 = pneg %p137
      %p261 = pneg %p134
      %p262 = pneg %p165
      %p263 = pneg %p162
      %s264 = smul.u32 32, %s20
      %p265 = scmp.lt.s32.totalorder %s264, 63
      %s266 = scalar_select %p265, %s264, 63
      %p267 = scmp.lt.s32.totalorder %s21, 0
      %s268 = scalar_select %p267, %s21, 0
      %s269 = sadd.s32 %s268, %s266
      %s270 = smul.addr %s269, 8
      %s271 = scalar_lea.vmem %s4, %s270
      %s272 = smul.u32 32, %s20
      %s273 = smul.u32 2, %s22
      %p274 = scmp.lt.s32.totalorder %s272, 63
      %s275 = scalar_select %p274, %s272, 63
      %p276 = scmp.lt.s32.totalorder %s273, 1
      %s277 = scalar_select %p276, %s273, 1
      %s278 = smul.addr %s275, 2
      %s279 = sadd.s32 %s277, %s278
      %s280 = smul.addr %s279, 4
      %s281 = scalar_lea.vmem %s0, %s280
      %s282 = smul.u32 32, %s20
      %s283 = smul.u32 2, %s22
      %s284 = smul.u32 19, %s22
      %p285 = scmp.lt.s32.totalorder %s284, 18
      %s286 = scalar_select %p285, %s284, 18
      %p287 = scmp.lt.s32.totalorder %s21, 0
      %s288 = scalar_select %p287, %s21, 0
      %s289 = sadd.s32 %s288, %s286
      %s290 = smul.addr %s289, 4
      %s291 = scalar_lea.vmem %s1, %s290
      %s292 = smul.u32 19, %s22
      %p293 = scmp.lt.s32.totalorder %s21, 0
      %s294 = scalar_select %p293, %s21, 0
      %s295 = scalar_lea.vmem %s2, %s294
      %p296 = scmp.lt.s32.totalorder %s21, 0
      %s297 = scalar_select %p296, %s21, 0
      %s298 = scalar_lea.vmem %s3, %s297
      %s299 = smul.u32 32, %s20
      %p300 = scmp.lt.s32.totalorder %s299, 63
      %s301 = scalar_select %p300, %s299, 63
      %p302 = scmp.lt.s32.totalorder %s21, 0
      %s303 = scalar_select %p302, %s21, 0
      %s304 = sadd.s32 %s303, %s301
      %s305 = smul.addr %s304, 8
      %s306 = scalar_lea.vmem %s4, %s305
      %s307 = smul.u32 32, %s20
      %p309 = scmp.eq.s32.totalorder %s22, 0
      // Predicated region
      $region37: #{e_densenet_forward.25} parent=35 // pred_check
        %p310 = pneg %p309
      $region38: #{e_densenet_forward.25} parent=35 // pred_check_branch
        %312 = sbr.rel (%p310) target = $region40
      $region39: #{e_densenet_forward.25} parent=35 // pred_region
        %vm313 = vcmask 130048
        %314 = vst.msk [vmem:[#allocation2] sm:$0xff] %vm313, 0.0
        %315 = vst.msk [vmem:[#allocation2 + $0x8] sm:$0xff] %vm313, 0.0
        %316 = vst.msk [vmem:[#allocation2 + $0x10] sm:$0xff] %vm313, 0.0
        %317 = vst.msk [vmem:[#allocation2 + $0x18] sm:$0xff] %vm313, 0.0
        %318 = vst.msk [vmem:[#allocation2 + $0x20] sm:$0xff] %vm313, 0.0
        %319 = vst.msk [vmem:[#allocation2 + $0x28] sm:$0xff] %vm313, 0.0
        %320 = vst.msk [vmem:[#allocation2 + $0x30] sm:$0xff] %vm313, 0.0
        %321 = vst.msk [vmem:[#allocation2 + $0x38] sm:$0xff] %vm313, 0.0
        %322 = vst.msk [vmem:[#allocation2 + $0x40] sm:$0xff] %vm313, 0.0
        %323 = vst.msk [vmem:[#allocation2 + $0x48] sm:$0xff] %vm313, 0.0
        %324 = vst.msk [vmem:[#allocation2 + $0x50] sm:$0xff] %vm313, 0.0
        %325 = vst.msk [vmem:[#allocation2 + $0x58] sm:$0xff] %vm313, 0.0
        %326 = vst.msk [vmem:[#allocation2 + $0x60] sm:$0xff] %vm313, 0.0
        %327 = vst.msk [vmem:[#allocation2 + $0x68] sm:$0xff] %vm313, 0.0
        %328 = vst.msk [vmem:[#allocation2 + $0x70] sm:$0xff] %vm313, 0.0
        %329 = vst.msk [vmem:[#allocation2 + $0x78] sm:$0xff] %vm313, 0.0
        %330 = vst.msk [vmem:[#allocation2 + $0x80] sm:$0xff] %vm313, 0.0
        %331 = vst.msk [vmem:[#allocation2 + $0x88] sm:$0xff] %vm313, 0.0
        %332 = vst.msk [vmem:[#allocation2 + $0x90] sm:$0xff] %vm313, 0.0
        %333 = vst.msk [vmem:[#allocation2 + $0x98] sm:$0xff] %vm313, 0.0
        %334 = vst.msk [vmem:[#allocation2 + $0xa0] sm:$0xff] %vm313, 0.0
        %335 = vst.msk [vmem:[#allocation2 + $0xa8] sm:$0xff] %vm313, 0.0
        %336 = vst.msk [vmem:[#allocation2 + $0xb0] sm:$0xff] %vm313, 0.0
        %337 = vst.msk [vmem:[#allocation2 + $0xb8] sm:$0xff] %vm313, 0.0
        %338 = vst.msk [vmem:[#allocation2 + $0xc0] sm:$0xff] %vm313, 0.0
        %339 = vst.msk [vmem:[#allocation2 + $0xc8] sm:$0xff] %vm313, 0.0
        %340 = vst.msk [vmem:[#allocation2 + $0xd0] sm:$0xff] %vm313, 0.0
        %341 = vst.msk [vmem:[#allocation2 + $0xd8] sm:$0xff] %vm313, 0.0
        %342 = vst.msk [vmem:[#allocation2 + $0xe0] sm:$0xff] %vm313, 0.0
        %343 = vst.msk [vmem:[#allocation2 + $0xe8] sm:$0xff] %vm313, 0.0
        %344 = vst.msk [vmem:[#allocation2 + $0xf0] sm:$0xff] %vm313, 0.0
        %345 = vst.msk [vmem:[#allocation2 + $0xf8] sm:$0xff] %vm313, 0.0
      $region40: #{e_densenet_forward.25} parent=35 // pred_fallthru
        _
      %v346 = vld [vmem:[%s281] sm:$0xff]
      %v347 = vld [vmem:[%s281 + $0x8] sm:$0xff]
      %v348 = vld [vmem:[%s281 + $0x10] sm:$0xff]
      %v349 = vld [vmem:[%s281 + $0x18] sm:$0xff]
      %v350 = vld [vmem:[%s281 + $0x20] sm:$0xff]
      %v351 = vld [vmem:[%s281 + $0x28] sm:$0xff]
      %v352 = vld [vmem:[%s281 + $0x30] sm:$0xff]
      %v353 = vld [vmem:[%s281 + $0x38] sm:$0xff]
      %v354 = vld [vmem:[%s281 + $0x40] sm:$0xff]
      %v355 = vld [vmem:[%s281 + $0x48] sm:$0xff]
      %v356 = vld [vmem:[%s281 + $0x50] sm:$0xff]
      %v357 = vld [vmem:[%s281 + $0x58] sm:$0xff]
      %v358 = vld [vmem:[%s281 + $0x60] sm:$0xff]
      %v359 = vld [vmem:[%s281 + $0x68] sm:$0xff]
      %v360 = vld [vmem:[%s281 + $0x70] sm:$0xff]
      %v361 = vld [vmem:[%s281 + $0x78] sm:$0xff]
      %v362 = vld [vmem:[%s281 + $0x80] sm:$0xff]
      %v363 = vld [vmem:[%s281 + $0x88] sm:$0xff]
      %v364 = vld [vmem:[%s281 + $0x90] sm:$0xff]
      %v365 = vld [vmem:[%s281 + $0x98] sm:$0xff]
      %v366 = vld [vmem:[%s281 + $0xa0] sm:$0xff]
      %v367 = vld [vmem:[%s281 + $0xa8] sm:$0xff]
      %v368 = vld [vmem:[%s281 + $0xb0] sm:$0xff]
      %v369 = vld [vmem:[%s281 + $0xb8] sm:$0xff]
      %v370 = vld [vmem:[%s281 + $0xc0] sm:$0xff]
      %v371 = vld [vmem:[%s281 + $0xc8] sm:$0xff]
      %v372 = vld [vmem:[%s281 + $0xd0] sm:$0xff]
      %v373 = vld [vmem:[%s281 + $0xd8] sm:$0xff]
      %v374 = vld [vmem:[%s281 + $0xe0] sm:$0xff]
      %v375 = vld [vmem:[%s281 + $0xe8] sm:$0xff]
      %v376 = vld [vmem:[%s281 + $0xf0] sm:$0xff]
      %v377 = vld [vmem:[%s281 + $0xf8] sm:$0xff]
      %v378 = vld [vmem:[#allocation2] sm:$0xff]
      %v379 = vld [vmem:[#allocation2 + $0x8] sm:$0xff]
      %v380 = vld [vmem:[#allocation2 + $0x10] sm:$0xff]
      %v381 = vld [vmem:[#allocation2 + $0x18] sm:$0xff]
      %v382 = vld [vmem:[#allocation2 + $0x20] sm:$0xff]
      %v383 = vld [vmem:[#allocation2 + $0x28] sm:$0xff]
      %v384 = vld [vmem:[#allocation2 + $0x30] sm:$0xff]
      %v385 = vld [vmem:[#allocation2 + $0x38] sm:$0xff]
      %v386 = vld [vmem:[#allocation2 + $0x40] sm:$0xff]
      %v387 = vld [vmem:[#allocation2 + $0x48] sm:$0xff]
      %v388 = vld [vmem:[#allocation2 + $0x50] sm:$0xff]
      %v389 = vld [vmem:[#allocation2 + $0x58] sm:$0xff]
      %v390 = vld [vmem:[#allocation2 + $0x60] sm:$0xff]
      %v391 = vld [vmem:[#allocation2 + $0x68] sm:$0xff]
      %v392 = vld [vmem:[#allocation2 + $0x70] sm:$0xff]
      %v393 = vld [vmem:[#allocation2 + $0x78] sm:$0xff]
      %v394 = vld [vmem:[#allocation2 + $0x80] sm:$0xff]
      %v395 = vld [vmem:[#allocation2 + $0x88] sm:$0xff]
      %v396 = vld [vmem:[#allocation2 + $0x90] sm:$0xff]
      %v397 = vld [vmem:[#allocation2 + $0x98] sm:$0xff]
      %v398 = vld [vmem:[#allocation2 + $0xa0] sm:$0xff]
      %v399 = vld [vmem:[#allocation2 + $0xa8] sm:$0xff]
      %v400 = vld [vmem:[#allocation2 + $0xb0] sm:$0xff]
      %v401 = vld [vmem:[#allocation2 + $0xb8] sm:$0xff]
      %v402 = vld [vmem:[#allocation2 + $0xc0] sm:$0xff]
      %v403 = vld [vmem:[#allocation2 + $0xc8] sm:$0xff]
      %v404 = vld [vmem:[#allocation2 + $0xd0] sm:$0xff]
      %v405 = vld [vmem:[#allocation2 + $0xd8] sm:$0xff]
      %v406 = vld [vmem:[#allocation2 + $0xe0] sm:$0xff]
      %v407 = vld [vmem:[#allocation2 + $0xe8] sm:$0xff]
      %v408 = vld [vmem:[#allocation2 + $0xf0] sm:$0xff]
      %v409 = vld [vmem:[#allocation2 + $0xf8] sm:$0xff]
      %v410 = vld [vmem:[%s291] sm:$0xf]
      %v411 = vld [vmem:[%s291 + $0x4] sm:$0xf]
      %v412 = vld [vmem:[%s291 + $0x8] sm:$0xf]
      %v413 = vld [vmem:[%s291 + $0xc] sm:$0xf]
      %v414 = vld [vmem:[%s291 + $0x10] sm:$0xf]
      %v415 = vld [vmem:[%s291 + $0x14] sm:$0xf]
      %v416 = vld [vmem:[%s291 + $0x18] sm:$0xf]
      %v417 = vld [vmem:[%s291 + $0x1c] sm:$0xf]
      %v418 = vld [vmem:[%s291 + $0x20] sm:$0xf]
      %v419 = vld [vmem:[%s291 + $0x24] sm:$0xf]
      %v420 = vld [vmem:[%s291 + $0x28] sm:$0xf]
      %v421 = vld [vmem:[%s291 + $0x2c] sm:$0xf]
      %v422 = vld [vmem:[%s291 + $0x30] sm:$0xf]
      %v423 = vld [vmem:[%s291 + $0x34] sm:$0xf]
      %v424 = vld [vmem:[%s291 + $0x38] sm:$0xf]
      %v425 = vld [vmem:[%s291 + $0x3c] sm:$0xf]
      %v426 = vld [vmem:[%s291 + $0x40] sm:$0xf]
      %v427 = vld [vmem:[%s291 + $0x44] sm:$0xf]
      %v428 = vld [vmem:[%s291 + $0x48] sm:$0x3]
      %v461 = vunpack.c.l.b16 %v346
      %v462 = vunpack.c.h.b16 %v346
      %v463 = vunpack.c.l.b16 %v347
      %v464 = vunpack.c.h.b16 %v347
      %v465 = vunpack.c.l.b16 %v348
      %v466 = vunpack.c.h.b16 %v348
      %v467 = vunpack.c.l.b16 %v349
      %v468 = vunpack.c.h.b16 %v349
      %v469 = vunpack.c.l.b16 %v350
      %v470 = vunpack.c.h.b16 %v350
      %v471 = vunpack.c.l.b16 %v351
      %v472 = vunpack.c.h.b16 %v351
      %v473 = vunpack.c.l.b16 %v352
      %v474 = vunpack.c.h.b16 %v352
      %v475 = vunpack.c.l.b16 %v353
      %v476 = vunpack.c.h.b16 %v353
      %v477 = vunpack.c.l.b16 %v354
      %v478 = vunpack.c.h.b16 %v354
      %v479 = vunpack.c.l.b16 %v355
      %v480 = vunpack.c.h.b16 %v355
      %v481 = vunpack.c.l.b16 %v356
      %v482 = vunpack.c.h.b16 %v356
      %v483 = vunpack.c.l.b16 %v357
      %v484 = vunpack.c.h.b16 %v357
      %v485 = vunpack.c.l.b16 %v358
      %v486 = vunpack.c.h.b16 %v358
      %v487 = vunpack.c.l.b16 %v359
      %v488 = vunpack.c.h.b16 %v359
      %v489 = vunpack.c.l.b16 %v360
      %v490 = vunpack.c.h.b16 %v360
      %v491 = vunpack.c.l.b16 %v361
      %v492 = vunpack.c.h.b16 %v361
      %v493 = vunpack.c.l.b16 %v362
      %v494 = vunpack.c.h.b16 %v362
      %v495 = vunpack.c.l.b16 %v363
      %v496 = vunpack.c.h.b16 %v363
      %v497 = vunpack.c.l.b16 %v364
      %v498 = vunpack.c.h.b16 %v364
      %v499 = vunpack.c.l.b16 %v365
      %v500 = vunpack.c.h.b16 %v365
      %v501 = vunpack.c.l.b16 %v366
      %v502 = vunpack.c.h.b16 %v366
      %v503 = vunpack.c.l.b16 %v367
      %v504 = vunpack.c.h.b16 %v367
      %v505 = vunpack.c.l.b16 %v368
      %v506 = vunpack.c.h.b16 %v368
      %v507 = vunpack.c.l.b16 %v369
      %v508 = vunpack.c.h.b16 %v369
      %v509 = vunpack.c.l.b16 %v370
      %v510 = vunpack.c.h.b16 %v370
      %v511 = vunpack.c.l.b16 %v371
      %v512 = vunpack.c.h.b16 %v371
      %v513 = vunpack.c.l.b16 %v372
      %v514 = vunpack.c.h.b16 %v372
      %v515 = vunpack.c.l.b16 %v373
      %v516 = vunpack.c.h.b16 %v373
      %v517 = vunpack.c.l.b16 %v374
      %v518 = vunpack.c.h.b16 %v374
      %v519 = vunpack.c.l.b16 %v375
      %v520 = vunpack.c.h.b16 %v375
      %v521 = vunpack.c.l.b16 %v376
      %v522 = vunpack.c.h.b16 %v376
      %v523 = vunpack.c.l.b16 %v377
      %v524 = vunpack.c.h.b16 %v377
      %v525 = vpack.c.b16 %v463, %v461
      %v526 = vpack.c.b16 %v464, %v462
      %v527 = vpack.c.b16 %v467, %v465
      %v528 = vpack.c.b16 %v468, %v466
      %v529 = vpack.c.b16 %v471, %v469
      %v530 = vpack.c.b16 %v472, %v470
      %v531 = vpack.c.b16 %v475, %v473
      %v532 = vpack.c.b16 %v476, %v474
      %v533 = vpack.c.b16 %v479, %v477
      %v534 = vpack.c.b16 %v480, %v478
      %v535 = vpack.c.b16 %v483, %v481
      %v536 = vpack.c.b16 %v484, %v482
      %v537 = vpack.c.b16 %v487, %v485
      %v538 = vpack.c.b16 %v488, %v486
      %v539 = vpack.c.b16 %v491, %v489
      %v540 = vpack.c.b16 %v492, %v490
      %v541 = vpack.c.b16 %v495, %v493
      %v542 = vpack.c.b16 %v496, %v494
      %v543 = vpack.c.b16 %v499, %v497
      %v544 = vpack.c.b16 %v500, %v498
      %v545 = vpack.c.b16 %v503, %v501
      %v546 = vpack.c.b16 %v504, %v502
      %v547 = vpack.c.b16 %v507, %v505
      %v548 = vpack.c.b16 %v508, %v506
      %v549 = vpack.c.b16 %v511, %v509
      %v550 = vpack.c.b16 %v512, %v510
      %v551 = vpack.c.b16 %v515, %v513
      %v552 = vpack.c.b16 %v516, %v514
      %v553 = vpack.c.b16 %v519, %v517
      %v554 = vpack.c.b16 %v520, %v518
      %v555 = vpack.c.b16 %v523, %v521
      %v556 = vpack.c.b16 %v524, %v522
      %v592 = vunpack.c.l.b16 %v410
      %v593 = vunpack.c.l.b16 %v411
      %v594 = vunpack.c.l.b16 %v412
      %v595 = vunpack.c.l.b16 %v413
      %v596 = vunpack.c.l.b16 %v414
      %v597 = vunpack.c.l.b16 %v415
      %v598 = vunpack.c.l.b16 %v416
      %v599 = vunpack.c.l.b16 %v417
      %v600 = vunpack.c.l.b16 %v418
      %v601 = vunpack.c.l.b16 %v419
      %v602 = vunpack.c.l.b16 %v420
      %v603 = vunpack.c.l.b16 %v421
      %v604 = vunpack.c.l.b16 %v422
      %v605 = vunpack.c.l.b16 %v423
      %v606 = vunpack.c.l.b16 %v424
      %v607 = vunpack.c.l.b16 %v425
      %v608 = vunpack.c.l.b16 %v426
      %v609 = vunpack.c.l.b16 %v427
      %v610 = vunpack.c.l.b16 %v428
      %v611 = vpack.c.b16 %v593, %v592
      %v612 = vpack.c.b16 %v595, %v594
      %v613 = vpack.c.b16 %v597, %v596
      %v614 = vpack.c.b16 %v599, %v598
      %v615 = vpack.c.b16 %v601, %v600
      %v616 = vpack.c.b16 %v603, %v602
      %v617 = vpack.c.b16 %v605, %v604
      %v618 = vpack.c.b16 %v607, %v606
      %v619 = vpack.c.b16 %v609, %v608
      %v620 = vpack.c.b16 %v610, %v610
      %vm630 = vcmask 154624
      %v632 = vsel %vm630, %v526, 0
      %v635 = vsel %vm630, %v528, 0
      %v638 = vsel %vm630, %v530, 0
      %v641 = vsel %vm630, %v532, 0
      %v644 = vsel %vm630, %v534, 0
      %v647 = vsel %vm630, %v536, 0
      %v650 = vsel %vm630, %v538, 0
      %v653 = vsel %vm630, %v540, 0
      %v656 = vsel %vm630, %v542, 0
      %v659 = vsel %vm630, %v544, 0
      %v662 = vsel %vm630, %v546, 0
      %v665 = vsel %vm630, %v548, 0
      %v668 = vsel %vm630, %v550, 0
      %v671 = vsel %vm630, %v552, 0
      %v674 = vsel %vm630, %v554, 0
      %v677 = vsel %vm630, %v556, 0
      %vm679 = vcmask 1040384
      %vm680 = vcmask 1041408
      %v681 = vsel %vm679, 4294967295, 65535
      %v682 = vsel %vm680, %v681, 0
      %v684 = vand.u32 %v620, %v682
      %686 = vmatprep.subr.bf16.mxu0 0
      %687 = vmatpush1.bf16.msra.mxu0 %v618
      %688 = vmatprep.subr.bf16.mxu0 0
      %689 = vmatpush1.bf16.msra.mxu0 %v617
      %690 = vmatprep.subr.bf16.mxu0 0
      %691 = vmatpush1.bf16.msra.mxu0 %v616
      %692 = vmatprep.subr.bf16.mxu0 0
      %693 = vmatpush1.bf16.msra.mxu0 %v615
      %694 = vmatprep.subr.bf16.mxu0 0
      %695 = vmatpush1.bf16.msra.mxu0 %v614
      %696 = vmatprep.subr.bf16.mxu0 0
      %697 = vmatpush1.bf16.msra.mxu0 %v613
      %698 = vmatprep.subr.bf16.mxu0 0
      %699 = vmatpush1.bf16.msra.mxu0 %v612
      %700 = vmatprep.subr.bf16.mxu0 0
      %701 = vmatpush1.bf16.msra.mxu0 %v611
      %702 = vmatprep.subr.bf16.mxu0 0
      %703 = vmatpush2.bf16.msra.mxu0 0
      %704 = vmatprep.subr.bf16.mxu0 0
      %705 = vmatpush2.bf16.msra.mxu0 0
      %706 = vmatprep.subr.bf16.mxu0 0
      %707 = vmatpush2.bf16.msra.mxu0 0
      %708 = vmatprep.subr.bf16.mxu0 0
      %709 = vmatpush2.bf16.msra.mxu0 0
      %710 = vmatprep.subr.bf16.mxu0 0
      %711 = vmatpush2.bf16.msra.mxu0 0
      %712 = vmatprep.subr.bf16.mxu0 0
      %713 = vmatpush2.bf16.msra.mxu0 0
      %714 = vmatprep.subr.bf16.mxu0 0
      %715 = vmatpush2.bf16.msra.mxu0 %v684
      %716 = vmatprep.subr.bf16.mxu0 0
      %717 = vmatpush2.bf16.msra.mxu0 %v619
      %718 = vmatprep.mubr.bf16.mxu0 %v632
      %719 = vmatmul.mubr.bf16.gmra.mxu0 %v525
      %v720 = vpop.f32.mrf.mxu0
      %v721 = vadd.f32 0.0, %v720
      %v722 = vpop.f32.mrf.mxu0
      %v723 = vpop.f32.mrf.mxu0
      %v724 = vadd.f32 0.0, %v723
      %v725 = vpop.f32.mrf.mxu0
      %726 = vmatprep.mubr.bf16.mxu0 %v635
      %727 = vmatmul.mubr.bf16.gmra.mxu0 %v527
      %v728 = vpop.f32.mrf.mxu0
      %v729 = vadd.f32 0.0, %v728
      %v730 = vpop.f32.mrf.mxu0
      %v731 = vpop.f32.mrf.mxu0
      %v732 = vadd.f32 0.0, %v731
      %v733 = vpop.f32.mrf.mxu0
      %734 = vmatprep.mubr.bf16.mxu0 %v638
      %735 = vmatmul.mubr.bf16.gmra.mxu0 %v529
      %v736 = vpop.f32.mrf.mxu0
      %v737 = vadd.f32 0.0, %v736
      %v738 = vpop.f32.mrf.mxu0
      %v739 = vpop.f32.mrf.mxu0
      %v740 = vadd.f32 0.0, %v739
      %v741 = vpop.f32.mrf.mxu0
      %742 = vmatprep.mubr.bf16.mxu0 %v641
      %743 = vmatmul.mubr.bf16.gmra.mxu0 %v531
      %v744 = vpop.f32.mrf.mxu0
      %v745 = vadd.f32 0.0, %v744
      %v746 = vpop.f32.mrf.mxu0
      %v747 = vpop.f32.mrf.mxu0
      %v748 = vadd.f32 0.0, %v747
      %v749 = vpop.f32.mrf.mxu0
      %750 = vmatprep.mubr.bf16.mxu0 %v644
      %751 = vmatmul.mubr.bf16.gmra.mxu0 %v533
      %v752 = vpop.f32.mrf.mxu0
      %v753 = vadd.f32 0.0, %v752
      %v754 = vpop.f32.mrf.mxu0
      %v755 = vpop.f32.mrf.mxu0
      %v756 = vadd.f32 0.0, %v755
      %v757 = vpop.f32.mrf.mxu0
      %758 = vmatprep.mubr.bf16.mxu0 %v647
      %759 = vmatmul.mubr.bf16.gmra.mxu0 %v535
      %v760 = vpop.f32.mrf.mxu0
      %v761 = vadd.f32 0.0, %v760
      %v762 = vpop.f32.mrf.mxu0
      %v763 = vpop.f32.mrf.mxu0
      %v764 = vadd.f32 0.0, %v763
      %v765 = vpop.f32.mrf.mxu0
      %766 = vmatprep.mubr.bf16.mxu0 %v650
      %767 = vmatmul.mubr.bf16.gmra.mxu0 %v537
      %v768 = vpop.f32.mrf.mxu0
      %v769 = vadd.f32 0.0, %v768
      %v770 = vpop.f32.mrf.mxu0
      %v771 = vpop.f32.mrf.mxu0
      %v772 = vadd.f32 0.0, %v771
      %v773 = vpop.f32.mrf.mxu0
      %774 = vmatprep.mubr.bf16.mxu0 %v653
      %775 = vmatmul.mubr.bf16.gmra.mxu0 %v539
      %v776 = vpop.f32.mrf.mxu0
      %v777 = vadd.f32 0.0, %v776
      %v778 = vpop.f32.mrf.mxu0
      %v779 = vpop.f32.mrf.mxu0
      %v780 = vadd.f32 0.0, %v779
      %v781 = vpop.f32.mrf.mxu0
      %782 = vmatprep.mubr.bf16.mxu0 %v656
      %783 = vmatmul.mubr.bf16.gmra.mxu0 %v541
      %v784 = vpop.f32.mrf.mxu0
      %v785 = vadd.f32 0.0, %v784
      %v786 = vpop.f32.mrf.mxu0
      %v787 = vpop.f32.mrf.mxu0
      %v788 = vadd.f32 0.0, %v787
      %v789 = vpop.f32.mrf.mxu0
      %790 = vmatprep.mubr.bf16.mxu0 %v659
      %791 = vmatmul.mubr.bf16.gmra.mxu0 %v543
      %v792 = vpop.f32.mrf.mxu0
      %v793 = vadd.f32 0.0, %v792
      %v794 = vpop.f32.mrf.mxu0
      %v795 = vpop.f32.mrf.mxu0
      %v796 = vadd.f32 0.0, %v795
      %v797 = vpop.f32.mrf.mxu0
      %798 = vmatprep.mubr.bf16.mxu0 %v662
      %799 = vmatmul.mubr.bf16.gmra.mxu0 %v545
      %v800 = vpop.f32.mrf.mxu0
      %v801 = vadd.f32 0.0, %v800
      %v802 = vpop.f32.mrf.mxu0
      %v803 = vpop.f32.mrf.mxu0
      %v804 = vadd.f32 0.0, %v803
      %v805 = vpop.f32.mrf.mxu0
      %806 = vmatprep.mubr.bf16.mxu0 %v665
      %807 = vmatmul.mubr.bf16.gmra.mxu0 %v547
      %v808 = vpop.f32.mrf.mxu0
      %v809 = vadd.f32 0.0, %v808
      %v810 = vpop.f32.mrf.mxu0
      %v811 = vpop.f32.mrf.mxu0
      %v812 = vadd.f32 0.0, %v811
      %v813 = vpop.f32.mrf.mxu0
      %814 = vmatprep.mubr.bf16.mxu0 %v668
      %815 = vmatmul.mubr.bf16.gmra.mxu0 %v549
      %v816 = vpop.f32.mrf.mxu0
      %v817 = vadd.f32 0.0, %v816
      %v818 = vpop.f32.mrf.mxu0
      %v819 = vpop.f32.mrf.mxu0
      %v820 = vadd.f32 0.0, %v819
      %v821 = vpop.f32.mrf.mxu0
      %822 = vmatprep.mubr.bf16.mxu0 %v671
      %823 = vmatmul.mubr.bf16.gmra.mxu0 %v551
      %v824 = vpop.f32.mrf.mxu0
      %v825 = vadd.f32 0.0, %v824
      %v826 = vpop.f32.mrf.mxu0
      %v827 = vpop.f32.mrf.mxu0
      %v828 = vadd.f32 0.0, %v827
      %v829 = vpop.f32.mrf.mxu0
      %830 = vmatprep.mubr.bf16.mxu0 %v674
      %831 = vmatmul.mubr.bf16.gmra.mxu0 %v553
      %v832 = vpop.f32.mrf.mxu0
      %v833 = vadd.f32 0.0, %v832
      %v834 = vpop.f32.mrf.mxu0
      %v835 = vpop.f32.mrf.mxu0
      %v836 = vadd.f32 0.0, %v835
      %v837 = vpop.f32.mrf.mxu0
      %838 = vmatprep.mubr.bf16.mxu0 %v677
      %839 = vmatmul.mubr.bf16.gmra.mxu0 %v555
      %v840 = vpop.f32.mrf.mxu0
      %v841 = vadd.f32 0.0, %v840
      %v842 = vpop.f32.mrf.mxu0
      %v843 = vpop.f32.mrf.mxu0
      %v844 = vadd.f32 0.0, %v843
      %v845 = vpop.f32.mrf.mxu0
      %846 = vdwg.mxu0
      %v847 = vadd.f32 %v378, %v721
      %v848 = vadd.f32 %v379, %v724
      %v849 = vadd.f32 %v380, %v729
      %v850 = vadd.f32 %v381, %v732
      %v851 = vadd.f32 %v382, %v737
      %v852 = vadd.f32 %v383, %v740
      %v853 = vadd.f32 %v384, %v745
      %v854 = vadd.f32 %v385, %v748
      %v855 = vadd.f32 %v386, %v753
      %v856 = vadd.f32 %v387, %v756
      %v857 = vadd.f32 %v388, %v761
      %v858 = vadd.f32 %v389, %v764
      %v859 = vadd.f32 %v390, %v769
      %v860 = vadd.f32 %v391, %v772
      %v861 = vadd.f32 %v392, %v777
      %v862 = vadd.f32 %v393, %v780
      %v863 = vadd.f32 %v394, %v785
      %v864 = vadd.f32 %v395, %v788
      %v865 = vadd.f32 %v396, %v793
      %v866 = vadd.f32 %v397, %v796
      %v867 = vadd.f32 %v398, %v801
      %v868 = vadd.f32 %v399, %v804
      %v869 = vadd.f32 %v400, %v809
      %v870 = vadd.f32 %v401, %v812
      %v871 = vadd.f32 %v402, %v817
      %v872 = vadd.f32 %v403, %v820
      %v873 = vadd.f32 %v404, %v825
      %v874 = vadd.f32 %v405, %v828
      %v875 = vadd.f32 %v406, %v833
      %v876 = vadd.f32 %v407, %v836
      %v877 = vadd.f32 %v408, %v841
      %v878 = vadd.f32 %v409, %v844
      %vm879 = vcmask 130048
      %880 = vst.msk [vmem:[#allocation2] sm:$0xff] %vm879, %v847
      %881 = vst.msk [vmem:[#allocation2 + $0x8] sm:$0xff] %vm879, %v848
      %882 = vst.msk [vmem:[#allocation2 + $0x10] sm:$0xff] %vm879, %v849
      %883 = vst.msk [vmem:[#allocation2 + $0x18] sm:$0xff] %vm879, %v850
      %884 = vst.msk [vmem:[#allocation2 + $0x20] sm:$0xff] %vm879, %v851
      %885 = vst.msk [vmem:[#allocation2 + $0x28] sm:$0xff] %vm879, %v852
      %886 = vst.msk [vmem:[#allocation2 + $0x30] sm:$0xff] %vm879, %v853
      %887 = vst.msk [vmem:[#allocation2 + $0x38] sm:$0xff] %vm879, %v854
      %888 = vst.msk [vmem:[#allocation2 + $0x40] sm:$0xff] %vm879, %v855
      %889 = vst.msk [vmem:[#allocation2 + $0x48] sm:$0xff] %vm879, %v856
      %890 = vst.msk [vmem:[#allocation2 + $0x50] sm:$0xff] %vm879, %v857
      %891 = vst.msk [vmem:[#allocation2 + $0x58] sm:$0xff] %vm879, %v858
      %892 = vst.msk [vmem:[#allocation2 + $0x60] sm:$0xff] %vm879, %v859
      %893 = vst.msk [vmem:[#allocation2 + $0x68] sm:$0xff] %vm879, %v860
      %894 = vst.msk [vmem:[#allocation2 + $0x70] sm:$0xff] %vm879, %v861
      %895 = vst.msk [vmem:[#allocation2 + $0x78] sm:$0xff] %vm879, %v862
      %896 = vst.msk [vmem:[#allocation2 + $0x80] sm:$0xff] %vm879, %v863
      %897 = vst.msk [vmem:[#allocation2 + $0x88] sm:$0xff] %vm879, %v864
      %898 = vst.msk [vmem:[#allocation2 + $0x90] sm:$0xff] %vm879, %v865
      %899 = vst.msk [vmem:[#allocation2 + $0x98] sm:$0xff] %vm879, %v866
      %900 = vst.msk [vmem:[#allocation2 + $0xa0] sm:$0xff] %vm879, %v867
      %901 = vst.msk [vmem:[#allocation2 + $0xa8] sm:$0xff] %vm879, %v868
      %902 = vst.msk [vmem:[#allocation2 + $0xb0] sm:$0xff] %vm879, %v869
      %903 = vst.msk [vmem:[#allocation2 + $0xb8] sm:$0xff] %vm879, %v870
      %904 = vst.msk [vmem:[#allocation2 + $0xc0] sm:$0xff] %vm879, %v871
      %905 = vst.msk [vmem:[#allocation2 + $0xc8] sm:$0xff] %vm879, %v872
      %906 = vst.msk [vmem:[#allocation2 + $0xd0] sm:$0xff] %vm879, %v873
      %907 = vst.msk [vmem:[#allocation2 + $0xd8] sm:$0xff] %vm879, %v874
      %908 = vst.msk [vmem:[#allocation2 + $0xe0] sm:$0xff] %vm879, %v875
      %909 = vst.msk [vmem:[#allocation2 + $0xe8] sm:$0xff] %vm879, %v876
      %910 = vst.msk [vmem:[#allocation2 + $0xf0] sm:$0xff] %vm879, %v877
      %911 = vst.msk [vmem:[#allocation2 + $0xf8] sm:$0xff] %vm879, %v878
      // Predicated region
      $region41: #{e_densenet_forward.25} parent=35 // pred_check
        %p912 = pneg %p309
      $region42: #{e_densenet_forward.25} parent=35 // pred_check_branch
        %914 = sbr.rel (%p912) target = $region44
      $region43: #{e_densenet_forward.25} parent=35 // pred_region
        %v915 = vld [vmem:[#allocation2] sm:$0xff]
        %v916 = vld [vmem:[#allocation2 + $0x8] sm:$0xff]
        %v917 = vld [vmem:[#allocation2 + $0x10] sm:$0xff]
        %v918 = vld [vmem:[#allocation2 + $0x18] sm:$0xff]
        %v919 = vld [vmem:[#allocation2 + $0x20] sm:$0xff]
        %v920 = vld [vmem:[#allocation2 + $0x28] sm:$0xff]
        %v921 = vld [vmem:[#allocation2 + $0x30] sm:$0xff]
        %v922 = vld [vmem:[#allocation2 + $0x38] sm:$0xff]
        %v923 = vld [vmem:[#allocation2 + $0x40] sm:$0xff]
        %v924 = vld [vmem:[#allocation2 + $0x48] sm:$0xff]
        %v925 = vld [vmem:[#allocation2 + $0x50] sm:$0xff]
        %v926 = vld [vmem:[#allocation2 + $0x58] sm:$0xff]
        %v927 = vld [vmem:[#allocation2 + $0x60] sm:$0xff]
        %v928 = vld [vmem:[#allocation2 + $0x68] sm:$0xff]
        %v929 = vld [vmem:[#allocation2 + $0x70] sm:$0xff]
        %v930 = vld [vmem:[#allocation2 + $0x78] sm:$0xff]
        %v931 = vld [vmem:[#allocation2 + $0x80] sm:$0xff]
        %v932 = vld [vmem:[#allocation2 + $0x88] sm:$0xff]
        %v933 = vld [vmem:[#allocation2 + $0x90] sm:$0xff]
        %v934 = vld [vmem:[#allocation2 + $0x98] sm:$0xff]
        %v935 = vld [vmem:[#allocation2 + $0xa0] sm:$0xff]
        %v936 = vld [vmem:[#allocation2 + $0xa8] sm:$0xff]
        %v937 = vld [vmem:[#allocation2 + $0xb0] sm:$0xff]
        %v938 = vld [vmem:[#allocation2 + $0xb8] sm:$0xff]
        %v939 = vld [vmem:[#allocation2 + $0xc0] sm:$0xff]
        %v940 = vld [vmem:[#allocation2 + $0xc8] sm:$0xff]
        %v941 = vld [vmem:[#allocation2 + $0xd0] sm:$0xff]
        %v942 = vld [vmem:[#allocation2 + $0xd8] sm:$0xff]
        %v943 = vld [vmem:[#allocation2 + $0xe0] sm:$0xff]
        %v944 = vld [vmem:[#allocation2 + $0xe8] sm:$0xff]
        %v945 = vld [vmem:[#allocation2 + $0xf0] sm:$0xff]
        %v946 = vld [vmem:[#allocation2 + $0xf8] sm:$0xff]
        %v947 = vld [vmem:[%s295] sm:$0x1]
        %v949 = vlaneseq
        %v950 = vshrl.u32 %v949, 7
        %v951 = vsub.s32 0, %v950
        %v952 = vrot.slane %v947, %v951
        %v954 = vmul.f32 %v915, %v952
        %v955 = vmul.f32 %v916, %v952
        %v956 = vmul.f32 %v917, %v952
        %v957 = vmul.f32 %v918, %v952
        %v958 = vmul.f32 %v919, %v952
        %v959 = vmul.f32 %v920, %v952
        %v960 = vmul.f32 %v921, %v952
        %v961 = vmul.f32 %v922, %v952
        %v962 = vmul.f32 %v923, %v952
        %v963 = vmul.f32 %v924, %v952
        %v964 = vmul.f32 %v925, %v952
        %v965 = vmul.f32 %v926, %v952
        %v966 = vmul.f32 %v927, %v952
        %v967 = vmul.f32 %v928, %v952
        %v968 = vmul.f32 %v929, %v952
        %v969 = vmul.f32 %v930, %v952
        %v970 = vmul.f32 %v931, %v952
        %v971 = vmul.f32 %v932, %v952
        %v972 = vmul.f32 %v933, %v952
        %v973 = vmul.f32 %v934, %v952
        %v974 = vmul.f32 %v935, %v952
        %v975 = vmul.f32 %v936, %v952
        %v976 = vmul.f32 %v937, %v952
        %v977 = vmul.f32 %v938, %v952
        %v978 = vmul.f32 %v939, %v952
        %v979 = vmul.f32 %v940, %v952
        %v980 = vmul.f32 %v941, %v952
        %v981 = vmul.f32 %v942, %v952
        %v982 = vmul.f32 %v943, %v952
        %v983 = vmul.f32 %v944, %v952
        %v984 = vmul.f32 %v945, %v952
        %v985 = vmul.f32 %v946, %v952
        %v986 = vld [vmem:[%s298] sm:$0x1]
        %v988 = vlaneseq
        %v989 = vshrl.u32 %v988, 7
        %v990 = vsub.s32 0, %v989
        %v991 = vrot.slane %v986, %v990
        %v993 = vadd.f32 %v954, %v991
        %v994 = vadd.f32 %v955, %v991
        %v995 = vadd.f32 %v956, %v991
        %v996 = vadd.f32 %v957, %v991
        %v997 = vadd.f32 %v958, %v991
        %v998 = vadd.f32 %v959, %v991
        %v999 = vadd.f32 %v960, %v991
        %v1000 = vadd.f32 %v961, %v991
        %v1001 = vadd.f32 %v962, %v991
        %v1002 = vadd.f32 %v963, %v991
        %v1003 = vadd.f32 %v964, %v991
        %v1004 = vadd.f32 %v965, %v991
        %v1005 = vadd.f32 %v966, %v991
        %v1006 = vadd.f32 %v967, %v991
        %v1007 = vadd.f32 %v968, %v991
        %v1008 = vadd.f32 %v969, %v991
        %v1009 = vadd.f32 %v970, %v991
        %v1010 = vadd.f32 %v971, %v991
        %v1011 = vadd.f32 %v972, %v991
        %v1012 = vadd.f32 %v973, %v991
        %v1013 = vadd.f32 %v974, %v991
        %v1014 = vadd.f32 %v975, %v991
        %v1015 = vadd.f32 %v976, %v991
        %v1016 = vadd.f32 %v977, %v991
        %v1017 = vadd.f32 %v978, %v991
        %v1018 = vadd.f32 %v979, %v991
        %v1019 = vadd.f32 %v980, %v991
        %v1020 = vadd.f32 %v981, %v991
        %v1021 = vadd.f32 %v982, %v991
        %v1022 = vadd.f32 %v983, %v991
        %v1023 = vadd.f32 %v984, %v991
        %v1024 = vadd.f32 %v985, %v991
        %v1025 = vmax.f32 %v993, 0.0
        %v1026 = vmax.f32 %v994, 0.0
        %v1027 = vmax.f32 %v995, 0.0
        %v1028 = vmax.f32 %v996, 0.0
        %v1029 = vmax.f32 %v997, 0.0
        %v1030 = vmax.f32 %v998, 0.0
        %v1031 = vmax.f32 %v999, 0.0
        %v1032 = vmax.f32 %v1000, 0.0
        %v1033 = vmax.f32 %v1001, 0.0
        %v1034 = vmax.f32 %v1002, 0.0
        %v1035 = vmax.f32 %v1003, 0.0
        %v1036 = vmax.f32 %v1004, 0.0
        %v1037 = vmax.f32 %v1005, 0.0
        %v1038 = vmax.f32 %v1006, 0.0
        %v1039 = vmax.f32 %v1007, 0.0
        %v1040 = vmax.f32 %v1008, 0.0
        %v1041 = vmax.f32 %v1009, 0.0
        %v1042 = vmax.f32 %v1010, 0.0
        %v1043 = vmax.f32 %v1011, 0.0
        %v1044 = vmax.f32 %v1012, 0.0
        %v1045 = vmax.f32 %v1013, 0.0
        %v1046 = vmax.f32 %v1014, 0.0
        %v1047 = vmax.f32 %v1015, 0.0
        %v1048 = vmax.f32 %v1016, 0.0
        %v1049 = vmax.f32 %v1017, 0.0
        %v1050 = vmax.f32 %v1018, 0.0
        %v1051 = vmax.f32 %v1019, 0.0
        %v1052 = vmax.f32 %v1020, 0.0
        %v1053 = vmax.f32 %v1021, 0.0
        %v1054 = vmax.f32 %v1022, 0.0
        %v1055 = vmax.f32 %v1023, 0.0
        %v1056 = vmax.f32 %v1024, 0.0
        %1057 = vst.msk [vmem:[%s306] sm:$0xff] %vm879, %v1025
        %1058 = vst.msk [vmem:[%s306 + $0x8] sm:$0xff] %vm879, %v1026
        %1059 = vst.msk [vmem:[%s306 + $0x10] sm:$0xff] %vm879, %v1027
        %1060 = vst.msk [vmem:[%s306 + $0x18] sm:$0xff] %vm879, %v1028
        %1061 = vst.msk [vmem:[%s306 + $0x20] sm:$0xff] %vm879, %v1029
        %1062 = vst.msk [vmem:[%s306 + $0x28] sm:$0xff] %vm879, %v1030
        %1063 = vst.msk [vmem:[%s306 + $0x30] sm:$0xff] %vm879, %v1031
        %1064 = vst.msk [vmem:[%s306 + $0x38] sm:$0xff] %vm879, %v1032
        %1065 = vst.msk [vmem:[%s306 + $0x40] sm:$0xff] %vm879, %v1033
        %1066 = vst.msk [vmem:[%s306 + $0x48] sm:$0xff] %vm879, %v1034
        %1067 = vst.msk [vmem:[%s306 + $0x50] sm:$0xff] %vm879, %v1035
        %1068 = vst.msk [vmem:[%s306 + $0x58] sm:$0xff] %vm879, %v1036
        %1069 = vst.msk [vmem:[%s306 + $0x60] sm:$0xff] %vm879, %v1037
        %1070 = vst.msk [vmem:[%s306 + $0x68] sm:$0xff] %vm879, %v1038
        %1071 = vst.msk [vmem:[%s306 + $0x70] sm:$0xff] %vm879, %v1039
        %1072 = vst.msk [vmem:[%s306 + $0x78] sm:$0xff] %vm879, %v1040
        %1073 = vst.msk [vmem:[%s306 + $0x80] sm:$0xff] %vm879, %v1041
        %1074 = vst.msk [vmem:[%s306 + $0x88] sm:$0xff] %vm879, %v1042
        %1075 = vst.msk [vmem:[%s306 + $0x90] sm:$0xff] %vm879, %v1043
        %1076 = vst.msk [vmem:[%s306 + $0x98] sm:$0xff] %vm879, %v1044
        %1077 = vst.msk [vmem:[%s306 + $0xa0] sm:$0xff] %vm879, %v1045
        %1078 = vst.msk [vmem:[%s306 + $0xa8] sm:$0xff] %vm879, %v1046
        %1079 = vst.msk [vmem:[%s306 + $0xb0] sm:$0xff] %vm879, %v1047
        %1080 = vst.msk [vmem:[%s306 + $0xb8] sm:$0xff] %vm879, %v1048
        %1081 = vst.msk [vmem:[%s306 + $0xc0] sm:$0xff] %vm879, %v1049
        %1082 = vst.msk [vmem:[%s306 + $0xc8] sm:$0xff] %vm879, %v1050
        %1083 = vst.msk [vmem:[%s306 + $0xd0] sm:$0xff] %vm879, %v1051
        %1084 = vst.msk [vmem:[%s306 + $0xd8] sm:$0xff] %vm879, %v1052
        %1085 = vst.msk [vmem:[%s306 + $0xe0] sm:$0xff] %vm879, %v1053
        %1086 = vst.msk [vmem:[%s306 + $0xe8] sm:$0xff] %vm879, %v1054
        %1087 = vst.msk [vmem:[%s306 + $0xf0] sm:$0xff] %vm879, %v1055
        %1088 = vst.msk [vmem:[%s306 + $0xf8] sm:$0xff] %vm879, %v1056
      $region44: #{e_densenet_forward.25} parent=35 // pred_fallthru
        _
      %s1089 = smul.u32 32, %s20
      %p1090 = scmp.lt.s32.totalorder %s1089, 63
      %s1091 = scalar_select %p1090, %s1089, 63
      %p1092 = scmp.lt.s32.totalorder %s21, 0
      %s1093 = scalar_select %p1092, %s21, 0
      %s1094 = sadd.s32 %s1093, %s1091
      %s1095 = smul.addr %s1094, 8
      %s1096 = scalar_lea.vmem %s4, %s1095
      // Predicated region
      $region45: #{e_densenet_forward.25} parent=35 // pred_check
        %p1097 = pneg %p162
      $region46: #{e_densenet_forward.25} parent=35 // pred_check_branch
        %1099 = sbr.rel (%p1097) target = $region48
      $region47: #{e_densenet_forward.25} parent=35 // pred_region
        %s1100 = smul.u32 32, %s20
      $region48: #{e_densenet_forward.25} parent=35 // pred_fallthru
        _
    $region36: #{e_densenet_forward.25} parent=5 // pred_fallthru
      _
    %p1101 = scmp.le.s32.totalorder 2, %s10
    // Predicated region
    $region49: #{e_densenet_forward.25} parent=5 // pred_check
      %p1102 = pneg %p1101
    $region50: #{e_densenet_forward.25} parent=5 // pred_check_branch
      %1104 = sbr.rel (%p1102) target = $region52
    $region51: #{e_densenet_forward.25} parent=5 // pred_region
      %s1105 = ssub.s32 %s10, 2
      // Predicated region
      $region53: #{e_densenet_forward.25} parent=51 // pred_check
        %p1106 = pneg %p168
      $region54: #{e_densenet_forward.25} parent=51 // pred_check_branch
        %1108 = sbr.rel (%p1106) target = $region56
      $region55: #{e_densenet_forward.25} parent=51 // pred_region
        %s1109 = smul.u32 32, %s23
        %p1110 = scmp.lt.s32.totalorder %s1109, 63
        %s1111 = scalar_select %p1110, %s1109, 63
        %p1112 = scmp.lt.s32.totalorder %s24, 0
        %s1113 = scalar_select %p1112, %s24, 0
        %s1114 = sadd.s32 %s1113, %s1111
        %s1115 = smul.addr %s1114, 8
        %s1116 = scalar_lea.vmem %s4, %s1115
      $region56: #{e_densenet_forward.25} parent=51 // pred_fallthru
        _
    $region52: #{e_densenet_forward.25} parent=5 // pred_fallthru
      _
  $region6: #{e_densenet_forward.25} parent=0 // loop_footer
    %s14 = sadd.s32 1, %s10
  $region7: #{e_densenet_forward.25} parent=0 // loop_footer_branch
    %9 = sbr.rel target = $region3
  $region8: #{e_densenet_forward.25} parent=0 // loop_exit
    _

// kernel: e_densenet_forward.26
$region0: #{e_densenet_forward.26}
  #allocation0 [shape = 'u32[]', space=smem, size = 0x4, offset = 0x4, fixed_abs, tag = 'smem constant byte address 0x4 - core index']
  #allocation1 [shape = 'u32[144,128]{1,0:T(1,128)}', space=vmem, size = 0x12000, scoped, tag = 'internal scratch']
  #allocation2 [shape = 'f32[128,16]{1,0:T(8,128)}', space=vmem, size = 0x10000, scoped, tag = 'scratch operand']
  %s0 = inlined_call_operand.vmem [shape: f32[9,128,16], index: 0, kind: input, shape index: {}]
  %s1 = inlined_call_operand.vmem [shape: f32[128,16], index: 1, kind: output, shape index: {}]
  %s2 = sld [smem:[#allocation0]]
  $region45: #{e_densenet_forward.26} parent=0
    _
  %s4 = ssub.s32 1, %s2
  %s5 = scalar_select 0, %s4, %s2
  loop: start=0, step=1, limit=11
  $region2: #{e_densenet_forward.26} parent=0 // loop_pre_header
    _
  $region3: #{e_densenet_forward.26} parent=0 // loop_header
    %s7 = sphi 0, %s11
    %p8 = scmp.ge.s32.totalorder %s7, 11
    %s14 = sphi 0, %s26
    %s15 = sphi 0, %s22
    %s16 = sphi 0, %s14
    %s17 = sphi 0, %s15
    %s18 = sphi 0, %s16
    %s19 = sphi 0, %s17
    %s31 = sphi 0, %s33
    %s34 = sphi 0, %s31
    %s35 = sphi 0, %s34
    %s51 = sphi 0, %s35
    %s57 = sphi 0, %s59
    %s60 = sphi 0, %s57
    %s61 = sphi 0, %s60
    %s77 = sphi 0, %s61
  $region4: #{e_densenet_forward.26} parent=0 // loop_header_branch
    %10 = sbr.rel (%p8) target = $region8
  $region5: #{e_densenet_forward.26} parent=0 // loop_body
    %s12 = ssub.s32 %s7, 1
    %s13 = ssub.s32 %s7, 2
    %s20 = sadd.s32 1, %s15
    %p21 = scmp.ge.s32.totalorder %s20, 9
    %s22 = scalar_select %p21, 0, %s20
    %s23 = sadd.s32 1, %s14
    %s24 = scalar_select %p21, %s23, %s14
    %p25 = scmp.ge.s32.totalorder %s24, 1
    %s26 = scalar_select %p25, 0, %s24
    %s27 = ssub.s32 %s15, %s22
    %s28 = ssub.s32 %s14, %s26
    %s29 = sor.u32 %s27, %s28
    %p30 = scmp.eq.s32.totalorder %s29, 0
    %s32 = sadd.s32 %s31, 1
    %s33 = scalar_select %p30, %s31, %s32
    %p36 = pneg %p30
    %p37 = scmp.eq.s32.totalorder %s7, 8
    %p38 = por %p36, %p37
    %p39 = scmp.ne.s32.totalorder %s31, %s34
    %p40 = scmp.eq.s32.totalorder %s7, 0
    %p41 = por %p39, %p40
    %p42 = scmp.ne.s32.totalorder %s31, %s34
    %p43 = scmp.eq.s32.totalorder %s12, 8
    %p44 = por %p42, %p43
    %p45 = scmp.ne.s32.totalorder %s34, %s35
    %p46 = scmp.eq.s32.totalorder %s12, 0
    %p47 = por %p45, %p46
    %p48 = scmp.ne.s32.totalorder %s34, %s35
    %p49 = scmp.eq.s32.totalorder %s13, 8
    %p50 = por %p48, %p49
    %p52 = scmp.ne.s32.totalorder %s35, %s51
    %p53 = scmp.eq.s32.totalorder %s13, 0
    %p54 = por %p52, %p53
    %s55 = ssub.s32 %s14, %s26
    %p56 = scmp.eq.s32.totalorder %s55, 0
    %s58 = sadd.s32 %s57, 1
    %s59 = scalar_select %p56, %s57, %s58
    %p62 = pneg %p56
    %p63 = scmp.eq.s32.totalorder %s7, 8
    %p64 = por %p62, %p63
    %p65 = scmp.ne.s32.totalorder %s57, %s60
    %p66 = scmp.eq.s32.totalorder %s7, 0
    %p67 = por %p65, %p66
    %p68 = scmp.ne.s32.totalorder %s57, %s60
    %p69 = scmp.eq.s32.totalorder %s12, 8
    %p70 = por %p68, %p69
    %p71 = scmp.ne.s32.totalorder %s60, %s61
    %p72 = scmp.eq.s32.totalorder %s12, 0
    %p73 = por %p71, %p72
    %p74 = scmp.ne.s32.totalorder %s60, %s61
    %p75 = scmp.eq.s32.totalorder %s13, 8
    %p76 = por %p74, %p75
    %p78 = scmp.ne.s32.totalorder %s61, %s77
    %p79 = scmp.eq.s32.totalorder %s13, 0
    %p80 = por %p78, %p79
    %p81 = scmp.le.s32.totalorder 1, %s7
    %p82 = scmp.lt.s32.totalorder %s7, 10
    %p83 = pnand %p81, %p82
    %p84 = pneg %p83
    // Predicated region
    $region9: #{e_densenet_forward.26} parent=5 // pred_check
      _
    $region10: #{e_densenet_forward.26} parent=5 // pred_check_branch
      %86 = sbr.rel (%p83) target = $region12
    $region11: #{e_densenet_forward.26} parent=5 // pred_region
      %s87 = ssub.s32 %s7, 1
    $region12: #{e_densenet_forward.26} parent=5 // pred_fallthru
      _
    %p88 = scmp.lt.s32.totalorder %s7, 9
    // Predicated region
    $region13: #{e_densenet_forward.26} parent=5 // pred_check
      %p89 = pneg %p88
    $region14: #{e_densenet_forward.26} parent=5 // pred_check_branch
      %91 = sbr.rel (%p89) target = $region16
    $region15: #{e_densenet_forward.26} parent=5 // pred_region
      // Predicated region
      $region17: #{e_densenet_forward.26} parent=15 // pred_check
        %p92 = pneg %p41
      $region18: #{e_densenet_forward.26} parent=15 // pred_check_branch
        %94 = sbr.rel (%p92) target = $region20
      $region19: #{e_densenet_forward.26} parent=15 // pred_region
        %s95 = smul.u32 16, %s14
        %p96 = scmp.lt.s32.totalorder %s15, 8
        %s97 = scalar_select %p96, %s15, 8
        %p98 = scmp.lt.s32.totalorder %s95, 15
        %s99 = scalar_select %p98, %s95, 15
        %s100 = smul.addr %s97, 16
        %s101 = sadd.s32 %s99, %s100
        %s102 = smul.addr %s101, 8
        %s103 = scalar_lea.vmem %s0, %s102
        %s104 = smul.u32 16, %s14
      $region20: #{e_densenet_forward.26} parent=15 // pred_fallthru
        _
    $region16: #{e_densenet_forward.26} parent=5 // pred_fallthru
      _
    %p105 = scmp.le.s32.totalorder 1, %s7
    %p106 = scmp.lt.s32.totalorder %s7, 10
    %p107 = pnand %p105, %p106
    %p108 = pneg %p107
    // Predicated region
    $region21: #{e_densenet_forward.26} parent=5 // pred_check
      _
    $region22: #{e_densenet_forward.26} parent=5 // pred_check_branch
      %110 = sbr.rel (%p107) target = $region24
    $region23: #{e_densenet_forward.26} parent=5 // pred_region
      %s111 = ssub.s32 %s7, 1
      %s112 = smul.u32 16, %s16
      %p113 = scmp.lt.s32.totalorder %s17, 8
      %s114 = scalar_select %p113, %s17, 8
      %p115 = scmp.lt.s32.totalorder %s112, 15
      %s116 = scalar_select %p115, %s112, 15
      %s117 = smul.addr %s114, 16
      %s118 = sadd.s32 %s116, %s117
      %s119 = smul.addr %s118, 8
      %s120 = scalar_lea.vmem %s0, %s119
      %p121 = pneg %p47
      %p122 = pneg %p44
      %p123 = pneg %p73
      %p124 = pneg %p70
      %s125 = smul.u32 16, %s16
      %p126 = scmp.lt.s32.totalorder %s125, 15
      %s127 = scalar_select %p126, %s125, 15
      %s128 = smul.addr %s127, 8
      %s129 = scalar_lea.vmem %s1, %s128
      %s130 = smul.u32 16, %s16
      %p131 = scmp.lt.s32.totalorder %s17, 8
      %s132 = scalar_select %p131, %s17, 8
      %p133 = scmp.lt.s32.totalorder %s130, 15
      %s134 = scalar_select %p133, %s130, 15
      %s135 = smul.addr %s132, 16
      %s136 = sadd.s32 %s134, %s135
      %s137 = smul.addr %s136, 8
      %s138 = scalar_lea.vmem %s0, %s137
      %s139 = smul.u32 16, %s16
      %s140 = smul.u32 16, %s16
      %p141 = scmp.lt.s32.totalorder %s140, 15
      %s142 = scalar_select %p141, %s140, 15
      %s143 = smul.addr %s142, 8
      %s144 = scalar_lea.vmem %s1, %s143
      %s145 = smul.u32 16, %s16
      %p146 = scmp.eq.s32.totalorder %s17, 0
      // Predicated region
      $region25: #{e_densenet_forward.26} parent=23 // pred_check
        %p147 = pneg %p146
      $region26: #{e_densenet_forward.26} parent=23 // pred_check_branch
        %149 = sbr.rel (%p147) target = $region28
      $region27: #{e_densenet_forward.26} parent=23 // pred_region
        %vm150 = vcmask 130048
        %151 = vst.msk [vmem:[#allocation2] sm:$0xff] %vm150, -inf
        %152 = vst.msk [vmem:[#allocation2 + $0x8] sm:$0xff] %vm150, -inf
        %153 = vst.msk [vmem:[#allocation2 + $0x10] sm:$0xff] %vm150, -inf
        %154 = vst.msk [vmem:[#allocation2 + $0x18] sm:$0xff] %vm150, -inf
        %155 = vst.msk [vmem:[#allocation2 + $0x20] sm:$0xff] %vm150, -inf
        %156 = vst.msk [vmem:[#allocation2 + $0x28] sm:$0xff] %vm150, -inf
        %157 = vst.msk [vmem:[#allocation2 + $0x30] sm:$0xff] %vm150, -inf
        %158 = vst.msk [vmem:[#allocation2 + $0x38] sm:$0xff] %vm150, -inf
        %159 = vst.msk [vmem:[#allocation2 + $0x40] sm:$0xff] %vm150, -inf
        %160 = vst.msk [vmem:[#allocation2 + $0x48] sm:$0xff] %vm150, -inf
        %161 = vst.msk [vmem:[#allocation2 + $0x50] sm:$0xff] %vm150, -inf
        %162 = vst.msk [vmem:[#allocation2 + $0x58] sm:$0xff] %vm150, -inf
        %163 = vst.msk [vmem:[#allocation2 + $0x60] sm:$0xff] %vm150, -inf
        %164 = vst.msk [vmem:[#allocation2 + $0x68] sm:$0xff] %vm150, -inf
        %165 = vst.msk [vmem:[#allocation2 + $0x70] sm:$0xff] %vm150, -inf
        %166 = vst.msk [vmem:[#allocation2 + $0x78] sm:$0xff] %vm150, -inf
      $region28: #{e_densenet_forward.26} parent=23 // pred_fallthru
        _
      %v167 = vld [vmem:[#allocation2] sm:$0xff]
      %v168 = vld [vmem:[#allocation2 + $0x8] sm:$0xff]
      %v169 = vld [vmem:[#allocation2 + $0x10] sm:$0xff]
      %v170 = vld [vmem:[#allocation2 + $0x18] sm:$0xff]
      %v171 = vld [vmem:[#allocation2 + $0x20] sm:$0xff]
      %v172 = vld [vmem:[#allocation2 + $0x28] sm:$0xff]
      %v173 = vld [vmem:[#allocation2 + $0x30] sm:$0xff]
      %v174 = vld [vmem:[#allocation2 + $0x38] sm:$0xff]
      %v175 = vld [vmem:[#allocation2 + $0x40] sm:$0xff]
      %v176 = vld [vmem:[#allocation2 + $0x48] sm:$0xff]
      %v177 = vld [vmem:[#allocation2 + $0x50] sm:$0xff]
      %v178 = vld [vmem:[#allocation2 + $0x58] sm:$0xff]
      %v179 = vld [vmem:[#allocation2 + $0x60] sm:$0xff]
      %v180 = vld [vmem:[#allocation2 + $0x68] sm:$0xff]
      %v181 = vld [vmem:[#allocation2 + $0x70] sm:$0xff]
      %v182 = vld [vmem:[#allocation2 + $0x78] sm:$0xff]
      %v183 = vld [vmem:[%s138] sm:$0xff]
      %v184 = vld [vmem:[%s138 + $0x8] sm:$0xff]
      %v185 = vld [vmem:[%s138 + $0x10] sm:$0xff]
      %v186 = vld [vmem:[%s138 + $0x18] sm:$0xff]
      %v187 = vld [vmem:[%s138 + $0x20] sm:$0xff]
      %v188 = vld [vmem:[%s138 + $0x28] sm:$0xff]
      %v189 = vld [vmem:[%s138 + $0x30] sm:$0xff]
      %v190 = vld [vmem:[%s138 + $0x38] sm:$0xff]
      %v191 = vld [vmem:[%s138 + $0x40] sm:$0xff]
      %v192 = vld [vmem:[%s138 + $0x48] sm:$0xff]
      %v193 = vld [vmem:[%s138 + $0x50] sm:$0xff]
      %v194 = vld [vmem:[%s138 + $0x58] sm:$0xff]
      %v195 = vld [vmem:[%s138 + $0x60] sm:$0xff]
      %v196 = vld [vmem:[%s138 + $0x68] sm:$0xff]
      %v197 = vld [vmem:[%s138 + $0x70] sm:$0xff]
      %v198 = vld [vmem:[%s138 + $0x78] sm:$0xff]
      %v199 = vmax.f32 %v167, %v183
      %v200 = vmax.f32 %v168, %v184
      %v201 = vmax.f32 %v169, %v185
      %v202 = vmax.f32 %v170, %v186
      %v203 = vmax.f32 %v171, %v187
      %v204 = vmax.f32 %v172, %v188
      %v205 = vmax.f32 %v173, %v189
      %v206 = vmax.f32 %v174, %v190
      %v207 = vmax.f32 %v175, %v191
      %v208 = vmax.f32 %v176, %v192
      %v209 = vmax.f32 %v177, %v193
      %v210 = vmax.f32 %v178, %v194
      %v211 = vmax.f32 %v179, %v195
      %v212 = vmax.f32 %v180, %v196
      %v213 = vmax.f32 %v181, %v197
      %v214 = vmax.f32 %v182, %v198
      %vm215 = vcmask 130048
      %216 = vst.msk [vmem:[#allocation2] sm:$0xff] %vm215, %v199
      %217 = vst.msk [vmem:[#allocation2 + $0x8] sm:$0xff] %vm215, %v200
      %218 = vst.msk [vmem:[#allocation2 + $0x10] sm:$0xff] %vm215, %v201
      %219 = vst.msk [vmem:[#allocation2 + $0x18] sm:$0xff] %vm215, %v202
      %220 = vst.msk [vmem:[#allocation2 + $0x20] sm:$0xff] %vm215, %v203
      %221 = vst.msk [vmem:[#allocation2 + $0x28] sm:$0xff] %vm215, %v204
      %222 = vst.msk [vmem:[#allocation2 + $0x30] sm:$0xff] %vm215, %v205
      %223 = vst.msk [vmem:[#allocation2 + $0x38] sm:$0xff] %vm215, %v206
      %224 = vst.msk [vmem:[#allocation2 + $0x40] sm:$0xff] %vm215, %v207
      %225 = vst.msk [vmem:[#allocation2 + $0x48] sm:$0xff] %vm215, %v208
      %226 = vst.msk [vmem:[#allocation2 + $0x50] sm:$0xff] %vm215, %v209
      %227 = vst.msk [vmem:[#allocation2 + $0x58] sm:$0xff] %vm215, %v210
      %228 = vst.msk [vmem:[#allocation2 + $0x60] sm:$0xff] %vm215, %v211
      %229 = vst.msk [vmem:[#allocation2 + $0x68] sm:$0xff] %vm215, %v212
      %230 = vst.msk [vmem:[#allocation2 + $0x70] sm:$0xff] %vm215, %v213
      %231 = vst.msk [vmem:[#allocation2 + $0x78] sm:$0xff] %vm215, %v214
      %p232 = scmp.eq.s32.totalorder %s17, 8
      // Predicated region
      $region29: #{e_densenet_forward.26} parent=23 // pred_check
        %p233 = pneg %p232
      $region30: #{e_densenet_forward.26} parent=23 // pred_check_branch
        %235 = sbr.rel (%p233) target = $region32
      $region31: #{e_densenet_forward.26} parent=23 // pred_region
        %v236 = vld [vmem:[#allocation2] sm:$0xff]
        %v237 = vld [vmem:[#allocation2 + $0x8] sm:$0xff]
        %v238 = vld [vmem:[#allocation2 + $0x10] sm:$0xff]
        %v239 = vld [vmem:[#allocation2 + $0x18] sm:$0xff]
        %v240 = vld [vmem:[#allocation2 + $0x20] sm:$0xff]
        %v241 = vld [vmem:[#allocation2 + $0x28] sm:$0xff]
        %v242 = vld [vmem:[#allocation2 + $0x30] sm:$0xff]
        %v243 = vld [vmem:[#allocation2 + $0x38] sm:$0xff]
        %v244 = vld [vmem:[#allocation2 + $0x40] sm:$0xff]
        %v245 = vld [vmem:[#allocation2 + $0x48] sm:$0xff]
        %v246 = vld [vmem:[#allocation2 + $0x50] sm:$0xff]
        %v247 = vld [vmem:[#allocation2 + $0x58] sm:$0xff]
        %v248 = vld [vmem:[#allocation2 + $0x60] sm:$0xff]
        %v249 = vld [vmem:[#allocation2 + $0x68] sm:$0xff]
        %v250 = vld [vmem:[#allocation2 + $0x70] sm:$0xff]
        %v251 = vld [vmem:[#allocation2 + $0x78] sm:$0xff]
        %252 = vst.msk [vmem:[%s144] sm:$0xff] %vm215, %v236
        %253 = vst.msk [vmem:[%s144 + $0x8] sm:$0xff] %vm215, %v237
        %254 = vst.msk [vmem:[%s144 + $0x10] sm:$0xff] %vm215, %v238
        %255 = vst.msk [vmem:[%s144 + $0x18] sm:$0xff] %vm215, %v239
        %256 = vst.msk [vmem:[%s144 + $0x20] sm:$0xff] %vm215, %v240
        %257 = vst.msk [vmem:[%s144 + $0x28] sm:$0xff] %vm215, %v241
        %258 = vst.msk [vmem:[%s144 + $0x30] sm:$0xff] %vm215, %v242
        %259 = vst.msk [vmem:[%s144 + $0x38] sm:$0xff] %vm215, %v243
        %260 = vst.msk [vmem:[%s144 + $0x40] sm:$0xff] %vm215, %v244
        %261 = vst.msk [vmem:[%s144 + $0x48] sm:$0xff] %vm215, %v245
        %262 = vst.msk [vmem:[%s144 + $0x50] sm:$0xff] %vm215, %v246
        %263 = vst.msk [vmem:[%s144 + $0x58] sm:$0xff] %vm215, %v247
        %264 = vst.msk [vmem:[%s144 + $0x60] sm:$0xff] %vm215, %v248
        %265 = vst.msk [vmem:[%s144 + $0x68] sm:$0xff] %vm215, %v249
        %266 = vst.msk [vmem:[%s144 + $0x70] sm:$0xff] %vm215, %v250
        %267 = vst.msk [vmem:[%s144 + $0x78] sm:$0xff] %vm215, %v251
      $region32: #{e_densenet_forward.26} parent=23 // pred_fallthru
        _
      %s268 = smul.u32 16, %s16
      %p269 = scmp.lt.s32.totalorder %s268, 15
      %s270 = scalar_select %p269, %s268, 15
      %s271 = smul.addr %s270, 8
      %s272 = scalar_lea.vmem %s1, %s271
      // Predicated region
      $region33: #{e_densenet_forward.26} parent=23 // pred_check
        %p273 = pneg %p70
      $region34: #{e_densenet_forward.26} parent=23 // pred_check_branch
        %275 = sbr.rel (%p273) target = $region36
      $region35: #{e_densenet_forward.26} parent=23 // pred_region
        %s276 = smul.u32 16, %s16
      $region36: #{e_densenet_forward.26} parent=23 // pred_fallthru
        _
      // Predicated region
      $region37: #{e_densenet_forward.26} parent=23 // pred_check
        %p277 = pneg %p70
      $region38: #{e_densenet_forward.26} parent=23 // pred_check_branch
        %279 = sbr.rel (%p277) target = $region40
      $region39: #{e_densenet_forward.26} parent=23 // pred_region
        %s280 = smul.u32 16, %s16
        %p281 = scmp.lt.s32.totalorder %s280, 15
        %s282 = scalar_select %p281, %s280, 15
        %s283 = smul.addr %s282, 8
        %s284 = scalar_lea.vmem %s1, %s283
      $region40: #{e_densenet_forward.26} parent=23 // pred_fallthru
        _
    $region24: #{e_densenet_forward.26} parent=5 // pred_fallthru
      _
    %p285 = scmp.le.s32.totalorder 2, %s7
    // Predicated region
    $region41: #{e_densenet_forward.26} parent=5 // pred_check
      %p286 = pneg %p285
    $region42: #{e_densenet_forward.26} parent=5 // pred_check_branch
      %288 = sbr.rel (%p286) target = $region44
    $region43: #{e_densenet_forward.26} parent=5 // pred_region
      %s289 = ssub.s32 %s7, 2
    $region44: #{e_densenet_forward.26} parent=5 // pred_fallthru
      _
  $region6: #{e_densenet_forward.26} parent=0 // loop_footer
    %s11 = sadd.s32 1, %s7
  $region7: #{e_densenet_forward.26} parent=0 // loop_footer_branch
    %6 = sbr.rel target = $region3
  $region8: #{e_densenet_forward.26} parent=0 // loop_exit
    _

// kernel: e_densenet_forward.27
$region0: #{e_densenet_forward.27}
  #allocation0 [shape = 'u32[]', space=smem, size = 0x4, offset = 0x4, fixed_abs, tag = 'smem constant byte address 0x4 - core index']
  #allocation1 [shape = 'u32[144,128]{1,0:T(1,128)}', space=vmem, size = 0x12000, scoped, tag = 'internal scratch']
  #allocation2 [shape = 'f32[128,32]{1,0:T(8,128)}', space=vmem, size = 0x10000, scoped, tag = 'scratch operand']
  %s0 = inlined_call_operand.vmem [shape: f32[128,16], index: 0, kind: input, shape index: {}]
  %s1 = inlined_call_operand.vmem [shape: bf16[16,32], index: 1, kind: input, shape index: {}]
  %s2 = inlined_call_operand.vmem [shape: f32[1,16], index: 2, kind: input, shape index: {}]
  %s3 = inlined_call_operand.vmem [shape: f32[1,16], index: 3, kind: input, shape index: {}]
  %s4 = inlined_call_operand.vmem [shape: f32[1,32], index: 4, kind: input, shape index: {}]
  %s5 = inlined_call_operand.vmem [shape: f32[1,32], index: 5, kind: input, shape index: {}]
  %s6 = inlined_call_operand.vmem [shape: f32[128,32], index: 6, kind: output, shape index: {}]
  %s7 = sld [smem:[#allocation0]]
  $region42: #{e_densenet_forward.27} parent=0
    _
  %s9 = ssub.s32 1, %s7
  %s10 = scalar_select 0, %s9, %s7
  // Predicated region
  $region2: #{e_densenet_forward.27} parent=0 // pred_check
    _
  $region3: #{e_densenet_forward.27} parent=0 // pred_check_branch
    %12 = sbr.rel (0) target = $region5
  $region4: #{e_densenet_forward.27} parent=0 // pred_region
    _
  $region5: #{e_densenet_forward.27} parent=0 // pred_fallthru
    _
  // Predicated region
  $region6: #{e_densenet_forward.27} parent=0 // pred_check
    _
  $region7: #{e_densenet_forward.27} parent=0 // pred_check_branch
    %14 = sbr.rel (0) target = $region9
  $region8: #{e_densenet_forward.27} parent=0 // pred_region
    _
  $region9: #{e_densenet_forward.27} parent=0 // pred_fallthru
    _
  // Predicated region
  $region10: #{e_densenet_forward.27} parent=0 // pred_check
    _
  $region11: #{e_densenet_forward.27} parent=0 // pred_check_branch
    %16 = sbr.rel (0) target = $region13
  $region12: #{e_densenet_forward.27} parent=0 // pred_region
    _
  $region13: #{e_densenet_forward.27} parent=0 // pred_fallthru
    _
  // Predicated region
  $region14: #{e_densenet_forward.27} parent=0 // pred_check
    _
  $region15: #{e_densenet_forward.27} parent=0 // pred_check_branch
    %18 = sbr.rel (0) target = $region17
  $region16: #{e_densenet_forward.27} parent=0 // pred_region
    _
  $region17: #{e_densenet_forward.27} parent=0 // pred_fallthru
    _
  // Predicated region
  $region18: #{e_densenet_forward.27} parent=0 // pred_check
    _
  $region19: #{e_densenet_forward.27} parent=0 // pred_check_branch
    %20 = sbr.rel (0) target = $region21
  $region20: #{e_densenet_forward.27} parent=0 // pred_region
    _
  $region21: #{e_densenet_forward.27} parent=0 // pred_fallthru
    _
  // Predicated region
  $region22: #{e_densenet_forward.27} parent=0 // pred_check
    _
  $region23: #{e_densenet_forward.27} parent=0 // pred_check_branch
    %22 = sbr.rel (0) target = $region25
  $region24: #{e_densenet_forward.27} parent=0 // pred_region
    _
  $region25: #{e_densenet_forward.27} parent=0 // pred_fallthru
    _
  %p24 = scmp.eq.s32.totalorder 0, 0
  // Predicated region
  $region26: #{e_densenet_forward.27} parent=0 // pred_check
    %p25 = pneg %p24
  $region27: #{e_densenet_forward.27} parent=0 // pred_check_branch
    %27 = sbr.rel (%p25) target = $region29
  $region28: #{e_densenet_forward.27} parent=0 // pred_region
    %vm28 = vcmask 261120
    %29 = vst.msk [vmem:[#allocation2] sm:$0xff] %vm28, 0.0
    %30 = vst.msk [vmem:[#allocation2 + $0x8] sm:$0xff] %vm28, 0.0
    %31 = vst.msk [vmem:[#allocation2 + $0x10] sm:$0xff] %vm28, 0.0
    %32 = vst.msk [vmem:[#allocation2 + $0x18] sm:$0xff] %vm28, 0.0
    %33 = vst.msk [vmem:[#allocation2 + $0x20] sm:$0xff] %vm28, 0.0
    %34 = vst.msk [vmem:[#allocation2 + $0x28] sm:$0xff] %vm28, 0.0
    %35 = vst.msk [vmem:[#allocation2 + $0x30] sm:$0xff] %vm28, 0.0
    %36 = vst.msk [vmem:[#allocation2 + $0x38] sm:$0xff] %vm28, 0.0
    %37 = vst.msk [vmem:[#allocation2 + $0x40] sm:$0xff] %vm28, 0.0
    %38 = vst.msk [vmem:[#allocation2 + $0x48] sm:$0xff] %vm28, 0.0
    %39 = vst.msk [vmem:[#allocation2 + $0x50] sm:$0xff] %vm28, 0.0
    %40 = vst.msk [vmem:[#allocation2 + $0x58] sm:$0xff] %vm28, 0.0
    %41 = vst.msk [vmem:[#allocation2 + $0x60] sm:$0xff] %vm28, 0.0
    %42 = vst.msk [vmem:[#allocation2 + $0x68] sm:$0xff] %vm28, 0.0
    %43 = vst.msk [vmem:[#allocation2 + $0x70] sm:$0xff] %vm28, 0.0
    %44 = vst.msk [vmem:[#allocation2 + $0x78] sm:$0xff] %vm28, 0.0
  $region29: #{e_densenet_forward.27} parent=0 // pred_fallthru
    _
  %v45 = vld [vmem:[%s0] sm:$0xff]
  %v46 = vld [vmem:[%s0 + $0x8] sm:$0xff]
  %v47 = vld [vmem:[%s0 + $0x10] sm:$0xff]
  %v48 = vld [vmem:[%s0 + $0x18] sm:$0xff]
  %v49 = vld [vmem:[%s0 + $0x20] sm:$0xff]
  %v50 = vld [vmem:[%s0 + $0x28] sm:$0xff]
  %v51 = vld [vmem:[%s0 + $0x30] sm:$0xff]
  %v52 = vld [vmem:[%s0 + $0x38] sm:$0xff]
  %v53 = vld [vmem:[%s0 + $0x40] sm:$0xff]
  %v54 = vld [vmem:[%s0 + $0x48] sm:$0xff]
  %v55 = vld [vmem:[%s0 + $0x50] sm:$0xff]
  %v56 = vld [vmem:[%s0 + $0x58] sm:$0xff]
  %v57 = vld [vmem:[%s0 + $0x60] sm:$0xff]
  %v58 = vld [vmem:[%s0 + $0x68] sm:$0xff]
  %v59 = vld [vmem:[%s0 + $0x70] sm:$0xff]
  %v60 = vld [vmem:[%s0 + $0x78] sm:$0xff]
  %v61 = vld [vmem:[%s2] sm:$0x1]
  %v63 = vlaneseq
  %v64 = vshrl.u32 %v63, 7
  %v65 = vsub.s32 0, %v64
  %v66 = vrot.slane %v61, %v65
  %v68 = vmul.f32 %v45, %v66
  %v69 = vmul.f32 %v46, %v66
  %v70 = vmul.f32 %v47, %v66
  %v71 = vmul.f32 %v48, %v66
  %v72 = vmul.f32 %v49, %v66
  %v73 = vmul.f32 %v50, %v66
  %v74 = vmul.f32 %v51, %v66
  %v75 = vmul.f32 %v52, %v66
  %v76 = vmul.f32 %v53, %v66
  %v77 = vmul.f32 %v54, %v66
  %v78 = vmul.f32 %v55, %v66
  %v79 = vmul.f32 %v56, %v66
  %v80 = vmul.f32 %v57, %v66
  %v81 = vmul.f32 %v58, %v66
  %v82 = vmul.f32 %v59, %v66
  %v83 = vmul.f32 %v60, %v66
  %v84 = vld [vmem:[%s3] sm:$0x1]
  %v86 = vlaneseq
  %v87 = vshrl.u32 %v86, 7
  %v88 = vsub.s32 0, %v87
  %v89 = vrot.slane %v84, %v88
  %v91 = vadd.f32 %v68, %v89
  %v92 = vadd.f32 %v69, %v89
  %v93 = vadd.f32 %v70, %v89
  %v94 = vadd.f32 %v71, %v89
  %v95 = vadd.f32 %v72, %v89
  %v96 = vadd.f32 %v73, %v89
  %v97 = vadd.f32 %v74, %v89
  %v98 = vadd.f32 %v75, %v89
  %v99 = vadd.f32 %v76, %v89
  %v100 = vadd.f32 %v77, %v89
  %v101 = vadd.f32 %v78, %v89
  %v102 = vadd.f32 %v79, %v89
  %v103 = vadd.f32 %v80, %v89
  %v104 = vadd.f32 %v81, %v89
  %v105 = vadd.f32 %v82, %v89
  %v106 = vadd.f32 %v83, %v89
  %v107 = vmax.f32 %v91, 0.0
  %v108 = vmax.f32 %v92, 0.0
  %v109 = vmax.f32 %v93, 0.0
  %v110 = vmax.f32 %v94, 0.0
  %v111 = vmax.f32 %v95, 0.0
  %v112 = vmax.f32 %v96, 0.0
  %v113 = vmax.f32 %v97, 0.0
  %v114 = vmax.f32 %v98, 0.0
  %v115 = vmax.f32 %v99, 0.0
  %v116 = vmax.f32 %v100, 0.0
  %v117 = vmax.f32 %v101, 0.0
  %v118 = vmax.f32 %v102, 0.0
  %v119 = vmax.f32 %v103, 0.0
  %v120 = vmax.f32 %v104, 0.0
  %v121 = vmax.f32 %v105, 0.0
  %v122 = vmax.f32 %v106, 0.0
  %v123 = vld [vmem:[#allocation2] sm:$0xff]
  %v124 = vld [vmem:[#allocation2 + $0x8] sm:$0xff]
  %v125 = vld [vmem:[#allocation2 + $0x10] sm:$0xff]
  %v126 = vld [vmem:[#allocation2 + $0x18] sm:$0xff]
  %v127 = vld [vmem:[#allocation2 + $0x20] sm:$0xff]
  %v128 = vld [vmem:[#allocation2 + $0x28] sm:$0xff]
  %v129 = vld [vmem:[#allocation2 + $0x30] sm:$0xff]
  %v130 = vld [vmem:[#allocation2 + $0x38] sm:$0xff]
  %v131 = vld [vmem:[#allocation2 + $0x40] sm:$0xff]
  %v132 = vld [vmem:[#allocation2 + $0x48] sm:$0xff]
  %v133 = vld [vmem:[#allocation2 + $0x50] sm:$0xff]
  %v134 = vld [vmem:[#allocation2 + $0x58] sm:$0xff]
  %v135 = vld [vmem:[#allocation2 + $0x60] sm:$0xff]
  %v136 = vld [vmem:[#allocation2 + $0x68] sm:$0xff]
  %v137 = vld [vmem:[#allocation2 + $0x70] sm:$0xff]
  %v138 = vld [vmem:[#allocation2 + $0x78] sm:$0xff]
  %v139 = vpack.c.bf16 %v108, %v107
  %v140 = vpack.c.bf16 %v110, %v109
  %v141 = vpack.c.bf16 %v112, %v111
  %v142 = vpack.c.bf16 %v114, %v113
  %v143 = vpack.c.bf16 %v116, %v115
  %v144 = vpack.c.bf16 %v118, %v117
  %v145 = vpack.c.bf16 %v120, %v119
  %v146 = vpack.c.bf16 %v122, %v121
  %v147 = vld [vmem:[%s1] sm:$0xf]
  %v148 = vld [vmem:[%s1 + $0x4] sm:$0xf]
  %v151 = vunpack.c.l.b16 %v147
  %v152 = vunpack.c.l.b16 %v148
  %v153 = vpack.c.b16 %v152, %v151
  %vm155 = vcmask 130048
  %v157 = vsel %vm155, %v139, 0
  %v160 = vsel %vm155, %v140, 0
  %v163 = vsel %vm155, %v141, 0
  %v166 = vsel %vm155, %v142, 0
  %v169 = vsel %vm155, %v143, 0
  %v172 = vsel %vm155, %v144, 0
  %v175 = vsel %vm155, %v145, 0
  %v178 = vsel %vm155, %v146, 0
  %180 = vmatprep.subr.bf16.mxu0 0
  %181 = vmatpush1.bf16.msra.mxu0 0
  %182 = vmatprep.subr.bf16.mxu0 0
  %183 = vmatpush1.bf16.msra.mxu0 0
  %184 = vmatprep.subr.bf16.mxu0 0
  %185 = vmatpush1.bf16.msra.mxu0 0
  %186 = vmatprep.subr.bf16.mxu0 0
  %187 = vmatpush1.bf16.msra.mxu0 0
  %188 = vmatprep.subr.bf16.mxu0 0
  %189 = vmatpush1.bf16.msra.mxu0 0
  %190 = vmatprep.subr.bf16.mxu0 0
  %191 = vmatpush1.bf16.msra.mxu0 0
  %192 = vmatprep.subr.bf16.mxu0 0
  %193 = vmatpush1.bf16.msra.mxu0 0
  %194 = vmatprep.subr.bf16.mxu0 0
  %195 = vmatpush1.bf16.msra.mxu0 %v153
  %196 = vmatprep.subr.bf16.mxu0 0
  %197 = vmatpush2.bf16.msra.mxu0 0
  %198 = vmatprep.subr.bf16.mxu0 0
  %199 = vmatpush2.bf16.msra.mxu0 0
  %200 = vmatprep.subr.bf16.mxu0 0
  %201 = vmatpush2.bf16.msra.mxu0 0
  %202 = vmatprep.subr.bf16.mxu0 0
  %203 = vmatpush2.bf16.msra.mxu0 0
  %204 = vmatprep.subr.bf16.mxu0 0
  %205 = vmatpush2.bf16.msra.mxu0 0
  %206 = vmatprep.subr.bf16.mxu0 0
  %207 = vmatpush2.bf16.msra.mxu0 0
  %208 = vmatprep.subr.bf16.mxu0 0
  %209 = vmatpush2.bf16.msra.mxu0 0
  %210 = vmatprep.subr.bf16.mxu0 0
  %211 = vmatpush2.bf16.msra.mxu0 0
  %212 = vmatprep.mubr.bf16.mxu0 0
  %213 = vmatmul.mubr.bf16.gmra.mxu0 %v157
  %v214 = vpop.f32.mrf.mxu0
  %v215 = vadd.f32 0.0, %v214
  %v216 = vpop.f32.mrf.mxu0
  %v217 = vpop.f32.mrf.mxu0
  %v218 = vadd.f32 0.0, %v217
  %v219 = vpop.f32.mrf.mxu0
  %220 = vmatprep.mubr.bf16.mxu0 0
  %221 = vmatmul.mubr.bf16.gmra.mxu0 %v160
  %v222 = vpop.f32.mrf.mxu0
  %v223 = vadd.f32 0.0, %v222
  %v224 = vpop.f32.mrf.mxu0
  %v225 = vpop.f32.mrf.mxu0
  %v226 = vadd.f32 0.0, %v225
  %v227 = vpop.f32.mrf.mxu0
  %228 = vmatprep.mubr.bf16.mxu0 0
  %229 = vmatmul.mubr.bf16.gmra.mxu0 %v163
  %v230 = vpop.f32.mrf.mxu0
  %v231 = vadd.f32 0.0, %v230
  %v232 = vpop.f32.mrf.mxu0
  %v233 = vpop.f32.mrf.mxu0
  %v234 = vadd.f32 0.0, %v233
  %v235 = vpop.f32.mrf.mxu0
  %236 = vmatprep.mubr.bf16.mxu0 0
  %237 = vmatmul.mubr.bf16.gmra.mxu0 %v166
  %v238 = vpop.f32.mrf.mxu0
  %v239 = vadd.f32 0.0, %v238
  %v240 = vpop.f32.mrf.mxu0
  %v241 = vpop.f32.mrf.mxu0
  %v242 = vadd.f32 0.0, %v241
  %v243 = vpop.f32.mrf.mxu0
  %244 = vmatprep.mubr.bf16.mxu0 0
  %245 = vmatmul.mubr.bf16.gmra.mxu0 %v169
  %v246 = vpop.f32.mrf.mxu0
  %v247 = vadd.f32 0.0, %v246
  %v248 = vpop.f32.mrf.mxu0
  %v249 = vpop.f32.mrf.mxu0
  %v250 = vadd.f32 0.0, %v249
  %v251 = vpop.f32.mrf.mxu0
  %252 = vmatprep.mubr.bf16.mxu0 0
  %253 = vmatmul.mubr.bf16.gmra.mxu0 %v172
  %v254 = vpop.f32.mrf.mxu0
  %v255 = vadd.f32 0.0, %v254
  %v256 = vpop.f32.mrf.mxu0
  %v257 = vpop.f32.mrf.mxu0
  %v258 = vadd.f32 0.0, %v257
  %v259 = vpop.f32.mrf.mxu0
  %260 = vmatprep.mubr.bf16.mxu0 0
  %261 = vmatmul.mubr.bf16.gmra.mxu0 %v175
  %v262 = vpop.f32.mrf.mxu0
  %v263 = vadd.f32 0.0, %v262
  %v264 = vpop.f32.mrf.mxu0
  %v265 = vpop.f32.mrf.mxu0
  %v266 = vadd.f32 0.0, %v265
  %v267 = vpop.f32.mrf.mxu0
  %268 = vmatprep.mubr.bf16.mxu0 0
  %269 = vmatmul.mubr.bf16.gmra.mxu0 %v178
  %v270 = vpop.f32.mrf.mxu0
  %v271 = vadd.f32 0.0, %v270
  %v272 = vpop.f32.mrf.mxu0
  %v273 = vpop.f32.mrf.mxu0
  %v274 = vadd.f32 0.0, %v273
  %v275 = vpop.f32.mrf.mxu0
  %276 = vdwg.mxu0
  %v277 = vadd.f32 %v123, %v215
  %v278 = vadd.f32 %v124, %v218
  %v279 = vadd.f32 %v125, %v223
  %v280 = vadd.f32 %v126, %v226
  %v281 = vadd.f32 %v127, %v231
  %v282 = vadd.f32 %v128, %v234
  %v283 = vadd.f32 %v129, %v239
  %v284 = vadd.f32 %v130, %v242
  %v285 = vadd.f32 %v131, %v247
  %v286 = vadd.f32 %v132, %v250
  %v287 = vadd.f32 %v133, %v255
  %v288 = vadd.f32 %v134, %v258
  %v289 = vadd.f32 %v135, %v263
  %v290 = vadd.f32 %v136, %v266
  %v291 = vadd.f32 %v137, %v271
  %v292 = vadd.f32 %v138, %v274
  %vm293 = vcmask 261120
  %294 = vst.msk [vmem:[#allocation2] sm:$0xff] %vm293, %v277
  %295 = vst.msk [vmem:[#allocation2 + $0x8] sm:$0xff] %vm293, %v278
  %296 = vst.msk [vmem:[#allocation2 + $0x10] sm:$0xff] %vm293, %v279
  %297 = vst.msk [vmem:[#allocation2 + $0x18] sm:$0xff] %vm293, %v280
  %298 = vst.msk [vmem:[#allocation2 + $0x20] sm:$0xff] %vm293, %v281
  %299 = vst.msk [vmem:[#allocation2 + $0x28] sm:$0xff] %vm293, %v282
  %300 = vst.msk [vmem:[#allocation2 + $0x30] sm:$0xff] %vm293, %v283
  %301 = vst.msk [vmem:[#allocation2 + $0x38] sm:$0xff] %vm293, %v284
  %302 = vst.msk [vmem:[#allocation2 + $0x40] sm:$0xff] %vm293, %v285
  %303 = vst.msk [vmem:[#allocation2 + $0x48] sm:$0xff] %vm293, %v286
  %304 = vst.msk [vmem:[#allocation2 + $0x50] sm:$0xff] %vm293, %v287
  %305 = vst.msk [vmem:[#allocation2 + $0x58] sm:$0xff] %vm293, %v288
  %306 = vst.msk [vmem:[#allocation2 + $0x60] sm:$0xff] %vm293, %v289
  %307 = vst.msk [vmem:[#allocation2 + $0x68] sm:$0xff] %vm293, %v290
  %308 = vst.msk [vmem:[#allocation2 + $0x70] sm:$0xff] %vm293, %v291
  %309 = vst.msk [vmem:[#allocation2 + $0x78] sm:$0xff] %vm293, %v292
  // Predicated region
  $region30: #{e_densenet_forward.27} parent=0 // pred_check
    %p310 = pneg %p24
  $region31: #{e_densenet_forward.27} parent=0 // pred_check_branch
    %312 = sbr.rel (%p310) target = $region33
  $region32: #{e_densenet_forward.27} parent=0 // pred_region
    %v313 = vld [vmem:[#allocation2] sm:$0xff]
    %v314 = vld [vmem:[#allocation2 + $0x8] sm:$0xff]
    %v315 = vld [vmem:[#allocation2 + $0x10] sm:$0xff]
    %v316 = vld [vmem:[#allocation2 + $0x18] sm:$0xff]
    %v317 = vld [vmem:[#allocation2 + $0x20] sm:$0xff]
    %v318 = vld [vmem:[#allocation2 + $0x28] sm:$0xff]
    %v319 = vld [vmem:[#allocation2 + $0x30] sm:$0xff]
    %v320 = vld [vmem:[#allocation2 + $0x38] sm:$0xff]
    %v321 = vld [vmem:[#allocation2 + $0x40] sm:$0xff]
    %v322 = vld [vmem:[#allocation2 + $0x48] sm:$0xff]
    %v323 = vld [vmem:[#allocation2 + $0x50] sm:$0xff]
    %v324 = vld [vmem:[#allocation2 + $0x58] sm:$0xff]
    %v325 = vld [vmem:[#allocation2 + $0x60] sm:$0xff]
    %v326 = vld [vmem:[#allocation2 + $0x68] sm:$0xff]
    %v327 = vld [vmem:[#allocation2 + $0x70] sm:$0xff]
    %v328 = vld [vmem:[#allocation2 + $0x78] sm:$0xff]
    %v329 = vld [vmem:[%s4] sm:$0x1]
    %v331 = vlaneseq
    %v332 = vshrl.u32 %v331, 7
    %v333 = vsub.s32 0, %v332
    %v334 = vrot.slane %v329, %v333
    %v336 = vmul.f32 %v313, %v334
    %v337 = vmul.f32 %v314, %v334
    %v338 = vmul.f32 %v315, %v334
    %v339 = vmul.f32 %v316, %v334
    %v340 = vmul.f32 %v317, %v334
    %v341 = vmul.f32 %v318, %v334
    %v342 = vmul.f32 %v319, %v334
    %v343 = vmul.f32 %v320, %v334
    %v344 = vmul.f32 %v321, %v334
    %v345 = vmul.f32 %v322, %v334
    %v346 = vmul.f32 %v323, %v334
    %v347 = vmul.f32 %v324, %v334
    %v348 = vmul.f32 %v325, %v334
    %v349 = vmul.f32 %v326, %v334
    %v350 = vmul.f32 %v327, %v334
    %v351 = vmul.f32 %v328, %v334
    %v352 = vld [vmem:[%s5] sm:$0x1]
    %v354 = vlaneseq
    %v355 = vshrl.u32 %v354, 7
    %v356 = vsub.s32 0, %v355
    %v357 = vrot.slane %v352, %v356
    %v359 = vadd.f32 %v336, %v357
    %v360 = vadd.f32 %v337, %v357
    %v361 = vadd.f32 %v338, %v357
    %v362 = vadd.f32 %v339, %v357
    %v363 = vadd.f32 %v340, %v357
    %v364 = vadd.f32 %v341, %v357
    %v365 = vadd.f32 %v342, %v357
    %v366 = vadd.f32 %v343, %v357
    %v367 = vadd.f32 %v344, %v357
    %v368 = vadd.f32 %v345, %v357
    %v369 = vadd.f32 %v346, %v357
    %v370 = vadd.f32 %v347, %v357
    %v371 = vadd.f32 %v348, %v357
    %v372 = vadd.f32 %v349, %v357
    %v373 = vadd.f32 %v350, %v357
    %v374 = vadd.f32 %v351, %v357
    %v375 = vmax.f32 %v359, 0.0
    %v376 = vmax.f32 %v360, 0.0
    %v377 = vmax.f32 %v361, 0.0
    %v378 = vmax.f32 %v362, 0.0
    %v379 = vmax.f32 %v363, 0.0
    %v380 = vmax.f32 %v364, 0.0
    %v381 = vmax.f32 %v365, 0.0
    %v382 = vmax.f32 %v366, 0.0
    %v383 = vmax.f32 %v367, 0.0
    %v384 = vmax.f32 %v368, 0.0
    %v385 = vmax.f32 %v369, 0.0
    %v386 = vmax.f32 %v370, 0.0
    %v387 = vmax.f32 %v371, 0.0
    %v388 = vmax.f32 %v372, 0.0
    %v389 = vmax.f32 %v373, 0.0
    %v390 = vmax.f32 %v374, 0.0
    %391 = vst.msk [vmem:[%s6] sm:$0xff] %vm293, %v375
    %392 = vst.msk [vmem:[%s6 + $0x8] sm:$0xff] %vm293, %v376
    %393 = vst.msk [vmem:[%s6 + $0x10] sm:$0xff] %vm293, %v377
    %394 = vst.msk [vmem:[%s6 + $0x18] sm:$0xff] %vm293, %v378
    %395 = vst.msk [vmem:[%s6 + $0x20] sm:$0xff] %vm293, %v379
    %396 = vst.msk [vmem:[%s6 + $0x28] sm:$0xff] %vm293, %v380
    %397 = vst.msk [vmem:[%s6 + $0x30] sm:$0xff] %vm293, %v381
    %398 = vst.msk [vmem:[%s6 + $0x38] sm:$0xff] %vm293, %v382
    %399 = vst.msk [vmem:[%s6 + $0x40] sm:$0xff] %vm293, %v383
    %400 = vst.msk [vmem:[%s6 + $0x48] sm:$0xff] %vm293, %v384
    %401 = vst.msk [vmem:[%s6 + $0x50] sm:$0xff] %vm293, %v385
    %402 = vst.msk [vmem:[%s6 + $0x58] sm:$0xff] %vm293, %v386
    %403 = vst.msk [vmem:[%s6 + $0x60] sm:$0xff] %vm293, %v387
    %404 = vst.msk [vmem:[%s6 + $0x68] sm:$0xff] %vm293, %v388
    %405 = vst.msk [vmem:[%s6 + $0x70] sm:$0xff] %vm293, %v389
    %406 = vst.msk [vmem:[%s6 + $0x78] sm:$0xff] %vm293, %v390
  $region33: #{e_densenet_forward.27} parent=0 // pred_fallthru
    _
  // Predicated region
  $region34: #{e_densenet_forward.27} parent=0 // pred_check
    _
  $region35: #{e_densenet_forward.27} parent=0 // pred_check_branch
    %408 = sbr.rel (0) target = $region37
  $region36: #{e_densenet_forward.27} parent=0 // pred_region
    _
  $region37: #{e_densenet_forward.27} parent=0 // pred_fallthru
    _
  // Predicated region
  $region38: #{e_densenet_forward.27} parent=0 // pred_check
    _
  $region39: #{e_densenet_forward.27} parent=0 // pred_check_branch
    %410 = sbr.rel (0) target = $region41
  $region40: #{e_densenet_forward.27} parent=0 // pred_region
    _
  $region41: #{e_densenet_forward.27} parent=0 // pred_fallthru
    _

// kernel: e_densenet_forward.28
$region0: #{e_densenet_forward.28}
  #allocation0 [shape = 'u32[]', space=smem, size = 0x4, offset = 0x4, fixed_abs, tag = 'smem constant byte address 0x4 - core index']
  #allocation1 [shape = 'u32[144,128]{1,0:T(1,128)}', space=vmem, size = 0x12000, scoped, tag = 'internal scratch']
  #allocation2 [shape = 'f32[128,8]{1,0:T(8,128)}', space=vmem, size = 0x10000, scoped, tag = 'scratch operand']
  %s0 = inlined_call_operand.vmem [shape: bf16[128,288], index: 0, kind: input, shape index: {}]
  %s1 = inlined_call_operand.vmem [shape: bf16[288,8], index: 1, kind: input, shape index: {}]
  %s2 = inlined_call_operand.vmem [shape: f32[128,16], index: 2, kind: input, shape index: {}]
  %s3 = inlined_call_operand.vmem [shape: f32[128,24], index: 3, kind: output, shape index: {}]
  %s4 = sld [smem:[#allocation0]]
  $region30: #{e_densenet_forward.28} parent=0
    _
  %s6 = ssub.s32 1, %s4
  %s7 = scalar_select 0, %s6, %s4
  // Predicated region
  $region2: #{e_densenet_forward.28} parent=0 // pred_check
    _
  $region3: #{e_densenet_forward.28} parent=0 // pred_check_branch
    %9 = sbr.rel (0) target = $region5
  $region4: #{e_densenet_forward.28} parent=0 // pred_region
    _
  $region5: #{e_densenet_forward.28} parent=0 // pred_fallthru
    _
  // Predicated region
  $region6: #{e_densenet_forward.28} parent=0 // pred_check
    _
  $region7: #{e_densenet_forward.28} parent=0 // pred_check_branch
    %11 = sbr.rel (0) target = $region9
  $region8: #{e_densenet_forward.28} parent=0 // pred_region
    _
  $region9: #{e_densenet_forward.28} parent=0 // pred_fallthru
    _
  // Predicated region
  $region10: #{e_densenet_forward.28} parent=0 // pred_check
    _
  $region11: #{e_densenet_forward.28} parent=0 // pred_check_branch
    %13 = sbr.rel (0) target = $region13
  $region12: #{e_densenet_forward.28} parent=0 // pred_region
    _
  $region13: #{e_densenet_forward.28} parent=0 // pred_fallthru
    _
  %p15 = scmp.eq.s32.totalorder 0, 0
  // Predicated region
  $region14: #{e_densenet_forward.28} parent=0 // pred_check
    %p16 = pneg %p15
  $region15: #{e_densenet_forward.28} parent=0 // pred_check_branch
    %18 = sbr.rel (%p16) target = $region17
  $region16: #{e_densenet_forward.28} parent=0 // pred_region
    %vm19 = vcmask 64512
    %20 = vst.msk [vmem:[#allocation2] sm:$0xff] %vm19, 0.0
    %21 = vst.msk [vmem:[#allocation2 + $0x8] sm:$0xff] %vm19, 0.0
    %22 = vst.msk [vmem:[#allocation2 + $0x10] sm:$0xff] %vm19, 0.0
    %23 = vst.msk [vmem:[#allocation2 + $0x18] sm:$0xff] %vm19, 0.0
    %24 = vst.msk [vmem:[#allocation2 + $0x20] sm:$0xff] %vm19, 0.0
    %25 = vst.msk [vmem:[#allocation2 + $0x28] sm:$0xff] %vm19, 0.0
    %26 = vst.msk [vmem:[#allocation2 + $0x30] sm:$0xff] %vm19, 0.0
    %27 = vst.msk [vmem:[#allocation2 + $0x38] sm:$0xff] %vm19, 0.0
    %28 = vst.msk [vmem:[#allocation2 + $0x40] sm:$0xff] %vm19, 0.0
    %29 = vst.msk [vmem:[#allocation2 + $0x48] sm:$0xff] %vm19, 0.0
    %30 = vst.msk [vmem:[#allocation2 + $0x50] sm:$0xff] %vm19, 0.0
    %31 = vst.msk [vmem:[#allocation2 + $0x58] sm:$0xff] %vm19, 0.0
    %32 = vst.msk [vmem:[#allocation2 + $0x60] sm:$0xff] %vm19, 0.0
    %33 = vst.msk [vmem:[#allocation2 + $0x68] sm:$0xff] %vm19, 0.0
    %34 = vst.msk [vmem:[#allocation2 + $0x70] sm:$0xff] %vm19, 0.0
    %35 = vst.msk [vmem:[#allocation2 + $0x78] sm:$0xff] %vm19, 0.0
  $region17: #{e_densenet_forward.28} parent=0 // pred_fallthru
    _
  %v36 = vld [vmem:[%s0] sm:$0xff]
  %v37 = vld [vmem:[%s0 + $0x8] sm:$0xf]
  %v38 = vld [vmem:[%s0 + $0xc] sm:$0xff]
  %v39 = vld [vmem:[%s0 + $0x14] sm:$0xf]
  %v40 = vld [vmem:[%s0 + $0x18] sm:$0xff]
  %v41 = vld [vmem:[%s0 + $0x20] sm:$0xf]
  %v42 = vld [vmem:[%s0 + $0x24] sm:$0xff]
  %v43 = vld [vmem:[%s0 + $0x2c] sm:$0xf]
  %v44 = vld [vmem:[%s0 + $0x30] sm:$0xff]
  %v45 = vld [vmem:[%s0 + $0x38] sm:$0xf]
  %v46 = vld [vmem:[%s0 + $0x3c] sm:$0xff]
  %v47 = vld [vmem:[%s0 + $0x44] sm:$0xf]
  %v48 = vld [vmem:[%s0 + $0x48] sm:$0xff]
  %v49 = vld [vmem:[%s0 + $0x50] sm:$0xf]
  %v50 = vld [vmem:[%s0 + $0x54] sm:$0xff]
  %v51 = vld [vmem:[%s0 + $0x5c] sm:$0xf]
  %v52 = vld [vmem:[%s0 + $0x60] sm:$0xff]
  %v53 = vld [vmem:[%s0 + $0x68] sm:$0xf]
  %v54 = vld [vmem:[%s0 + $0x6c] sm:$0xff]
  %v55 = vld [vmem:[%s0 + $0x74] sm:$0xf]
  %v56 = vld [vmem:[%s0 + $0x78] sm:$0xff]
  %v57 = vld [vmem:[%s0 + $0x80] sm:$0xf]
  %v58 = vld [vmem:[%s0 + $0x84] sm:$0xff]
  %v59 = vld [vmem:[%s0 + $0x8c] sm:$0xf]
  %v60 = vld [vmem:[%s0 + $0x90] sm:$0xff]
  %v61 = vld [vmem:[%s0 + $0x98] sm:$0xf]
  %v62 = vld [vmem:[%s0 + $0x9c] sm:$0xff]
  %v63 = vld [vmem:[%s0 + $0xa4] sm:$0xf]
  %v64 = vld [vmem:[%s0 + $0xa8] sm:$0xff]
  %v65 = vld [vmem:[%s0 + $0xb0] sm:$0xf]
  %v66 = vld [vmem:[%s0 + $0xb4] sm:$0xff]
  %v67 = vld [vmem:[%s0 + $0xbc] sm:$0xf]
  %v68 = vld [vmem:[#allocation2] sm:$0xff]
  %v69 = vld [vmem:[#allocation2 + $0x8] sm:$0xff]
  %v70 = vld [vmem:[#allocation2 + $0x10] sm:$0xff]
  %v71 = vld [vmem:[#allocation2 + $0x18] sm:$0xff]
  %v72 = vld [vmem:[#allocation2 + $0x20] sm:$0xff]
  %v73 = vld [vmem:[#allocation2 + $0x28] sm:$0xff]
  %v74 = vld [vmem:[#allocation2 + $0x30] sm:$0xff]
  %v75 = vld [vmem:[#allocation2 + $0x38] sm:$0xff]
  %v76 = vld [vmem:[#allocation2 + $0x40] sm:$0xff]
  %v77 = vld [vmem:[#allocation2 + $0x48] sm:$0xff]
  %v78 = vld [vmem:[#allocation2 + $0x50] sm:$0xff]
  %v79 = vld [vmem:[#allocation2 + $0x58] sm:$0xff]
  %v80 = vld [vmem:[#allocation2 + $0x60] sm:$0xff]
  %v81 = vld [vmem:[#allocation2 + $0x68] sm:$0xff]
  %v82 = vld [vmem:[#allocation2 + $0x70] sm:$0xff]
  %v83 = vld [vmem:[#allocation2 + $0x78] sm:$0xff]
  %v84 = vld [vmem:[%s1] sm:$0xf]
  %v85 = vld [vmem:[%s1 + $0x4] sm:$0xf]
  %v86 = vld [vmem:[%s1 + $0x8] sm:$0xf]
  %v87 = vld [vmem:[%s1 + $0xc] sm:$0xf]
  %v88 = vld [vmem:[%s1 + $0x10] sm:$0xf]
  %v89 = vld [vmem:[%s1 + $0x14] sm:$0xf]
  %v90 = vld [vmem:[%s1 + $0x18] sm:$0xf]
  %v91 = vld [vmem:[%s1 + $0x1c] sm:$0xf]
  %v92 = vld [vmem:[%s1 + $0x20] sm:$0xf]
  %v93 = vld [vmem:[%s1 + $0x24] sm:$0xf]
  %v94 = vld [vmem:[%s1 + $0x28] sm:$0xf]
  %v95 = vld [vmem:[%s1 + $0x2c] sm:$0xf]
  %v96 = vld [vmem:[%s1 + $0x30] sm:$0xf]
  %v97 = vld [vmem:[%s1 + $0x34] sm:$0xf]
  %v98 = vld [vmem:[%s1 + $0x38] sm:$0xf]
  %v99 = vld [vmem:[%s1 + $0x3c] sm:$0xf]
  %v100 = vld [vmem:[%s1 + $0x40] sm:$0xf]
  %v101 = vld [vmem:[%s1 + $0x44] sm:$0xf]
  %v102 = vld [vmem:[%s1 + $0x48] sm:$0xf]
  %v103 = vld [vmem:[%s1 + $0x4c] sm:$0xf]
  %v104 = vld [vmem:[%s1 + $0x50] sm:$0xf]
  %v105 = vld [vmem:[%s1 + $0x54] sm:$0xf]
  %v106 = vld [vmem:[%s1 + $0x58] sm:$0xf]
  %v107 = vld [vmem:[%s1 + $0x5c] sm:$0xf]
  %v108 = vld [vmem:[%s1 + $0x60] sm:$0xf]
  %v109 = vld [vmem:[%s1 + $0x64] sm:$0xf]
  %v110 = vld [vmem:[%s1 + $0x68] sm:$0xf]
  %v111 = vld [vmem:[%s1 + $0x6c] sm:$0xf]
  %v112 = vld [vmem:[%s1 + $0x70] sm:$0xf]
  %v113 = vld [vmem:[%s1 + $0x74] sm:$0xf]
  %v114 = vld [vmem:[%s1 + $0x78] sm:$0xf]
  %v115 = vld [vmem:[%s1 + $0x7c] sm:$0xf]
  %v116 = vld [vmem:[%s1 + $0x80] sm:$0xf]
  %v117 = vld [vmem:[%s1 + $0x84] sm:$0xf]
  %v118 = vld [vmem:[%s1 + $0x88] sm:$0xf]
  %v119 = vld [vmem:[%s1 + $0x8c] sm:$0xf]
  %v152 = vunpack.c.l.b16 %v36
  %v153 = vunpack.c.h.b16 %v36
  %v154 = vunpack.c.l.b16 %v37
  %v155 = vunpack.c.l.b16 %v38
  %v156 = vunpack.c.h.b16 %v38
  %v157 = vunpack.c.l.b16 %v39
  %v158 = vunpack.c.l.b16 %v40
  %v159 = vunpack.c.h.b16 %v40
  %v160 = vunpack.c.l.b16 %v41
  %v161 = vunpack.c.l.b16 %v42
  %v162 = vunpack.c.h.b16 %v42
  %v163 = vunpack.c.l.b16 %v43
  %v164 = vunpack.c.l.b16 %v44
  %v165 = vunpack.c.h.b16 %v44
  %v166 = vunpack.c.l.b16 %v45
  %v167 = vunpack.c.l.b16 %v46
  %v168 = vunpack.c.h.b16 %v46
  %v169 = vunpack.c.l.b16 %v47
  %v170 = vunpack.c.l.b16 %v48
  %v171 = vunpack.c.h.b16 %v48
  %v172 = vunpack.c.l.b16 %v49
  %v173 = vunpack.c.l.b16 %v50
  %v174 = vunpack.c.h.b16 %v50
  %v175 = vunpack.c.l.b16 %v51
  %v176 = vunpack.c.l.b16 %v52
  %v177 = vunpack.c.h.b16 %v52
  %v178 = vunpack.c.l.b16 %v53
  %v179 = vunpack.c.l.b16 %v54
  %v180 = vunpack.c.h.b16 %v54
  %v181 = vunpack.c.l.b16 %v55
  %v182 = vunpack.c.l.b16 %v56
  %v183 = vunpack.c.h.b16 %v56
  %v184 = vunpack.c.l.b16 %v57
  %v185 = vunpack.c.l.b16 %v58
  %v186 = vunpack.c.h.b16 %v58
  %v187 = vunpack.c.l.b16 %v59
  %v188 = vunpack.c.l.b16 %v60
  %v189 = vunpack.c.h.b16 %v60
  %v190 = vunpack.c.l.b16 %v61
  %v191 = vunpack.c.l.b16 %v62
  %v192 = vunpack.c.h.b16 %v62
  %v193 = vunpack.c.l.b16 %v63
  %v194 = vunpack.c.l.b16 %v64
  %v195 = vunpack.c.h.b16 %v64
  %v196 = vunpack.c.l.b16 %v65
  %v197 = vunpack.c.l.b16 %v66
  %v198 = vunpack.c.h.b16 %v66
  %v199 = vunpack.c.l.b16 %v67
  %v200 = vpack.c.b16 %v155, %v152
  %v201 = vpack.c.b16 %v156, %v153
  %v202 = vpack.c.b16 %v157, %v154
  %v203 = vpack.c.b16 %v161, %v158
  %v204 = vpack.c.b16 %v162, %v159
  %v205 = vpack.c.b16 %v163, %v160
  %v206 = vpack.c.b16 %v167, %v164
  %v207 = vpack.c.b16 %v168, %v165
  %v208 = vpack.c.b16 %v169, %v166
  %v209 = vpack.c.b16 %v173, %v170
  %v210 = vpack.c.b16 %v174, %v171
  %v211 = vpack.c.b16 %v175, %v172
  %v212 = vpack.c.b16 %v179, %v176
  %v213 = vpack.c.b16 %v180, %v177
  %v214 = vpack.c.b16 %v181, %v178
  %v215 = vpack.c.b16 %v185, %v182
  %v216 = vpack.c.b16 %v186, %v183
  %v217 = vpack.c.b16 %v187, %v184
  %v218 = vpack.c.b16 %v191, %v188
  %v219 = vpack.c.b16 %v192, %v189
  %v220 = vpack.c.b16 %v193, %v190
  %v221 = vpack.c.b16 %v197, %v194
  %v222 = vpack.c.b16 %v198, %v195
  %v223 = vpack.c.b16 %v199, %v196
  %v276 = vunpack.c.l.b16 %v84
  %v277 = vunpack.c.l.b16 %v85
  %v278 = vunpack.c.l.b16 %v86
  %v279 = vunpack.c.l.b16 %v87
  %v280 = vunpack.c.l.b16 %v88
  %v281 = vunpack.c.l.b16 %v89
  %v282 = vunpack.c.l.b16 %v90
  %v283 = vunpack.c.l.b16 %v91
  %v284 = vunpack.c.l.b16 %v92
  %v285 = vunpack.c.l.b16 %v93
  %v286 = vunpack.c.l.b16 %v94
  %v287 = vunpack.c.l.b16 %v95
  %v288 = vunpack.c.l.b16 %v96
  %v289 = vunpack.c.l.b16 %v97
  %v290 = vunpack.c.l.b16 %v98
  %v291 = vunpack.c.l.b16 %v99
  %v292 = vunpack.c.l.b16 %v100
  %v293 = vunpack.c.l.b16 %v101
  %v294 = vunpack.c.l.b16 %v102
  %v295 = vunpack.c.l.b16 %v103
  %v296 = vunpack.c.l.b16 %v104
  %v297 = vunpack.c.l.b16 %v105
  %v298 = vunpack.c.l.b16 %v106
  %v299 = vunpack.c.l.b16 %v107
  %v300 = vunpack.c.l.b16 %v108
  %v301 = vunpack.c.l.b16 %v109
  %v302 = vunpack.c.l.b16 %v110
  %v303 = vunpack.c.l.b16 %v111
  %v304 = vunpack.c.l.b16 %v112
  %v305 = vunpack.c.l.b16 %v113
  %v306 = vunpack.c.l.b16 %v114
  %v307 = vunpack.c.l.b16 %v115
  %v308 = vunpack.c.l.b16 %v116
  %v309 = vunpack.c.l.b16 %v117
  %v310 = vunpack.c.l.b16 %v118
  %v311 = vunpack.c.l.b16 %v119
  %v312 = vpack.c.b16 %v277, %v276
  %v313 = vpack.c.b16 %v279, %v278
  %v314 = vpack.c.b16 %v281, %v280
  %v315 = vpack.c.b16 %v283, %v282
  %v316 = vpack.c.b16 %v285, %v284
  %v317 = vpack.c.b16 %v287, %v286
  %v318 = vpack.c.b16 %v289, %v288
  %v319 = vpack.c.b16 %v291, %v290
  %v320 = vpack.c.b16 %v293, %v292
  %v321 = vpack.c.b16 %v295, %v294
  %v322 = vpack.c.b16 %v297, %v296
  %v323 = vpack.c.b16 %v299, %v298
  %v324 = vpack.c.b16 %v301, %v300
  %v325 = vpack.c.b16 %v303, %v302
  %v326 = vpack.c.b16 %v305, %v304
  %v327 = vpack.c.b16 %v307, %v306
  %v328 = vpack.c.b16 %v309, %v308
  %v329 = vpack.c.b16 %v311, %v310
  %vm348 = vcmask 261120
  %v350 = vsel %vm348, %v202, 0
  %v353 = vsel %vm348, %v205, 0
  %v356 = vsel %vm348, %v208, 0
  %v359 = vsel %vm348, %v211, 0
  %v362 = vsel %vm348, %v214, 0
  %v365 = vsel %vm348, %v217, 0
  %v368 = vsel %vm348, %v220, 0
  %v371 = vsel %vm348, %v223, 0
  %373 = vmatprep.subr.bf16.mxu0 0
  %374 = vmatpush1.bf16.msra.mxu0 %v319
  %375 = vmatprep.subr.bf16.mxu0 0
  %376 = vmatpush1.bf16.msra.mxu0 %v318
  %377 = vmatprep.subr.bf16.mxu0 0
  %378 = vmatpush1.bf16.msra.mxu0 %v317
  %379 = vmatprep.subr.bf16.mxu0 0
  %380 = vmatpush1.bf16.msra.mxu0 %v316
  %381 = vmatprep.subr.bf16.mxu0 0
  %382 = vmatpush1.bf16.msra.mxu0 %v315
  %383 = vmatprep.subr.bf16.mxu0 0
  %384 = vmatpush1.bf16.msra.mxu0 %v314
  %385 = vmatprep.subr.bf16.mxu0 0
  %386 = vmatpush1.bf16.msra.mxu0 %v313
  %387 = vmatprep.subr.bf16.mxu0 0
  %388 = vmatpush1.bf16.msra.mxu0 %v312
  %389 = vmatprep.subr.bf16.mxu0 0
  %390 = vmatpush2.bf16.msra.mxu0 %v327
  %391 = vmatprep.subr.bf16.mxu0 0
  %392 = vmatpush2.bf16.msra.mxu0 %v326
  %393 = vmatprep.subr.bf16.mxu0 0
  %394 = vmatpush2.bf16.msra.mxu0 %v325
  %395 = vmatprep.subr.bf16.mxu0 0
  %396 = vmatpush2.bf16.msra.mxu0 %v324
  %397 = vmatprep.subr.bf16.mxu0 0
  %398 = vmatpush2.bf16.msra.mxu0 %v323
  %399 = vmatprep.subr.bf16.mxu0 0
  %400 = vmatpush2.bf16.msra.mxu0 %v322
  %401 = vmatprep.subr.bf16.mxu0 0
  %402 = vmatpush2.bf16.msra.mxu0 %v321
  %403 = vmatprep.subr.bf16.mxu0 0
  %404 = vmatpush2.bf16.msra.mxu0 %v320
  %405 = vmatprep.mubr.bf16.mxu0 %v201
  %406 = vmatmul.mubr.bf16.gmra.mxu0 %v200
  %v407 = vpop.f32.mrf.mxu0
  %v408 = vadd.f32 0.0, %v407
  %v409 = vpop.f32.mrf.mxu0
  %v410 = vpop.f32.mrf.mxu0
  %v411 = vadd.f32 0.0, %v410
  %v412 = vpop.f32.mrf.mxu0
  %413 = vmatprep.mubr.bf16.mxu0 %v204
  %414 = vmatmul.mubr.bf16.gmra.mxu0 %v203
  %v415 = vpop.f32.mrf.mxu0
  %v416 = vadd.f32 0.0, %v415
  %v417 = vpop.f32.mrf.mxu0
  %v418 = vpop.f32.mrf.mxu0
  %v419 = vadd.f32 0.0, %v418
  %v420 = vpop.f32.mrf.mxu0
  %421 = vmatprep.mubr.bf16.mxu0 %v207
  %422 = vmatmul.mubr.bf16.gmra.mxu0 %v206
  %v423 = vpop.f32.mrf.mxu0
  %v424 = vadd.f32 0.0, %v423
  %v425 = vpop.f32.mrf.mxu0
  %v426 = vpop.f32.mrf.mxu0
  %v427 = vadd.f32 0.0, %v426
  %v428 = vpop.f32.mrf.mxu0
  %429 = vmatprep.mubr.bf16.mxu0 %v210
  %430 = vmatmul.mubr.bf16.gmra.mxu0 %v209
  %v431 = vpop.f32.mrf.mxu0
  %v432 = vadd.f32 0.0, %v431
  %v433 = vpop.f32.mrf.mxu0
  %v434 = vpop.f32.mrf.mxu0
  %v435 = vadd.f32 0.0, %v434
  %v436 = vpop.f32.mrf.mxu0
  %437 = vmatprep.mubr.bf16.mxu0 %v213
  %438 = vmatmul.mubr.bf16.gmra.mxu0 %v212
  %v439 = vpop.f32.mrf.mxu0
  %v440 = vadd.f32 0.0, %v439
  %v441 = vpop.f32.mrf.mxu0
  %v442 = vpop.f32.mrf.mxu0
  %v443 = vadd.f32 0.0, %v442
  %v444 = vpop.f32.mrf.mxu0
  %445 = vmatprep.mubr.bf16.mxu0 %v216
  %446 = vmatmul.mubr.bf16.gmra.mxu0 %v215
  %v447 = vpop.f32.mrf.mxu0
  %v448 = vadd.f32 0.0, %v447
  %v449 = vpop.f32.mrf.mxu0
  %v450 = vpop.f32.mrf.mxu0
  %v451 = vadd.f32 0.0, %v450
  %v452 = vpop.f32.mrf.mxu0
  %453 = vmatprep.mubr.bf16.mxu0 %v219
  %454 = vmatmul.mubr.bf16.gmra.mxu0 %v218
  %v455 = vpop.f32.mrf.mxu0
  %v456 = vadd.f32 0.0, %v455
  %v457 = vpop.f32.mrf.mxu0
  %v458 = vpop.f32.mrf.mxu0
  %v459 = vadd.f32 0.0, %v458
  %v460 = vpop.f32.mrf.mxu0
  %461 = vmatprep.mubr.bf16.mxu0 %v222
  %462 = vmatmul.mubr.bf16.gmra.mxu0 %v221
  %v463 = vpop.f32.mrf.mxu0
  %v464 = vadd.f32 0.0, %v463
  %v465 = vpop.f32.mrf.mxu0
  %v466 = vpop.f32.mrf.mxu0
  %v467 = vadd.f32 0.0, %v466
  %v468 = vpop.f32.mrf.mxu0
  %469 = vdwg.mxu0
  %470 = vmatprep.subr.bf16.mxu0 0
  %471 = vmatpush1.bf16.msra.mxu0 0
  %472 = vmatprep.subr.bf16.mxu0 0
  %473 = vmatpush1.bf16.msra.mxu0 0
  %474 = vmatprep.subr.bf16.mxu0 0
  %475 = vmatpush1.bf16.msra.mxu0 0
  %476 = vmatprep.subr.bf16.mxu0 0
  %477 = vmatpush1.bf16.msra.mxu0 0
  %478 = vmatprep.subr.bf16.mxu0 0
  %479 = vmatpush1.bf16.msra.mxu0 0
  %480 = vmatprep.subr.bf16.mxu0 0
  %481 = vmatpush1.bf16.msra.mxu0 0
  %482 = vmatprep.subr.bf16.mxu0 0
  %483 = vmatpush1.bf16.msra.mxu0 %v329
  %484 = vmatprep.subr.bf16.mxu0 0
  %485 = vmatpush1.bf16.msra.mxu0 %v328
  %486 = vmatprep.subr.bf16.mxu0 0
  %487 = vmatpush2.bf16.msra.mxu0 0
  %488 = vmatprep.subr.bf16.mxu0 0
  %489 = vmatpush2.bf16.msra.mxu0 0
  %490 = vmatprep.subr.bf16.mxu0 0
  %491 = vmatpush2.bf16.msra.mxu0 0
  %492 = vmatprep.subr.bf16.mxu0 0
  %493 = vmatpush2.bf16.msra.mxu0 0
  %494 = vmatprep.subr.bf16.mxu0 0
  %495 = vmatpush2.bf16.msra.mxu0 0
  %496 = vmatprep.subr.bf16.mxu0 0
  %497 = vmatpush2.bf16.msra.mxu0 0
  %498 = vmatprep.subr.bf16.mxu0 0
  %499 = vmatpush2.bf16.msra.mxu0 0
  %500 = vmatprep.subr.bf16.mxu0 0
  %501 = vmatpush2.bf16.msra.mxu0 0
  %502 = vmatprep.mubr.bf16.mxu0 0
  %503 = vmatmul.mubr.bf16.gmra.mxu0 %v350
  %v504 = vpop.f32.mrf.mxu0
  %v505 = vadd.f32 %v408, %v504
  %v506 = vpop.f32.mrf.mxu0
  %v507 = vpop.f32.mrf.mxu0
  %v508 = vadd.f32 %v411, %v507
  %v509 = vpop.f32.mrf.mxu0
  %510 = vmatprep.mubr.bf16.mxu0 0
  %511 = vmatmul.mubr.bf16.gmra.mxu0 %v353
  %v512 = vpop.f32.mrf.mxu0
  %v513 = vadd.f32 %v416, %v512
  %v514 = vpop.f32.mrf.mxu0
  %v515 = vpop.f32.mrf.mxu0
  %v516 = vadd.f32 %v419, %v515
  %v517 = vpop.f32.mrf.mxu0
  %518 = vmatprep.mubr.bf16.mxu0 0
  %519 = vmatmul.mubr.bf16.gmra.mxu0 %v356
  %v520 = vpop.f32.mrf.mxu0
  %v521 = vadd.f32 %v424, %v520
  %v522 = vpop.f32.mrf.mxu0
  %v523 = vpop.f32.mrf.mxu0
  %v524 = vadd.f32 %v427, %v523
  %v525 = vpop.f32.mrf.mxu0
  %526 = vmatprep.mubr.bf16.mxu0 0
  %527 = vmatmul.mubr.bf16.gmra.mxu0 %v359
  %v528 = vpop.f32.mrf.mxu0
  %v529 = vadd.f32 %v432, %v528
  %v530 = vpop.f32.mrf.mxu0
  %v531 = vpop.f32.mrf.mxu0
  %v532 = vadd.f32 %v435, %v531
  %v533 = vpop.f32.mrf.mxu0
  %534 = vmatprep.mubr.bf16.mxu0 0
  %535 = vmatmul.mubr.bf16.gmra.mxu0 %v362
  %v536 = vpop.f32.mrf.mxu0
  %v537 = vadd.f32 %v440, %v536
  %v538 = vpop.f32.mrf.mxu0
  %v539 = vpop.f32.mrf.mxu0
  %v540 = vadd.f32 %v443, %v539
  %v541 = vpop.f32.mrf.mxu0
  %542 = vmatprep.mubr.bf16.mxu0 0
  %543 = vmatmul.mubr.bf16.gmra.mxu0 %v365
  %v544 = vpop.f32.mrf.mxu0
  %v545 = vadd.f32 %v448, %v544
  %v546 = vpop.f32.mrf.mxu0
  %v547 = vpop.f32.mrf.mxu0
  %v548 = vadd.f32 %v451, %v547
  %v549 = vpop.f32.mrf.mxu0
  %550 = vmatprep.mubr.bf16.mxu0 0
  %551 = vmatmul.mubr.bf16.gmra.mxu0 %v368
  %v552 = vpop.f32.mrf.mxu0
  %v553 = vadd.f32 %v456, %v552
  %v554 = vpop.f32.mrf.mxu0
  %v555 = vpop.f32.mrf.mxu0
  %v556 = vadd.f32 %v459, %v555
  %v557 = vpop.f32.mrf.mxu0
  %558 = vmatprep.mubr.bf16.mxu0 0
  %559 = vmatmul.mubr.bf16.gmra.mxu0 %v371
  %v560 = vpop.f32.mrf.mxu0
  %v561 = vadd.f32 %v464, %v560
  %v562 = vpop.f32.mrf.mxu0
  %v563 = vpop.f32.mrf.mxu0
  %v564 = vadd.f32 %v467, %v563
  %v565 = vpop.f32.mrf.mxu0
  %566 = vdwg.mxu0
  %v567 = vadd.f32 %v68, %v505
  %v568 = vadd.f32 %v69, %v508
  %v569 = vadd.f32 %v70, %v513
  %v570 = vadd.f32 %v71, %v516
  %v571 = vadd.f32 %v72, %v521
  %v572 = vadd.f32 %v73, %v524
  %v573 = vadd.f32 %v74, %v529
  %v574 = vadd.f32 %v75, %v532
  %v575 = vadd.f32 %v76, %v537
  %v576 = vadd.f32 %v77, %v540
  %v577 = vadd.f32 %v78, %v545
  %v578 = vadd.f32 %v79, %v548
  %v579 = vadd.f32 %v80, %v553
  %v580 = vadd.f32 %v81, %v556
  %v581 = vadd.f32 %v82, %v561
  %v582 = vadd.f32 %v83, %v564
  %vm583 = vcmask 64512
  %584 = vst.msk [vmem:[#allocation2] sm:$0xff] %vm583, %v567
  %585 = vst.msk [vmem:[#allocation2 + $0x8] sm:$0xff] %vm583, %v568
  %586 = vst.msk [vmem:[#allocation2 + $0x10] sm:$0xff] %vm583, %v569
  %587 = vst.msk [vmem:[#allocation2 + $0x18] sm:$0xff] %vm583, %v570
  %588 = vst.msk [vmem:[#allocation2 + $0x20] sm:$0xff] %vm583, %v571
  %589 = vst.msk [vmem:[#allocation2 + $0x28] sm:$0xff] %vm583, %v572
  %590 = vst.msk [vmem:[#allocation2 + $0x30] sm:$0xff] %vm583, %v573
  %591 = vst.msk [vmem:[#allocation2 + $0x38] sm:$0xff] %vm583, %v574
  %592 = vst.msk [vmem:[#allocation2 + $0x40] sm:$0xff] %vm583, %v575
  %593 = vst.msk [vmem:[#allocation2 + $0x48] sm:$0xff] %vm583, %v576
  %594 = vst.msk [vmem:[#allocation2 + $0x50] sm:$0xff] %vm583, %v577
  %595 = vst.msk [vmem:[#allocation2 + $0x58] sm:$0xff] %vm583, %v578
  %596 = vst.msk [vmem:[#allocation2 + $0x60] sm:$0xff] %vm583, %v579
  %597 = vst.msk [vmem:[#allocation2 + $0x68] sm:$0xff] %vm583, %v580
  %598 = vst.msk [vmem:[#allocation2 + $0x70] sm:$0xff] %vm583, %v581
  %599 = vst.msk [vmem:[#allocation2 + $0x78] sm:$0xff] %vm583, %v582
  // Predicated region
  $region18: #{e_densenet_forward.28} parent=0 // pred_check
    %p600 = pneg %p15
  $region19: #{e_densenet_forward.28} parent=0 // pred_check_branch
    %602 = sbr.rel (%p600) target = $region21
  $region20: #{e_densenet_forward.28} parent=0 // pred_region
    %v603 = vld [vmem:[#allocation2] sm:$0xff]
    %v604 = vld [vmem:[#allocation2 + $0x8] sm:$0xff]
    %v605 = vld [vmem:[#allocation2 + $0x10] sm:$0xff]
    %v606 = vld [vmem:[#allocation2 + $0x18] sm:$0xff]
    %v607 = vld [vmem:[#allocation2 + $0x20] sm:$0xff]
    %v608 = vld [vmem:[#allocation2 + $0x28] sm:$0xff]
    %v609 = vld [vmem:[#allocation2 + $0x30] sm:$0xff]
    %v610 = vld [vmem:[#allocation2 + $0x38] sm:$0xff]
    %v611 = vld [vmem:[#allocation2 + $0x40] sm:$0xff]
    %v612 = vld [vmem:[#allocation2 + $0x48] sm:$0xff]
    %v613 = vld [vmem:[#allocation2 + $0x50] sm:$0xff]
    %v614 = vld [vmem:[#allocation2 + $0x58] sm:$0xff]
    %v615 = vld [vmem:[#allocation2 + $0x60] sm:$0xff]
    %v616 = vld [vmem:[#allocation2 + $0x68] sm:$0xff]
    %v617 = vld [vmem:[#allocation2 + $0x70] sm:$0xff]
    %v618 = vld [vmem:[#allocation2 + $0x78] sm:$0xff]
    %v619 = vld [vmem:[%s2] sm:$0xff]
    %v620 = vld [vmem:[%s2 + $0x8] sm:$0xff]
    %v621 = vld [vmem:[%s2 + $0x10] sm:$0xff]
    %v622 = vld [vmem:[%s2 + $0x18] sm:$0xff]
    %v623 = vld [vmem:[%s2 + $0x20] sm:$0xff]
    %v624 = vld [vmem:[%s2 + $0x28] sm:$0xff]
    %v625 = vld [vmem:[%s2 + $0x30] sm:$0xff]
    %v626 = vld [vmem:[%s2 + $0x38] sm:$0xff]
    %v627 = vld [vmem:[%s2 + $0x40] sm:$0xff]
    %v628 = vld [vmem:[%s2 + $0x48] sm:$0xff]
    %v629 = vld [vmem:[%s2 + $0x50] sm:$0xff]
    %v630 = vld [vmem:[%s2 + $0x58] sm:$0xff]
    %v631 = vld [vmem:[%s2 + $0x60] sm:$0xff]
    %v632 = vld [vmem:[%s2 + $0x68] sm:$0xff]
    %v633 = vld [vmem:[%s2 + $0x70] sm:$0xff]
    %v634 = vld [vmem:[%s2 + $0x78] sm:$0xff]
    %vm635 = vcmask 130048
    %636 = vst.msk [vmem:[%s3] sm:$0xff] %vm635, %v619
    %637 = vst.msk [vmem:[%s3 + $0x8] sm:$0xff] %vm635, %v620
    %638 = vst.msk [vmem:[%s3 + $0x10] sm:$0xff] %vm635, %v621
    %639 = vst.msk [vmem:[%s3 + $0x18] sm:$0xff] %vm635, %v622
    %640 = vst.msk [vmem:[%s3 + $0x20] sm:$0xff] %vm635, %v623
    %641 = vst.msk [vmem:[%s3 + $0x28] sm:$0xff] %vm635, %v624
    %642 = vst.msk [vmem:[%s3 + $0x30] sm:$0xff] %vm635, %v625
    %643 = vst.msk [vmem:[%s3 + $0x38] sm:$0xff] %vm635, %v626
    %644 = vst.msk [vmem:[%s3 + $0x40] sm:$0xff] %vm635, %v627
    %645 = vst.msk [vmem:[%s3 + $0x48] sm:$0xff] %vm635, %v628
    %646 = vst.msk [vmem:[%s3 + $0x50] sm:$0xff] %vm635, %v629
    %647 = vst.msk [vmem:[%s3 + $0x58] sm:$0xff] %vm635, %v630
    %648 = vst.msk [vmem:[%s3 + $0x60] sm:$0xff] %vm635, %v631
    %649 = vst.msk [vmem:[%s3 + $0x68] sm:$0xff] %vm635, %v632
    %650 = vst.msk [vmem:[%s3 + $0x70] sm:$0xff] %vm635, %v633
    %651 = vst.msk [vmem:[%s3 + $0x78] sm:$0xff] %vm635, %v634
    %668 = vrot.lane.b32.xlu0 %v603, 16
    %v669 = vpop.permute.xlu0 %668
    %670 = vrot.lane.b32.xlu0 %v604, 16
    %v671 = vpop.permute.xlu0 %670
    %672 = vrot.lane.b32.xlu0 %v605, 16
    %v673 = vpop.permute.xlu0 %672
    %674 = vrot.lane.b32.xlu0 %v606, 16
    %v675 = vpop.permute.xlu0 %674
    %676 = vrot.lane.b32.xlu0 %v607, 16
    %v677 = vpop.permute.xlu0 %676
    %678 = vrot.lane.b32.xlu0 %v608, 16
    %v679 = vpop.permute.xlu0 %678
    %680 = vrot.lane.b32.xlu0 %v609, 16
    %v681 = vpop.permute.xlu0 %680
    %682 = vrot.lane.b32.xlu0 %v610, 16
    %v683 = vpop.permute.xlu0 %682
    %684 = vrot.lane.b32.xlu0 %v611, 16
    %v685 = vpop.permute.xlu0 %684
    %686 = vrot.lane.b32.xlu0 %v612, 16
    %v687 = vpop.permute.xlu0 %686
    %688 = vrot.lane.b32.xlu0 %v613, 16
    %v689 = vpop.permute.xlu0 %688
    %690 = vrot.lane.b32.xlu0 %v614, 16
    %v691 = vpop.permute.xlu0 %690
    %692 = vrot.lane.b32.xlu0 %v615, 16
    %v693 = vpop.permute.xlu0 %692
    %694 = vrot.lane.b32.xlu0 %v616, 16
    %v695 = vpop.permute.xlu0 %694
    %696 = vrot.lane.b32.xlu0 %v617, 16
    %v697 = vpop.permute.xlu0 %696
    %698 = vrot.lane.b32.xlu0 %v618, 16
    %v699 = vpop.permute.xlu0 %698
    %vm716 = vcmask 195712
    %717 = vst.msk [vmem:[%s3] sm:$0xff] %vm716, %v669
    %718 = vst.msk [vmem:[%s3 + $0x8] sm:$0xff] %vm716, %v671
    %719 = vst.msk [vmem:[%s3 + $0x10] sm:$0xff] %vm716, %v673
    %720 = vst.msk [vmem:[%s3 + $0x18] sm:$0xff] %vm716, %v675
    %721 = vst.msk [vmem:[%s3 + $0x20] sm:$0xff] %vm716, %v677
    %722 = vst.msk [vmem:[%s3 + $0x28] sm:$0xff] %vm716, %v679
    %723 = vst.msk [vmem:[%s3 + $0x30] sm:$0xff] %vm716, %v681
    %724 = vst.msk [vmem:[%s3 + $0x38] sm:$0xff] %vm716, %v683
    %725 = vst.msk [vmem:[%s3 + $0x40] sm:$0xff] %vm716, %v685
    %726 = vst.msk [vmem:[%s3 + $0x48] sm:$0xff] %vm716, %v687
    %727 = vst.msk [vmem:[%s3 + $0x50] sm:$0xff] %vm716, %v689
    %728 = vst.msk [vmem:[%s3 + $0x58] sm:$0xff] %vm716, %v691
    %729 = vst.msk [vmem:[%s3 + $0x60] sm:$0xff] %vm716, %v693
    %730 = vst.msk [vmem:[%s3 + $0x68] sm:$0xff] %vm716, %v695
    %731 = vst.msk [vmem:[%s3 + $0x70] sm:$0xff] %vm716, %v697
    %732 = vst.msk [vmem:[%s3 + $0x78] sm:$0xff] %vm716, %v699
  $region21: #{e_densenet_forward.28} parent=0 // pred_fallthru
    _
  // Predicated region
  $region22: #{e_densenet_forward.28} parent=0 // pred_check
    _
  $region23: #{e_densenet_forward.28} parent=0 // pred_check_branch
    %734 = sbr.rel (0) target = $region25
  $region24: #{e_densenet_forward.28} parent=0 // pred_region
    _
  $region25: #{e_densenet_forward.28} parent=0 // pred_fallthru
    _
  // Predicated region
  $region26: #{e_densenet_forward.28} parent=0 // pred_check
    _
  $region27: #{e_densenet_forward.28} parent=0 // pred_check_branch
    %736 = sbr.rel (0) target = $region29
  $region28: #{e_densenet_forward.28} parent=0 // pred_region
    _
  $region29: #{e_densenet_forward.28} parent=0 // pred_fallthru
    _

// kernel: e_densenet_forward.29
$region0: #{e_densenet_forward.29}
  #allocation0 [shape = 'u32[]', space=smem, size = 0x4, offset = 0x4, fixed_abs, tag = 'smem constant byte address 0x4 - core index']
  #allocation1 [shape = 'u32[144,128]{1,0:T(1,128)}', space=vmem, size = 0x12000, scoped, tag = 'internal scratch']
  #allocation2 [shape = 'f32[128,32]{1,0:T(8,128)}', space=vmem, size = 0x10000, scoped, tag = 'scratch operand']
  %s0 = inlined_call_operand.vmem [shape: f32[128,24], index: 0, kind: input, shape index: {}]
  %s1 = inlined_call_operand.vmem [shape: bf16[24,32], index: 1, kind: input, shape index: {}]
  %s2 = inlined_call_operand.vmem [shape: f32[1,24], index: 2, kind: input, shape index: {}]
  %s3 = inlined_call_operand.vmem [shape: f32[1,24], index: 3, kind: input, shape index: {}]
  %s4 = inlined_call_operand.vmem [shape: f32[1,32], index: 4, kind: input, shape index: {}]
  %s5 = inlined_call_operand.vmem [shape: f32[1,32], index: 5, kind: input, shape index: {}]
  %s6 = inlined_call_operand.vmem [shape: f32[128,32], index: 6, kind: output, shape index: {}]
  %s7 = sld [smem:[#allocation0]]
  $region42: #{e_densenet_forward.29} parent=0
    _
  %s9 = ssub.s32 1, %s7
  %s10 = scalar_select 0, %s9, %s7
  // Predicated region
  $region2: #{e_densenet_forward.29} parent=0 // pred_check
    _
  $region3: #{e_densenet_forward.29} parent=0 // pred_check_branch
    %12 = sbr.rel (0) target = $region5
  $region4: #{e_densenet_forward.29} parent=0 // pred_region
    _
  $region5: #{e_densenet_forward.29} parent=0 // pred_fallthru
    _
  // Predicated region
  $region6: #{e_densenet_forward.29} parent=0 // pred_check
    _
  $region7: #{e_densenet_forward.29} parent=0 // pred_check_branch
    %14 = sbr.rel (0) target = $region9
  $region8: #{e_densenet_forward.29} parent=0 // pred_region
    _
  $region9: #{e_densenet_forward.29} parent=0 // pred_fallthru
    _
  // Predicated region
  $region10: #{e_densenet_forward.29} parent=0 // pred_check
    _
  $region11: #{e_densenet_forward.29} parent=0 // pred_check_branch
    %16 = sbr.rel (0) target = $region13
  $region12: #{e_densenet_forward.29} parent=0 // pred_region
    _
  $region13: #{e_densenet_forward.29} parent=0 // pred_fallthru
    _
  // Predicated region
  $region14: #{e_densenet_forward.29} parent=0 // pred_check
    _
  $region15: #{e_densenet_forward.29} parent=0 // pred_check_branch
    %18 = sbr.rel (0) target = $region17
  $region16: #{e_densenet_forward.29} parent=0 // pred_region
    _
  $region17: #{e_densenet_forward.29} parent=0 // pred_fallthru
    _
  // Predicated region
  $region18: #{e_densenet_forward.29} parent=0 // pred_check
    _
  $region19: #{e_densenet_forward.29} parent=0 // pred_check_branch
    %20 = sbr.rel (0) target = $region21
  $region20: #{e_densenet_forward.29} parent=0 // pred_region
    _
  $region21: #{e_densenet_forward.29} parent=0 // pred_fallthru
    _
  // Predicated region
  $region22: #{e_densenet_forward.29} parent=0 // pred_check
    _
  $region23: #{e_densenet_forward.29} parent=0 // pred_check_branch
    %22 = sbr.rel (0) target = $region25
  $region24: #{e_densenet_forward.29} parent=0 // pred_region
    _
  $region25: #{e_densenet_forward.29} parent=0 // pred_fallthru
    _
  %p24 = scmp.eq.s32.totalorder 0, 0
  // Predicated region
  $region26: #{e_densenet_forward.29} parent=0 // pred_check
    %p25 = pneg %p24
  $region27: #{e_densenet_forward.29} parent=0 // pred_check_branch
    %27 = sbr.rel (%p25) target = $region29
  $region28: #{e_densenet_forward.29} parent=0 // pred_region
    %vm28 = vcmask 261120
    %29 = vst.msk [vmem:[#allocation2] sm:$0xff] %vm28, 0.0
    %30 = vst.msk [vmem:[#allocation2 + $0x8] sm:$0xff] %vm28, 0.0
    %31 = vst.msk [vmem:[#allocation2 + $0x10] sm:$0xff] %vm28, 0.0
    %32 = vst.msk [vmem:[#allocation2 + $0x18] sm:$0xff] %vm28, 0.0
    %33 = vst.msk [vmem:[#allocation2 + $0x20] sm:$0xff] %vm28, 0.0
    %34 = vst.msk [vmem:[#allocation2 + $0x28] sm:$0xff] %vm28, 0.0
    %35 = vst.msk [vmem:[#allocation2 + $0x30] sm:$0xff] %vm28, 0.0
    %36 = vst.msk [vmem:[#allocation2 + $0x38] sm:$0xff] %vm28, 0.0
    %37 = vst.msk [vmem:[#allocation2 + $0x40] sm:$0xff] %vm28, 0.0
    %38 = vst.msk [vmem:[#allocation2 + $0x48] sm:$0xff] %vm28, 0.0
    %39 = vst.msk [vmem:[#allocation2 + $0x50] sm:$0xff] %vm28, 0.0
    %40 = vst.msk [vmem:[#allocation2 + $0x58] sm:$0xff] %vm28, 0.0
    %41 = vst.msk [vmem:[#allocation2 + $0x60] sm:$0xff] %vm28, 0.0
    %42 = vst.msk [vmem:[#allocation2 + $0x68] sm:$0xff] %vm28, 0.0
    %43 = vst.msk [vmem:[#allocation2 + $0x70] sm:$0xff] %vm28, 0.0
    %44 = vst.msk [vmem:[#allocation2 + $0x78] sm:$0xff] %vm28, 0.0
  $region29: #{e_densenet_forward.29} parent=0 // pred_fallthru
    _
  %v45 = vld [vmem:[%s0] sm:$0xff]
  %v46 = vld [vmem:[%s0 + $0x8] sm:$0xff]
  %v47 = vld [vmem:[%s0 + $0x10] sm:$0xff]
  %v48 = vld [vmem:[%s0 + $0x18] sm:$0xff]
  %v49 = vld [vmem:[%s0 + $0x20] sm:$0xff]
  %v50 = vld [vmem:[%s0 + $0x28] sm:$0xff]
  %v51 = vld [vmem:[%s0 + $0x30] sm:$0xff]
  %v52 = vld [vmem:[%s0 + $0x38] sm:$0xff]
  %v53 = vld [vmem:[%s0 + $0x40] sm:$0xff]
  %v54 = vld [vmem:[%s0 + $0x48] sm:$0xff]
  %v55 = vld [vmem:[%s0 + $0x50] sm:$0xff]
  %v56 = vld [vmem:[%s0 + $0x58] sm:$0xff]
  %v57 = vld [vmem:[%s0 + $0x60] sm:$0xff]
  %v58 = vld [vmem:[%s0 + $0x68] sm:$0xff]
  %v59 = vld [vmem:[%s0 + $0x70] sm:$0xff]
  %v60 = vld [vmem:[%s0 + $0x78] sm:$0xff]
  %v61 = vld [vmem:[%s2] sm:$0x1]
  %v63 = vlaneseq
  %v64 = vshrl.u32 %v63, 7
  %v65 = vsub.s32 0, %v64
  %v66 = vrot.slane %v61, %v65
  %v68 = vmul.f32 %v45, %v66
  %v69 = vmul.f32 %v46, %v66
  %v70 = vmul.f32 %v47, %v66
  %v71 = vmul.f32 %v48, %v66
  %v72 = vmul.f32 %v49, %v66
  %v73 = vmul.f32 %v50, %v66
  %v74 = vmul.f32 %v51, %v66
  %v75 = vmul.f32 %v52, %v66
  %v76 = vmul.f32 %v53, %v66
  %v77 = vmul.f32 %v54, %v66
  %v78 = vmul.f32 %v55, %v66
  %v79 = vmul.f32 %v56, %v66
  %v80 = vmul.f32 %v57, %v66
  %v81 = vmul.f32 %v58, %v66
  %v82 = vmul.f32 %v59, %v66
  %v83 = vmul.f32 %v60, %v66
  %v84 = vld [vmem:[%s3] sm:$0x1]
  %v86 = vlaneseq
  %v87 = vshrl.u32 %v86, 7
  %v88 = vsub.s32 0, %v87
  %v89 = vrot.slane %v84, %v88
  %v91 = vadd.f32 %v68, %v89
  %v92 = vadd.f32 %v69, %v89
  %v93 = vadd.f32 %v70, %v89
  %v94 = vadd.f32 %v71, %v89
  %v95 = vadd.f32 %v72, %v89
  %v96 = vadd.f32 %v73, %v89
  %v97 = vadd.f32 %v74, %v89
  %v98 = vadd.f32 %v75, %v89
  %v99 = vadd.f32 %v76, %v89
  %v100 = vadd.f32 %v77, %v89
  %v101 = vadd.f32 %v78, %v89
  %v102 = vadd.f32 %v79, %v89
  %v103 = vadd.f32 %v80, %v89
  %v104 = vadd.f32 %v81, %v89
  %v105 = vadd.f32 %v82, %v89
  %v106 = vadd.f32 %v83, %v89
  %v107 = vmax.f32 %v91, 0.0
  %v108 = vmax.f32 %v92, 0.0
  %v109 = vmax.f32 %v93, 0.0
  %v110 = vmax.f32 %v94, 0.0
  %v111 = vmax.f32 %v95, 0.0
  %v112 = vmax.f32 %v96, 0.0
  %v113 = vmax.f32 %v97, 0.0
  %v114 = vmax.f32 %v98, 0.0
  %v115 = vmax.f32 %v99, 0.0
  %v116 = vmax.f32 %v100, 0.0
  %v117 = vmax.f32 %v101, 0.0
  %v118 = vmax.f32 %v102, 0.0
  %v119 = vmax.f32 %v103, 0.0
  %v120 = vmax.f32 %v104, 0.0
  %v121 = vmax.f32 %v105, 0.0
  %v122 = vmax.f32 %v106, 0.0
  %v123 = vld [vmem:[#allocation2] sm:$0xff]
  %v124 = vld [vmem:[#allocation2 + $0x8] sm:$0xff]
  %v125 = vld [vmem:[#allocation2 + $0x10] sm:$0xff]
  %v126 = vld [vmem:[#allocation2 + $0x18] sm:$0xff]
  %v127 = vld [vmem:[#allocation2 + $0x20] sm:$0xff]
  %v128 = vld [vmem:[#allocation2 + $0x28] sm:$0xff]
  %v129 = vld [vmem:[#allocation2 + $0x30] sm:$0xff]
  %v130 = vld [vmem:[#allocation2 + $0x38] sm:$0xff]
  %v131 = vld [vmem:[#allocation2 + $0x40] sm:$0xff]
  %v132 = vld [vmem:[#allocation2 + $0x48] sm:$0xff]
  %v133 = vld [vmem:[#allocation2 + $0x50] sm:$0xff]
  %v134 = vld [vmem:[#allocation2 + $0x58] sm:$0xff]
  %v135 = vld [vmem:[#allocation2 + $0x60] sm:$0xff]
  %v136 = vld [vmem:[#allocation2 + $0x68] sm:$0xff]
  %v137 = vld [vmem:[#allocation2 + $0x70] sm:$0xff]
  %v138 = vld [vmem:[#allocation2 + $0x78] sm:$0xff]
  %v139 = vpack.c.bf16 %v108, %v107
  %v140 = vpack.c.bf16 %v110, %v109
  %v141 = vpack.c.bf16 %v112, %v111
  %v142 = vpack.c.bf16 %v114, %v113
  %v143 = vpack.c.bf16 %v116, %v115
  %v144 = vpack.c.bf16 %v118, %v117
  %v145 = vpack.c.bf16 %v120, %v119
  %v146 = vpack.c.bf16 %v122, %v121
  %v147 = vld [vmem:[%s1] sm:$0xf]
  %v148 = vld [vmem:[%s1 + $0x4] sm:$0xf]
  %v149 = vld [vmem:[%s1 + $0x8] sm:$0xf]
  %v153 = vunpack.c.l.b16 %v147
  %v154 = vunpack.c.l.b16 %v148
  %v155 = vunpack.c.l.b16 %v149
  %v156 = vpack.c.b16 %v154, %v153
  %v157 = vpack.c.b16 %v155, %v155
  %vm159 = vcmask 195584
  %v161 = vsel %vm159, %v139, 0
  %v164 = vsel %vm159, %v140, 0
  %v167 = vsel %vm159, %v141, 0
  %v170 = vsel %vm159, %v142, 0
  %v173 = vsel %vm159, %v143, 0
  %v176 = vsel %vm159, %v144, 0
  %v179 = vsel %vm159, %v145, 0
  %v182 = vsel %vm159, %v146, 0
  %vm184 = vcmask 1043456
  %v186 = vsel %vm184, %v157, 0
  %188 = vmatprep.subr.bf16.mxu0 0
  %189 = vmatpush1.bf16.msra.mxu0 0
  %190 = vmatprep.subr.bf16.mxu0 0
  %191 = vmatpush1.bf16.msra.mxu0 0
  %192 = vmatprep.subr.bf16.mxu0 0
  %193 = vmatpush1.bf16.msra.mxu0 0
  %194 = vmatprep.subr.bf16.mxu0 0
  %195 = vmatpush1.bf16.msra.mxu0 0
  %196 = vmatprep.subr.bf16.mxu0 0
  %197 = vmatpush1.bf16.msra.mxu0 0
  %198 = vmatprep.subr.bf16.mxu0 0
  %199 = vmatpush1.bf16.msra.mxu0 0
  %200 = vmatprep.subr.bf16.mxu0 0
  %201 = vmatpush1.bf16.msra.mxu0 %v186
  %202 = vmatprep.subr.bf16.mxu0 0
  %203 = vmatpush1.bf16.msra.mxu0 %v156
  %204 = vmatprep.subr.bf16.mxu0 0
  %205 = vmatpush2.bf16.msra.mxu0 0
  %206 = vmatprep.subr.bf16.mxu0 0
  %207 = vmatpush2.bf16.msra.mxu0 0
  %208 = vmatprep.subr.bf16.mxu0 0
  %209 = vmatpush2.bf16.msra.mxu0 0
  %210 = vmatprep.subr.bf16.mxu0 0
  %211 = vmatpush2.bf16.msra.mxu0 0
  %212 = vmatprep.subr.bf16.mxu0 0
  %213 = vmatpush2.bf16.msra.mxu0 0
  %214 = vmatprep.subr.bf16.mxu0 0
  %215 = vmatpush2.bf16.msra.mxu0 0
  %216 = vmatprep.subr.bf16.mxu0 0
  %217 = vmatpush2.bf16.msra.mxu0 0
  %218 = vmatprep.subr.bf16.mxu0 0
  %219 = vmatpush2.bf16.msra.mxu0 0
  %220 = vmatprep.mubr.bf16.mxu0 0
  %221 = vmatmul.mubr.bf16.gmra.mxu0 %v161
  %v222 = vpop.f32.mrf.mxu0
  %v223 = vadd.f32 0.0, %v222
  %v224 = vpop.f32.mrf.mxu0
  %v225 = vpop.f32.mrf.mxu0
  %v226 = vadd.f32 0.0, %v225
  %v227 = vpop.f32.mrf.mxu0
  %228 = vmatprep.mubr.bf16.mxu0 0
  %229 = vmatmul.mubr.bf16.gmra.mxu0 %v164
  %v230 = vpop.f32.mrf.mxu0
  %v231 = vadd.f32 0.0, %v230
  %v232 = vpop.f32.mrf.mxu0
  %v233 = vpop.f32.mrf.mxu0
  %v234 = vadd.f32 0.0, %v233
  %v235 = vpop.f32.mrf.mxu0
  %236 = vmatprep.mubr.bf16.mxu0 0
  %237 = vmatmul.mubr.bf16.gmra.mxu0 %v167
  %v238 = vpop.f32.mrf.mxu0
  %v239 = vadd.f32 0.0, %v238
  %v240 = vpop.f32.mrf.mxu0
  %v241 = vpop.f32.mrf.mxu0
  %v242 = vadd.f32 0.0, %v241
  %v243 = vpop.f32.mrf.mxu0
  %244 = vmatprep.mubr.bf16.mxu0 0
  %245 = vmatmul.mubr.bf16.gmra.mxu0 %v170
  %v246 = vpop.f32.mrf.mxu0
  %v247 = vadd.f32 0.0, %v246
  %v248 = vpop.f32.mrf.mxu0
  %v249 = vpop.f32.mrf.mxu0
  %v250 = vadd.f32 0.0, %v249
  %v251 = vpop.f32.mrf.mxu0
  %252 = vmatprep.mubr.bf16.mxu0 0
  %253 = vmatmul.mubr.bf16.gmra.mxu0 %v173
  %v254 = vpop.f32.mrf.mxu0
  %v255 = vadd.f32 0.0, %v254
  %v256 = vpop.f32.mrf.mxu0
  %v257 = vpop.f32.mrf.mxu0
  %v258 = vadd.f32 0.0, %v257
  %v259 = vpop.f32.mrf.mxu0
  %260 = vmatprep.mubr.bf16.mxu0 0
  %261 = vmatmul.mubr.bf16.gmra.mxu0 %v176
  %v262 = vpop.f32.mrf.mxu0
  %v263 = vadd.f32 0.0, %v262
  %v264 = vpop.f32.mrf.mxu0
  %v265 = vpop.f32.mrf.mxu0
  %v266 = vadd.f32 0.0, %v265
  %v267 = vpop.f32.mrf.mxu0
  %268 = vmatprep.mubr.bf16.mxu0 0
  %269 = vmatmul.mubr.bf16.gmra.mxu0 %v179
  %v270 = vpop.f32.mrf.mxu0
  %v271 = vadd.f32 0.0, %v270
  %v272 = vpop.f32.mrf.mxu0
  %v273 = vpop.f32.mrf.mxu0
  %v274 = vadd.f32 0.0, %v273
  %v275 = vpop.f32.mrf.mxu0
  %276 = vmatprep.mubr.bf16.mxu0 0
  %277 = vmatmul.mubr.bf16.gmra.mxu0 %v182
  %v278 = vpop.f32.mrf.mxu0
  %v279 = vadd.f32 0.0, %v278
  %v280 = vpop.f32.mrf.mxu0
  %v281 = vpop.f32.mrf.mxu0
  %v282 = vadd.f32 0.0, %v281
  %v283 = vpop.f32.mrf.mxu0
  %284 = vdwg.mxu0
  %v285 = vadd.f32 %v123, %v223
  %v286 = vadd.f32 %v124, %v226
  %v287 = vadd.f32 %v125, %v231
  %v288 = vadd.f32 %v126, %v234
  %v289 = vadd.f32 %v127, %v239
  %v290 = vadd.f32 %v128, %v242
  %v291 = vadd.f32 %v129, %v247
  %v292 = vadd.f32 %v130, %v250
  %v293 = vadd.f32 %v131, %v255
  %v294 = vadd.f32 %v132, %v258
  %v295 = vadd.f32 %v133, %v263
  %v296 = vadd.f32 %v134, %v266
  %v297 = vadd.f32 %v135, %v271
  %v298 = vadd.f32 %v136, %v274
  %v299 = vadd.f32 %v137, %v279
  %v300 = vadd.f32 %v138, %v282
  %vm301 = vcmask 261120
  %302 = vst.msk [vmem:[#allocation2] sm:$0xff] %vm301, %v285
  %303 = vst.msk [vmem:[#allocation2 + $0x8] sm:$0xff] %vm301, %v286
  %304 = vst.msk [vmem:[#allocation2 + $0x10] sm:$0xff] %vm301, %v287
  %305 = vst.msk [vmem:[#allocation2 + $0x18] sm:$0xff] %vm301, %v288
  %306 = vst.msk [vmem:[#allocation2 + $0x20] sm:$0xff] %vm301, %v289
  %307 = vst.msk [vmem:[#allocation2 + $0x28] sm:$0xff] %vm301, %v290
  %308 = vst.msk [vmem:[#allocation2 + $0x30] sm:$0xff] %vm301, %v291
  %309 = vst.msk [vmem:[#allocation2 + $0x38] sm:$0xff] %vm301, %v292
  %310 = vst.msk [vmem:[#allocation2 + $0x40] sm:$0xff] %vm301, %v293
  %311 = vst.msk [vmem:[#allocation2 + $0x48] sm:$0xff] %vm301, %v294
  %312 = vst.msk [vmem:[#allocation2 + $0x50] sm:$0xff] %vm301, %v295
  %313 = vst.msk [vmem:[#allocation2 + $0x58] sm:$0xff] %vm301, %v296
  %314 = vst.msk [vmem:[#allocation2 + $0x60] sm:$0xff] %vm301, %v297
  %315 = vst.msk [vmem:[#allocation2 + $0x68] sm:$0xff] %vm301, %v298
  %316 = vst.msk [vmem:[#allocation2 + $0x70] sm:$0xff] %vm301, %v299
  %317 = vst.msk [vmem:[#allocation2 + $0x78] sm:$0xff] %vm301, %v300
  // Predicated region
  $region30: #{e_densenet_forward.29} parent=0 // pred_check
    %p318 = pneg %p24
  $region31: #{e_densenet_forward.29} parent=0 // pred_check_branch
    %320 = sbr.rel (%p318) target = $region33
  $region32: #{e_densenet_forward.29} parent=0 // pred_region
    %v321 = vld [vmem:[#allocation2] sm:$0xff]
    %v322 = vld [vmem:[#allocation2 + $0x8] sm:$0xff]
    %v323 = vld [vmem:[#allocation2 + $0x10] sm:$0xff]
    %v324 = vld [vmem:[#allocation2 + $0x18] sm:$0xff]
    %v325 = vld [vmem:[#allocation2 + $0x20] sm:$0xff]
    %v326 = vld [vmem:[#allocation2 + $0x28] sm:$0xff]
    %v327 = vld [vmem:[#allocation2 + $0x30] sm:$0xff]
    %v328 = vld [vmem:[#allocation2 + $0x38] sm:$0xff]
    %v329 = vld [vmem:[#allocation2 + $0x40] sm:$0xff]
    %v330 = vld [vmem:[#allocation2 + $0x48] sm:$0xff]
    %v331 = vld [vmem:[#allocation2 + $0x50] sm:$0xff]
    %v332 = vld [vmem:[#allocation2 + $0x58] sm:$0xff]
    %v333 = vld [vmem:[#allocation2 + $0x60] sm:$0xff]
    %v334 = vld [vmem:[#allocation2 + $0x68] sm:$0xff]
    %v335 = vld [vmem:[#allocation2 + $0x70] sm:$0xff]
    %v336 = vld [vmem:[#allocation2 + $0x78] sm:$0xff]
    %v337 = vld [vmem:[%s4] sm:$0x1]
    %v339 = vlaneseq
    %v340 = vshrl.u32 %v339, 7
    %v341 = vsub.s32 0, %v340
    %v342 = vrot.slane %v337, %v341
    %v344 = vmul.f32 %v321, %v342
    %v345 = vmul.f32 %v322, %v342
    %v346 = vmul.f32 %v323, %v342
    %v347 = vmul.f32 %v324, %v342
    %v348 = vmul.f32 %v325, %v342
    %v349 = vmul.f32 %v326, %v342
    %v350 = vmul.f32 %v327, %v342
    %v351 = vmul.f32 %v328, %v342
    %v352 = vmul.f32 %v329, %v342
    %v353 = vmul.f32 %v330, %v342
    %v354 = vmul.f32 %v331, %v342
    %v355 = vmul.f32 %v332, %v342
    %v356 = vmul.f32 %v333, %v342
    %v357 = vmul.f32 %v334, %v342
    %v358 = vmul.f32 %v335, %v342
    %v359 = vmul.f32 %v336, %v342
    %v360 = vld [vmem:[%s5] sm:$0x1]
    %v362 = vlaneseq
    %v363 = vshrl.u32 %v362, 7
    %v364 = vsub.s32 0, %v363
    %v365 = vrot.slane %v360, %v364
    %v367 = vadd.f32 %v344, %v365
    %v368 = vadd.f32 %v345, %v365
    %v369 = vadd.f32 %v346, %v365
    %v370 = vadd.f32 %v347, %v365
    %v371 = vadd.f32 %v348, %v365
    %v372 = vadd.f32 %v349, %v365
    %v373 = vadd.f32 %v350, %v365
    %v374 = vadd.f32 %v351, %v365
    %v375 = vadd.f32 %v352, %v365
    %v376 = vadd.f32 %v353, %v365
    %v377 = vadd.f32 %v354, %v365
    %v378 = vadd.f32 %v355, %v365
    %v379 = vadd.f32 %v356, %v365
    %v380 = vadd.f32 %v357, %v365
    %v381 = vadd.f32 %v358, %v365
    %v382 = vadd.f32 %v359, %v365
    %v383 = vmax.f32 %v367, 0.0
    %v384 = vmax.f32 %v368, 0.0
    %v385 = vmax.f32 %v369, 0.0
    %v386 = vmax.f32 %v370, 0.0
    %v387 = vmax.f32 %v371, 0.0
    %v388 = vmax.f32 %v372, 0.0
    %v389 = vmax.f32 %v373, 0.0
    %v390 = vmax.f32 %v374, 0.0
    %v391 = vmax.f32 %v375, 0.0
    %v392 = vmax.f32 %v376, 0.0
    %v393 = vmax.f32 %v377, 0.0
    %v394 = vmax.f32 %v378, 0.0
    %v395 = vmax.f32 %v379, 0.0
    %v396 = vmax.f32 %v380, 0.0
    %v397 = vmax.f32 %v381, 0.0
    %v398 = vmax.f32 %v382, 0.0
    %399 = vst.msk [vmem:[%s6] sm:$0xff] %vm301, %v383
    %400 = vst.msk [vmem:[%s6 + $0x8] sm:$0xff] %vm301, %v384
    %401 = vst.msk [vmem:[%s6 + $0x10] sm:$0xff] %vm301, %v385
    %402 = vst.msk [vmem:[%s6 + $0x18] sm:$0xff] %vm301, %v386
    %403 = vst.msk [vmem:[%s6 + $0x20] sm:$0xff] %vm301, %v387
    %404 = vst.msk [vmem:[%s6 + $0x28] sm:$0xff] %vm301, %v388
    %405 = vst.msk [vmem:[%s6 + $0x30] sm:$0xff] %vm301, %v389
    %406 = vst.msk [vmem:[%s6 + $0x38] sm:$0xff] %vm301, %v390
    %407 = vst.msk [vmem:[%s6 + $0x40] sm:$0xff] %vm301, %v391
    %408 = vst.msk [vmem:[%s6 + $0x48] sm:$0xff] %vm301, %v392
    %409 = vst.msk [vmem:[%s6 + $0x50] sm:$0xff] %vm301, %v393
    %410 = vst.msk [vmem:[%s6 + $0x58] sm:$0xff] %vm301, %v394
    %411 = vst.msk [vmem:[%s6 + $0x60] sm:$0xff] %vm301, %v395
    %412 = vst.msk [vmem:[%s6 + $0x68] sm:$0xff] %vm301, %v396
    %413 = vst.msk [vmem:[%s6 + $0x70] sm:$0xff] %vm301, %v397
    %414 = vst.msk [vmem:[%s6 + $0x78] sm:$0xff] %vm301, %v398
  $region33: #{e_densenet_forward.29} parent=0 // pred_fallthru
    _
  // Predicated region
  $region34: #{e_densenet_forward.29} parent=0 // pred_check
    _
  $region35: #{e_densenet_forward.29} parent=0 // pred_check_branch
    %416 = sbr.rel (0) target = $region37
  $region36: #{e_densenet_forward.29} parent=0 // pred_region
    _
  $region37: #{e_densenet_forward.29} parent=0 // pred_fallthru
    _
  // Predicated region
  $region38: #{e_densenet_forward.29} parent=0 // pred_check
    _
  $region39: #{e_densenet_forward.29} parent=0 // pred_check_branch
    %418 = sbr.rel (0) target = $region41
  $region40: #{e_densenet_forward.29} parent=0 // pred_region
    _
  $region41: #{e_densenet_forward.29} parent=0 // pred_fallthru
    _

// kernel: e_densenet_forward.30
$region0: #{e_densenet_forward.30}
  #allocation0 [shape = 'u32[]', space=smem, size = 0x4, offset = 0x4, fixed_abs, tag = 'smem constant byte address 0x4 - core index']
  #allocation1 [shape = 'u32[144,128]{1,0:T(1,128)}', space=vmem, size = 0x12000, scoped, tag = 'internal scratch']
  #allocation2 [shape = 'f32[128,8]{1,0:T(8,128)}', space=vmem, size = 0x10000, scoped, tag = 'scratch operand']
  %s0 = inlined_call_operand.vmem [shape: bf16[128,288], index: 0, kind: input, shape index: {}]
  %s1 = inlined_call_operand.vmem [shape: bf16[288,8], index: 1, kind: input, shape index: {}]
  %s2 = inlined_call_operand.vmem [shape: f32[128,24], index: 2, kind: input, shape index: {}]
  %s3 = inlined_call_operand.vmem [shape: f32[128,32], index: 3, kind: output, shape index: {}]
  %s4 = sld [smem:[#allocation0]]
  $region30: #{e_densenet_forward.30} parent=0
    _
  %s6 = ssub.s32 1, %s4
  %s7 = scalar_select 0, %s6, %s4
  // Predicated region
  $region2: #{e_densenet_forward.30} parent=0 // pred_check
    _
  $region3: #{e_densenet_forward.30} parent=0 // pred_check_branch
    %9 = sbr.rel (0) target = $region5
  $region4: #{e_densenet_forward.30} parent=0 // pred_region
    _
  $region5: #{e_densenet_forward.30} parent=0 // pred_fallthru
    _
  // Predicated region
  $region6: #{e_densenet_forward.30} parent=0 // pred_check
    _
  $region7: #{e_densenet_forward.30} parent=0 // pred_check_branch
    %11 = sbr.rel (0) target = $region9
  $region8: #{e_densenet_forward.30} parent=0 // pred_region
    _
  $region9: #{e_densenet_forward.30} parent=0 // pred_fallthru
    _
  // Predicated region
  $region10: #{e_densenet_forward.30} parent=0 // pred_check
    _
  $region11: #{e_densenet_forward.30} parent=0 // pred_check_branch
    %13 = sbr.rel (0) target = $region13
  $region12: #{e_densenet_forward.30} parent=0 // pred_region
    _
  $region13: #{e_densenet_forward.30} parent=0 // pred_fallthru
    _
  %p15 = scmp.eq.s32.totalorder 0, 0
  // Predicated region
  $region14: #{e_densenet_forward.30} parent=0 // pred_check
    %p16 = pneg %p15
  $region15: #{e_densenet_forward.30} parent=0 // pred_check_branch
    %18 = sbr.rel (%p16) target = $region17
  $region16: #{e_densenet_forward.30} parent=0 // pred_region
    %vm19 = vcmask 64512
    %20 = vst.msk [vmem:[#allocation2] sm:$0xff] %vm19, 0.0
    %21 = vst.msk [vmem:[#allocation2 + $0x8] sm:$0xff] %vm19, 0.0
    %22 = vst.msk [vmem:[#allocation2 + $0x10] sm:$0xff] %vm19, 0.0
    %23 = vst.msk [vmem:[#allocation2 + $0x18] sm:$0xff] %vm19, 0.0
    %24 = vst.msk [vmem:[#allocation2 + $0x20] sm:$0xff] %vm19, 0.0
    %25 = vst.msk [vmem:[#allocation2 + $0x28] sm:$0xff] %vm19, 0.0
    %26 = vst.msk [vmem:[#allocation2 + $0x30] sm:$0xff] %vm19, 0.0
    %27 = vst.msk [vmem:[#allocation2 + $0x38] sm:$0xff] %vm19, 0.0
    %28 = vst.msk [vmem:[#allocation2 + $0x40] sm:$0xff] %vm19, 0.0
    %29 = vst.msk [vmem:[#allocation2 + $0x48] sm:$0xff] %vm19, 0.0
    %30 = vst.msk [vmem:[#allocation2 + $0x50] sm:$0xff] %vm19, 0.0
    %31 = vst.msk [vmem:[#allocation2 + $0x58] sm:$0xff] %vm19, 0.0
    %32 = vst.msk [vmem:[#allocation2 + $0x60] sm:$0xff] %vm19, 0.0
    %33 = vst.msk [vmem:[#allocation2 + $0x68] sm:$0xff] %vm19, 0.0
    %34 = vst.msk [vmem:[#allocation2 + $0x70] sm:$0xff] %vm19, 0.0
    %35 = vst.msk [vmem:[#allocation2 + $0x78] sm:$0xff] %vm19, 0.0
  $region17: #{e_densenet_forward.30} parent=0 // pred_fallthru
    _
  %v36 = vld [vmem:[%s0] sm:$0xff]
  %v37 = vld [vmem:[%s0 + $0x8] sm:$0xf]
  %v38 = vld [vmem:[%s0 + $0xc] sm:$0xff]
  %v39 = vld [vmem:[%s0 + $0x14] sm:$0xf]
  %v40 = vld [vmem:[%s0 + $0x18] sm:$0xff]
  %v41 = vld [vmem:[%s0 + $0x20] sm:$0xf]
  %v42 = vld [vmem:[%s0 + $0x24] sm:$0xff]
  %v43 = vld [vmem:[%s0 + $0x2c] sm:$0xf]
  %v44 = vld [vmem:[%s0 + $0x30] sm:$0xff]
  %v45 = vld [vmem:[%s0 + $0x38] sm:$0xf]
  %v46 = vld [vmem:[%s0 + $0x3c] sm:$0xff]
  %v47 = vld [vmem:[%s0 + $0x44] sm:$0xf]
  %v48 = vld [vmem:[%s0 + $0x48] sm:$0xff]
  %v49 = vld [vmem:[%s0 + $0x50] sm:$0xf]
  %v50 = vld [vmem:[%s0 + $0x54] sm:$0xff]
  %v51 = vld [vmem:[%s0 + $0x5c] sm:$0xf]
  %v52 = vld [vmem:[%s0 + $0x60] sm:$0xff]
  %v53 = vld [vmem:[%s0 + $0x68] sm:$0xf]
  %v54 = vld [vmem:[%s0 + $0x6c] sm:$0xff]
  %v55 = vld [vmem:[%s0 + $0x74] sm:$0xf]
  %v56 = vld [vmem:[%s0 + $0x78] sm:$0xff]
  %v57 = vld [vmem:[%s0 + $0x80] sm:$0xf]
  %v58 = vld [vmem:[%s0 + $0x84] sm:$0xff]
  %v59 = vld [vmem:[%s0 + $0x8c] sm:$0xf]
  %v60 = vld [vmem:[%s0 + $0x90] sm:$0xff]
  %v61 = vld [vmem:[%s0 + $0x98] sm:$0xf]
  %v62 = vld [vmem:[%s0 + $0x9c] sm:$0xff]
  %v63 = vld [vmem:[%s0 + $0xa4] sm:$0xf]
  %v64 = vld [vmem:[%s0 + $0xa8] sm:$0xff]
  %v65 = vld [vmem:[%s0 + $0xb0] sm:$0xf]
  %v66 = vld [vmem:[%s0 + $0xb4] sm:$0xff]
  %v67 = vld [vmem:[%s0 + $0xbc] sm:$0xf]
  %v68 = vld [vmem:[#allocation2] sm:$0xff]
  %v69 = vld [vmem:[#allocation2 + $0x8] sm:$0xff]
  %v70 = vld [vmem:[#allocation2 + $0x10] sm:$0xff]
  %v71 = vld [vmem:[#allocation2 + $0x18] sm:$0xff]
  %v72 = vld [vmem:[#allocation2 + $0x20] sm:$0xff]
  %v73 = vld [vmem:[#allocation2 + $0x28] sm:$0xff]
  %v74 = vld [vmem:[#allocation2 + $0x30] sm:$0xff]
  %v75 = vld [vmem:[#allocation2 + $0x38] sm:$0xff]
  %v76 = vld [vmem:[#allocation2 + $0x40] sm:$0xff]
  %v77 = vld [vmem:[#allocation2 + $0x48] sm:$0xff]
  %v78 = vld [vmem:[#allocation2 + $0x50] sm:$0xff]
  %v79 = vld [vmem:[#allocation2 + $0x58] sm:$0xff]
  %v80 = vld [vmem:[#allocation2 + $0x60] sm:$0xff]
  %v81 = vld [vmem:[#allocation2 + $0x68] sm:$0xff]
  %v82 = vld [vmem:[#allocation2 + $0x70] sm:$0xff]
  %v83 = vld [vmem:[#allocation2 + $0x78] sm:$0xff]
  %v84 = vld [vmem:[%s1] sm:$0xf]
  %v85 = vld [vmem:[%s1 + $0x4] sm:$0xf]
  %v86 = vld [vmem:[%s1 + $0x8] sm:$0xf]
  %v87 = vld [vmem:[%s1 + $0xc] sm:$0xf]
  %v88 = vld [vmem:[%s1 + $0x10] sm:$0xf]
  %v89 = vld [vmem:[%s1 + $0x14] sm:$0xf]
  %v90 = vld [vmem:[%s1 + $0x18] sm:$0xf]
  %v91 = vld [vmem:[%s1 + $0x1c] sm:$0xf]
  %v92 = vld [vmem:[%s1 + $0x20] sm:$0xf]
  %v93 = vld [vmem:[%s1 + $0x24] sm:$0xf]
  %v94 = vld [vmem:[%s1 + $0x28] sm:$0xf]
  %v95 = vld [vmem:[%s1 + $0x2c] sm:$0xf]
  %v96 = vld [vmem:[%s1 + $0x30] sm:$0xf]
  %v97 = vld [vmem:[%s1 + $0x34] sm:$0xf]
  %v98 = vld [vmem:[%s1 + $0x38] sm:$0xf]
  %v99 = vld [vmem:[%s1 + $0x3c] sm:$0xf]
  %v100 = vld [vmem:[%s1 + $0x40] sm:$0xf]
  %v101 = vld [vmem:[%s1 + $0x44] sm:$0xf]
  %v102 = vld [vmem:[%s1 + $0x48] sm:$0xf]
  %v103 = vld [vmem:[%s1 + $0x4c] sm:$0xf]
  %v104 = vld [vmem:[%s1 + $0x50] sm:$0xf]
  %v105 = vld [vmem:[%s1 + $0x54] sm:$0xf]
  %v106 = vld [vmem:[%s1 + $0x58] sm:$0xf]
  %v107 = vld [vmem:[%s1 + $0x5c] sm:$0xf]
  %v108 = vld [vmem:[%s1 + $0x60] sm:$0xf]
  %v109 = vld [vmem:[%s1 + $0x64] sm:$0xf]
  %v110 = vld [vmem:[%s1 + $0x68] sm:$0xf]
  %v111 = vld [vmem:[%s1 + $0x6c] sm:$0xf]
  %v112 = vld [vmem:[%s1 + $0x70] sm:$0xf]
  %v113 = vld [vmem:[%s1 + $0x74] sm:$0xf]
  %v114 = vld [vmem:[%s1 + $0x78] sm:$0xf]
  %v115 = vld [vmem:[%s1 + $0x7c] sm:$0xf]
  %v116 = vld [vmem:[%s1 + $0x80] sm:$0xf]
  %v117 = vld [vmem:[%s1 + $0x84] sm:$0xf]
  %v118 = vld [vmem:[%s1 + $0x88] sm:$0xf]
  %v119 = vld [vmem:[%s1 + $0x8c] sm:$0xf]
  %v152 = vunpack.c.l.b16 %v36
  %v153 = vunpack.c.h.b16 %v36
  %v154 = vunpack.c.l.b16 %v37
  %v155 = vunpack.c.l.b16 %v38
  %v156 = vunpack.c.h.b16 %v38
  %v157 = vunpack.c.l.b16 %v39
  %v158 = vunpack.c.l.b16 %v40
  %v159 = vunpack.c.h.b16 %v40
  %v160 = vunpack.c.l.b16 %v41
  %v161 = vunpack.c.l.b16 %v42
  %v162 = vunpack.c.h.b16 %v42
  %v163 = vunpack.c.l.b16 %v43
  %v164 = vunpack.c.l.b16 %v44
  %v165 = vunpack.c.h.b16 %v44
  %v166 = vunpack.c.l.b16 %v45
  %v167 = vunpack.c.l.b16 %v46
  %v168 = vunpack.c.h.b16 %v46
  %v169 = vunpack.c.l.b16 %v47
  %v170 = vunpack.c.l.b16 %v48
  %v171 = vunpack.c.h.b16 %v48
  %v172 = vunpack.c.l.b16 %v49
  %v173 = vunpack.c.l.b16 %v50
  %v174 = vunpack.c.h.b16 %v50
  %v175 = vunpack.c.l.b16 %v51
  %v176 = vunpack.c.l.b16 %v52
  %v177 = vunpack.c.h.b16 %v52
  %v178 = vunpack.c.l.b16 %v53
  %v179 = vunpack.c.l.b16 %v54
  %v180 = vunpack.c.h.b16 %v54
  %v181 = vunpack.c.l.b16 %v55
  %v182 = vunpack.c.l.b16 %v56
  %v183 = vunpack.c.h.b16 %v56
  %v184 = vunpack.c.l.b16 %v57
  %v185 = vunpack.c.l.b16 %v58
  %v186 = vunpack.c.h.b16 %v58
  %v187 = vunpack.c.l.b16 %v59
  %v188 = vunpack.c.l.b16 %v60
  %v189 = vunpack.c.h.b16 %v60
  %v190 = vunpack.c.l.b16 %v61
  %v191 = vunpack.c.l.b16 %v62
  %v192 = vunpack.c.h.b16 %v62
  %v193 = vunpack.c.l.b16 %v63
  %v194 = vunpack.c.l.b16 %v64
  %v195 = vunpack.c.h.b16 %v64
  %v196 = vunpack.c.l.b16 %v65
  %v197 = vunpack.c.l.b16 %v66
  %v198 = vunpack.c.h.b16 %v66
  %v199 = vunpack.c.l.b16 %v67
  %v200 = vpack.c.b16 %v155, %v152
  %v201 = vpack.c.b16 %v156, %v153
  %v202 = vpack.c.b16 %v157, %v154
  %v203 = vpack.c.b16 %v161, %v158
  %v204 = vpack.c.b16 %v162, %v159
  %v205 = vpack.c.b16 %v163, %v160
  %v206 = vpack.c.b16 %v167, %v164
  %v207 = vpack.c.b16 %v168, %v165
  %v208 = vpack.c.b16 %v169, %v166
  %v209 = vpack.c.b16 %v173, %v170
  %v210 = vpack.c.b16 %v174, %v171
  %v211 = vpack.c.b16 %v175, %v172
  %v212 = vpack.c.b16 %v179, %v176
  %v213 = vpack.c.b16 %v180, %v177
  %v214 = vpack.c.b16 %v181, %v178
  %v215 = vpack.c.b16 %v185, %v182
  %v216 = vpack.c.b16 %v186, %v183
  %v217 = vpack.c.b16 %v187, %v184
  %v218 = vpack.c.b16 %v191, %v188
  %v219 = vpack.c.b16 %v192, %v189
  %v220 = vpack.c.b16 %v193, %v190
  %v221 = vpack.c.b16 %v197, %v194
  %v222 = vpack.c.b16 %v198, %v195
  %v223 = vpack.c.b16 %v199, %v196
  %v276 = vunpack.c.l.b16 %v84
  %v277 = vunpack.c.l.b16 %v85
  %v278 = vunpack.c.l.b16 %v86
  %v279 = vunpack.c.l.b16 %v87
  %v280 = vunpack.c.l.b16 %v88
  %v281 = vunpack.c.l.b16 %v89
  %v282 = vunpack.c.l.b16 %v90
  %v283 = vunpack.c.l.b16 %v91
  %v284 = vunpack.c.l.b16 %v92
  %v285 = vunpack.c.l.b16 %v93
  %v286 = vunpack.c.l.b16 %v94
  %v287 = vunpack.c.l.b16 %v95
  %v288 = vunpack.c.l.b16 %v96
  %v289 = vunpack.c.l.b16 %v97
  %v290 = vunpack.c.l.b16 %v98
  %v291 = vunpack.c.l.b16 %v99
  %v292 = vunpack.c.l.b16 %v100
  %v293 = vunpack.c.l.b16 %v101
  %v294 = vunpack.c.l.b16 %v102
  %v295 = vunpack.c.l.b16 %v103
  %v296 = vunpack.c.l.b16 %v104
  %v297 = vunpack.c.l.b16 %v105
  %v298 = vunpack.c.l.b16 %v106
  %v299 = vunpack.c.l.b16 %v107
  %v300 = vunpack.c.l.b16 %v108
  %v301 = vunpack.c.l.b16 %v109
  %v302 = vunpack.c.l.b16 %v110
  %v303 = vunpack.c.l.b16 %v111
  %v304 = vunpack.c.l.b16 %v112
  %v305 = vunpack.c.l.b16 %v113
  %v306 = vunpack.c.l.b16 %v114
  %v307 = vunpack.c.l.b16 %v115
  %v308 = vunpack.c.l.b16 %v116
  %v309 = vunpack.c.l.b16 %v117
  %v310 = vunpack.c.l.b16 %v118
  %v311 = vunpack.c.l.b16 %v119
  %v312 = vpack.c.b16 %v277, %v276
  %v313 = vpack.c.b16 %v279, %v278
  %v314 = vpack.c.b16 %v281, %v280
  %v315 = vpack.c.b16 %v283, %v282
  %v316 = vpack.c.b16 %v285, %v284
  %v317 = vpack.c.b16 %v287, %v286
  %v318 = vpack.c.b16 %v289, %v288
  %v319 = vpack.c.b16 %v291, %v290
  %v320 = vpack.c.b16 %v293, %v292
  %v321 = vpack.c.b16 %v295, %v294
  %v322 = vpack.c.b16 %v297, %v296
  %v323 = vpack.c.b16 %v299, %v298
  %v324 = vpack.c.b16 %v301, %v300
  %v325 = vpack.c.b16 %v303, %v302
  %v326 = vpack.c.b16 %v305, %v304
  %v327 = vpack.c.b16 %v307, %v306
  %v328 = vpack.c.b16 %v309, %v308
  %v329 = vpack.c.b16 %v311, %v310
  %vm348 = vcmask 261120
  %v350 = vsel %vm348, %v202, 0
  %v353 = vsel %vm348, %v205, 0
  %v356 = vsel %vm348, %v208, 0
  %v359 = vsel %vm348, %v211, 0
  %v362 = vsel %vm348, %v214, 0
  %v365 = vsel %vm348, %v217, 0
  %v368 = vsel %vm348, %v220, 0
  %v371 = vsel %vm348, %v223, 0
  %373 = vmatprep.subr.bf16.mxu0 0
  %374 = vmatpush1.bf16.msra.mxu0 %v319
  %375 = vmatprep.subr.bf16.mxu0 0
  %376 = vmatpush1.bf16.msra.mxu0 %v318
  %377 = vmatprep.subr.bf16.mxu0 0
  %378 = vmatpush1.bf16.msra.mxu0 %v317
  %379 = vmatprep.subr.bf16.mxu0 0
  %380 = vmatpush1.bf16.msra.mxu0 %v316
  %381 = vmatprep.subr.bf16.mxu0 0
  %382 = vmatpush1.bf16.msra.mxu0 %v315
  %383 = vmatprep.subr.bf16.mxu0 0
  %384 = vmatpush1.bf16.msra.mxu0 %v314
  %385 = vmatprep.subr.bf16.mxu0 0
  %386 = vmatpush1.bf16.msra.mxu0 %v313
  %387 = vmatprep.subr.bf16.mxu0 0
  %388 = vmatpush1.bf16.msra.mxu0 %v312
  %389 = vmatprep.subr.bf16.mxu0 0
  %390 = vmatpush2.bf16.msra.mxu0 %v327
  %391 = vmatprep.subr.bf16.mxu0 0
  %392 = vmatpush2.bf16.msra.mxu0 %v326
  %393 = vmatprep.subr.bf16.mxu0 0
  %394 = vmatpush2.bf16.msra.mxu0 %v325
  %395 = vmatprep.subr.bf16.mxu0 0
  %396 = vmatpush2.bf16.msra.mxu0 %v324
  %397 = vmatprep.subr.bf16.mxu0 0
  %398 = vmatpush2.bf16.msra.mxu0 %v323
  %399 = vmatprep.subr.bf16.mxu0 0
  %400 = vmatpush2.bf16.msra.mxu0 %v322
  %401 = vmatprep.subr.bf16.mxu0 0
  %402 = vmatpush2.bf16.msra.mxu0 %v321
  %403 = vmatprep.subr.bf16.mxu0 0
  %404 = vmatpush2.bf16.msra.mxu0 %v320
  %405 = vmatprep.mubr.bf16.mxu0 %v201
  %406 = vmatmul.mubr.bf16.gmra.mxu0 %v200
  %v407 = vpop.f32.mrf.mxu0
  %v408 = vadd.f32 0.0, %v407
  %v409 = vpop.f32.mrf.mxu0
  %v410 = vpop.f32.mrf.mxu0
  %v411 = vadd.f32 0.0, %v410
  %v412 = vpop.f32.mrf.mxu0
  %413 = vmatprep.mubr.bf16.mxu0 %v204
  %414 = vmatmul.mubr.bf16.gmra.mxu0 %v203
  %v415 = vpop.f32.mrf.mxu0
  %v416 = vadd.f32 0.0, %v415
  %v417 = vpop.f32.mrf.mxu0
  %v418 = vpop.f32.mrf.mxu0
  %v419 = vadd.f32 0.0, %v418
  %v420 = vpop.f32.mrf.mxu0
  %421 = vmatprep.mubr.bf16.mxu0 %v207
  %422 = vmatmul.mubr.bf16.gmra.mxu0 %v206
  %v423 = vpop.f32.mrf.mxu0
  %v424 = vadd.f32 0.0, %v423
  %v425 = vpop.f32.mrf.mxu0
  %v426 = vpop.f32.mrf.mxu0
  %v427 = vadd.f32 0.0, %v426
  %v428 = vpop.f32.mrf.mxu0
  %429 = vmatprep.mubr.bf16.mxu0 %v210
  %430 = vmatmul.mubr.bf16.gmra.mxu0 %v209
  %v431 = vpop.f32.mrf.mxu0
  %v432 = vadd.f32 0.0, %v431
  %v433 = vpop.f32.mrf.mxu0
  %v434 = vpop.f32.mrf.mxu0
  %v435 = vadd.f32 0.0, %v434
  %v436 = vpop.f32.mrf.mxu0
  %437 = vmatprep.mubr.bf16.mxu0 %v213
  %438 = vmatmul.mubr.bf16.gmra.mxu0 %v212
  %v439 = vpop.f32.mrf.mxu0
  %v440 = vadd.f32 0.0, %v439
  %v441 = vpop.f32.mrf.mxu0
  %v442 = vpop.f32.mrf.mxu0
  %v443 = vadd.f32 0.0, %v442
  %v444 = vpop.f32.mrf.mxu0
  %445 = vmatprep.mubr.bf16.mxu0 %v216
  %446 = vmatmul.mubr.bf16.gmra.mxu0 %v215
  %v447 = vpop.f32.mrf.mxu0
  %v448 = vadd.f32 0.0, %v447
  %v449 = vpop.f32.mrf.mxu0
  %v450 = vpop.f32.mrf.mxu0
  %v451 = vadd.f32 0.0, %v450
  %v452 = vpop.f32.mrf.mxu0
  %453 = vmatprep.mubr.bf16.mxu0 %v219
  %454 = vmatmul.mubr.bf16.gmra.mxu0 %v218
  %v455 = vpop.f32.mrf.mxu0
  %v456 = vadd.f32 0.0, %v455
  %v457 = vpop.f32.mrf.mxu0
  %v458 = vpop.f32.mrf.mxu0
  %v459 = vadd.f32 0.0, %v458
  %v460 = vpop.f32.mrf.mxu0
  %461 = vmatprep.mubr.bf16.mxu0 %v222
  %462 = vmatmul.mubr.bf16.gmra.mxu0 %v221
  %v463 = vpop.f32.mrf.mxu0
  %v464 = vadd.f32 0.0, %v463
  %v465 = vpop.f32.mrf.mxu0
  %v466 = vpop.f32.mrf.mxu0
  %v467 = vadd.f32 0.0, %v466
  %v468 = vpop.f32.mrf.mxu0
  %469 = vdwg.mxu0
  %470 = vmatprep.subr.bf16.mxu0 0
  %471 = vmatpush1.bf16.msra.mxu0 0
  %472 = vmatprep.subr.bf16.mxu0 0
  %473 = vmatpush1.bf16.msra.mxu0 0
  %474 = vmatprep.subr.bf16.mxu0 0
  %475 = vmatpush1.bf16.msra.mxu0 0
  %476 = vmatprep.subr.bf16.mxu0 0
  %477 = vmatpush1.bf16.msra.mxu0 0
  %478 = vmatprep.subr.bf16.mxu0 0
  %479 = vmatpush1.bf16.msra.mxu0 0
  %480 = vmatprep.subr.bf16.mxu0 0
  %481 = vmatpush1.bf16.msra.mxu0 0
  %482 = vmatprep.subr.bf16.mxu0 0
  %483 = vmatpush1.bf16.msra.mxu0 %v329
  %484 = vmatprep.subr.bf16.mxu0 0
  %485 = vmatpush1.bf16.msra.mxu0 %v328
  %486 = vmatprep.subr.bf16.mxu0 0
  %487 = vmatpush2.bf16.msra.mxu0 0
  %488 = vmatprep.subr.bf16.mxu0 0
  %489 = vmatpush2.bf16.msra.mxu0 0
  %490 = vmatprep.subr.bf16.mxu0 0
  %491 = vmatpush2.bf16.msra.mxu0 0
  %492 = vmatprep.subr.bf16.mxu0 0
  %493 = vmatpush2.bf16.msra.mxu0 0
  %494 = vmatprep.subr.bf16.mxu0 0
  %495 = vmatpush2.bf16.msra.mxu0 0
  %496 = vmatprep.subr.bf16.mxu0 0
  %497 = vmatpush2.bf16.msra.mxu0 0
  %498 = vmatprep.subr.bf16.mxu0 0
  %499 = vmatpush2.bf16.msra.mxu0 0
  %500 = vmatprep.subr.bf16.mxu0 0
  %501 = vmatpush2.bf16.msra.mxu0 0
  %502 = vmatprep.mubr.bf16.mxu0 0
  %503 = vmatmul.mubr.bf16.gmra.mxu0 %v350
  %v504 = vpop.f32.mrf.mxu0
  %v505 = vadd.f32 %v408, %v504
  %v506 = vpop.f32.mrf.mxu0
  %v507 = vpop.f32.mrf.mxu0
  %v508 = vadd.f32 %v411, %v507
  %v509 = vpop.f32.mrf.mxu0
  %510 = vmatprep.mubr.bf16.mxu0 0
  %511 = vmatmul.mubr.bf16.gmra.mxu0 %v353
  %v512 = vpop.f32.mrf.mxu0
  %v513 = vadd.f32 %v416, %v512
  %v514 = vpop.f32.mrf.mxu0
  %v515 = vpop.f32.mrf.mxu0
  %v516 = vadd.f32 %v419, %v515
  %v517 = vpop.f32.mrf.mxu0
  %518 = vmatprep.mubr.bf16.mxu0 0
  %519 = vmatmul.mubr.bf16.gmra.mxu0 %v356
  %v520 = vpop.f32.mrf.mxu0
  %v521 = vadd.f32 %v424, %v520
  %v522 = vpop.f32.mrf.mxu0
  %v523 = vpop.f32.mrf.mxu0
  %v524 = vadd.f32 %v427, %v523
  %v525 = vpop.f32.mrf.mxu0
  %526 = vmatprep.mubr.bf16.mxu0 0
  %527 = vmatmul.mubr.bf16.gmra.mxu0 %v359
  %v528 = vpop.f32.mrf.mxu0
  %v529 = vadd.f32 %v432, %v528
  %v530 = vpop.f32.mrf.mxu0
  %v531 = vpop.f32.mrf.mxu0
  %v532 = vadd.f32 %v435, %v531
  %v533 = vpop.f32.mrf.mxu0
  %534 = vmatprep.mubr.bf16.mxu0 0
  %535 = vmatmul.mubr.bf16.gmra.mxu0 %v362
  %v536 = vpop.f32.mrf.mxu0
  %v537 = vadd.f32 %v440, %v536
  %v538 = vpop.f32.mrf.mxu0
  %v539 = vpop.f32.mrf.mxu0
  %v540 = vadd.f32 %v443, %v539
  %v541 = vpop.f32.mrf.mxu0
  %542 = vmatprep.mubr.bf16.mxu0 0
  %543 = vmatmul.mubr.bf16.gmra.mxu0 %v365
  %v544 = vpop.f32.mrf.mxu0
  %v545 = vadd.f32 %v448, %v544
  %v546 = vpop.f32.mrf.mxu0
  %v547 = vpop.f32.mrf.mxu0
  %v548 = vadd.f32 %v451, %v547
  %v549 = vpop.f32.mrf.mxu0
  %550 = vmatprep.mubr.bf16.mxu0 0
  %551 = vmatmul.mubr.bf16.gmra.mxu0 %v368
  %v552 = vpop.f32.mrf.mxu0
  %v553 = vadd.f32 %v456, %v552
  %v554 = vpop.f32.mrf.mxu0
  %v555 = vpop.f32.mrf.mxu0
  %v556 = vadd.f32 %v459, %v555
  %v557 = vpop.f32.mrf.mxu0
  %558 = vmatprep.mubr.bf16.mxu0 0
  %559 = vmatmul.mubr.bf16.gmra.mxu0 %v371
  %v560 = vpop.f32.mrf.mxu0
  %v561 = vadd.f32 %v464, %v560
  %v562 = vpop.f32.mrf.mxu0
  %v563 = vpop.f32.mrf.mxu0
  %v564 = vadd.f32 %v467, %v563
  %v565 = vpop.f32.mrf.mxu0
  %566 = vdwg.mxu0
  %v567 = vadd.f32 %v68, %v505
  %v568 = vadd.f32 %v69, %v508
  %v569 = vadd.f32 %v70, %v513
  %v570 = vadd.f32 %v71, %v516
  %v571 = vadd.f32 %v72, %v521
  %v572 = vadd.f32 %v73, %v524
  %v573 = vadd.f32 %v74, %v529
  %v574 = vadd.f32 %v75, %v532
  %v575 = vadd.f32 %v76, %v537
  %v576 = vadd.f32 %v77, %v540
  %v577 = vadd.f32 %v78, %v545
  %v578 = vadd.f32 %v79, %v548
  %v579 = vadd.f32 %v80, %v553
  %v580 = vadd.f32 %v81, %v556
  %v581 = vadd.f32 %v82, %v561
  %v582 = vadd.f32 %v83, %v564
  %vm583 = vcmask 64512
  %584 = vst.msk [vmem:[#allocation2] sm:$0xff] %vm583, %v567
  %585 = vst.msk [vmem:[#allocation2 + $0x8] sm:$0xff] %vm583, %v568
  %586 = vst.msk [vmem:[#allocation2 + $0x10] sm:$0xff] %vm583, %v569
  %587 = vst.msk [vmem:[#allocation2 + $0x18] sm:$0xff] %vm583, %v570
  %588 = vst.msk [vmem:[#allocation2 + $0x20] sm:$0xff] %vm583, %v571
  %589 = vst.msk [vmem:[#allocation2 + $0x28] sm:$0xff] %vm583, %v572
  %590 = vst.msk [vmem:[#allocation2 + $0x30] sm:$0xff] %vm583, %v573
  %591 = vst.msk [vmem:[#allocation2 + $0x38] sm:$0xff] %vm583, %v574
  %592 = vst.msk [vmem:[#allocation2 + $0x40] sm:$0xff] %vm583, %v575
  %593 = vst.msk [vmem:[#allocation2 + $0x48] sm:$0xff] %vm583, %v576
  %594 = vst.msk [vmem:[#allocation2 + $0x50] sm:$0xff] %vm583, %v577
  %595 = vst.msk [vmem:[#allocation2 + $0x58] sm:$0xff] %vm583, %v578
  %596 = vst.msk [vmem:[#allocation2 + $0x60] sm:$0xff] %vm583, %v579
  %597 = vst.msk [vmem:[#allocation2 + $0x68] sm:$0xff] %vm583, %v580
  %598 = vst.msk [vmem:[#allocation2 + $0x70] sm:$0xff] %vm583, %v581
  %599 = vst.msk [vmem:[#allocation2 + $0x78] sm:$0xff] %vm583, %v582
  // Predicated region
  $region18: #{e_densenet_forward.30} parent=0 // pred_check
    %p600 = pneg %p15
  $region19: #{e_densenet_forward.30} parent=0 // pred_check_branch
    %602 = sbr.rel (%p600) target = $region21
  $region20: #{e_densenet_forward.30} parent=0 // pred_region
    %v603 = vld [vmem:[#allocation2] sm:$0xff]
    %v604 = vld [vmem:[#allocation2 + $0x8] sm:$0xff]
    %v605 = vld [vmem:[#allocation2 + $0x10] sm:$0xff]
    %v606 = vld [vmem:[#allocation2 + $0x18] sm:$0xff]
    %v607 = vld [vmem:[#allocation2 + $0x20] sm:$0xff]
    %v608 = vld [vmem:[#allocation2 + $0x28] sm:$0xff]
    %v609 = vld [vmem:[#allocation2 + $0x30] sm:$0xff]
    %v610 = vld [vmem:[#allocation2 + $0x38] sm:$0xff]
    %v611 = vld [vmem:[#allocation2 + $0x40] sm:$0xff]
    %v612 = vld [vmem:[#allocation2 + $0x48] sm:$0xff]
    %v613 = vld [vmem:[#allocation2 + $0x50] sm:$0xff]
    %v614 = vld [vmem:[#allocation2 + $0x58] sm:$0xff]
    %v615 = vld [vmem:[#allocation2 + $0x60] sm:$0xff]
    %v616 = vld [vmem:[#allocation2 + $0x68] sm:$0xff]
    %v617 = vld [vmem:[#allocation2 + $0x70] sm:$0xff]
    %v618 = vld [vmem:[#allocation2 + $0x78] sm:$0xff]
    %v619 = vld [vmem:[%s2] sm:$0xff]
    %v620 = vld [vmem:[%s2 + $0x8] sm:$0xff]
    %v621 = vld [vmem:[%s2 + $0x10] sm:$0xff]
    %v622 = vld [vmem:[%s2 + $0x18] sm:$0xff]
    %v623 = vld [vmem:[%s2 + $0x20] sm:$0xff]
    %v624 = vld [vmem:[%s2 + $0x28] sm:$0xff]
    %v625 = vld [vmem:[%s2 + $0x30] sm:$0xff]
    %v626 = vld [vmem:[%s2 + $0x38] sm:$0xff]
    %v627 = vld [vmem:[%s2 + $0x40] sm:$0xff]
    %v628 = vld [vmem:[%s2 + $0x48] sm:$0xff]
    %v629 = vld [vmem:[%s2 + $0x50] sm:$0xff]
    %v630 = vld [vmem:[%s2 + $0x58] sm:$0xff]
    %v631 = vld [vmem:[%s2 + $0x60] sm:$0xff]
    %v632 = vld [vmem:[%s2 + $0x68] sm:$0xff]
    %v633 = vld [vmem:[%s2 + $0x70] sm:$0xff]
    %v634 = vld [vmem:[%s2 + $0x78] sm:$0xff]
    %vm635 = vcmask 195584
    %636 = vst.msk [vmem:[%s3] sm:$0xff] %vm635, %v619
    %637 = vst.msk [vmem:[%s3 + $0x8] sm:$0xff] %vm635, %v620
    %638 = vst.msk [vmem:[%s3 + $0x10] sm:$0xff] %vm635, %v621
    %639 = vst.msk [vmem:[%s3 + $0x18] sm:$0xff] %vm635, %v622
    %640 = vst.msk [vmem:[%s3 + $0x20] sm:$0xff] %vm635, %v623
    %641 = vst.msk [vmem:[%s3 + $0x28] sm:$0xff] %vm635, %v624
    %642 = vst.msk [vmem:[%s3 + $0x30] sm:$0xff] %vm635, %v625
    %643 = vst.msk [vmem:[%s3 + $0x38] sm:$0xff] %vm635, %v626
    %644 = vst.msk [vmem:[%s3 + $0x40] sm:$0xff] %vm635, %v627
    %645 = vst.msk [vmem:[%s3 + $0x48] sm:$0xff] %vm635, %v628
    %646 = vst.msk [vmem:[%s3 + $0x50] sm:$0xff] %vm635, %v629
    %647 = vst.msk [vmem:[%s3 + $0x58] sm:$0xff] %vm635, %v630
    %648 = vst.msk [vmem:[%s3 + $0x60] sm:$0xff] %vm635, %v631
    %649 = vst.msk [vmem:[%s3 + $0x68] sm:$0xff] %vm635, %v632
    %650 = vst.msk [vmem:[%s3 + $0x70] sm:$0xff] %vm635, %v633
    %651 = vst.msk [vmem:[%s3 + $0x78] sm:$0xff] %vm635, %v634
    %668 = vrot.lane.b32.xlu0 %v603, 24
    %v669 = vpop.permute.xlu0 %668
    %670 = vrot.lane.b32.xlu0 %v604, 24
    %v671 = vpop.permute.xlu0 %670
    %672 = vrot.lane.b32.xlu0 %v605, 24
    %v673 = vpop.permute.xlu0 %672
    %674 = vrot.lane.b32.xlu0 %v606, 24
    %v675 = vpop.permute.xlu0 %674
    %676 = vrot.lane.b32.xlu0 %v607, 24
    %v677 = vpop.permute.xlu0 %676
    %678 = vrot.lane.b32.xlu0 %v608, 24
    %v679 = vpop.permute.xlu0 %678
    %680 = vrot.lane.b32.xlu0 %v609, 24
    %v681 = vpop.permute.xlu0 %680
    %682 = vrot.lane.b32.xlu0 %v610, 24
    %v683 = vpop.permute.xlu0 %682
    %684 = vrot.lane.b32.xlu0 %v611, 24
    %v685 = vpop.permute.xlu0 %684
    %686 = vrot.lane.b32.xlu0 %v612, 24
    %v687 = vpop.permute.xlu0 %686
    %688 = vrot.lane.b32.xlu0 %v613, 24
    %v689 = vpop.permute.xlu0 %688
    %690 = vrot.lane.b32.xlu0 %v614, 24
    %v691 = vpop.permute.xlu0 %690
    %692 = vrot.lane.b32.xlu0 %v615, 24
    %v693 = vpop.permute.xlu0 %692
    %694 = vrot.lane.b32.xlu0 %v616, 24
    %v695 = vpop.permute.xlu0 %694
    %696 = vrot.lane.b32.xlu0 %v617, 24
    %v697 = vpop.permute.xlu0 %696
    %698 = vrot.lane.b32.xlu0 %v618, 24
    %v699 = vpop.permute.xlu0 %698
    %vm716 = vcmask 261312
    %717 = vst.msk [vmem:[%s3] sm:$0xff] %vm716, %v669
    %718 = vst.msk [vmem:[%s3 + $0x8] sm:$0xff] %vm716, %v671
    %719 = vst.msk [vmem:[%s3 + $0x10] sm:$0xff] %vm716, %v673
    %720 = vst.msk [vmem:[%s3 + $0x18] sm:$0xff] %vm716, %v675
    %721 = vst.msk [vmem:[%s3 + $0x20] sm:$0xff] %vm716, %v677
    %722 = vst.msk [vmem:[%s3 + $0x28] sm:$0xff] %vm716, %v679
    %723 = vst.msk [vmem:[%s3 + $0x30] sm:$0xff] %vm716, %v681
    %724 = vst.msk [vmem:[%s3 + $0x38] sm:$0xff] %vm716, %v683
    %725 = vst.msk [vmem:[%s3 + $0x40] sm:$0xff] %vm716, %v685
    %726 = vst.msk [vmem:[%s3 + $0x48] sm:$0xff] %vm716, %v687
    %727 = vst.msk [vmem:[%s3 + $0x50] sm:$0xff] %vm716, %v689
    %728 = vst.msk [vmem:[%s3 + $0x58] sm:$0xff] %vm716, %v691
    %729 = vst.msk [vmem:[%s3 + $0x60] sm:$0xff] %vm716, %v693
    %730 = vst.msk [vmem:[%s3 + $0x68] sm:$0xff] %vm716, %v695
    %731 = vst.msk [vmem:[%s3 + $0x70] sm:$0xff] %vm716, %v697
    %732 = vst.msk [vmem:[%s3 + $0x78] sm:$0xff] %vm716, %v699
  $region21: #{e_densenet_forward.30} parent=0 // pred_fallthru
    _
  // Predicated region
  $region22: #{e_densenet_forward.30} parent=0 // pred_check
    _
  $region23: #{e_densenet_forward.30} parent=0 // pred_check_branch
    %734 = sbr.rel (0) target = $region25
  $region24: #{e_densenet_forward.30} parent=0 // pred_region
    _
  $region25: #{e_densenet_forward.30} parent=0 // pred_fallthru
    _
  // Predicated region
  $region26: #{e_densenet_forward.30} parent=0 // pred_check
    _
  $region27: #{e_densenet_forward.30} parent=0 // pred_check_branch
    %736 = sbr.rel (0) target = $region29
  $region28: #{e_densenet_forward.30} parent=0 // pred_region
    _
  $region29: #{e_densenet_forward.30} parent=0 // pred_fallthru
    _

// kernel: e_densenet_forward.31
$region0: #{e_densenet_forward.31}
  #allocation0 [shape = 'u32[]', space=smem, size = 0x4, offset = 0x4, fixed_abs, tag = 'smem constant byte address 0x4 - core index']
  #allocation1 [shape = 'u32[144,128]{1,0:T(1,128)}', space=vmem, size = 0x12000, scoped, tag = 'internal scratch']
  #allocation2 [shape = 'f32[128,16]{1,0:T(8,128)}', space=vmem, size = 0x10000, scoped, tag = 'scratch operand']
  %s0 = inlined_call_operand.vmem [shape: f32[128,32], index: 0, kind: input, shape index: {}]
  %s1 = inlined_call_operand.vmem [shape: bf16[32,16], index: 1, kind: input, shape index: {}]
  %s2 = inlined_call_operand.vmem [shape: f32[1,32], index: 2, kind: input, shape index: {}]
  %s3 = inlined_call_operand.vmem [shape: f32[1,32], index: 3, kind: input, shape index: {}]
  %s4 = inlined_call_operand.vmem [shape: f32[128,16], index: 4, kind: output, shape index: {}]
  %s5 = sld [smem:[#allocation0]]
  $region34: #{e_densenet_forward.31} parent=0
    _
  %s7 = ssub.s32 1, %s5
  %s8 = scalar_select 0, %s7, %s5
  // Predicated region
  $region2: #{e_densenet_forward.31} parent=0 // pred_check
    _
  $region3: #{e_densenet_forward.31} parent=0 // pred_check_branch
    %10 = sbr.rel (0) target = $region5
  $region4: #{e_densenet_forward.31} parent=0 // pred_region
    _
  $region5: #{e_densenet_forward.31} parent=0 // pred_fallthru
    _
  // Predicated region
  $region6: #{e_densenet_forward.31} parent=0 // pred_check
    _
  $region7: #{e_densenet_forward.31} parent=0 // pred_check_branch
    %12 = sbr.rel (0) target = $region9
  $region8: #{e_densenet_forward.31} parent=0 // pred_region
    _
  $region9: #{e_densenet_forward.31} parent=0 // pred_fallthru
    _
  // Predicated region
  $region10: #{e_densenet_forward.31} parent=0 // pred_check
    _
  $region11: #{e_densenet_forward.31} parent=0 // pred_check_branch
    %14 = sbr.rel (0) target = $region13
  $region12: #{e_densenet_forward.31} parent=0 // pred_region
    _
  $region13: #{e_densenet_forward.31} parent=0 // pred_fallthru
    _
  // Predicated region
  $region14: #{e_densenet_forward.31} parent=0 // pred_check
    _
  $region15: #{e_densenet_forward.31} parent=0 // pred_check_branch
    %16 = sbr.rel (0) target = $region17
  $region16: #{e_densenet_forward.31} parent=0 // pred_region
    _
  $region17: #{e_densenet_forward.31} parent=0 // pred_fallthru
    _
  %p18 = scmp.eq.s32.totalorder 0, 0
  // Predicated region
  $region18: #{e_densenet_forward.31} parent=0 // pred_check
    %p19 = pneg %p18
  $region19: #{e_densenet_forward.31} parent=0 // pred_check_branch
    %21 = sbr.rel (%p19) target = $region21
  $region20: #{e_densenet_forward.31} parent=0 // pred_region
    %vm22 = vcmask 130048
    %23 = vst.msk [vmem:[#allocation2] sm:$0xff] %vm22, 0.0
    %24 = vst.msk [vmem:[#allocation2 + $0x8] sm:$0xff] %vm22, 0.0
    %25 = vst.msk [vmem:[#allocation2 + $0x10] sm:$0xff] %vm22, 0.0
    %26 = vst.msk [vmem:[#allocation2 + $0x18] sm:$0xff] %vm22, 0.0
    %27 = vst.msk [vmem:[#allocation2 + $0x20] sm:$0xff] %vm22, 0.0
    %28 = vst.msk [vmem:[#allocation2 + $0x28] sm:$0xff] %vm22, 0.0
    %29 = vst.msk [vmem:[#allocation2 + $0x30] sm:$0xff] %vm22, 0.0
    %30 = vst.msk [vmem:[#allocation2 + $0x38] sm:$0xff] %vm22, 0.0
    %31 = vst.msk [vmem:[#allocation2 + $0x40] sm:$0xff] %vm22, 0.0
    %32 = vst.msk [vmem:[#allocation2 + $0x48] sm:$0xff] %vm22, 0.0
    %33 = vst.msk [vmem:[#allocation2 + $0x50] sm:$0xff] %vm22, 0.0
    %34 = vst.msk [vmem:[#allocation2 + $0x58] sm:$0xff] %vm22, 0.0
    %35 = vst.msk [vmem:[#allocation2 + $0x60] sm:$0xff] %vm22, 0.0
    %36 = vst.msk [vmem:[#allocation2 + $0x68] sm:$0xff] %vm22, 0.0
    %37 = vst.msk [vmem:[#allocation2 + $0x70] sm:$0xff] %vm22, 0.0
    %38 = vst.msk [vmem:[#allocation2 + $0x78] sm:$0xff] %vm22, 0.0
  $region21: #{e_densenet_forward.31} parent=0 // pred_fallthru
    _
  %v39 = vld [vmem:[%s0] sm:$0xff]
  %v40 = vld [vmem:[%s0 + $0x8] sm:$0xff]
  %v41 = vld [vmem:[%s0 + $0x10] sm:$0xff]
  %v42 = vld [vmem:[%s0 + $0x18] sm:$0xff]
  %v43 = vld [vmem:[%s0 + $0x20] sm:$0xff]
  %v44 = vld [vmem:[%s0 + $0x28] sm:$0xff]
  %v45 = vld [vmem:[%s0 + $0x30] sm:$0xff]
  %v46 = vld [vmem:[%s0 + $0x38] sm:$0xff]
  %v47 = vld [vmem:[%s0 + $0x40] sm:$0xff]
  %v48 = vld [vmem:[%s0 + $0x48] sm:$0xff]
  %v49 = vld [vmem:[%s0 + $0x50] sm:$0xff]
  %v50 = vld [vmem:[%s0 + $0x58] sm:$0xff]
  %v51 = vld [vmem:[%s0 + $0x60] sm:$0xff]
  %v52 = vld [vmem:[%s0 + $0x68] sm:$0xff]
  %v53 = vld [vmem:[%s0 + $0x70] sm:$0xff]
  %v54 = vld [vmem:[%s0 + $0x78] sm:$0xff]
  %v55 = vld [vmem:[%s2] sm:$0x1]
  %v57 = vlaneseq
  %v58 = vshrl.u32 %v57, 7
  %v59 = vsub.s32 0, %v58
  %v60 = vrot.slane %v55, %v59
  %v62 = vmul.f32 %v39, %v60
  %v63 = vmul.f32 %v40, %v60
  %v64 = vmul.f32 %v41, %v60
  %v65 = vmul.f32 %v42, %v60
  %v66 = vmul.f32 %v43, %v60
  %v67 = vmul.f32 %v44, %v60
  %v68 = vmul.f32 %v45, %v60
  %v69 = vmul.f32 %v46, %v60
  %v70 = vmul.f32 %v47, %v60
  %v71 = vmul.f32 %v48, %v60
  %v72 = vmul.f32 %v49, %v60
  %v73 = vmul.f32 %v50, %v60
  %v74 = vmul.f32 %v51, %v60
  %v75 = vmul.f32 %v52, %v60
  %v76 = vmul.f32 %v53, %v60
  %v77 = vmul.f32 %v54, %v60
  %v78 = vld [vmem:[%s3] sm:$0x1]
  %v80 = vlaneseq
  %v81 = vshrl.u32 %v80, 7
  %v82 = vsub.s32 0, %v81
  %v83 = vrot.slane %v78, %v82
  %v85 = vadd.f32 %v62, %v83
  %v86 = vadd.f32 %v63, %v83
  %v87 = vadd.f32 %v64, %v83
  %v88 = vadd.f32 %v65, %v83
  %v89 = vadd.f32 %v66, %v83
  %v90 = vadd.f32 %v67, %v83
  %v91 = vadd.f32 %v68, %v83
  %v92 = vadd.f32 %v69, %v83
  %v93 = vadd.f32 %v70, %v83
  %v94 = vadd.f32 %v71, %v83
  %v95 = vadd.f32 %v72, %v83
  %v96 = vadd.f32 %v73, %v83
  %v97 = vadd.f32 %v74, %v83
  %v98 = vadd.f32 %v75, %v83
  %v99 = vadd.f32 %v76, %v83
  %v100 = vadd.f32 %v77, %v83
  %v101 = vmax.f32 %v85, 0.0
  %v102 = vmax.f32 %v86, 0.0
  %v103 = vmax.f32 %v87, 0.0
  %v104 = vmax.f32 %v88, 0.0
  %v105 = vmax.f32 %v89, 0.0
  %v106 = vmax.f32 %v90, 0.0
  %v107 = vmax.f32 %v91, 0.0
  %v108 = vmax.f32 %v92, 0.0
  %v109 = vmax.f32 %v93, 0.0
  %v110 = vmax.f32 %v94, 0.0
  %v111 = vmax.f32 %v95, 0.0
  %v112 = vmax.f32 %v96, 0.0
  %v113 = vmax.f32 %v97, 0.0
  %v114 = vmax.f32 %v98, 0.0
  %v115 = vmax.f32 %v99, 0.0
  %v116 = vmax.f32 %v100, 0.0
  %v117 = vld [vmem:[#allocation2] sm:$0xff]
  %v118 = vld [vmem:[#allocation2 + $0x8] sm:$0xff]
  %v119 = vld [vmem:[#allocation2 + $0x10] sm:$0xff]
  %v120 = vld [vmem:[#allocation2 + $0x18] sm:$0xff]
  %v121 = vld [vmem:[#allocation2 + $0x20] sm:$0xff]
  %v122 = vld [vmem:[#allocation2 + $0x28] sm:$0xff]
  %v123 = vld [vmem:[#allocation2 + $0x30] sm:$0xff]
  %v124 = vld [vmem:[#allocation2 + $0x38] sm:$0xff]
  %v125 = vld [vmem:[#allocation2 + $0x40] sm:$0xff]
  %v126 = vld [vmem:[#allocation2 + $0x48] sm:$0xff]
  %v127 = vld [vmem:[#allocation2 + $0x50] sm:$0xff]
  %v128 = vld [vmem:[#allocation2 + $0x58] sm:$0xff]
  %v129 = vld [vmem:[#allocation2 + $0x60] sm:$0xff]
  %v130 = vld [vmem:[#allocation2 + $0x68] sm:$0xff]
  %v131 = vld [vmem:[#allocation2 + $0x70] sm:$0xff]
  %v132 = vld [vmem:[#allocation2 + $0x78] sm:$0xff]
  %v133 = vpack.c.bf16 %v102, %v101
  %v134 = vpack.c.bf16 %v104, %v103
  %v135 = vpack.c.bf16 %v106, %v105
  %v136 = vpack.c.bf16 %v108, %v107
  %v137 = vpack.c.bf16 %v110, %v109
  %v138 = vpack.c.bf16 %v112, %v111
  %v139 = vpack.c.bf16 %v114, %v113
  %v140 = vpack.c.bf16 %v116, %v115
  %v141 = vld [vmem:[%s1] sm:$0xf]
  %v142 = vld [vmem:[%s1 + $0x4] sm:$0xf]
  %v143 = vld [vmem:[%s1 + $0x8] sm:$0xf]
  %v144 = vld [vmem:[%s1 + $0xc] sm:$0xf]
  %v149 = vunpack.c.l.b16 %v141
  %v150 = vunpack.c.l.b16 %v142
  %v151 = vunpack.c.l.b16 %v143
  %v152 = vunpack.c.l.b16 %v144
  %v153 = vpack.c.b16 %v150, %v149
  %v154 = vpack.c.b16 %v152, %v151
  %vm157 = vcmask 261120
  %v159 = vsel %vm157, %v133, 0
  %v162 = vsel %vm157, %v134, 0
  %v165 = vsel %vm157, %v135, 0
  %v168 = vsel %vm157, %v136, 0
  %v171 = vsel %vm157, %v137, 0
  %v174 = vsel %vm157, %v138, 0
  %v177 = vsel %vm157, %v139, 0
  %v180 = vsel %vm157, %v140, 0
  %182 = vmatprep.subr.bf16.mxu0 0
  %183 = vmatpush1.bf16.msra.mxu0 0
  %184 = vmatprep.subr.bf16.mxu0 0
  %185 = vmatpush1.bf16.msra.mxu0 0
  %186 = vmatprep.subr.bf16.mxu0 0
  %187 = vmatpush1.bf16.msra.mxu0 0
  %188 = vmatprep.subr.bf16.mxu0 0
  %189 = vmatpush1.bf16.msra.mxu0 0
  %190 = vmatprep.subr.bf16.mxu0 0
  %191 = vmatpush1.bf16.msra.mxu0 0
  %192 = vmatprep.subr.bf16.mxu0 0
  %193 = vmatpush1.bf16.msra.mxu0 0
  %194 = vmatprep.subr.bf16.mxu0 0
  %195 = vmatpush1.bf16.msra.mxu0 %v154
  %196 = vmatprep.subr.bf16.mxu0 0
  %197 = vmatpush1.bf16.msra.mxu0 %v153
  %198 = vmatprep.subr.bf16.mxu0 0
  %199 = vmatpush2.bf16.msra.mxu0 0
  %200 = vmatprep.subr.bf16.mxu0 0
  %201 = vmatpush2.bf16.msra.mxu0 0
  %202 = vmatprep.subr.bf16.mxu0 0
  %203 = vmatpush2.bf16.msra.mxu0 0
  %204 = vmatprep.subr.bf16.mxu0 0
  %205 = vmatpush2.bf16.msra.mxu0 0
  %206 = vmatprep.subr.bf16.mxu0 0
  %207 = vmatpush2.bf16.msra.mxu0 0
  %208 = vmatprep.subr.bf16.mxu0 0
  %209 = vmatpush2.bf16.msra.mxu0 0
  %210 = vmatprep.subr.bf16.mxu0 0
  %211 = vmatpush2.bf16.msra.mxu0 0
  %212 = vmatprep.subr.bf16.mxu0 0
  %213 = vmatpush2.bf16.msra.mxu0 0
  %214 = vmatprep.mubr.bf16.mxu0 0
  %215 = vmatmul.mubr.bf16.gmra.mxu0 %v159
  %v216 = vpop.f32.mrf.mxu0
  %v217 = vadd.f32 0.0, %v216
  %v218 = vpop.f32.mrf.mxu0
  %v219 = vpop.f32.mrf.mxu0
  %v220 = vadd.f32 0.0, %v219
  %v221 = vpop.f32.mrf.mxu0
  %222 = vmatprep.mubr.bf16.mxu0 0
  %223 = vmatmul.mubr.bf16.gmra.mxu0 %v162
  %v224 = vpop.f32.mrf.mxu0
  %v225 = vadd.f32 0.0, %v224
  %v226 = vpop.f32.mrf.mxu0
  %v227 = vpop.f32.mrf.mxu0
  %v228 = vadd.f32 0.0, %v227
  %v229 = vpop.f32.mrf.mxu0
  %230 = vmatprep.mubr.bf16.mxu0 0
  %231 = vmatmul.mubr.bf16.gmra.mxu0 %v165
  %v232 = vpop.f32.mrf.mxu0
  %v233 = vadd.f32 0.0, %v232
  %v234 = vpop.f32.mrf.mxu0
  %v235 = vpop.f32.mrf.mxu0
  %v236 = vadd.f32 0.0, %v235
  %v237 = vpop.f32.mrf.mxu0
  %238 = vmatprep.mubr.bf16.mxu0 0
  %239 = vmatmul.mubr.bf16.gmra.mxu0 %v168
  %v240 = vpop.f32.mrf.mxu0
  %v241 = vadd.f32 0.0, %v240
  %v242 = vpop.f32.mrf.mxu0
  %v243 = vpop.f32.mrf.mxu0
  %v244 = vadd.f32 0.0, %v243
  %v245 = vpop.f32.mrf.mxu0
  %246 = vmatprep.mubr.bf16.mxu0 0
  %247 = vmatmul.mubr.bf16.gmra.mxu0 %v171
  %v248 = vpop.f32.mrf.mxu0
  %v249 = vadd.f32 0.0, %v248
  %v250 = vpop.f32.mrf.mxu0
  %v251 = vpop.f32.mrf.mxu0
  %v252 = vadd.f32 0.0, %v251
  %v253 = vpop.f32.mrf.mxu0
  %254 = vmatprep.mubr.bf16.mxu0 0
  %255 = vmatmul.mubr.bf16.gmra.mxu0 %v174
  %v256 = vpop.f32.mrf.mxu0
  %v257 = vadd.f32 0.0, %v256
  %v258 = vpop.f32.mrf.mxu0
  %v259 = vpop.f32.mrf.mxu0
  %v260 = vadd.f32 0.0, %v259
  %v261 = vpop.f32.mrf.mxu0
  %262 = vmatprep.mubr.bf16.mxu0 0
  %263 = vmatmul.mubr.bf16.gmra.mxu0 %v177
  %v264 = vpop.f32.mrf.mxu0
  %v265 = vadd.f32 0.0, %v264
  %v266 = vpop.f32.mrf.mxu0
  %v267 = vpop.f32.mrf.mxu0
  %v268 = vadd.f32 0.0, %v267
  %v269 = vpop.f32.mrf.mxu0
  %270 = vmatprep.mubr.bf16.mxu0 0
  %271 = vmatmul.mubr.bf16.gmra.mxu0 %v180
  %v272 = vpop.f32.mrf.mxu0
  %v273 = vadd.f32 0.0, %v272
  %v274 = vpop.f32.mrf.mxu0
  %v275 = vpop.f32.mrf.mxu0
  %v276 = vadd.f32 0.0, %v275
  %v277 = vpop.f32.mrf.mxu0
  %278 = vdwg.mxu0
  %v279 = vadd.f32 %v117, %v217
  %v280 = vadd.f32 %v118, %v220
  %v281 = vadd.f32 %v119, %v225
  %v282 = vadd.f32 %v120, %v228
  %v283 = vadd.f32 %v121, %v233
  %v284 = vadd.f32 %v122, %v236
  %v285 = vadd.f32 %v123, %v241
  %v286 = vadd.f32 %v124, %v244
  %v287 = vadd.f32 %v125, %v249
  %v288 = vadd.f32 %v126, %v252
  %v289 = vadd.f32 %v127, %v257
  %v290 = vadd.f32 %v128, %v260
  %v291 = vadd.f32 %v129, %v265
  %v292 = vadd.f32 %v130, %v268
  %v293 = vadd.f32 %v131, %v273
  %v294 = vadd.f32 %v132, %v276
  %vm295 = vcmask 130048
  %296 = vst.msk [vmem:[#allocation2] sm:$0xff] %vm295, %v279
  %297 = vst.msk [vmem:[#allocation2 + $0x8] sm:$0xff] %vm295, %v280
  %298 = vst.msk [vmem:[#allocation2 + $0x10] sm:$0xff] %vm295, %v281
  %299 = vst.msk [vmem:[#allocation2 + $0x18] sm:$0xff] %vm295, %v282
  %300 = vst.msk [vmem:[#allocation2 + $0x20] sm:$0xff] %vm295, %v283
  %301 = vst.msk [vmem:[#allocation2 + $0x28] sm:$0xff] %vm295, %v284
  %302 = vst.msk [vmem:[#allocation2 + $0x30] sm:$0xff] %vm295, %v285
  %303 = vst.msk [vmem:[#allocation2 + $0x38] sm:$0xff] %vm295, %v286
  %304 = vst.msk [vmem:[#allocation2 + $0x40] sm:$0xff] %vm295, %v287
  %305 = vst.msk [vmem:[#allocation2 + $0x48] sm:$0xff] %vm295, %v288
  %306 = vst.msk [vmem:[#allocation2 + $0x50] sm:$0xff] %vm295, %v289
  %307 = vst.msk [vmem:[#allocation2 + $0x58] sm:$0xff] %vm295, %v290
  %308 = vst.msk [vmem:[#allocation2 + $0x60] sm:$0xff] %vm295, %v291
  %309 = vst.msk [vmem:[#allocation2 + $0x68] sm:$0xff] %vm295, %v292
  %310 = vst.msk [vmem:[#allocation2 + $0x70] sm:$0xff] %vm295, %v293
  %311 = vst.msk [vmem:[#allocation2 + $0x78] sm:$0xff] %vm295, %v294
  // Predicated region
  $region22: #{e_densenet_forward.31} parent=0 // pred_check
    %p312 = pneg %p18
  $region23: #{e_densenet_forward.31} parent=0 // pred_check_branch
    %314 = sbr.rel (%p312) target = $region25
  $region24: #{e_densenet_forward.31} parent=0 // pred_region
    %v315 = vld [vmem:[#allocation2] sm:$0xff]
    %v316 = vld [vmem:[#allocation2 + $0x8] sm:$0xff]
    %v317 = vld [vmem:[#allocation2 + $0x10] sm:$0xff]
    %v318 = vld [vmem:[#allocation2 + $0x18] sm:$0xff]
    %v319 = vld [vmem:[#allocation2 + $0x20] sm:$0xff]
    %v320 = vld [vmem:[#allocation2 + $0x28] sm:$0xff]
    %v321 = vld [vmem:[#allocation2 + $0x30] sm:$0xff]
    %v322 = vld [vmem:[#allocation2 + $0x38] sm:$0xff]
    %v323 = vld [vmem:[#allocation2 + $0x40] sm:$0xff]
    %v324 = vld [vmem:[#allocation2 + $0x48] sm:$0xff]
    %v325 = vld [vmem:[#allocation2 + $0x50] sm:$0xff]
    %v326 = vld [vmem:[#allocation2 + $0x58] sm:$0xff]
    %v327 = vld [vmem:[#allocation2 + $0x60] sm:$0xff]
    %v328 = vld [vmem:[#allocation2 + $0x68] sm:$0xff]
    %v329 = vld [vmem:[#allocation2 + $0x70] sm:$0xff]
    %v330 = vld [vmem:[#allocation2 + $0x78] sm:$0xff]
    %331 = vst.msk [vmem:[%s4] sm:$0xff] %vm295, %v315
    %332 = vst.msk [vmem:[%s4 + $0x8] sm:$0xff] %vm295, %v316
    %333 = vst.msk [vmem:[%s4 + $0x10] sm:$0xff] %vm295, %v317
    %334 = vst.msk [vmem:[%s4 + $0x18] sm:$0xff] %vm295, %v318
    %335 = vst.msk [vmem:[%s4 + $0x20] sm:$0xff] %vm295, %v319
    %336 = vst.msk [vmem:[%s4 + $0x28] sm:$0xff] %vm295, %v320
    %337 = vst.msk [vmem:[%s4 + $0x30] sm:$0xff] %vm295, %v321
    %338 = vst.msk [vmem:[%s4 + $0x38] sm:$0xff] %vm295, %v322
    %339 = vst.msk [vmem:[%s4 + $0x40] sm:$0xff] %vm295, %v323
    %340 = vst.msk [vmem:[%s4 + $0x48] sm:$0xff] %vm295, %v324
    %341 = vst.msk [vmem:[%s4 + $0x50] sm:$0xff] %vm295, %v325
    %342 = vst.msk [vmem:[%s4 + $0x58] sm:$0xff] %vm295, %v326
    %343 = vst.msk [vmem:[%s4 + $0x60] sm:$0xff] %vm295, %v327
    %344 = vst.msk [vmem:[%s4 + $0x68] sm:$0xff] %vm295, %v328
    %345 = vst.msk [vmem:[%s4 + $0x70] sm:$0xff] %vm295, %v329
    %346 = vst.msk [vmem:[%s4 + $0x78] sm:$0xff] %vm295, %v330
  $region25: #{e_densenet_forward.31} parent=0 // pred_fallthru
    _
  // Predicated region
  $region26: #{e_densenet_forward.31} parent=0 // pred_check
    _
  $region27: #{e_densenet_forward.31} parent=0 // pred_check_branch
    %348 = sbr.rel (0) target = $region29
  $region28: #{e_densenet_forward.31} parent=0 // pred_region
    _
  $region29: #{e_densenet_forward.31} parent=0 // pred_fallthru
    _
  // Predicated region
  $region30: #{e_densenet_forward.31} parent=0 // pred_check
    _
  $region31: #{e_densenet_forward.31} parent=0 // pred_check_branch
    %350 = sbr.rel (0) target = $region33
  $region32: #{e_densenet_forward.31} parent=0 // pred_region
    _
  $region33: #{e_densenet_forward.31} parent=0 // pred_fallthru
    _

// kernel: e_densenet_forward.32
$region0: #{e_densenet_forward.32}
  #allocation0 [shape = 'u32[]', space=smem, size = 0x4, offset = 0x4, fixed_abs, tag = 'smem constant byte address 0x4 - core index']
  #allocation1 [shape = 'u32[144,128]{1,0:T(1,128)}', space=vmem, size = 0x12000, scoped, tag = 'internal scratch']
  #allocation2 [shape = 'f32[32,16]{1,0:T(8,128)}', space=vmem, size = 0x4000, scoped, tag = 'scratch operand']
  %s0 = inlined_call_operand.vmem [shape: f32[4,32,16], index: 0, kind: input, shape index: {}]
  %s1 = inlined_call_operand.vmem [shape: f32[32,16], index: 1, kind: output, shape index: {}]
  %s2 = sld [smem:[#allocation0]]
  $region45: #{e_densenet_forward.32} parent=0
    _
  %s4 = ssub.s32 1, %s2
  %s5 = scalar_select 0, %s4, %s2
  loop: start=0, step=1, limit=6
  $region2: #{e_densenet_forward.32} parent=0 // loop_pre_header
    _
  $region3: #{e_densenet_forward.32} parent=0 // loop_header
    %s7 = sphi 0, %s11
    %p8 = scmp.ge.s32.totalorder %s7, 6
    %s14 = sphi 0, %s26
    %s15 = sphi 0, %s22
    %s16 = sphi 0, %s14
    %s17 = sphi 0, %s15
    %s18 = sphi 0, %s16
    %s19 = sphi 0, %s17
    %s31 = sphi 0, %s33
    %s34 = sphi 0, %s31
    %s35 = sphi 0, %s34
    %s51 = sphi 0, %s35
    %s57 = sphi 0, %s59
    %s60 = sphi 0, %s57
    %s61 = sphi 0, %s60
    %s77 = sphi 0, %s61
  $region4: #{e_densenet_forward.32} parent=0 // loop_header_branch
    %10 = sbr.rel (%p8) target = $region8
  $region5: #{e_densenet_forward.32} parent=0 // loop_body
    %s12 = ssub.s32 %s7, 1
    %s13 = ssub.s32 %s7, 2
    %s20 = sadd.s32 1, %s15
    %p21 = scmp.ge.s32.totalorder %s20, 4
    %s22 = scalar_select %p21, 0, %s20
    %s23 = sadd.s32 1, %s14
    %s24 = scalar_select %p21, %s23, %s14
    %p25 = scmp.ge.s32.totalorder %s24, 1
    %s26 = scalar_select %p25, 0, %s24
    %s27 = ssub.s32 %s15, %s22
    %s28 = ssub.s32 %s14, %s26
    %s29 = sor.u32 %s27, %s28
    %p30 = scmp.eq.s32.totalorder %s29, 0
    %s32 = sadd.s32 %s31, 1
    %s33 = scalar_select %p30, %s31, %s32
    %p36 = pneg %p30
    %p37 = scmp.eq.s32.totalorder %s7, 3
    %p38 = por %p36, %p37
    %p39 = scmp.ne.s32.totalorder %s31, %s34
    %p40 = scmp.eq.s32.totalorder %s7, 0
    %p41 = por %p39, %p40
    %p42 = scmp.ne.s32.totalorder %s31, %s34
    %p43 = scmp.eq.s32.totalorder %s12, 3
    %p44 = por %p42, %p43
    %p45 = scmp.ne.s32.totalorder %s34, %s35
    %p46 = scmp.eq.s32.totalorder %s12, 0
    %p47 = por %p45, %p46
    %p48 = scmp.ne.s32.totalorder %s34, %s35
    %p49 = scmp.eq.s32.totalorder %s13, 3
    %p50 = por %p48, %p49
    %p52 = scmp.ne.s32.totalorder %s35, %s51
    %p53 = scmp.eq.s32.totalorder %s13, 0
    %p54 = por %p52, %p53
    %s55 = ssub.s32 %s14, %s26
    %p56 = scmp.eq.s32.totalorder %s55, 0
    %s58 = sadd.s32 %s57, 1
    %s59 = scalar_select %p56, %s57, %s58
    %p62 = pneg %p56
    %p63 = scmp.eq.s32.totalorder %s7, 3
    %p64 = por %p62, %p63
    %p65 = scmp.ne.s32.totalorder %s57, %s60
    %p66 = scmp.eq.s32.totalorder %s7, 0
    %p67 = por %p65, %p66
    %p68 = scmp.ne.s32.totalorder %s57, %s60
    %p69 = scmp.eq.s32.totalorder %s12, 3
    %p70 = por %p68, %p69
    %p71 = scmp.ne.s32.totalorder %s60, %s61
    %p72 = scmp.eq.s32.totalorder %s12, 0
    %p73 = por %p71, %p72
    %p74 = scmp.ne.s32.totalorder %s60, %s61
    %p75 = scmp.eq.s32.totalorder %s13, 3
    %p76 = por %p74, %p75
    %p78 = scmp.ne.s32.totalorder %s61, %s77
    %p79 = scmp.eq.s32.totalorder %s13, 0
    %p80 = por %p78, %p79
    %p81 = scmp.le.s32.totalorder 1, %s7
    %p82 = scmp.lt.s32.totalorder %s7, 5
    %p83 = pnand %p81, %p82
    %p84 = pneg %p83
    // Predicated region
    $region9: #{e_densenet_forward.32} parent=5 // pred_check
      _
    $region10: #{e_densenet_forward.32} parent=5 // pred_check_branch
      %86 = sbr.rel (%p83) target = $region12
    $region11: #{e_densenet_forward.32} parent=5 // pred_region
      %s87 = ssub.s32 %s7, 1
    $region12: #{e_densenet_forward.32} parent=5 // pred_fallthru
      _
    %p88 = scmp.lt.s32.totalorder %s7, 4
    // Predicated region
    $region13: #{e_densenet_forward.32} parent=5 // pred_check
      %p89 = pneg %p88
    $region14: #{e_densenet_forward.32} parent=5 // pred_check_branch
      %91 = sbr.rel (%p89) target = $region16
    $region15: #{e_densenet_forward.32} parent=5 // pred_region
      // Predicated region
      $region17: #{e_densenet_forward.32} parent=15 // pred_check
        %p92 = pneg %p41
      $region18: #{e_densenet_forward.32} parent=15 // pred_check_branch
        %94 = sbr.rel (%p92) target = $region20
      $region19: #{e_densenet_forward.32} parent=15 // pred_region
        %s95 = smul.u32 4, %s14
        %p96 = scmp.lt.s32.totalorder %s15, 3
        %s97 = scalar_select %p96, %s15, 3
        %p98 = scmp.lt.s32.totalorder %s95, 3
        %s99 = scalar_select %p98, %s95, 3
        %s100 = smul.addr %s97, 4
        %s101 = sadd.s32 %s99, %s100
        %s102 = smul.addr %s101, 8
        %s103 = scalar_lea.vmem %s0, %s102
        %s104 = smul.u32 4, %s14
      $region20: #{e_densenet_forward.32} parent=15 // pred_fallthru
        _
    $region16: #{e_densenet_forward.32} parent=5 // pred_fallthru
      _
    %p105 = scmp.le.s32.totalorder 1, %s7
    %p106 = scmp.lt.s32.totalorder %s7, 5
    %p107 = pnand %p105, %p106
    %p108 = pneg %p107
    // Predicated region
    $region21: #{e_densenet_forward.32} parent=5 // pred_check
      _
    $region22: #{e_densenet_forward.32} parent=5 // pred_check_branch
      %110 = sbr.rel (%p107) target = $region24
    $region23: #{e_densenet_forward.32} parent=5 // pred_region
      %s111 = ssub.s32 %s7, 1
      %s112 = smul.u32 4, %s16
      %p113 = scmp.lt.s32.totalorder %s17, 3
      %s114 = scalar_select %p113, %s17, 3
      %p115 = scmp.lt.s32.totalorder %s112, 3
      %s116 = scalar_select %p115, %s112, 3
      %s117 = smul.addr %s114, 4
      %s118 = sadd.s32 %s116, %s117
      %s119 = smul.addr %s118, 8
      %s120 = scalar_lea.vmem %s0, %s119
      %p121 = pneg %p47
      %p122 = pneg %p44
      %p123 = pneg %p73
      %p124 = pneg %p70
      %s125 = smul.u32 4, %s16
      %p126 = scmp.lt.s32.totalorder %s125, 3
      %s127 = scalar_select %p126, %s125, 3
      %s128 = smul.addr %s127, 8
      %s129 = scalar_lea.vmem %s1, %s128
      %s130 = smul.u32 4, %s16
      %p131 = scmp.lt.s32.totalorder %s17, 3
      %s132 = scalar_select %p131, %s17, 3
      %p133 = scmp.lt.s32.totalorder %s130, 3
      %s134 = scalar_select %p133, %s130, 3
      %s135 = smul.addr %s132, 4
      %s136 = sadd.s32 %s134, %s135
      %s137 = smul.addr %s136, 8
      %s138 = scalar_lea.vmem %s0, %s137
      %s139 = smul.u32 4, %s16
      %s140 = smul.u32 4, %s16
      %p141 = scmp.lt.s32.totalorder %s140, 3
      %s142 = scalar_select %p141, %s140, 3
      %s143 = smul.addr %s142, 8
      %s144 = scalar_lea.vmem %s1, %s143
      %s145 = smul.u32 4, %s16
      %p146 = scmp.eq.s32.totalorder %s17, 0
      // Predicated region
      $region25: #{e_densenet_forward.32} parent=23 // pred_check
        %p147 = pneg %p146
      $region26: #{e_densenet_forward.32} parent=23 // pred_check_branch
        %149 = sbr.rel (%p147) target = $region28
      $region27: #{e_densenet_forward.32} parent=23 // pred_region
        %vm150 = vcmask 130048
        %151 = vst.msk [vmem:[#allocation2] sm:$0xff] %vm150, 0.0
        %152 = vst.msk [vmem:[#allocation2 + $0x8] sm:$0xff] %vm150, 0.0
        %153 = vst.msk [vmem:[#allocation2 + $0x10] sm:$0xff] %vm150, 0.0
        %154 = vst.msk [vmem:[#allocation2 + $0x18] sm:$0xff] %vm150, 0.0
      $region28: #{e_densenet_forward.32} parent=23 // pred_fallthru
        _
      %v155 = vld [vmem:[#allocation2] sm:$0xff]
      %v156 = vld [vmem:[#allocation2 + $0x8] sm:$0xff]
      %v157 = vld [vmem:[#allocation2 + $0x10] sm:$0xff]
      %v158 = vld [vmem:[#allocation2 + $0x18] sm:$0xff]
      %v159 = vld [vmem:[%s138] sm:$0xff]
      %v160 = vld [vmem:[%s138 + $0x8] sm:$0xff]
      %v161 = vld [vmem:[%s138 + $0x10] sm:$0xff]
      %v162 = vld [vmem:[%s138 + $0x18] sm:$0xff]
      %v163 = vadd.f32 %v155, %v159
      %v164 = vadd.f32 %v156, %v160
      %v165 = vadd.f32 %v157, %v161
      %v166 = vadd.f32 %v158, %v162
      %vm167 = vcmask 130048
      %168 = vst.msk [vmem:[#allocation2] sm:$0xff] %vm167, %v163
      %169 = vst.msk [vmem:[#allocation2 + $0x8] sm:$0xff] %vm167, %v164
      %170 = vst.msk [vmem:[#allocation2 + $0x10] sm:$0xff] %vm167, %v165
      %171 = vst.msk [vmem:[#allocation2 + $0x18] sm:$0xff] %vm167, %v166
      %p172 = scmp.eq.s32.totalorder %s17, 3
      // Predicated region
      $region29: #{e_densenet_forward.32} parent=23 // pred_check
        %p173 = pneg %p172
      $region30: #{e_densenet_forward.32} parent=23 // pred_check_branch
        %175 = sbr.rel (%p173) target = $region32
      $region31: #{e_densenet_forward.32} parent=23 // pred_region
        %v176 = vld [vmem:[#allocation2] sm:$0xff]
        %v177 = vld [vmem:[#allocation2 + $0x8] sm:$0xff]
        %v178 = vld [vmem:[#allocation2 + $0x10] sm:$0xff]
        %v179 = vld [vmem:[#allocation2 + $0x18] sm:$0xff]
        %v180 = vmul.f32 %v176, 0.25
        %v181 = vmul.f32 %v177, 0.25
        %v182 = vmul.f32 %v178, 0.25
        %v183 = vmul.f32 %v179, 0.25
        %184 = vst.msk [vmem:[%s144] sm:$0xff] %vm167, %v180
        %185 = vst.msk [vmem:[%s144 + $0x8] sm:$0xff] %vm167, %v181
        %186 = vst.msk [vmem:[%s144 + $0x10] sm:$0xff] %vm167, %v182
        %187 = vst.msk [vmem:[%s144 + $0x18] sm:$0xff] %vm167, %v183
      $region32: #{e_densenet_forward.32} parent=23 // pred_fallthru
        _
      %s188 = smul.u32 4, %s16
      %p189 = scmp.lt.s32.totalorder %s188, 3
      %s190 = scalar_select %p189, %s188, 3
      %s191 = smul.addr %s190, 8
      %s192 = scalar_lea.vmem %s1, %s191
      // Predicated region
      $region33: #{e_densenet_forward.32} parent=23 // pred_check
        %p193 = pneg %p70
      $region34: #{e_densenet_forward.32} parent=23 // pred_check_branch
        %195 = sbr.rel (%p193) target = $region36
      $region35: #{e_densenet_forward.32} parent=23 // pred_region
        %s196 = smul.u32 4, %s16
      $region36: #{e_densenet_forward.32} parent=23 // pred_fallthru
        _
      // Predicated region
      $region37: #{e_densenet_forward.32} parent=23 // pred_check
        %p197 = pneg %p70
      $region38: #{e_densenet_forward.32} parent=23 // pred_check_branch
        %199 = sbr.rel (%p197) target = $region40
      $region39: #{e_densenet_forward.32} parent=23 // pred_region
        %s200 = smul.u32 4, %s16
        %p201 = scmp.lt.s32.totalorder %s200, 3
        %s202 = scalar_select %p201, %s200, 3
        %s203 = smul.addr %s202, 8
        %s204 = scalar_lea.vmem %s1, %s203
      $region40: #{e_densenet_forward.32} parent=23 // pred_fallthru
        _
    $region24: #{e_densenet_forward.32} parent=5 // pred_fallthru
      _
    %p205 = scmp.le.s32.totalorder 2, %s7
    // Predicated region
    $region41: #{e_densenet_forward.32} parent=5 // pred_check
      %p206 = pneg %p205
    $region42: #{e_densenet_forward.32} parent=5 // pred_check_branch
      %208 = sbr.rel (%p206) target = $region44
    $region43: #{e_densenet_forward.32} parent=5 // pred_region
      %s209 = ssub.s32 %s7, 2
    $region44: #{e_densenet_forward.32} parent=5 // pred_fallthru
      _
  $region6: #{e_densenet_forward.32} parent=0 // loop_footer
    %s11 = sadd.s32 1, %s7
  $region7: #{e_densenet_forward.32} parent=0 // loop_footer_branch
    %6 = sbr.rel target = $region3
  $region8: #{e_densenet_forward.32} parent=0 // loop_exit
    _

// kernel: e_densenet_forward.33
$region0: #{e_densenet_forward.33}
  #allocation0 [shape = 'u32[]', space=smem, size = 0x4, offset = 0x4, fixed_abs, tag = 'smem constant byte address 0x4 - core index']
  #allocation1 [shape = 'u32[144,128]{1,0:T(1,128)}', space=vmem, size = 0x12000, scoped, tag = 'internal scratch']
  #allocation2 [shape = 'f32[32,32]{1,0:T(8,128)}', space=vmem, size = 0x4000, scoped, tag = 'scratch operand']
  %s0 = inlined_call_operand.vmem [shape: f32[32,16], index: 0, kind: input, shape index: {}]
  %s1 = inlined_call_operand.vmem [shape: bf16[16,32], index: 1, kind: input, shape index: {}]
  %s2 = inlined_call_operand.vmem [shape: f32[1,16], index: 2, kind: input, shape index: {}]
  %s3 = inlined_call_operand.vmem [shape: f32[1,16], index: 3, kind: input, shape index: {}]
  %s4 = inlined_call_operand.vmem [shape: f32[1,32], index: 4, kind: input, shape index: {}]
  %s5 = inlined_call_operand.vmem [shape: f32[1,32], index: 5, kind: input, shape index: {}]
  %s6 = inlined_call_operand.vmem [shape: f32[32,32], index: 6, kind: output, shape index: {}]
  %s7 = sld [smem:[#allocation0]]
  $region42: #{e_densenet_forward.33} parent=0
    _
  %s9 = ssub.s32 1, %s7
  %s10 = scalar_select 0, %s9, %s7
  // Predicated region
  $region2: #{e_densenet_forward.33} parent=0 // pred_check
    _
  $region3: #{e_densenet_forward.33} parent=0 // pred_check_branch
    %12 = sbr.rel (0) target = $region5
  $region4: #{e_densenet_forward.33} parent=0 // pred_region
    _
  $region5: #{e_densenet_forward.33} parent=0 // pred_fallthru
    _
  // Predicated region
  $region6: #{e_densenet_forward.33} parent=0 // pred_check
    _
  $region7: #{e_densenet_forward.33} parent=0 // pred_check_branch
    %14 = sbr.rel (0) target = $region9
  $region8: #{e_densenet_forward.33} parent=0 // pred_region
    _
  $region9: #{e_densenet_forward.33} parent=0 // pred_fallthru
    _
  // Predicated region
  $region10: #{e_densenet_forward.33} parent=0 // pred_check
    _
  $region11: #{e_densenet_forward.33} parent=0 // pred_check_branch
    %16 = sbr.rel (0) target = $region13
  $region12: #{e_densenet_forward.33} parent=0 // pred_region
    _
  $region13: #{e_densenet_forward.33} parent=0 // pred_fallthru
    _
  // Predicated region
  $region14: #{e_densenet_forward.33} parent=0 // pred_check
    _
  $region15: #{e_densenet_forward.33} parent=0 // pred_check_branch
    %18 = sbr.rel (0) target = $region17
  $region16: #{e_densenet_forward.33} parent=0 // pred_region
    _
  $region17: #{e_densenet_forward.33} parent=0 // pred_fallthru
    _
  // Predicated region
  $region18: #{e_densenet_forward.33} parent=0 // pred_check
    _
  $region19: #{e_densenet_forward.33} parent=0 // pred_check_branch
    %20 = sbr.rel (0) target = $region21
  $region20: #{e_densenet_forward.33} parent=0 // pred_region
    _
  $region21: #{e_densenet_forward.33} parent=0 // pred_fallthru
    _
  // Predicated region
  $region22: #{e_densenet_forward.33} parent=0 // pred_check
    _
  $region23: #{e_densenet_forward.33} parent=0 // pred_check_branch
    %22 = sbr.rel (0) target = $region25
  $region24: #{e_densenet_forward.33} parent=0 // pred_region
    _
  $region25: #{e_densenet_forward.33} parent=0 // pred_fallthru
    _
  %p24 = scmp.eq.s32.totalorder 0, 0
  // Predicated region
  $region26: #{e_densenet_forward.33} parent=0 // pred_check
    %p25 = pneg %p24
  $region27: #{e_densenet_forward.33} parent=0 // pred_check_branch
    %27 = sbr.rel (%p25) target = $region29
  $region28: #{e_densenet_forward.33} parent=0 // pred_region
    %vm28 = vcmask 261120
    %29 = vst.msk [vmem:[#allocation2] sm:$0xff] %vm28, 0.0
    %30 = vst.msk [vmem:[#allocation2 + $0x8] sm:$0xff] %vm28, 0.0
    %31 = vst.msk [vmem:[#allocation2 + $0x10] sm:$0xff] %vm28, 0.0
    %32 = vst.msk [vmem:[#allocation2 + $0x18] sm:$0xff] %vm28, 0.0
  $region29: #{e_densenet_forward.33} parent=0 // pred_fallthru
    _
  %v33 = vld [vmem:[%s0] sm:$0xff]
  %v34 = vld [vmem:[%s0 + $0x8] sm:$0xff]
  %v35 = vld [vmem:[%s0 + $0x10] sm:$0xff]
  %v36 = vld [vmem:[%s0 + $0x18] sm:$0xff]
  %v37 = vld [vmem:[%s2] sm:$0x1]
  %v39 = vlaneseq
  %v40 = vshrl.u32 %v39, 7
  %v41 = vsub.s32 0, %v40
  %v42 = vrot.slane %v37, %v41
  %v44 = vmul.f32 %v33, %v42
  %v45 = vmul.f32 %v34, %v42
  %v46 = vmul.f32 %v35, %v42
  %v47 = vmul.f32 %v36, %v42
  %v48 = vld [vmem:[%s3] sm:$0x1]
  %v50 = vlaneseq
  %v51 = vshrl.u32 %v50, 7
  %v52 = vsub.s32 0, %v51
  %v53 = vrot.slane %v48, %v52
  %v55 = vadd.f32 %v44, %v53
  %v56 = vadd.f32 %v45, %v53
  %v57 = vadd.f32 %v46, %v53
  %v58 = vadd.f32 %v47, %v53
  %v59 = vmax.f32 %v55, 0.0
  %v60 = vmax.f32 %v56, 0.0
  %v61 = vmax.f32 %v57, 0.0
  %v62 = vmax.f32 %v58, 0.0
  %v63 = vld [vmem:[#allocation2] sm:$0xff]
  %v64 = vld [vmem:[#allocation2 + $0x8] sm:$0xff]
  %v65 = vld [vmem:[#allocation2 + $0x10] sm:$0xff]
  %v66 = vld [vmem:[#allocation2 + $0x18] sm:$0xff]
  %v67 = vpack.c.bf16 %v60, %v59
  %v68 = vpack.c.bf16 %v62, %v61
  %v69 = vld [vmem:[%s1] sm:$0xf]
  %v70 = vld [vmem:[%s1 + $0x4] sm:$0xf]
  %v73 = vunpack.c.l.b16 %v69
  %v74 = vunpack.c.l.b16 %v70
  %v75 = vpack.c.b16 %v74, %v73
  %vm77 = vcmask 130048
  %v79 = vsel %vm77, %v67, 0
  %v82 = vsel %vm77, %v68, 0
  %84 = vmatprep.subr.bf16.mxu0 0
  %85 = vmatpush1.bf16.msra.mxu0 0
  %86 = vmatprep.subr.bf16.mxu0 0
  %87 = vmatpush1.bf16.msra.mxu0 0
  %88 = vmatprep.subr.bf16.mxu0 0
  %89 = vmatpush1.bf16.msra.mxu0 0
  %90 = vmatprep.subr.bf16.mxu0 0
  %91 = vmatpush1.bf16.msra.mxu0 0
  %92 = vmatprep.subr.bf16.mxu0 0
  %93 = vmatpush1.bf16.msra.mxu0 0
  %94 = vmatprep.subr.bf16.mxu0 0
  %95 = vmatpush1.bf16.msra.mxu0 0
  %96 = vmatprep.subr.bf16.mxu0 0
  %97 = vmatpush1.bf16.msra.mxu0 0
  %98 = vmatprep.subr.bf16.mxu0 0
  %99 = vmatpush1.bf16.msra.mxu0 %v75
  %100 = vmatprep.subr.bf16.mxu0 0
  %101 = vmatpush2.bf16.msra.mxu0 0
  %102 = vmatprep.subr.bf16.mxu0 0
  %103 = vmatpush2.bf16.msra.mxu0 0
  %104 = vmatprep.subr.bf16.mxu0 0
  %105 = vmatpush2.bf16.msra.mxu0 0
  %106 = vmatprep.subr.bf16.mxu0 0
  %107 = vmatpush2.bf16.msra.mxu0 0
  %108 = vmatprep.subr.bf16.mxu0 0
  %109 = vmatpush2.bf16.msra.mxu0 0
  %110 = vmatprep.subr.bf16.mxu0 0
  %111 = vmatpush2.bf16.msra.mxu0 0
  %112 = vmatprep.subr.bf16.mxu0 0
  %113 = vmatpush2.bf16.msra.mxu0 0
  %114 = vmatprep.subr.bf16.mxu0 0
  %115 = vmatpush2.bf16.msra.mxu0 0
  %116 = vmatprep.mubr.bf16.mxu0 0
  %117 = vmatmul.mubr.bf16.gmra.mxu0 %v79
  %v118 = vpop.f32.mrf.mxu0
  %v119 = vadd.f32 0.0, %v118
  %v120 = vpop.f32.mrf.mxu0
  %v121 = vpop.f32.mrf.mxu0
  %v122 = vadd.f32 0.0, %v121
  %v123 = vpop.f32.mrf.mxu0
  %124 = vmatprep.mubr.bf16.mxu0 0
  %125 = vmatmul.mubr.bf16.gmra.mxu0 %v82
  %v126 = vpop.f32.mrf.mxu0
  %v127 = vadd.f32 0.0, %v126
  %v128 = vpop.f32.mrf.mxu0
  %v129 = vpop.f32.mrf.mxu0
  %v130 = vadd.f32 0.0, %v129
  %v131 = vpop.f32.mrf.mxu0
  %132 = vdwg.mxu0
  %v133 = vadd.f32 %v63, %v119
  %v134 = vadd.f32 %v64, %v122
  %v135 = vadd.f32 %v65, %v127
  %v136 = vadd.f32 %v66, %v130
  %vm137 = vcmask 261120
  %138 = vst.msk [vmem:[#allocation2] sm:$0xff] %vm137, %v133
  %139 = vst.msk [vmem:[#allocation2 + $0x8] sm:$0xff] %vm137, %v134
  %140 = vst.msk [vmem:[#allocation2 + $0x10] sm:$0xff] %vm137, %v135
  %141 = vst.msk [vmem:[#allocation2 + $0x18] sm:$0xff] %vm137, %v136
  // Predicated region
  $region30: #{e_densenet_forward.33} parent=0 // pred_check
    %p142 = pneg %p24
  $region31: #{e_densenet_forward.33} parent=0 // pred_check_branch
    %144 = sbr.rel (%p142) target = $region33
  $region32: #{e_densenet_forward.33} parent=0 // pred_region
    %v145 = vld [vmem:[#allocation2] sm:$0xff]
    %v146 = vld [vmem:[#allocation2 + $0x8] sm:$0xff]
    %v147 = vld [vmem:[#allocation2 + $0x10] sm:$0xff]
    %v148 = vld [vmem:[#allocation2 + $0x18] sm:$0xff]
    %v149 = vld [vmem:[%s4] sm:$0x1]
    %v151 = vlaneseq
    %v152 = vshrl.u32 %v151, 7
    %v153 = vsub.s32 0, %v152
    %v154 = vrot.slane %v149, %v153
    %v156 = vmul.f32 %v145, %v154
    %v157 = vmul.f32 %v146, %v154
    %v158 = vmul.f32 %v147, %v154
    %v159 = vmul.f32 %v148, %v154
    %v160 = vld [vmem:[%s5] sm:$0x1]
    %v162 = vlaneseq
    %v163 = vshrl.u32 %v162, 7
    %v164 = vsub.s32 0, %v163
    %v165 = vrot.slane %v160, %v164
    %v167 = vadd.f32 %v156, %v165
    %v168 = vadd.f32 %v157, %v165
    %v169 = vadd.f32 %v158, %v165
    %v170 = vadd.f32 %v159, %v165
    %v171 = vmax.f32 %v167, 0.0
    %v172 = vmax.f32 %v168, 0.0
    %v173 = vmax.f32 %v169, 0.0
    %v174 = vmax.f32 %v170, 0.0
    %175 = vst.msk [vmem:[%s6] sm:$0xff] %vm137, %v171
    %176 = vst.msk [vmem:[%s6 + $0x8] sm:$0xff] %vm137, %v172
    %177 = vst.msk [vmem:[%s6 + $0x10] sm:$0xff] %vm137, %v173
    %178 = vst.msk [vmem:[%s6 + $0x18] sm:$0xff] %vm137, %v174
  $region33: #{e_densenet_forward.33} parent=0 // pred_fallthru
    _
  // Predicated region
  $region34: #{e_densenet_forward.33} parent=0 // pred_check
    _
  $region35: #{e_densenet_forward.33} parent=0 // pred_check_branch
    %180 = sbr.rel (0) target = $region37
  $region36: #{e_densenet_forward.33} parent=0 // pred_region
    _
  $region37: #{e_densenet_forward.33} parent=0 // pred_fallthru
    _
  // Predicated region
  $region38: #{e_densenet_forward.33} parent=0 // pred_check
    _
  $region39: #{e_densenet_forward.33} parent=0 // pred_check_branch
    %182 = sbr.rel (0) target = $region41
  $region40: #{e_densenet_forward.33} parent=0 // pred_region
    _
  $region41: #{e_densenet_forward.33} parent=0 // pred_fallthru
    _

// kernel: e_densenet_forward.34
$region0: #{e_densenet_forward.34}
  #allocation0 [shape = 'u32[]', space=smem, size = 0x4, offset = 0x4, fixed_abs, tag = 'smem constant byte address 0x4 - core index']
  #allocation1 [shape = 'u32[144,128]{1,0:T(1,128)}', space=vmem, size = 0x12000, scoped, tag = 'internal scratch']
  #allocation2 [shape = 'f32[32,8]{1,0:T(8,128)}', space=vmem, size = 0x4000, scoped, tag = 'scratch operand']
  %s0 = inlined_call_operand.vmem [shape: bf16[32,288], index: 0, kind: input, shape index: {}]
  %s1 = inlined_call_operand.vmem [shape: bf16[288,8], index: 1, kind: input, shape index: {}]
  %s2 = inlined_call_operand.vmem [shape: f32[32,16], index: 2, kind: input, shape index: {}]
  %s3 = inlined_call_operand.vmem [shape: f32[32,24], index: 3, kind: output, shape index: {}]
  %s4 = sld [smem:[#allocation0]]
  $region30: #{e_densenet_forward.34} parent=0
    _
  %s6 = ssub.s32 1, %s4
  %s7 = scalar_select 0, %s6, %s4
  // Predicated region
  $region2: #{e_densenet_forward.34} parent=0 // pred_check
    _
  $region3: #{e_densenet_forward.34} parent=0 // pred_check_branch
    %9 = sbr.rel (0) target = $region5
  $region4: #{e_densenet_forward.34} parent=0 // pred_region
    _
  $region5: #{e_densenet_forward.34} parent=0 // pred_fallthru
    _
  // Predicated region
  $region6: #{e_densenet_forward.34} parent=0 // pred_check
    _
  $region7: #{e_densenet_forward.34} parent=0 // pred_check_branch
    %11 = sbr.rel (0) target = $region9
  $region8: #{e_densenet_forward.34} parent=0 // pred_region
    _
  $region9: #{e_densenet_forward.34} parent=0 // pred_fallthru
    _
  // Predicated region
  $region10: #{e_densenet_forward.34} parent=0 // pred_check
    _
  $region11: #{e_densenet_forward.34} parent=0 // pred_check_branch
    %13 = sbr.rel (0) target = $region13
  $region12: #{e_densenet_forward.34} parent=0 // pred_region
    _
  $region13: #{e_densenet_forward.34} parent=0 // pred_fallthru
    _
  %p15 = scmp.eq.s32.totalorder 0, 0
  // Predicated region
  $region14: #{e_densenet_forward.34} parent=0 // pred_check
    %p16 = pneg %p15
  $region15: #{e_densenet_forward.34} parent=0 // pred_check_branch
    %18 = sbr.rel (%p16) target = $region17
  $region16: #{e_densenet_forward.34} parent=0 // pred_region
    %vm19 = vcmask 64512
    %20 = vst.msk [vmem:[#allocation2] sm:$0xff] %vm19, 0.0
    %21 = vst.msk [vmem:[#allocation2 + $0x8] sm:$0xff] %vm19, 0.0
    %22 = vst.msk [vmem:[#allocation2 + $0x10] sm:$0xff] %vm19, 0.0
    %23 = vst.msk [vmem:[#allocation2 + $0x18] sm:$0xff] %vm19, 0.0
  $region17: #{e_densenet_forward.34} parent=0 // pred_fallthru
    _
  %v24 = vld [vmem:[%s0] sm:$0xff]
  %v25 = vld [vmem:[%s0 + $0x8] sm:$0xf]
  %v26 = vld [vmem:[%s0 + $0xc] sm:$0xff]
  %v27 = vld [vmem:[%s0 + $0x14] sm:$0xf]
  %v28 = vld [vmem:[%s0 + $0x18] sm:$0xff]
  %v29 = vld [vmem:[%s0 + $0x20] sm:$0xf]
  %v30 = vld [vmem:[%s0 + $0x24] sm:$0xff]
  %v31 = vld [vmem:[%s0 + $0x2c] sm:$0xf]
  %v32 = vld [vmem:[#allocation2] sm:$0xff]
  %v33 = vld [vmem:[#allocation2 + $0x8] sm:$0xff]
  %v34 = vld [vmem:[#allocation2 + $0x10] sm:$0xff]
  %v35 = vld [vmem:[#allocation2 + $0x18] sm:$0xff]
  %v36 = vld [vmem:[%s1] sm:$0xf]
  %v37 = vld [vmem:[%s1 + $0x4] sm:$0xf]
  %v38 = vld [vmem:[%s1 + $0x8] sm:$0xf]
  %v39 = vld [vmem:[%s1 + $0xc] sm:$0xf]
  %v40 = vld [vmem:[%s1 + $0x10] sm:$0xf]
  %v41 = vld [vmem:[%s1 + $0x14] sm:$0xf]
  %v42 = vld [vmem:[%s1 + $0x18] sm:$0xf]
  %v43 = vld [vmem:[%s1 + $0x1c] sm:$0xf]
  %v44 = vld [vmem:[%s1 + $0x20] sm:$0xf]
  %v45 = vld [vmem:[%s1 + $0x24] sm:$0xf]
  %v46 = vld [vmem:[%s1 + $0x28] sm:$0xf]
  %v47 = vld [vmem:[%s1 + $0x2c] sm:$0xf]
  %v48 = vld [vmem:[%s1 + $0x30] sm:$0xf]
  %v49 = vld [vmem:[%s1 + $0x34] sm:$0xf]
  %v50 = vld [vmem:[%s1 + $0x38] sm:$0xf]
  %v51 = vld [vmem:[%s1 + $0x3c] sm:$0xf]
  %v52 = vld [vmem:[%s1 + $0x40] sm:$0xf]
  %v53 = vld [vmem:[%s1 + $0x44] sm:$0xf]
  %v54 = vld [vmem:[%s1 + $0x48] sm:$0xf]
  %v55 = vld [vmem:[%s1 + $0x4c] sm:$0xf]
  %v56 = vld [vmem:[%s1 + $0x50] sm:$0xf]
  %v57 = vld [vmem:[%s1 + $0x54] sm:$0xf]
  %v58 = vld [vmem:[%s1 + $0x58] sm:$0xf]
  %v59 = vld [vmem:[%s1 + $0x5c] sm:$0xf]
  %v60 = vld [vmem:[%s1 + $0x60] sm:$0xf]
  %v61 = vld [vmem:[%s1 + $0x64] sm:$0xf]
  %v62 = vld [vmem:[%s1 + $0x68] sm:$0xf]
  %v63 = vld [vmem:[%s1 + $0x6c] sm:$0xf]
  %v64 = vld [vmem:[%s1 + $0x70] sm:$0xf]
  %v65 = vld [vmem:[%s1 + $0x74] sm:$0xf]
  %v66 = vld [vmem:[%s1 + $0x78] sm:$0xf]
  %v67 = vld [vmem:[%s1 + $0x7c] sm:$0xf]
  %v68 = vld [vmem:[%s1 + $0x80] sm:$0xf]
  %v69 = vld [vmem:[%s1 + $0x84] sm:$0xf]
  %v70 = vld [vmem:[%s1 + $0x88] sm:$0xf]
  %v71 = vld [vmem:[%s1 + $0x8c] sm:$0xf]
  %v80 = vunpack.c.l.b16 %v24
  %v81 = vunpack.c.h.b16 %v24
  %v82 = vunpack.c.l.b16 %v25
  %v83 = vunpack.c.l.b16 %v26
  %v84 = vunpack.c.h.b16 %v26
  %v85 = vunpack.c.l.b16 %v27
  %v86 = vunpack.c.l.b16 %v28
  %v87 = vunpack.c.h.b16 %v28
  %v88 = vunpack.c.l.b16 %v29
  %v89 = vunpack.c.l.b16 %v30
  %v90 = vunpack.c.h.b16 %v30
  %v91 = vunpack.c.l.b16 %v31
  %v92 = vpack.c.b16 %v83, %v80
  %v93 = vpack.c.b16 %v84, %v81
  %v94 = vpack.c.b16 %v85, %v82
  %v95 = vpack.c.b16 %v89, %v86
  %v96 = vpack.c.b16 %v90, %v87
  %v97 = vpack.c.b16 %v91, %v88
  %v138 = vunpack.c.l.b16 %v36
  %v139 = vunpack.c.l.b16 %v37
  %v140 = vunpack.c.l.b16 %v38
  %v141 = vunpack.c.l.b16 %v39
  %v142 = vunpack.c.l.b16 %v40
  %v143 = vunpack.c.l.b16 %v41
  %v144 = vunpack.c.l.b16 %v42
  %v145 = vunpack.c.l.b16 %v43
  %v146 = vunpack.c.l.b16 %v44
  %v147 = vunpack.c.l.b16 %v45
  %v148 = vunpack.c.l.b16 %v46
  %v149 = vunpack.c.l.b16 %v47
  %v150 = vunpack.c.l.b16 %v48
  %v151 = vunpack.c.l.b16 %v49
  %v152 = vunpack.c.l.b16 %v50
  %v153 = vunpack.c.l.b16 %v51
  %v154 = vunpack.c.l.b16 %v52
  %v155 = vunpack.c.l.b16 %v53
  %v156 = vunpack.c.l.b16 %v54
  %v157 = vunpack.c.l.b16 %v55
  %v158 = vunpack.c.l.b16 %v56
  %v159 = vunpack.c.l.b16 %v57
  %v160 = vunpack.c.l.b16 %v58
  %v161 = vunpack.c.l.b16 %v59
  %v162 = vunpack.c.l.b16 %v60
  %v163 = vunpack.c.l.b16 %v61
  %v164 = vunpack.c.l.b16 %v62
  %v165 = vunpack.c.l.b16 %v63
  %v166 = vunpack.c.l.b16 %v64
  %v167 = vunpack.c.l.b16 %v65
  %v168 = vunpack.c.l.b16 %v66
  %v169 = vunpack.c.l.b16 %v67
  %v170 = vunpack.c.l.b16 %v68
  %v171 = vunpack.c.l.b16 %v69
  %v172 = vunpack.c.l.b16 %v70
  %v173 = vunpack.c.l.b16 %v71
  %v174 = vpack.c.b16 %v139, %v138
  %v175 = vpack.c.b16 %v141, %v140
  %v176 = vpack.c.b16 %v143, %v142
  %v177 = vpack.c.b16 %v145, %v144
  %v178 = vpack.c.b16 %v147, %v146
  %v179 = vpack.c.b16 %v149, %v148
  %v180 = vpack.c.b16 %v151, %v150
  %v181 = vpack.c.b16 %v153, %v152
  %v182 = vpack.c.b16 %v155, %v154
  %v183 = vpack.c.b16 %v157, %v156
  %v184 = vpack.c.b16 %v159, %v158
  %v185 = vpack.c.b16 %v161, %v160
  %v186 = vpack.c.b16 %v163, %v162
  %v187 = vpack.c.b16 %v165, %v164
  %v188 = vpack.c.b16 %v167, %v166
  %v189 = vpack.c.b16 %v169, %v168
  %v190 = vpack.c.b16 %v171, %v170
  %v191 = vpack.c.b16 %v173, %v172
  %vm210 = vcmask 261120
  %v212 = vsel %vm210, %v94, 0
  %v215 = vsel %vm210, %v97, 0
  %217 = vmatprep.subr.bf16.mxu0 0
  %218 = vmatpush1.bf16.msra.mxu0 %v181
  %219 = vmatprep.subr.bf16.mxu0 0
  %220 = vmatpush1.bf16.msra.mxu0 %v180
  %221 = vmatprep.subr.bf16.mxu0 0
  %222 = vmatpush1.bf16.msra.mxu0 %v179
  %223 = vmatprep.subr.bf16.mxu0 0
  %224 = vmatpush1.bf16.msra.mxu0 %v178
  %225 = vmatprep.subr.bf16.mxu0 0
  %226 = vmatpush1.bf16.msra.mxu0 %v177
  %227 = vmatprep.subr.bf16.mxu0 0
  %228 = vmatpush1.bf16.msra.mxu0 %v176
  %229 = vmatprep.subr.bf16.mxu0 0
  %230 = vmatpush1.bf16.msra.mxu0 %v175
  %231 = vmatprep.subr.bf16.mxu0 0
  %232 = vmatpush1.bf16.msra.mxu0 %v174
  %233 = vmatprep.subr.bf16.mxu0 0
  %234 = vmatpush2.bf16.msra.mxu0 %v189
  %235 = vmatprep.subr.bf16.mxu0 0
  %236 = vmatpush2.bf16.msra.mxu0 %v188
  %237 = vmatprep.subr.bf16.mxu0 0
  %238 = vmatpush2.bf16.msra.mxu0 %v187
  %239 = vmatprep.subr.bf16.mxu0 0
  %240 = vmatpush2.bf16.msra.mxu0 %v186
  %241 = vmatprep.subr.bf16.mxu0 0
  %242 = vmatpush2.bf16.msra.mxu0 %v185
  %243 = vmatprep.subr.bf16.mxu0 0
  %244 = vmatpush2.bf16.msra.mxu0 %v184
  %245 = vmatprep.subr.bf16.mxu0 0
  %246 = vmatpush2.bf16.msra.mxu0 %v183
  %247 = vmatprep.subr.bf16.mxu0 0
  %248 = vmatpush2.bf16.msra.mxu0 %v182
  %249 = vmatprep.mubr.bf16.mxu0 %v93
  %250 = vmatmul.mubr.bf16.gmra.mxu0 %v92
  %v251 = vpop.f32.mrf.mxu0
  %v252 = vadd.f32 0.0, %v251
  %v253 = vpop.f32.mrf.mxu0
  %v254 = vpop.f32.mrf.mxu0
  %v255 = vadd.f32 0.0, %v254
  %v256 = vpop.f32.mrf.mxu0
  %257 = vmatprep.mubr.bf16.mxu0 %v96
  %258 = vmatmul.mubr.bf16.gmra.mxu0 %v95
  %v259 = vpop.f32.mrf.mxu0
  %v260 = vadd.f32 0.0, %v259
  %v261 = vpop.f32.mrf.mxu0
  %v262 = vpop.f32.mrf.mxu0
  %v263 = vadd.f32 0.0, %v262
  %v264 = vpop.f32.mrf.mxu0
  %265 = vdwg.mxu0
  %266 = vmatprep.subr.bf16.mxu0 0
  %267 = vmatpush1.bf16.msra.mxu0 0
  %268 = vmatprep.subr.bf16.mxu0 0
  %269 = vmatpush1.bf16.msra.mxu0 0
  %270 = vmatprep.subr.bf16.mxu0 0
  %271 = vmatpush1.bf16.msra.mxu0 0
  %272 = vmatprep.subr.bf16.mxu0 0
  %273 = vmatpush1.bf16.msra.mxu0 0
  %274 = vmatprep.subr.bf16.mxu0 0
  %275 = vmatpush1.bf16.msra.mxu0 0
  %276 = vmatprep.subr.bf16.mxu0 0
  %277 = vmatpush1.bf16.msra.mxu0 0
  %278 = vmatprep.subr.bf16.mxu0 0
  %279 = vmatpush1.bf16.msra.mxu0 %v191
  %280 = vmatprep.subr.bf16.mxu0 0
  %281 = vmatpush1.bf16.msra.mxu0 %v190
  %282 = vmatprep.subr.bf16.mxu0 0
  %283 = vmatpush2.bf16.msra.mxu0 0
  %284 = vmatprep.subr.bf16.mxu0 0
  %285 = vmatpush2.bf16.msra.mxu0 0
  %286 = vmatprep.subr.bf16.mxu0 0
  %287 = vmatpush2.bf16.msra.mxu0 0
  %288 = vmatprep.subr.bf16.mxu0 0
  %289 = vmatpush2.bf16.msra.mxu0 0
  %290 = vmatprep.subr.bf16.mxu0 0
  %291 = vmatpush2.bf16.msra.mxu0 0
  %292 = vmatprep.subr.bf16.mxu0 0
  %293 = vmatpush2.bf16.msra.mxu0 0
  %294 = vmatprep.subr.bf16.mxu0 0
  %295 = vmatpush2.bf16.msra.mxu0 0
  %296 = vmatprep.subr.bf16.mxu0 0
  %297 = vmatpush2.bf16.msra.mxu0 0
  %298 = vmatprep.mubr.bf16.mxu0 0
  %299 = vmatmul.mubr.bf16.gmra.mxu0 %v212
  %v300 = vpop.f32.mrf.mxu0
  %v301 = vadd.f32 %v252, %v300
  %v302 = vpop.f32.mrf.mxu0
  %v303 = vpop.f32.mrf.mxu0
  %v304 = vadd.f32 %v255, %v303
  %v305 = vpop.f32.mrf.mxu0
  %306 = vmatprep.mubr.bf16.mxu0 0
  %307 = vmatmul.mubr.bf16.gmra.mxu0 %v215
  %v308 = vpop.f32.mrf.mxu0
  %v309 = vadd.f32 %v260, %v308
  %v310 = vpop.f32.mrf.mxu0
  %v311 = vpop.f32.mrf.mxu0
  %v312 = vadd.f32 %v263, %v311
  %v313 = vpop.f32.mrf.mxu0
  %314 = vdwg.mxu0
  %v315 = vadd.f32 %v32, %v301
  %v316 = vadd.f32 %v33, %v304
  %v317 = vadd.f32 %v34, %v309
  %v318 = vadd.f32 %v35, %v312
  %vm319 = vcmask 64512
  %320 = vst.msk [vmem:[#allocation2] sm:$0xff] %vm319, %v315
  %321 = vst.msk [vmem:[#allocation2 + $0x8] sm:$0xff] %vm319, %v316
  %322 = vst.msk [vmem:[#allocation2 + $0x10] sm:$0xff] %vm319, %v317
  %323 = vst.msk [vmem:[#allocation2 + $0x18] sm:$0xff] %vm319, %v318
  // Predicated region
  $region18: #{e_densenet_forward.34} parent=0 // pred_check
    %p324 = pneg %p15
  $region19: #{e_densenet_forward.34} parent=0 // pred_check_branch
    %326 = sbr.rel (%p324) target = $region21
  $region20: #{e_densenet_forward.34} parent=0 // pred_region
    %v327 = vld [vmem:[#allocation2] sm:$0xff]
    %v328 = vld [vmem:[#allocation2 + $0x8] sm:$0xff]
    %v329 = vld [vmem:[#allocation2 + $0x10] sm:$0xff]
    %v330 = vld [vmem:[#allocation2 + $0x18] sm:$0xff]
    %v331 = vld [vmem:[%s2] sm:$0xff]
    %v332 = vld [vmem:[%s2 + $0x8] sm:$0xff]
    %v333 = vld [vmem:[%s2 + $0x10] sm:$0xff]
    %v334 = vld [vmem:[%s2 + $0x18] sm:$0xff]
    %vm335 = vcmask 130048
    %336 = vst.msk [vmem:[%s3] sm:$0xff] %vm335, %v331
    %337 = vst.msk [vmem:[%s3 + $0x8] sm:$0xff] %vm335, %v332
    %338 = vst.msk [vmem:[%s3 + $0x10] sm:$0xff] %vm335, %v333
    %339 = vst.msk [vmem:[%s3 + $0x18] sm:$0xff] %vm335, %v334
    %344 = vrot.lane.b32.xlu0 %v327, 16
    %v345 = vpop.permute.xlu0 %344
    %346 = vrot.lane.b32.xlu0 %v328, 16
    %v347 = vpop.permute.xlu0 %346
    %348 = vrot.lane.b32.xlu0 %v329, 16
    %v349 = vpop.permute.xlu0 %348
    %350 = vrot.lane.b32.xlu0 %v330, 16
    %v351 = vpop.permute.xlu0 %350
    %vm356 = vcmask 195712
    %357 = vst.msk [vmem:[%s3] sm:$0xff] %vm356, %v345
    %358 = vst.msk [vmem:[%s3 + $0x8] sm:$0xff] %vm356, %v347
    %359 = vst.msk [vmem:[%s3 + $0x10] sm:$0xff] %vm356, %v349
    %360 = vst.msk [vmem:[%s3 + $0x18] sm:$0xff] %vm356, %v351
  $region21: #{e_densenet_forward.34} parent=0 // pred_fallthru
    _
  // Predicated region
  $region22: #{e_densenet_forward.34} parent=0 // pred_check
    _
  $region23: #{e_densenet_forward.34} parent=0 // pred_check_branch
    %362 = sbr.rel (0) target = $region25
  $region24: #{e_densenet_forward.34} parent=0 // pred_region
    _
  $region25: #{e_densenet_forward.34} parent=0 // pred_fallthru
    _
  // Predicated region
  $region26: #{e_densenet_forward.34} parent=0 // pred_check
    _
  $region27: #{e_densenet_forward.34} parent=0 // pred_check_branch
    %364 = sbr.rel (0) target = $region29
  $region28: #{e_densenet_forward.34} parent=0 // pred_region
    _
  $region29: #{e_densenet_forward.34} parent=0 // pred_fallthru
    _

// kernel: e_densenet_forward.35
$region0: #{e_densenet_forward.35}
  #allocation0 [shape = 'u32[]', space=smem, size = 0x4, offset = 0x4, fixed_abs, tag = 'smem constant byte address 0x4 - core index']
  #allocation1 [shape = 'u32[144,128]{1,0:T(1,128)}', space=vmem, size = 0x12000, scoped, tag = 'internal scratch']
  #allocation2 [shape = 'f32[32,32]{1,0:T(8,128)}', space=vmem, size = 0x4000, scoped, tag = 'scratch operand']
  %s0 = inlined_call_operand.vmem [shape: f32[32,24], index: 0, kind: input, shape index: {}]
  %s1 = inlined_call_operand.vmem [shape: bf16[24,32], index: 1, kind: input, shape index: {}]
  %s2 = inlined_call_operand.vmem [shape: f32[1,24], index: 2, kind: input, shape index: {}]
  %s3 = inlined_call_operand.vmem [shape: f32[1,24], index: 3, kind: input, shape index: {}]
  %s4 = inlined_call_operand.vmem [shape: f32[1,32], index: 4, kind: input, shape index: {}]
  %s5 = inlined_call_operand.vmem [shape: f32[1,32], index: 5, kind: input, shape index: {}]
  %s6 = inlined_call_operand.vmem [shape: f32[32,32], index: 6, kind: output, shape index: {}]
  %s7 = sld [smem:[#allocation0]]
  $region42: #{e_densenet_forward.35} parent=0
    _
  %s9 = ssub.s32 1, %s7
  %s10 = scalar_select 0, %s9, %s7
  // Predicated region
  $region2: #{e_densenet_forward.35} parent=0 // pred_check
    _
  $region3: #{e_densenet_forward.35} parent=0 // pred_check_branch
    %12 = sbr.rel (0) target = $region5
  $region4: #{e_densenet_forward.35} parent=0 // pred_region
    _
  $region5: #{e_densenet_forward.35} parent=0 // pred_fallthru
    _
  // Predicated region
  $region6: #{e_densenet_forward.35} parent=0 // pred_check
    _
  $region7: #{e_densenet_forward.35} parent=0 // pred_check_branch
    %14 = sbr.rel (0) target = $region9
  $region8: #{e_densenet_forward.35} parent=0 // pred_region
    _
  $region9: #{e_densenet_forward.35} parent=0 // pred_fallthru
    _
  // Predicated region
  $region10: #{e_densenet_forward.35} parent=0 // pred_check
    _
  $region11: #{e_densenet_forward.35} parent=0 // pred_check_branch
    %16 = sbr.rel (0) target = $region13
  $region12: #{e_densenet_forward.35} parent=0 // pred_region
    _
  $region13: #{e_densenet_forward.35} parent=0 // pred_fallthru
    _
  // Predicated region
  $region14: #{e_densenet_forward.35} parent=0 // pred_check
    _
  $region15: #{e_densenet_forward.35} parent=0 // pred_check_branch
    %18 = sbr.rel (0) target = $region17
  $region16: #{e_densenet_forward.35} parent=0 // pred_region
    _
  $region17: #{e_densenet_forward.35} parent=0 // pred_fallthru
    _
  // Predicated region
  $region18: #{e_densenet_forward.35} parent=0 // pred_check
    _
  $region19: #{e_densenet_forward.35} parent=0 // pred_check_branch
    %20 = sbr.rel (0) target = $region21
  $region20: #{e_densenet_forward.35} parent=0 // pred_region
    _
  $region21: #{e_densenet_forward.35} parent=0 // pred_fallthru
    _
  // Predicated region
  $region22: #{e_densenet_forward.35} parent=0 // pred_check
    _
  $region23: #{e_densenet_forward.35} parent=0 // pred_check_branch
    %22 = sbr.rel (0) target = $region25
  $region24: #{e_densenet_forward.35} parent=0 // pred_region
    _
  $region25: #{e_densenet_forward.35} parent=0 // pred_fallthru
    _
  %p24 = scmp.eq.s32.totalorder 0, 0
  // Predicated region
  $region26: #{e_densenet_forward.35} parent=0 // pred_check
    %p25 = pneg %p24
  $region27: #{e_densenet_forward.35} parent=0 // pred_check_branch
    %27 = sbr.rel (%p25) target = $region29
  $region28: #{e_densenet_forward.35} parent=0 // pred_region
    %vm28 = vcmask 261120
    %29 = vst.msk [vmem:[#allocation2] sm:$0xff] %vm28, 0.0
    %30 = vst.msk [vmem:[#allocation2 + $0x8] sm:$0xff] %vm28, 0.0
    %31 = vst.msk [vmem:[#allocation2 + $0x10] sm:$0xff] %vm28, 0.0
    %32 = vst.msk [vmem:[#allocation2 + $0x18] sm:$0xff] %vm28, 0.0
  $region29: #{e_densenet_forward.35} parent=0 // pred_fallthru
    _
  %v33 = vld [vmem:[%s0] sm:$0xff]
  %v34 = vld [vmem:[%s0 + $0x8] sm:$0xff]
  %v35 = vld [vmem:[%s0 + $0x10] sm:$0xff]
  %v36 = vld [vmem:[%s0 + $0x18] sm:$0xff]
  %v37 = vld [vmem:[%s2] sm:$0x1]
  %v39 = vlaneseq
  %v40 = vshrl.u32 %v39, 7
  %v41 = vsub.s32 0, %v40
  %v42 = vrot.slane %v37, %v41
  %v44 = vmul.f32 %v33, %v42
  %v45 = vmul.f32 %v34, %v42
  %v46 = vmul.f32 %v35, %v42
  %v47 = vmul.f32 %v36, %v42
  %v48 = vld [vmem:[%s3] sm:$0x1]
  %v50 = vlaneseq
  %v51 = vshrl.u32 %v50, 7
  %v52 = vsub.s32 0, %v51
  %v53 = vrot.slane %v48, %v52
  %v55 = vadd.f32 %v44, %v53
  %v56 = vadd.f32 %v45, %v53
  %v57 = vadd.f32 %v46, %v53
  %v58 = vadd.f32 %v47, %v53
  %v59 = vmax.f32 %v55, 0.0
  %v60 = vmax.f32 %v56, 0.0
  %v61 = vmax.f32 %v57, 0.0
  %v62 = vmax.f32 %v58, 0.0
  %v63 = vld [vmem:[#allocation2] sm:$0xff]
  %v64 = vld [vmem:[#allocation2 + $0x8] sm:$0xff]
  %v65 = vld [vmem:[#allocation2 + $0x10] sm:$0xff]
  %v66 = vld [vmem:[#allocation2 + $0x18] sm:$0xff]
  %v67 = vpack.c.bf16 %v60, %v59
  %v68 = vpack.c.bf16 %v62, %v61
  %v69 = vld [vmem:[%s1] sm:$0xf]
  %v70 = vld [vmem:[%s1 + $0x4] sm:$0xf]
  %v71 = vld [vmem:[%s1 + $0x8] sm:$0xf]
  %v75 = vunpack.c.l.b16 %v69
  %v76 = vunpack.c.l.b16 %v70
  %v77 = vunpack.c.l.b16 %v71
  %v78 = vpack.c.b16 %v76, %v75
  %v79 = vpack.c.b16 %v77, %v77
  %vm81 = vcmask 195584
  %v83 = vsel %vm81, %v67, 0
  %v86 = vsel %vm81, %v68, 0
  %vm88 = vcmask 1043456
  %v90 = vsel %vm88, %v79, 0
  %92 = vmatprep.subr.bf16.mxu0 0
  %93 = vmatpush1.bf16.msra.mxu0 0
  %94 = vmatprep.subr.bf16.mxu0 0
  %95 = vmatpush1.bf16.msra.mxu0 0
  %96 = vmatprep.subr.bf16.mxu0 0
  %97 = vmatpush1.bf16.msra.mxu0 0
  %98 = vmatprep.subr.bf16.mxu0 0
  %99 = vmatpush1.bf16.msra.mxu0 0
  %100 = vmatprep.subr.bf16.mxu0 0
  %101 = vmatpush1.bf16.msra.mxu0 0
  %102 = vmatprep.subr.bf16.mxu0 0
  %103 = vmatpush1.bf16.msra.mxu0 0
  %104 = vmatprep.subr.bf16.mxu0 0
  %105 = vmatpush1.bf16.msra.mxu0 %v90
  %106 = vmatprep.subr.bf16.mxu0 0
  %107 = vmatpush1.bf16.msra.mxu0 %v78
  %108 = vmatprep.subr.bf16.mxu0 0
  %109 = vmatpush2.bf16.msra.mxu0 0
  %110 = vmatprep.subr.bf16.mxu0 0
  %111 = vmatpush2.bf16.msra.mxu0 0
  %112 = vmatprep.subr.bf16.mxu0 0
  %113 = vmatpush2.bf16.msra.mxu0 0
  %114 = vmatprep.subr.bf16.mxu0 0
  %115 = vmatpush2.bf16.msra.mxu0 0
  %116 = vmatprep.subr.bf16.mxu0 0
  %117 = vmatpush2.bf16.msra.mxu0 0
  %118 = vmatprep.subr.bf16.mxu0 0
  %119 = vmatpush2.bf16.msra.mxu0 0
  %120 = vmatprep.subr.bf16.mxu0 0
  %121 = vmatpush2.bf16.msra.mxu0 0
  %122 = vmatprep.subr.bf16.mxu0 0
  %123 = vmatpush2.bf16.msra.mxu0 0
  %124 = vmatprep.mubr.bf16.mxu0 0
  %125 = vmatmul.mubr.bf16.gmra.mxu0 %v83
  %v126 = vpop.f32.mrf.mxu0
  %v127 = vadd.f32 0.0, %v126
  %v128 = vpop.f32.mrf.mxu0
  %v129 = vpop.f32.mrf.mxu0
  %v130 = vadd.f32 0.0, %v129
  %v131 = vpop.f32.mrf.mxu0
  %132 = vmatprep.mubr.bf16.mxu0 0
  %133 = vmatmul.mubr.bf16.gmra.mxu0 %v86
  %v134 = vpop.f32.mrf.mxu0
  %v135 = vadd.f32 0.0, %v134
  %v136 = vpop.f32.mrf.mxu0
  %v137 = vpop.f32.mrf.mxu0
  %v138 = vadd.f32 0.0, %v137
  %v139 = vpop.f32.mrf.mxu0
  %140 = vdwg.mxu0
  %v141 = vadd.f32 %v63, %v127
  %v142 = vadd.f32 %v64, %v130
  %v143 = vadd.f32 %v65, %v135
  %v144 = vadd.f32 %v66, %v138
  %vm145 = vcmask 261120
  %146 = vst.msk [vmem:[#allocation2] sm:$0xff] %vm145, %v141
  %147 = vst.msk [vmem:[#allocation2 + $0x8] sm:$0xff] %vm145, %v142
  %148 = vst.msk [vmem:[#allocation2 + $0x10] sm:$0xff] %vm145, %v143
  %149 = vst.msk [vmem:[#allocation2 + $0x18] sm:$0xff] %vm145, %v144
  // Predicated region
  $region30: #{e_densenet_forward.35} parent=0 // pred_check
    %p150 = pneg %p24
  $region31: #{e_densenet_forward.35} parent=0 // pred_check_branch
    %152 = sbr.rel (%p150) target = $region33
  $region32: #{e_densenet_forward.35} parent=0 // pred_region
    %v153 = vld [vmem:[#allocation2] sm:$0xff]
    %v154 = vld [vmem:[#allocation2 + $0x8] sm:$0xff]
    %v155 = vld [vmem:[#allocation2 + $0x10] sm:$0xff]
    %v156 = vld [vmem:[#allocation2 + $0x18] sm:$0xff]
    %v157 = vld [vmem:[%s4] sm:$0x1]
    %v159 = vlaneseq
    %v160 = vshrl.u32 %v159, 7
    %v161 = vsub.s32 0, %v160
    %v162 = vrot.slane %v157, %v161
    %v164 = vmul.f32 %v153, %v162
    %v165 = vmul.f32 %v154, %v162
    %v166 = vmul.f32 %v155, %v162
    %v167 = vmul.f32 %v156, %v162
    %v168 = vld [vmem:[%s5] sm:$0x1]
    %v170 = vlaneseq
    %v171 = vshrl.u32 %v170, 7
    %v172 = vsub.s32 0, %v171
    %v173 = vrot.slane %v168, %v172
    %v175 = vadd.f32 %v164, %v173
    %v176 = vadd.f32 %v165, %v173
    %v177 = vadd.f32 %v166, %v173
    %v178 = vadd.f32 %v167, %v173
    %v179 = vmax.f32 %v175, 0.0
    %v180 = vmax.f32 %v176, 0.0
    %v181 = vmax.f32 %v177, 0.0
    %v182 = vmax.f32 %v178, 0.0
    %183 = vst.msk [vmem:[%s6] sm:$0xff] %vm145, %v179
    %184 = vst.msk [vmem:[%s6 + $0x8] sm:$0xff] %vm145, %v180
    %185 = vst.msk [vmem:[%s6 + $0x10] sm:$0xff] %vm145, %v181
    %186 = vst.msk [vmem:[%s6 + $0x18] sm:$0xff] %vm145, %v182
  $region33: #{e_densenet_forward.35} parent=0 // pred_fallthru
    _
  // Predicated region
  $region34: #{e_densenet_forward.35} parent=0 // pred_check
    _
  $region35: #{e_densenet_forward.35} parent=0 // pred_check_branch
    %188 = sbr.rel (0) target = $region37
  $region36: #{e_densenet_forward.35} parent=0 // pred_region
    _
  $region37: #{e_densenet_forward.35} parent=0 // pred_fallthru
    _
  // Predicated region
  $region38: #{e_densenet_forward.35} parent=0 // pred_check
    _
  $region39: #{e_densenet_forward.35} parent=0 // pred_check_branch
    %190 = sbr.rel (0) target = $region41
  $region40: #{e_densenet_forward.35} parent=0 // pred_region
    _
  $region41: #{e_densenet_forward.35} parent=0 // pred_fallthru
    _

// kernel: e_densenet_forward.36
$region0: #{e_densenet_forward.36}
  #allocation0 [shape = 'u32[]', space=smem, size = 0x4, offset = 0x4, fixed_abs, tag = 'smem constant byte address 0x4 - core index']
  #allocation1 [shape = 'u32[144,128]{1,0:T(1,128)}', space=vmem, size = 0x12000, scoped, tag = 'internal scratch']
  #allocation2 [shape = 'f32[32,8]{1,0:T(8,128)}', space=vmem, size = 0x4000, scoped, tag = 'scratch operand']
  %s0 = inlined_call_operand.vmem [shape: bf16[32,288], index: 0, kind: input, shape index: {}]
  %s1 = inlined_call_operand.vmem [shape: bf16[288,8], index: 1, kind: input, shape index: {}]
  %s2 = inlined_call_operand.vmem [shape: f32[32,24], index: 2, kind: input, shape index: {}]
  %s3 = inlined_call_operand.vmem [shape: f32[32,32], index: 3, kind: output, shape index: {}]
  %s4 = sld [smem:[#allocation0]]
  $region30: #{e_densenet_forward.36} parent=0
    _
  %s6 = ssub.s32 1, %s4
  %s7 = scalar_select 0, %s6, %s4
  // Predicated region
  $region2: #{e_densenet_forward.36} parent=0 // pred_check
    _
  $region3: #{e_densenet_forward.36} parent=0 // pred_check_branch
    %9 = sbr.rel (0) target = $region5
  $region4: #{e_densenet_forward.36} parent=0 // pred_region
    _
  $region5: #{e_densenet_forward.36} parent=0 // pred_fallthru
    _
  // Predicated region
  $region6: #{e_densenet_forward.36} parent=0 // pred_check
    _
  $region7: #{e_densenet_forward.36} parent=0 // pred_check_branch
    %11 = sbr.rel (0) target = $region9
  $region8: #{e_densenet_forward.36} parent=0 // pred_region
    _
  $region9: #{e_densenet_forward.36} parent=0 // pred_fallthru
    _
  // Predicated region
  $region10: #{e_densenet_forward.36} parent=0 // pred_check
    _
  $region11: #{e_densenet_forward.36} parent=0 // pred_check_branch
    %13 = sbr.rel (0) target = $region13
  $region12: #{e_densenet_forward.36} parent=0 // pred_region
    _
  $region13: #{e_densenet_forward.36} parent=0 // pred_fallthru
    _
  %p15 = scmp.eq.s32.totalorder 0, 0
  // Predicated region
  $region14: #{e_densenet_forward.36} parent=0 // pred_check
    %p16 = pneg %p15
  $region15: #{e_densenet_forward.36} parent=0 // pred_check_branch
    %18 = sbr.rel (%p16) target = $region17
  $region16: #{e_densenet_forward.36} parent=0 // pred_region
    %vm19 = vcmask 64512
    %20 = vst.msk [vmem:[#allocation2] sm:$0xff] %vm19, 0.0
    %21 = vst.msk [vmem:[#allocation2 + $0x8] sm:$0xff] %vm19, 0.0
    %22 = vst.msk [vmem:[#allocation2 + $0x10] sm:$0xff] %vm19, 0.0
    %23 = vst.msk [vmem:[#allocation2 + $0x18] sm:$0xff] %vm19, 0.0
  $region17: #{e_densenet_forward.36} parent=0 // pred_fallthru
    _
  %v24 = vld [vmem:[%s0] sm:$0xff]
  %v25 = vld [vmem:[%s0 + $0x8] sm:$0xf]
  %v26 = vld [vmem:[%s0 + $0xc] sm:$0xff]
  %v27 = vld [vmem:[%s0 + $0x14] sm:$0xf]
  %v28 = vld [vmem:[%s0 + $0x18] sm:$0xff]
  %v29 = vld [vmem:[%s0 + $0x20] sm:$0xf]
  %v30 = vld [vmem:[%s0 + $0x24] sm:$0xff]
  %v31 = vld [vmem:[%s0 + $0x2c] sm:$0xf]
  %v32 = vld [vmem:[#allocation2] sm:$0xff]
  %v33 = vld [vmem:[#allocation2 + $0x8] sm:$0xff]
  %v34 = vld [vmem:[#allocation2 + $0x10] sm:$0xff]
  %v35 = vld [vmem:[#allocation2 + $0x18] sm:$0xff]
  %v36 = vld [vmem:[%s1] sm:$0xf]
  %v37 = vld [vmem:[%s1 + $0x4] sm:$0xf]
  %v38 = vld [vmem:[%s1 + $0x8] sm:$0xf]
  %v39 = vld [vmem:[%s1 + $0xc] sm:$0xf]
  %v40 = vld [vmem:[%s1 + $0x10] sm:$0xf]
  %v41 = vld [vmem:[%s1 + $0x14] sm:$0xf]
  %v42 = vld [vmem:[%s1 + $0x18] sm:$0xf]
  %v43 = vld [vmem:[%s1 + $0x1c] sm:$0xf]
  %v44 = vld [vmem:[%s1 + $0x20] sm:$0xf]
  %v45 = vld [vmem:[%s1 + $0x24] sm:$0xf]
  %v46 = vld [vmem:[%s1 + $0x28] sm:$0xf]
  %v47 = vld [vmem:[%s1 + $0x2c] sm:$0xf]
  %v48 = vld [vmem:[%s1 + $0x30] sm:$0xf]
  %v49 = vld [vmem:[%s1 + $0x34] sm:$0xf]
  %v50 = vld [vmem:[%s1 + $0x38] sm:$0xf]
  %v51 = vld [vmem:[%s1 + $0x3c] sm:$0xf]
  %v52 = vld [vmem:[%s1 + $0x40] sm:$0xf]
  %v53 = vld [vmem:[%s1 + $0x44] sm:$0xf]
  %v54 = vld [vmem:[%s1 + $0x48] sm:$0xf]
  %v55 = vld [vmem:[%s1 + $0x4c] sm:$0xf]
  %v56 = vld [vmem:[%s1 + $0x50] sm:$0xf]
  %v57 = vld [vmem:[%s1 + $0x54] sm:$0xf]
  %v58 = vld [vmem:[%s1 + $0x58] sm:$0xf]
  %v59 = vld [vmem:[%s1 + $0x5c] sm:$0xf]
  %v60 = vld [vmem:[%s1 + $0x60] sm:$0xf]
  %v61 = vld [vmem:[%s1 + $0x64] sm:$0xf]
  %v62 = vld [vmem:[%s1 + $0x68] sm:$0xf]
  %v63 = vld [vmem:[%s1 + $0x6c] sm:$0xf]
  %v64 = vld [vmem:[%s1 + $0x70] sm:$0xf]
  %v65 = vld [vmem:[%s1 + $0x74] sm:$0xf]
  %v66 = vld [vmem:[%s1 + $0x78] sm:$0xf]
  %v67 = vld [vmem:[%s1 + $0x7c] sm:$0xf]
  %v68 = vld [vmem:[%s1 + $0x80] sm:$0xf]
  %v69 = vld [vmem:[%s1 + $0x84] sm:$0xf]
  %v70 = vld [vmem:[%s1 + $0x88] sm:$0xf]
  %v71 = vld [vmem:[%s1 + $0x8c] sm:$0xf]
  %v80 = vunpack.c.l.b16 %v24
  %v81 = vunpack.c.h.b16 %v24
  %v82 = vunpack.c.l.b16 %v25
  %v83 = vunpack.c.l.b16 %v26
  %v84 = vunpack.c.h.b16 %v26
  %v85 = vunpack.c.l.b16 %v27
  %v86 = vunpack.c.l.b16 %v28
  %v87 = vunpack.c.h.b16 %v28
  %v88 = vunpack.c.l.b16 %v29
  %v89 = vunpack.c.l.b16 %v30
  %v90 = vunpack.c.h.b16 %v30
  %v91 = vunpack.c.l.b16 %v31
  %v92 = vpack.c.b16 %v83, %v80
  %v93 = vpack.c.b16 %v84, %v81
  %v94 = vpack.c.b16 %v85, %v82
  %v95 = vpack.c.b16 %v89, %v86
  %v96 = vpack.c.b16 %v90, %v87
  %v97 = vpack.c.b16 %v91, %v88
  %v138 = vunpack.c.l.b16 %v36
  %v139 = vunpack.c.l.b16 %v37
  %v140 = vunpack.c.l.b16 %v38
  %v141 = vunpack.c.l.b16 %v39
  %v142 = vunpack.c.l.b16 %v40
  %v143 = vunpack.c.l.b16 %v41
  %v144 = vunpack.c.l.b16 %v42
  %v145 = vunpack.c.l.b16 %v43
  %v146 = vunpack.c.l.b16 %v44
  %v147 = vunpack.c.l.b16 %v45
  %v148 = vunpack.c.l.b16 %v46
  %v149 = vunpack.c.l.b16 %v47
  %v150 = vunpack.c.l.b16 %v48
  %v151 = vunpack.c.l.b16 %v49
  %v152 = vunpack.c.l.b16 %v50
  %v153 = vunpack.c.l.b16 %v51
  %v154 = vunpack.c.l.b16 %v52
  %v155 = vunpack.c.l.b16 %v53
  %v156 = vunpack.c.l.b16 %v54
  %v157 = vunpack.c.l.b16 %v55
  %v158 = vunpack.c.l.b16 %v56
  %v159 = vunpack.c.l.b16 %v57
  %v160 = vunpack.c.l.b16 %v58
  %v161 = vunpack.c.l.b16 %v59
  %v162 = vunpack.c.l.b16 %v60
  %v163 = vunpack.c.l.b16 %v61
  %v164 = vunpack.c.l.b16 %v62
  %v165 = vunpack.c.l.b16 %v63
  %v166 = vunpack.c.l.b16 %v64
  %v167 = vunpack.c.l.b16 %v65
  %v168 = vunpack.c.l.b16 %v66
  %v169 = vunpack.c.l.b16 %v67
  %v170 = vunpack.c.l.b16 %v68
  %v171 = vunpack.c.l.b16 %v69
  %v172 = vunpack.c.l.b16 %v70
  %v173 = vunpack.c.l.b16 %v71
  %v174 = vpack.c.b16 %v139, %v138
  %v175 = vpack.c.b16 %v141, %v140
  %v176 = vpack.c.b16 %v143, %v142
  %v177 = vpack.c.b16 %v145, %v144
  %v178 = vpack.c.b16 %v147, %v146
  %v179 = vpack.c.b16 %v149, %v148
  %v180 = vpack.c.b16 %v151, %v150
  %v181 = vpack.c.b16 %v153, %v152
  %v182 = vpack.c.b16 %v155, %v154
  %v183 = vpack.c.b16 %v157, %v156
  %v184 = vpack.c.b16 %v159, %v158
  %v185 = vpack.c.b16 %v161, %v160
  %v186 = vpack.c.b16 %v163, %v162
  %v187 = vpack.c.b16 %v165, %v164
  %v188 = vpack.c.b16 %v167, %v166
  %v189 = vpack.c.b16 %v169, %v168
  %v190 = vpack.c.b16 %v171, %v170
  %v191 = vpack.c.b16 %v173, %v172
  %vm210 = vcmask 261120
  %v212 = vsel %vm210, %v94, 0
  %v215 = vsel %vm210, %v97, 0
  %217 = vmatprep.subr.bf16.mxu0 0
  %218 = vmatpush1.bf16.msra.mxu0 %v181
  %219 = vmatprep.subr.bf16.mxu0 0
  %220 = vmatpush1.bf16.msra.mxu0 %v180
  %221 = vmatprep.subr.bf16.mxu0 0
  %222 = vmatpush1.bf16.msra.mxu0 %v179
  %223 = vmatprep.subr.bf16.mxu0 0
  %224 = vmatpush1.bf16.msra.mxu0 %v178
  %225 = vmatprep.subr.bf16.mxu0 0
  %226 = vmatpush1.bf16.msra.mxu0 %v177
  %227 = vmatprep.subr.bf16.mxu0 0
  %228 = vmatpush1.bf16.msra.mxu0 %v176
  %229 = vmatprep.subr.bf16.mxu0 0
  %230 = vmatpush1.bf16.msra.mxu0 %v175
  %231 = vmatprep.subr.bf16.mxu0 0
  %232 = vmatpush1.bf16.msra.mxu0 %v174
  %233 = vmatprep.subr.bf16.mxu0 0
  %234 = vmatpush2.bf16.msra.mxu0 %v189
  %235 = vmatprep.subr.bf16.mxu0 0
  %236 = vmatpush2.bf16.msra.mxu0 %v188
  %237 = vmatprep.subr.bf16.mxu0 0
  %238 = vmatpush2.bf16.msra.mxu0 %v187
  %239 = vmatprep.subr.bf16.mxu0 0
  %240 = vmatpush2.bf16.msra.mxu0 %v186
  %241 = vmatprep.subr.bf16.mxu0 0
  %242 = vmatpush2.bf16.msra.mxu0 %v185
  %243 = vmatprep.subr.bf16.mxu0 0
  %244 = vmatpush2.bf16.msra.mxu0 %v184
  %245 = vmatprep.subr.bf16.mxu0 0
  %246 = vmatpush2.bf16.msra.mxu0 %v183
  %247 = vmatprep.subr.bf16.mxu0 0
  %248 = vmatpush2.bf16.msra.mxu0 %v182
  %249 = vmatprep.mubr.bf16.mxu0 %v93
  %250 = vmatmul.mubr.bf16.gmra.mxu0 %v92
  %v251 = vpop.f32.mrf.mxu0
  %v252 = vadd.f32 0.0, %v251
  %v253 = vpop.f32.mrf.mxu0
  %v254 = vpop.f32.mrf.mxu0
  %v255 = vadd.f32 0.0, %v254
  %v256 = vpop.f32.mrf.mxu0
  %257 = vmatprep.mubr.bf16.mxu0 %v96
  %258 = vmatmul.mubr.bf16.gmra.mxu0 %v95
  %v259 = vpop.f32.mrf.mxu0
  %v260 = vadd.f32 0.0, %v259
  %v261 = vpop.f32.mrf.mxu0
  %v262 = vpop.f32.mrf.mxu0
  %v263 = vadd.f32 0.0, %v262
  %v264 = vpop.f32.mrf.mxu0
  %265 = vdwg.mxu0
  %266 = vmatprep.subr.bf16.mxu0 0
  %267 = vmatpush1.bf16.msra.mxu0 0
  %268 = vmatprep.subr.bf16.mxu0 0
  %269 = vmatpush1.bf16.msra.mxu0 0
  %270 = vmatprep.subr.bf16.mxu0 0
  %271 = vmatpush1.bf16.msra.mxu0 0
  %272 = vmatprep.subr.bf16.mxu0 0
  %273 = vmatpush1.bf16.msra.mxu0 0
  %274 = vmatprep.subr.bf16.mxu0 0
  %275 = vmatpush1.bf16.msra.mxu0 0
  %276 = vmatprep.subr.bf16.mxu0 0
  %277 = vmatpush1.bf16.msra.mxu0 0
  %278 = vmatprep.subr.bf16.mxu0 0
  %279 = vmatpush1.bf16.msra.mxu0 %v191
  %280 = vmatprep.subr.bf16.mxu0 0
  %281 = vmatpush1.bf16.msra.mxu0 %v190
  %282 = vmatprep.subr.bf16.mxu0 0
  %283 = vmatpush2.bf16.msra.mxu0 0
  %284 = vmatprep.subr.bf16.mxu0 0
  %285 = vmatpush2.bf16.msra.mxu0 0
  %286 = vmatprep.subr.bf16.mxu0 0
  %287 = vmatpush2.bf16.msra.mxu0 0
  %288 = vmatprep.subr.bf16.mxu0 0
  %289 = vmatpush2.bf16.msra.mxu0 0
  %290 = vmatprep.subr.bf16.mxu0 0
  %291 = vmatpush2.bf16.msra.mxu0 0
  %292 = vmatprep.subr.bf16.mxu0 0
  %293 = vmatpush2.bf16.msra.mxu0 0
  %294 = vmatprep.subr.bf16.mxu0 0
  %295 = vmatpush2.bf16.msra.mxu0 0
  %296 = vmatprep.subr.bf16.mxu0 0
  %297 = vmatpush2.bf16.msra.mxu0 0
  %298 = vmatprep.mubr.bf16.mxu0 0
  %299 = vmatmul.mubr.bf16.gmra.mxu0 %v212
  %v300 = vpop.f32.mrf.mxu0
  %v301 = vadd.f32 %v252, %v300
  %v302 = vpop.f32.mrf.mxu0
  %v303 = vpop.f32.mrf.mxu0
  %v304 = vadd.f32 %v255, %v303
  %v305 = vpop.f32.mrf.mxu0
  %306 = vmatprep.mubr.bf16.mxu0 0
  %307 = vmatmul.mubr.bf16.gmra.mxu0 %v215
  %v308 = vpop.f32.mrf.mxu0
  %v309 = vadd.f32 %v260, %v308
  %v310 = vpop.f32.mrf.mxu0
  %v311 = vpop.f32.mrf.mxu0
  %v312 = vadd.f32 %v263, %v311
  %v313 = vpop.f32.mrf.mxu0
  %314 = vdwg.mxu0
  %v315 = vadd.f32 %v32, %v301
  %v316 = vadd.f32 %v33, %v304
  %v317 = vadd.f32 %v34, %v309
  %v318 = vadd.f32 %v35, %v312
  %vm319 = vcmask 64512
  %320 = vst.msk [vmem:[#allocation2] sm:$0xff] %vm319, %v315
  %321 = vst.msk [vmem:[#allocation2 + $0x8] sm:$0xff] %vm319, %v316
  %322 = vst.msk [vmem:[#allocation2 + $0x10] sm:$0xff] %vm319, %v317
  %323 = vst.msk [vmem:[#allocation2 + $0x18] sm:$0xff] %vm319, %v318
  // Predicated region
  $region18: #{e_densenet_forward.36} parent=0 // pred_check
    %p324 = pneg %p15
  $region19: #{e_densenet_forward.36} parent=0 // pred_check_branch
    %326 = sbr.rel (%p324) target = $region21
  $region20: #{e_densenet_forward.36} parent=0 // pred_region
    %v327 = vld [vmem:[#allocation2] sm:$0xff]
    %v328 = vld [vmem:[#allocation2 + $0x8] sm:$0xff]
    %v329 = vld [vmem:[#allocation2 + $0x10] sm:$0xff]
    %v330 = vld [vmem:[#allocation2 + $0x18] sm:$0xff]
    %v331 = vld [vmem:[%s2] sm:$0xff]
    %v332 = vld [vmem:[%s2 + $0x8] sm:$0xff]
    %v333 = vld [vmem:[%s2 + $0x10] sm:$0xff]
    %v334 = vld [vmem:[%s2 + $0x18] sm:$0xff]
    %vm335 = vcmask 195584
    %336 = vst.msk [vmem:[%s3] sm:$0xff] %vm335, %v331
    %337 = vst.msk [vmem:[%s3 + $0x8] sm:$0xff] %vm335, %v332
    %338 = vst.msk [vmem:[%s3 + $0x10] sm:$0xff] %vm335, %v333
    %339 = vst.msk [vmem:[%s3 + $0x18] sm:$0xff] %vm335, %v334
    %344 = vrot.lane.b32.xlu0 %v327, 24
    %v345 = vpop.permute.xlu0 %344
    %346 = vrot.lane.b32.xlu0 %v328, 24
    %v347 = vpop.permute.xlu0 %346
    %348 = vrot.lane.b32.xlu0 %v329, 24
    %v349 = vpop.permute.xlu0 %348
    %350 = vrot.lane.b32.xlu0 %v330, 24
    %v351 = vpop.permute.xlu0 %350
    %vm356 = vcmask 261312
    %357 = vst.msk [vmem:[%s3] sm:$0xff] %vm356, %v345
    %358 = vst.msk [vmem:[%s3 + $0x8] sm:$0xff] %vm356, %v347
    %359 = vst.msk [vmem:[%s3 + $0x10] sm:$0xff] %vm356, %v349
    %360 = vst.msk [vmem:[%s3 + $0x18] sm:$0xff] %vm356, %v351
  $region21: #{e_densenet_forward.36} parent=0 // pred_fallthru
    _
  // Predicated region
  $region22: #{e_densenet_forward.36} parent=0 // pred_check
    _
  $region23: #{e_densenet_forward.36} parent=0 // pred_check_branch
    %362 = sbr.rel (0) target = $region25
  $region24: #{e_densenet_forward.36} parent=0 // pred_region
    _
  $region25: #{e_densenet_forward.36} parent=0 // pred_fallthru
    _
  // Predicated region
  $region26: #{e_densenet_forward.36} parent=0 // pred_check
    _
  $region27: #{e_densenet_forward.36} parent=0 // pred_check_branch
    %364 = sbr.rel (0) target = $region29
  $region28: #{e_densenet_forward.36} parent=0 // pred_region
    _
  $region29: #{e_densenet_forward.36} parent=0 // pred_fallthru
    _

// kernel: e_densenet_forward.37
$region0: #{e_densenet_forward.37}
  #allocation0 [shape = 'u32[]', space=smem, size = 0x4, offset = 0x4, fixed_abs, tag = 'smem constant byte address 0x4 - core index']
  #allocation1 [shape = 'u32[144,128]{1,0:T(1,128)}', space=vmem, size = 0x12000, scoped, tag = 'internal scratch']
  #allocation2 [shape = 'f32[32,16]{1,0:T(8,128)}', space=vmem, size = 0x4000, scoped, tag = 'scratch operand']
  %s0 = inlined_call_operand.vmem [shape: f32[32,32], index: 0, kind: input, shape index: {}]
  %s1 = inlined_call_operand.vmem [shape: bf16[32,16], index: 1, kind: input, shape index: {}]
  %s2 = inlined_call_operand.vmem [shape: f32[1,32], index: 2, kind: input, shape index: {}]
  %s3 = inlined_call_operand.vmem [shape: f32[1,32], index: 3, kind: input, shape index: {}]
  %s4 = inlined_call_operand.vmem [shape: f32[32,16], index: 4, kind: output, shape index: {}]
  %s5 = sld [smem:[#allocation0]]
  $region34: #{e_densenet_forward.37} parent=0
    _
  %s7 = ssub.s32 1, %s5
  %s8 = scalar_select 0, %s7, %s5
  // Predicated region
  $region2: #{e_densenet_forward.37} parent=0 // pred_check
    _
  $region3: #{e_densenet_forward.37} parent=0 // pred_check_branch
    %10 = sbr.rel (0) target = $region5
  $region4: #{e_densenet_forward.37} parent=0 // pred_region
    _
  $region5: #{e_densenet_forward.37} parent=0 // pred_fallthru
    _
  // Predicated region
  $region6: #{e_densenet_forward.37} parent=0 // pred_check
    _
  $region7: #{e_densenet_forward.37} parent=0 // pred_check_branch
    %12 = sbr.rel (0) target = $region9
  $region8: #{e_densenet_forward.37} parent=0 // pred_region
    _
  $region9: #{e_densenet_forward.37} parent=0 // pred_fallthru
    _
  // Predicated region
  $region10: #{e_densenet_forward.37} parent=0 // pred_check
    _
  $region11: #{e_densenet_forward.37} parent=0 // pred_check_branch
    %14 = sbr.rel (0) target = $region13
  $region12: #{e_densenet_forward.37} parent=0 // pred_region
    _
  $region13: #{e_densenet_forward.37} parent=0 // pred_fallthru
    _
  // Predicated region
  $region14: #{e_densenet_forward.37} parent=0 // pred_check
    _
  $region15: #{e_densenet_forward.37} parent=0 // pred_check_branch
    %16 = sbr.rel (0) target = $region17
  $region16: #{e_densenet_forward.37} parent=0 // pred_region
    _
  $region17: #{e_densenet_forward.37} parent=0 // pred_fallthru
    _
  %p18 = scmp.eq.s32.totalorder 0, 0
  // Predicated region
  $region18: #{e_densenet_forward.37} parent=0 // pred_check
    %p19 = pneg %p18
  $region19: #{e_densenet_forward.37} parent=0 // pred_check_branch
    %21 = sbr.rel (%p19) target = $region21
  $region20: #{e_densenet_forward.37} parent=0 // pred_region
    %vm22 = vcmask 130048
    %23 = vst.msk [vmem:[#allocation2] sm:$0xff] %vm22, 0.0
    %24 = vst.msk [vmem:[#allocation2 + $0x8] sm:$0xff] %vm22, 0.0
    %25 = vst.msk [vmem:[#allocation2 + $0x10] sm:$0xff] %vm22, 0.0
    %26 = vst.msk [vmem:[#allocation2 + $0x18] sm:$0xff] %vm22, 0.0
  $region21: #{e_densenet_forward.37} parent=0 // pred_fallthru
    _
  %v27 = vld [vmem:[%s0] sm:$0xff]
  %v28 = vld [vmem:[%s0 + $0x8] sm:$0xff]
  %v29 = vld [vmem:[%s0 + $0x10] sm:$0xff]
  %v30 = vld [vmem:[%s0 + $0x18] sm:$0xff]
  %v31 = vld [vmem:[%s2] sm:$0x1]
  %v33 = vlaneseq
  %v34 = vshrl.u32 %v33, 7
  %v35 = vsub.s32 0, %v34
  %v36 = vrot.slane %v31, %v35
  %v38 = vmul.f32 %v27, %v36
  %v39 = vmul.f32 %v28, %v36
  %v40 = vmul.f32 %v29, %v36
  %v41 = vmul.f32 %v30, %v36
  %v42 = vld [vmem:[%s3] sm:$0x1]
  %v44 = vlaneseq
  %v45 = vshrl.u32 %v44, 7
  %v46 = vsub.s32 0, %v45
  %v47 = vrot.slane %v42, %v46
  %v49 = vadd.f32 %v38, %v47
  %v50 = vadd.f32 %v39, %v47
  %v51 = vadd.f32 %v40, %v47
  %v52 = vadd.f32 %v41, %v47
  %v53 = vmax.f32 %v49, 0.0
  %v54 = vmax.f32 %v50, 0.0
  %v55 = vmax.f32 %v51, 0.0
  %v56 = vmax.f32 %v52, 0.0
  %v57 = vld [vmem:[#allocation2] sm:$0xff]
  %v58 = vld [vmem:[#allocation2 + $0x8] sm:$0xff]
  %v59 = vld [vmem:[#allocation2 + $0x10] sm:$0xff]
  %v60 = vld [vmem:[#allocation2 + $0x18] sm:$0xff]
  %v61 = vpack.c.bf16 %v54, %v53
  %v62 = vpack.c.bf16 %v56, %v55
  %v63 = vld [vmem:[%s1] sm:$0xf]
  %v64 = vld [vmem:[%s1 + $0x4] sm:$0xf]
  %v65 = vld [vmem:[%s1 + $0x8] sm:$0xf]
  %v66 = vld [vmem:[%s1 + $0xc] sm:$0xf]
  %v71 = vunpack.c.l.b16 %v63
  %v72 = vunpack.c.l.b16 %v64
  %v73 = vunpack.c.l.b16 %v65
  %v74 = vunpack.c.l.b16 %v66
  %v75 = vpack.c.b16 %v72, %v71
  %v76 = vpack.c.b16 %v74, %v73
  %vm79 = vcmask 261120
  %v81 = vsel %vm79, %v61, 0
  %v84 = vsel %vm79, %v62, 0
  %86 = vmatprep.subr.bf16.mxu0 0
  %87 = vmatpush1.bf16.msra.mxu0 0
  %88 = vmatprep.subr.bf16.mxu0 0
  %89 = vmatpush1.bf16.msra.mxu0 0
  %90 = vmatprep.subr.bf16.mxu0 0
  %91 = vmatpush1.bf16.msra.mxu0 0
  %92 = vmatprep.subr.bf16.mxu0 0
  %93 = vmatpush1.bf16.msra.mxu0 0
  %94 = vmatprep.subr.bf16.mxu0 0
  %95 = vmatpush1.bf16.msra.mxu0 0
  %96 = vmatprep.subr.bf16.mxu0 0
  %97 = vmatpush1.bf16.msra.mxu0 0
  %98 = vmatprep.subr.bf16.mxu0 0
  %99 = vmatpush1.bf16.msra.mxu0 %v76
  %100 = vmatprep.subr.bf16.mxu0 0
  %101 = vmatpush1.bf16.msra.mxu0 %v75
  %102 = vmatprep.subr.bf16.mxu0 0
  %103 = vmatpush2.bf16.msra.mxu0 0
  %104 = vmatprep.subr.bf16.mxu0 0
  %105 = vmatpush2.bf16.msra.mxu0 0
  %106 = vmatprep.subr.bf16.mxu0 0
  %107 = vmatpush2.bf16.msra.mxu0 0
  %108 = vmatprep.subr.bf16.mxu0 0
  %109 = vmatpush2.bf16.msra.mxu0 0
  %110 = vmatprep.subr.bf16.mxu0 0
  %111 = vmatpush2.bf16.msra.mxu0 0
  %112 = vmatprep.subr.bf16.mxu0 0
  %113 = vmatpush2.bf16.msra.mxu0 0
  %114 = vmatprep.subr.bf16.mxu0 0
  %115 = vmatpush2.bf16.msra.mxu0 0
  %116 = vmatprep.subr.bf16.mxu0 0
  %117 = vmatpush2.bf16.msra.mxu0 0
  %118 = vmatprep.mubr.bf16.mxu0 0
  %119 = vmatmul.mubr.bf16.gmra.mxu0 %v81
  %v120 = vpop.f32.mrf.mxu0
  %v121 = vadd.f32 0.0, %v120
  %v122 = vpop.f32.mrf.mxu0
  %v123 = vpop.f32.mrf.mxu0
  %v124 = vadd.f32 0.0, %v123
  %v125 = vpop.f32.mrf.mxu0
  %126 = vmatprep.mubr.bf16.mxu0 0
  %127 = vmatmul.mubr.bf16.gmra.mxu0 %v84
  %v128 = vpop.f32.mrf.mxu0
  %v129 = vadd.f32 0.0, %v128
  %v130 = vpop.f32.mrf.mxu0
  %v131 = vpop.f32.mrf.mxu0
  %v132 = vadd.f32 0.0, %v131
  %v133 = vpop.f32.mrf.mxu0
  %134 = vdwg.mxu0
  %v135 = vadd.f32 %v57, %v121
  %v136 = vadd.f32 %v58, %v124
  %v137 = vadd.f32 %v59, %v129
  %v138 = vadd.f32 %v60, %v132
  %vm139 = vcmask 130048
  %140 = vst.msk [vmem:[#allocation2] sm:$0xff] %vm139, %v135
  %141 = vst.msk [vmem:[#allocation2 + $0x8] sm:$0xff] %vm139, %v136
  %142 = vst.msk [vmem:[#allocation2 + $0x10] sm:$0xff] %vm139, %v137
  %143 = vst.msk [vmem:[#allocation2 + $0x18] sm:$0xff] %vm139, %v138
  // Predicated region
  $region22: #{e_densenet_forward.37} parent=0 // pred_check
    %p144 = pneg %p18
  $region23: #{e_densenet_forward.37} parent=0 // pred_check_branch
    %146 = sbr.rel (%p144) target = $region25
  $region24: #{e_densenet_forward.37} parent=0 // pred_region
    %v147 = vld [vmem:[#allocation2] sm:$0xff]
    %v148 = vld [vmem:[#allocation2 + $0x8] sm:$0xff]
    %v149 = vld [vmem:[#allocation2 + $0x10] sm:$0xff]
    %v150 = vld [vmem:[#allocation2 + $0x18] sm:$0xff]
    %151 = vst.msk [vmem:[%s4] sm:$0xff] %vm139, %v147
    %152 = vst.msk [vmem:[%s4 + $0x8] sm:$0xff] %vm139, %v148
    %153 = vst.msk [vmem:[%s4 + $0x10] sm:$0xff] %vm139, %v149
    %154 = vst.msk [vmem:[%s4 + $0x18] sm:$0xff] %vm139, %v150
  $region25: #{e_densenet_forward.37} parent=0 // pred_fallthru
    _
  // Predicated region
  $region26: #{e_densenet_forward.37} parent=0 // pred_check
    _
  $region27: #{e_densenet_forward.37} parent=0 // pred_check_branch
    %156 = sbr.rel (0) target = $region29
  $region28: #{e_densenet_forward.37} parent=0 // pred_region
    _
  $region29: #{e_densenet_forward.37} parent=0 // pred_fallthru
    _
  // Predicated region
  $region30: #{e_densenet_forward.37} parent=0 // pred_check
    _
  $region31: #{e_densenet_forward.37} parent=0 // pred_check_branch
    %158 = sbr.rel (0) target = $region33
  $region32: #{e_densenet_forward.37} parent=0 // pred_region
    _
  $region33: #{e_densenet_forward.37} parent=0 // pred_fallthru
    _

// kernel: e_densenet_forward.38
$region0: #{e_densenet_forward.38}
  #allocation0 [shape = 'u32[]', space=smem, size = 0x4, offset = 0x4, fixed_abs, tag = 'smem constant byte address 0x4 - core index']
  #allocation1 [shape = 'u32[144,128]{1,0:T(1,128)}', space=vmem, size = 0x12000, scoped, tag = 'internal scratch']
  #allocation2 [shape = 'f32[8,16]{1,0:T(8,128)}', space=vmem, size = 0x1000, scoped, tag = 'scratch operand']
  %s0 = inlined_call_operand.vmem [shape: f32[4,8,16], index: 0, kind: input, shape index: {}]
  %s1 = inlined_call_operand.vmem [shape: f32[8,16], index: 1, kind: output, shape index: {}]
  %s2 = sld [smem:[#allocation0]]
  $region45: #{e_densenet_forward.38} parent=0
    _
  %s4 = ssub.s32 1, %s2
  %s5 = scalar_select 0, %s4, %s2
  loop: start=0, step=1, limit=6
  $region2: #{e_densenet_forward.38} parent=0 // loop_pre_header
    _
  $region3: #{e_densenet_forward.38} parent=0 // loop_header
    %s7 = sphi 0, %s11
    %p8 = scmp.ge.s32.totalorder %s7, 6
    %s14 = sphi 0, %s26
    %s15 = sphi 0, %s22
    %s16 = sphi 0, %s14
    %s17 = sphi 0, %s15
    %s18 = sphi 0, %s16
    %s19 = sphi 0, %s17
    %s31 = sphi 0, %s33
    %s34 = sphi 0, %s31
    %s35 = sphi 0, %s34
    %s51 = sphi 0, %s35
    %s57 = sphi 0, %s59
    %s60 = sphi 0, %s57
    %s61 = sphi 0, %s60
    %s77 = sphi 0, %s61
  $region4: #{e_densenet_forward.38} parent=0 // loop_header_branch
    %10 = sbr.rel (%p8) target = $region8
  $region5: #{e_densenet_forward.38} parent=0 // loop_body
    %s12 = ssub.s32 %s7, 1
    %s13 = ssub.s32 %s7, 2
    %s20 = sadd.s32 1, %s15
    %p21 = scmp.ge.s32.totalorder %s20, 4
    %s22 = scalar_select %p21, 0, %s20
    %s23 = sadd.s32 1, %s14
    %s24 = scalar_select %p21, %s23, %s14
    %p25 = scmp.ge.s32.totalorder %s24, 1
    %s26 = scalar_select %p25, 0, %s24
    %s27 = ssub.s32 %s15, %s22
    %s28 = ssub.s32 %s14, %s26
    %s29 = sor.u32 %s27, %s28
    %p30 = scmp.eq.s32.totalorder %s29, 0
    %s32 = sadd.s32 %s31, 1
    %s33 = scalar_select %p30, %s31, %s32
    %p36 = pneg %p30
    %p37 = scmp.eq.s32.totalorder %s7, 3
    %p38 = por %p36, %p37
    %p39 = scmp.ne.s32.totalorder %s31, %s34
    %p40 = scmp.eq.s32.totalorder %s7, 0
    %p41 = por %p39, %p40
    %p42 = scmp.ne.s32.totalorder %s31, %s34
    %p43 = scmp.eq.s32.totalorder %s12, 3
    %p44 = por %p42, %p43
    %p45 = scmp.ne.s32.totalorder %s34, %s35
    %p46 = scmp.eq.s32.totalorder %s12, 0
    %p47 = por %p45, %p46
    %p48 = scmp.ne.s32.totalorder %s34, %s35
    %p49 = scmp.eq.s32.totalorder %s13, 3
    %p50 = por %p48, %p49
    %p52 = scmp.ne.s32.totalorder %s35, %s51
    %p53 = scmp.eq.s32.totalorder %s13, 0
    %p54 = por %p52, %p53
    %s55 = ssub.s32 %s14, %s26
    %p56 = scmp.eq.s32.totalorder %s55, 0
    %s58 = sadd.s32 %s57, 1
    %s59 = scalar_select %p56, %s57, %s58
    %p62 = pneg %p56
    %p63 = scmp.eq.s32.totalorder %s7, 3
    %p64 = por %p62, %p63
    %p65 = scmp.ne.s32.totalorder %s57, %s60
    %p66 = scmp.eq.s32.totalorder %s7, 0
    %p67 = por %p65, %p66
    %p68 = scmp.ne.s32.totalorder %s57, %s60
    %p69 = scmp.eq.s32.totalorder %s12, 3
    %p70 = por %p68, %p69
    %p71 = scmp.ne.s32.totalorder %s60, %s61
    %p72 = scmp.eq.s32.totalorder %s12, 0
    %p73 = por %p71, %p72
    %p74 = scmp.ne.s32.totalorder %s60, %s61
    %p75 = scmp.eq.s32.totalorder %s13, 3
    %p76 = por %p74, %p75
    %p78 = scmp.ne.s32.totalorder %s61, %s77
    %p79 = scmp.eq.s32.totalorder %s13, 0
    %p80 = por %p78, %p79
    %p81 = scmp.le.s32.totalorder 1, %s7
    %p82 = scmp.lt.s32.totalorder %s7, 5
    %p83 = pnand %p81, %p82
    %p84 = pneg %p83
    // Predicated region
    $region9: #{e_densenet_forward.38} parent=5 // pred_check
      _
    $region10: #{e_densenet_forward.38} parent=5 // pred_check_branch
      %86 = sbr.rel (%p83) target = $region12
    $region11: #{e_densenet_forward.38} parent=5 // pred_region
      %s87 = ssub.s32 %s7, 1
    $region12: #{e_densenet_forward.38} parent=5 // pred_fallthru
      _
    %p88 = scmp.lt.s32.totalorder %s7, 4
    // Predicated region
    $region13: #{e_densenet_forward.38} parent=5 // pred_check
      %p89 = pneg %p88
    $region14: #{e_densenet_forward.38} parent=5 // pred_check_branch
      %91 = sbr.rel (%p89) target = $region16
    $region15: #{e_densenet_forward.38} parent=5 // pred_region
      // Predicated region
      $region17: #{e_densenet_forward.38} parent=15 // pred_check
        %p92 = pneg %p41
      $region18: #{e_densenet_forward.38} parent=15 // pred_check_branch
        %94 = sbr.rel (%p92) target = $region20
      $region19: #{e_densenet_forward.38} parent=15 // pred_region
        %p95 = scmp.lt.s32.totalorder %s15, 3
        %s96 = scalar_select %p95, %s15, 3
        %p97 = scmp.lt.s32.totalorder %s14, 0
        %s98 = scalar_select %p97, %s14, 0
        %s99 = sadd.s32 %s98, %s96
        %s100 = smul.addr %s99, 8
        %s101 = scalar_lea.vmem %s0, %s100
      $region20: #{e_densenet_forward.38} parent=15 // pred_fallthru
        _
    $region16: #{e_densenet_forward.38} parent=5 // pred_fallthru
      _
    %p102 = scmp.le.s32.totalorder 1, %s7
    %p103 = scmp.lt.s32.totalorder %s7, 5
    %p104 = pnand %p102, %p103
    %p105 = pneg %p104
    // Predicated region
    $region21: #{e_densenet_forward.38} parent=5 // pred_check
      _
    $region22: #{e_densenet_forward.38} parent=5 // pred_check_branch
      %107 = sbr.rel (%p104) target = $region24
    $region23: #{e_densenet_forward.38} parent=5 // pred_region
      %s108 = ssub.s32 %s7, 1
      %p109 = scmp.lt.s32.totalorder %s17, 3
      %s110 = scalar_select %p109, %s17, 3
      %p111 = scmp.lt.s32.totalorder %s16, 0
      %s112 = scalar_select %p111, %s16, 0
      %s113 = sadd.s32 %s112, %s110
      %s114 = smul.addr %s113, 8
      %s115 = scalar_lea.vmem %s0, %s114
      %p116 = pneg %p47
      %p117 = pneg %p44
      %p118 = pneg %p73
      %p119 = pneg %p70
      %p120 = scmp.lt.s32.totalorder %s16, 0
      %s121 = scalar_select %p120, %s16, 0
      %s122 = smul.addr %s121, 8
      %s123 = scalar_lea.vmem %s1, %s122
      %p124 = scmp.lt.s32.totalorder %s17, 3
      %s125 = scalar_select %p124, %s17, 3
      %p126 = scmp.lt.s32.totalorder %s16, 0
      %s127 = scalar_select %p126, %s16, 0
      %s128 = sadd.s32 %s127, %s125
      %s129 = smul.addr %s128, 8
      %s130 = scalar_lea.vmem %s0, %s129
      %p131 = scmp.lt.s32.totalorder %s16, 0
      %s132 = scalar_select %p131, %s16, 0
      %s133 = smul.addr %s132, 8
      %s134 = scalar_lea.vmem %s1, %s133
      %p135 = scmp.eq.s32.totalorder %s17, 0
      // Predicated region
      $region25: #{e_densenet_forward.38} parent=23 // pred_check
        %p136 = pneg %p135
      $region26: #{e_densenet_forward.38} parent=23 // pred_check_branch
        %138 = sbr.rel (%p136) target = $region28
      $region27: #{e_densenet_forward.38} parent=23 // pred_region
        %vm139 = vcmask 130048
        %140 = vst.msk [vmem:[#allocation2] sm:$0xff] %vm139, 0.0
      $region28: #{e_densenet_forward.38} parent=23 // pred_fallthru
        _
      %v141 = vld [vmem:[#allocation2] sm:$0xff]
      %v142 = vld [vmem:[%s130] sm:$0xff]
      %v143 = vadd.f32 %v141, %v142
      %vm144 = vcmask 130048
      %145 = vst.msk [vmem:[#allocation2] sm:$0xff] %vm144, %v143
      %p146 = scmp.eq.s32.totalorder %s17, 3
      // Predicated region
      $region29: #{e_densenet_forward.38} parent=23 // pred_check
        %p147 = pneg %p146
      $region30: #{e_densenet_forward.38} parent=23 // pred_check_branch
        %149 = sbr.rel (%p147) target = $region32
      $region31: #{e_densenet_forward.38} parent=23 // pred_region
        %v150 = vld [vmem:[#allocation2] sm:$0xff]
        %v151 = vmul.f32 %v150, 0.25
        %152 = vst.msk [vmem:[%s134] sm:$0xff] %vm144, %v151
      $region32: #{e_densenet_forward.38} parent=23 // pred_fallthru
        _
      %p153 = scmp.lt.s32.totalorder %s16, 0
      %s154 = scalar_select %p153, %s16, 0
      %s155 = smul.addr %s154, 8
      %s156 = scalar_lea.vmem %s1, %s155
      // Predicated region
      $region33: #{e_densenet_forward.38} parent=23 // pred_check
        %p157 = pneg %p70
      $region34: #{e_densenet_forward.38} parent=23 // pred_check_branch
        %159 = sbr.rel (%p157) target = $region36
      $region35: #{e_densenet_forward.38} parent=23 // pred_region
        _
      $region36: #{e_densenet_forward.38} parent=23 // pred_fallthru
        _
      // Predicated region
      $region37: #{e_densenet_forward.38} parent=23 // pred_check
        %p160 = pneg %p70
      $region38: #{e_densenet_forward.38} parent=23 // pred_check_branch
        %162 = sbr.rel (%p160) target = $region40
      $region39: #{e_densenet_forward.38} parent=23 // pred_region
        %p163 = scmp.lt.s32.totalorder %s16, 0
        %s164 = scalar_select %p163, %s16, 0
        %s165 = smul.addr %s164, 8
        %s166 = scalar_lea.vmem %s1, %s165
      $region40: #{e_densenet_forward.38} parent=23 // pred_fallthru
        _
    $region24: #{e_densenet_forward.38} parent=5 // pred_fallthru
      _
    %p167 = scmp.le.s32.totalorder 2, %s7
    // Predicated region
    $region41: #{e_densenet_forward.38} parent=5 // pred_check
      %p168 = pneg %p167
    $region42: #{e_densenet_forward.38} parent=5 // pred_check_branch
      %170 = sbr.rel (%p168) target = $region44
    $region43: #{e_densenet_forward.38} parent=5 // pred_region
      %s171 = ssub.s32 %s7, 2
    $region44: #{e_densenet_forward.38} parent=5 // pred_fallthru
      _
  $region6: #{e_densenet_forward.38} parent=0 // loop_footer
    %s11 = sadd.s32 1, %s7
  $region7: #{e_densenet_forward.38} parent=0 // loop_footer_branch
    %6 = sbr.rel target = $region3
  $region8: #{e_densenet_forward.38} parent=0 // loop_exit
    _

// kernel: e_densenet_forward.39
$region0: #{e_densenet_forward.39}
  #allocation0 [shape = 'u32[]', space=smem, size = 0x4, offset = 0x4, fixed_abs, tag = 'smem constant byte address 0x4 - core index']
  #allocation1 [shape = 'u32[144,128]{1,0:T(1,128)}', space=vmem, size = 0x12000, scoped, tag = 'internal scratch']
  #allocation2 [shape = 'f32[8,32]{1,0:T(8,128)}', space=vmem, size = 0x1000, scoped, tag = 'scratch operand']
  %s0 = inlined_call_operand.vmem [shape: f32[8,16], index: 0, kind: input, shape index: {}]
  %s1 = inlined_call_operand.vmem [shape: bf16[16,32], index: 1, kind: input, shape index: {}]
  %s2 = inlined_call_operand.vmem [shape: f32[1,16], index: 2, kind: input, shape index: {}]
  %s3 = inlined_call_operand.vmem [shape: f32[1,16], index: 3, kind: input, shape index: {}]
  %s4 = inlined_call_operand.vmem [shape: f32[1,32], index: 4, kind: input, shape index: {}]
  %s5 = inlined_call_operand.vmem [shape: f32[1,32], index: 5, kind: input, shape index: {}]
  %s6 = inlined_call_operand.vmem [shape: f32[8,32], index: 6, kind: output, shape index: {}]
  %s7 = sld [smem:[#allocation0]]
  $region42: #{e_densenet_forward.39} parent=0
    _
  %s9 = ssub.s32 1, %s7
  %s10 = scalar_select 0, %s9, %s7
  // Predicated region
  $region2: #{e_densenet_forward.39} parent=0 // pred_check
    _
  $region3: #{e_densenet_forward.39} parent=0 // pred_check_branch
    %12 = sbr.rel (0) target = $region5
  $region4: #{e_densenet_forward.39} parent=0 // pred_region
    _
  $region5: #{e_densenet_forward.39} parent=0 // pred_fallthru
    _
  // Predicated region
  $region6: #{e_densenet_forward.39} parent=0 // pred_check
    _
  $region7: #{e_densenet_forward.39} parent=0 // pred_check_branch
    %14 = sbr.rel (0) target = $region9
  $region8: #{e_densenet_forward.39} parent=0 // pred_region
    _
  $region9: #{e_densenet_forward.39} parent=0 // pred_fallthru
    _
  // Predicated region
  $region10: #{e_densenet_forward.39} parent=0 // pred_check
    _
  $region11: #{e_densenet_forward.39} parent=0 // pred_check_branch
    %16 = sbr.rel (0) target = $region13
  $region12: #{e_densenet_forward.39} parent=0 // pred_region
    _
  $region13: #{e_densenet_forward.39} parent=0 // pred_fallthru
    _
  // Predicated region
  $region14: #{e_densenet_forward.39} parent=0 // pred_check
    _
  $region15: #{e_densenet_forward.39} parent=0 // pred_check_branch
    %18 = sbr.rel (0) target = $region17
  $region16: #{e_densenet_forward.39} parent=0 // pred_region
    _
  $region17: #{e_densenet_forward.39} parent=0 // pred_fallthru
    _
  // Predicated region
  $region18: #{e_densenet_forward.39} parent=0 // pred_check
    _
  $region19: #{e_densenet_forward.39} parent=0 // pred_check_branch
    %20 = sbr.rel (0) target = $region21
  $region20: #{e_densenet_forward.39} parent=0 // pred_region
    _
  $region21: #{e_densenet_forward.39} parent=0 // pred_fallthru
    _
  // Predicated region
  $region22: #{e_densenet_forward.39} parent=0 // pred_check
    _
  $region23: #{e_densenet_forward.39} parent=0 // pred_check_branch
    %22 = sbr.rel (0) target = $region25
  $region24: #{e_densenet_forward.39} parent=0 // pred_region
    _
  $region25: #{e_densenet_forward.39} parent=0 // pred_fallthru
    _
  %p24 = scmp.eq.s32.totalorder 0, 0
  // Predicated region
  $region26: #{e_densenet_forward.39} parent=0 // pred_check
    %p25 = pneg %p24
  $region27: #{e_densenet_forward.39} parent=0 // pred_check_branch
    %27 = sbr.rel (%p25) target = $region29
  $region28: #{e_densenet_forward.39} parent=0 // pred_region
    %vm28 = vcmask 261120
    %29 = vst.msk [vmem:[#allocation2] sm:$0xff] %vm28, 0.0
  $region29: #{e_densenet_forward.39} parent=0 // pred_fallthru
    _
  %v30 = vld [vmem:[%s0] sm:$0xff]
  %v31 = vld [vmem:[%s2] sm:$0x1]
  %v33 = vlaneseq
  %v34 = vshrl.u32 %v33, 7
  %v35 = vsub.s32 0, %v34
  %v36 = vrot.slane %v31, %v35
  %v38 = vmul.f32 %v30, %v36
  %v39 = vld [vmem:[%s3] sm:$0x1]
  %v41 = vlaneseq
  %v42 = vshrl.u32 %v41, 7
  %v43 = vsub.s32 0, %v42
  %v44 = vrot.slane %v39, %v43
  %v46 = vadd.f32 %v38, %v44
  %v47 = vmax.f32 %v46, 0.0
  %v48 = vld [vmem:[#allocation2] sm:$0xff]
  %v49 = vpack.c.bf16 %v47, %v47
  %v50 = vld [vmem:[%s1] sm:$0xf]
  %v51 = vld [vmem:[%s1 + $0x4] sm:$0xf]
  %v54 = vunpack.c.l.b16 %v50
  %v55 = vunpack.c.l.b16 %v51
  %v56 = vpack.c.b16 %v55, %v54
  %vm58 = vcmask 130048
  %v60 = vsel %vm58, %v49, 0
  %62 = vmatprep.subr.bf16.mxu0 0
  %63 = vmatpush1.bf16.msra.mxu0 0
  %64 = vmatprep.subr.bf16.mxu0 0
  %65 = vmatpush1.bf16.msra.mxu0 0
  %66 = vmatprep.subr.bf16.mxu0 0
  %67 = vmatpush1.bf16.msra.mxu0 0
  %68 = vmatprep.subr.bf16.mxu0 0
  %69 = vmatpush1.bf16.msra.mxu0 0
  %70 = vmatprep.subr.bf16.mxu0 0
  %71 = vmatpush1.bf16.msra.mxu0 0
  %72 = vmatprep.subr.bf16.mxu0 0
  %73 = vmatpush1.bf16.msra.mxu0 0
  %74 = vmatprep.subr.bf16.mxu0 0
  %75 = vmatpush1.bf16.msra.mxu0 0
  %76 = vmatprep.subr.bf16.mxu0 0
  %77 = vmatpush1.bf16.msra.mxu0 %v56
  %78 = vmatprep.subr.bf16.mxu0 0
  %79 = vmatpush2.bf16.msra.mxu0 0
  %80 = vmatprep.subr.bf16.mxu0 0
  %81 = vmatpush2.bf16.msra.mxu0 0
  %82 = vmatprep.subr.bf16.mxu0 0
  %83 = vmatpush2.bf16.msra.mxu0 0
  %84 = vmatprep.subr.bf16.mxu0 0
  %85 = vmatpush2.bf16.msra.mxu0 0
  %86 = vmatprep.subr.bf16.mxu0 0
  %87 = vmatpush2.bf16.msra.mxu0 0
  %88 = vmatprep.subr.bf16.mxu0 0
  %89 = vmatpush2.bf16.msra.mxu0 0
  %90 = vmatprep.subr.bf16.mxu0 0
  %91 = vmatpush2.bf16.msra.mxu0 0
  %92 = vmatprep.subr.bf16.mxu0 0
  %93 = vmatpush2.bf16.msra.mxu0 0
  %94 = vmatprep.mubr.bf16.mxu0 0
  %95 = vmatmul.mubr.bf16.gmra.mxu0 %v60
  %v96 = vpop.f32.mrf.mxu0
  %v97 = vadd.f32 0.0, %v96
  %v98 = vpop.f32.mrf.mxu0
  %v99 = vpop.f32.mrf.mxu0
  %v100 = vpop.f32.mrf.mxu0
  %101 = vdwg.mxu0
  %v102 = vadd.f32 %v48, %v97
  %vm103 = vcmask 261120
  %104 = vst.msk [vmem:[#allocation2] sm:$0xff] %vm103, %v102
  // Predicated region
  $region30: #{e_densenet_forward.39} parent=0 // pred_check
    %p105 = pneg %p24
  $region31: #{e_densenet_forward.39} parent=0 // pred_check_branch
    %107 = sbr.rel (%p105) target = $region33
  $region32: #{e_densenet_forward.39} parent=0 // pred_region
    %v108 = vld [vmem:[#allocation2] sm:$0xff]
    %v109 = vld [vmem:[%s4] sm:$0x1]
    %v111 = vlaneseq
    %v112 = vshrl.u32 %v111, 7
    %v113 = vsub.s32 0, %v112
    %v114 = vrot.slane %v109, %v113
    %v116 = vmul.f32 %v108, %v114
    %v117 = vld [vmem:[%s5] sm:$0x1]
    %v119 = vlaneseq
    %v120 = vshrl.u32 %v119, 7
    %v121 = vsub.s32 0, %v120
    %v122 = vrot.slane %v117, %v121
    %v124 = vadd.f32 %v116, %v122
    %v125 = vmax.f32 %v124, 0.0
    %126 = vst.msk [vmem:[%s6] sm:$0xff] %vm103, %v125
  $region33: #{e_densenet_forward.39} parent=0 // pred_fallthru
    _
  // Predicated region
  $region34: #{e_densenet_forward.39} parent=0 // pred_check
    _
  $region35: #{e_densenet_forward.39} parent=0 // pred_check_branch
    %128 = sbr.rel (0) target = $region37
  $region36: #{e_densenet_forward.39} parent=0 // pred_region
    _
  $region37: #{e_densenet_forward.39} parent=0 // pred_fallthru
    _
  // Predicated region
  $region38: #{e_densenet_forward.39} parent=0 // pred_check
    _
  $region39: #{e_densenet_forward.39} parent=0 // pred_check_branch
    %130 = sbr.rel (0) target = $region41
  $region40: #{e_densenet_forward.39} parent=0 // pred_region
    _
  $region41: #{e_densenet_forward.39} parent=0 // pred_fallthru
    _

// kernel: e_densenet_forward.41
$region0: #{e_densenet_forward.41}
  #allocation0 [shape = 'u32[]', space=smem, size = 0x4, offset = 0x4, fixed_abs, tag = 'smem constant byte address 0x4 - core index']
  #allocation1 [shape = 'u32[144,128]{1,0:T(1,128)}', space=vmem, size = 0x12000, scoped, tag = 'internal scratch']
  #allocation2 [shape = 'f32[8,32]{1,0:T(8,128)}', space=vmem, size = 0x1000, scoped, tag = 'scratch operand']
  %s0 = inlined_call_operand.vmem [shape: f32[8,24], index: 0, kind: input, shape index: {}]
  %s1 = inlined_call_operand.vmem [shape: bf16[24,32], index: 1, kind: input, shape index: {}]
  %s2 = inlined_call_operand.vmem [shape: f32[1,24], index: 2, kind: input, shape index: {}]
  %s3 = inlined_call_operand.vmem [shape: f32[1,24], index: 3, kind: input, shape index: {}]
  %s4 = inlined_call_operand.vmem [shape: f32[1,32], index: 4, kind: input, shape index: {}]
  %s5 = inlined_call_operand.vmem [shape: f32[1,32], index: 5, kind: input, shape index: {}]
  %s6 = inlined_call_operand.vmem [shape: f32[8,32], index: 6, kind: output, shape index: {}]
  %s7 = sld [smem:[#allocation0]]
  $region42: #{e_densenet_forward.41} parent=0
    _
  %s9 = ssub.s32 1, %s7
  %s10 = scalar_select 0, %s9, %s7
  // Predicated region
  $region2: #{e_densenet_forward.41} parent=0 // pred_check
    _
  $region3: #{e_densenet_forward.41} parent=0 // pred_check_branch
    %12 = sbr.rel (0) target = $region5
  $region4: #{e_densenet_forward.41} parent=0 // pred_region
    _
  $region5: #{e_densenet_forward.41} parent=0 // pred_fallthru
    _
  // Predicated region
  $region6: #{e_densenet_forward.41} parent=0 // pred_check
    _
  $region7: #{e_densenet_forward.41} parent=0 // pred_check_branch
    %14 = sbr.rel (0) target = $region9
  $region8: #{e_densenet_forward.41} parent=0 // pred_region
    _
  $region9: #{e_densenet_forward.41} parent=0 // pred_fallthru
    _
  // Predicated region
  $region10: #{e_densenet_forward.41} parent=0 // pred_check
    _
  $region11: #{e_densenet_forward.41} parent=0 // pred_check_branch
    %16 = sbr.rel (0) target = $region13
  $region12: #{e_densenet_forward.41} parent=0 // pred_region
    _
  $region13: #{e_densenet_forward.41} parent=0 // pred_fallthru
    _
  // Predicated region
  $region14: #{e_densenet_forward.41} parent=0 // pred_check
    _
  $region15: #{e_densenet_forward.41} parent=0 // pred_check_branch
    %18 = sbr.rel (0) target = $region17
  $region16: #{e_densenet_forward.41} parent=0 // pred_region
    _
  $region17: #{e_densenet_forward.41} parent=0 // pred_fallthru
    _
  // Predicated region
  $region18: #{e_densenet_forward.41} parent=0 // pred_check
    _
  $region19: #{e_densenet_forward.41} parent=0 // pred_check_branch
    %20 = sbr.rel (0) target = $region21
  $region20: #{e_densenet_forward.41} parent=0 // pred_region
    _
  $region21: #{e_densenet_forward.41} parent=0 // pred_fallthru
    _
  // Predicated region
  $region22: #{e_densenet_forward.41} parent=0 // pred_check
    _
  $region23: #{e_densenet_forward.41} parent=0 // pred_check_branch
    %22 = sbr.rel (0) target = $region25
  $region24: #{e_densenet_forward.41} parent=0 // pred_region
    _
  $region25: #{e_densenet_forward.41} parent=0 // pred_fallthru
    _
  %p24 = scmp.eq.s32.totalorder 0, 0
  // Predicated region
  $region26: #{e_densenet_forward.41} parent=0 // pred_check
    %p25 = pneg %p24
  $region27: #{e_densenet_forward.41} parent=0 // pred_check_branch
    %27 = sbr.rel (%p25) target = $region29
  $region28: #{e_densenet_forward.41} parent=0 // pred_region
    %vm28 = vcmask 261120
    %29 = vst.msk [vmem:[#allocation2] sm:$0xff] %vm28, 0.0
  $region29: #{e_densenet_forward.41} parent=0 // pred_fallthru
    _
  %v30 = vld [vmem:[%s0] sm:$0xff]
  %v31 = vld [vmem:[%s2] sm:$0x1]
  %v33 = vlaneseq
  %v34 = vshrl.u32 %v33, 7
  %v35 = vsub.s32 0, %v34
  %v36 = vrot.slane %v31, %v35
  %v38 = vmul.f32 %v30, %v36
  %v39 = vld [vmem:[%s3] sm:$0x1]
  %v41 = vlaneseq
  %v42 = vshrl.u32 %v41, 7
  %v43 = vsub.s32 0, %v42
  %v44 = vrot.slane %v39, %v43
  %v46 = vadd.f32 %v38, %v44
  %v47 = vmax.f32 %v46, 0.0
  %v48 = vld [vmem:[#allocation2] sm:$0xff]
  %v49 = vpack.c.bf16 %v47, %v47
  %v50 = vld [vmem:[%s1] sm:$0xf]
  %v51 = vld [vmem:[%s1 + $0x4] sm:$0xf]
  %v52 = vld [vmem:[%s1 + $0x8] sm:$0xf]
  %v56 = vunpack.c.l.b16 %v50
  %v57 = vunpack.c.l.b16 %v51
  %v58 = vunpack.c.l.b16 %v52
  %v59 = vpack.c.b16 %v57, %v56
  %v60 = vpack.c.b16 %v58, %v58
  %vm62 = vcmask 195584
  %v64 = vsel %vm62, %v49, 0
  %vm66 = vcmask 1043456
  %v68 = vsel %vm66, %v60, 0
  %70 = vmatprep.subr.bf16.mxu0 0
  %71 = vmatpush1.bf16.msra.mxu0 0
  %72 = vmatprep.subr.bf16.mxu0 0
  %73 = vmatpush1.bf16.msra.mxu0 0
  %74 = vmatprep.subr.bf16.mxu0 0
  %75 = vmatpush1.bf16.msra.mxu0 0
  %76 = vmatprep.subr.bf16.mxu0 0
  %77 = vmatpush1.bf16.msra.mxu0 0
  %78 = vmatprep.subr.bf16.mxu0 0
  %79 = vmatpush1.bf16.msra.mxu0 0
  %80 = vmatprep.subr.bf16.mxu0 0
  %81 = vmatpush1.bf16.msra.mxu0 0
  %82 = vmatprep.subr.bf16.mxu0 0
  %83 = vmatpush1.bf16.msra.mxu0 %v68
  %84 = vmatprep.subr.bf16.mxu0 0
  %85 = vmatpush1.bf16.msra.mxu0 %v59
  %86 = vmatprep.subr.bf16.mxu0 0
  %87 = vmatpush2.bf16.msra.mxu0 0
  %88 = vmatprep.subr.bf16.mxu0 0
  %89 = vmatpush2.bf16.msra.mxu0 0
  %90 = vmatprep.subr.bf16.mxu0 0
  %91 = vmatpush2.bf16.msra.mxu0 0
  %92 = vmatprep.subr.bf16.mxu0 0
  %93 = vmatpush2.bf16.msra.mxu0 0
  %94 = vmatprep.subr.bf16.mxu0 0
  %95 = vmatpush2.bf16.msra.mxu0 0
  %96 = vmatprep.subr.bf16.mxu0 0
  %97 = vmatpush2.bf16.msra.mxu0 0
  %98 = vmatprep.subr.bf16.mxu0 0
  %99 = vmatpush2.bf16.msra.mxu0 0
  %100 = vmatprep.subr.bf16.mxu0 0
  %101 = vmatpush2.bf16.msra.mxu0 0
  %102 = vmatprep.mubr.bf16.mxu0 0
  %103 = vmatmul.mubr.bf16.gmra.mxu0 %v64
  %v104 = vpop.f32.mrf.mxu0
  %v105 = vadd.f32 0.0, %v104
  %v106 = vpop.f32.mrf.mxu0
  %v107 = vpop.f32.mrf.mxu0
  %v108 = vpop.f32.mrf.mxu0
  %109 = vdwg.mxu0
  %v110 = vadd.f32 %v48, %v105
  %vm111 = vcmask 261120
  %112 = vst.msk [vmem:[#allocation2] sm:$0xff] %vm111, %v110
  // Predicated region
  $region30: #{e_densenet_forward.41} parent=0 // pred_check
    %p113 = pneg %p24
  $region31: #{e_densenet_forward.41} parent=0 // pred_check_branch
    %115 = sbr.rel (%p113) target = $region33
  $region32: #{e_densenet_forward.41} parent=0 // pred_region
    %v116 = vld [vmem:[#allocation2] sm:$0xff]
    %v117 = vld [vmem:[%s4] sm:$0x1]
    %v119 = vlaneseq
    %v120 = vshrl.u32 %v119, 7
    %v121 = vsub.s32 0, %v120
    %v122 = vrot.slane %v117, %v121
    %v124 = vmul.f32 %v116, %v122
    %v125 = vld [vmem:[%s5] sm:$0x1]
    %v127 = vlaneseq
    %v128 = vshrl.u32 %v127, 7
    %v129 = vsub.s32 0, %v128
    %v130 = vrot.slane %v125, %v129
    %v132 = vadd.f32 %v124, %v130
    %v133 = vmax.f32 %v132, 0.0
    %134 = vst.msk [vmem:[%s6] sm:$0xff] %vm111, %v133
  $region33: #{e_densenet_forward.41} parent=0 // pred_fallthru
    _
  // Predicated region
  $region34: #{e_densenet_forward.41} parent=0 // pred_check
    _
  $region35: #{e_densenet_forward.41} parent=0 // pred_check_branch
    %136 = sbr.rel (0) target = $region37
  $region36: #{e_densenet_forward.41} parent=0 // pred_region
    _
  $region37: #{e_densenet_forward.41} parent=0 // pred_fallthru
    _
  // Predicated region
  $region38: #{e_densenet_forward.41} parent=0 // pred_check
    _
  $region39: #{e_densenet_forward.41} parent=0 // pred_check_branch
    %138 = sbr.rel (0) target = $region41
  $region40: #{e_densenet_forward.41} parent=0 // pred_region
    _
  $region41: #{e_densenet_forward.41} parent=0 // pred_fallthru
    _

// kernel: e_densenet_forward.40
$region0: #{e_densenet_forward.40}
  #allocation0 [shape = 'u32[]', space=smem, size = 0x4, offset = 0x4, fixed_abs, tag = 'smem constant byte address 0x4 - core index']
  #allocation1 [shape = 'u32[144,128]{1,0:T(1,128)}', space=vmem, size = 0x12000, scoped, tag = 'internal scratch']
  #allocation2 [shape = 'f32[8,8]{1,0:T(8,128)}', space=vmem, size = 0x1000, scoped, tag = 'scratch operand']
  %s0 = inlined_call_operand.vmem [shape: bf16[8,288], index: 0, kind: input, shape index: {}]
  %s1 = inlined_call_operand.vmem [shape: bf16[288,8], index: 1, kind: input, shape index: {}]
  %s2 = inlined_call_operand.vmem [shape: f32[8,16], index: 2, kind: input, shape index: {}]
  %s3 = inlined_call_operand.vmem [shape: f32[8,24], index: 3, kind: output, shape index: {}]
  %s4 = sld [smem:[#allocation0]]
  $region30: #{e_densenet_forward.40} parent=0
    _
  %s6 = ssub.s32 1, %s4
  %s7 = scalar_select 0, %s6, %s4
  // Predicated region
  $region2: #{e_densenet_forward.40} parent=0 // pred_check
    _
  $region3: #{e_densenet_forward.40} parent=0 // pred_check_branch
    %9 = sbr.rel (0) target = $region5
  $region4: #{e_densenet_forward.40} parent=0 // pred_region
    _
  $region5: #{e_densenet_forward.40} parent=0 // pred_fallthru
    _
  // Predicated region
  $region6: #{e_densenet_forward.40} parent=0 // pred_check
    _
  $region7: #{e_densenet_forward.40} parent=0 // pred_check_branch
    %11 = sbr.rel (0) target = $region9
  $region8: #{e_densenet_forward.40} parent=0 // pred_region
    _
  $region9: #{e_densenet_forward.40} parent=0 // pred_fallthru
    _
  // Predicated region
  $region10: #{e_densenet_forward.40} parent=0 // pred_check
    _
  $region11: #{e_densenet_forward.40} parent=0 // pred_check_branch
    %13 = sbr.rel (0) target = $region13
  $region12: #{e_densenet_forward.40} parent=0 // pred_region
    _
  $region13: #{e_densenet_forward.40} parent=0 // pred_fallthru
    _
  %p15 = scmp.eq.s32.totalorder 0, 0
  // Predicated region
  $region14: #{e_densenet_forward.40} parent=0 // pred_check
    %p16 = pneg %p15
  $region15: #{e_densenet_forward.40} parent=0 // pred_check_branch
    %18 = sbr.rel (%p16) target = $region17
  $region16: #{e_densenet_forward.40} parent=0 // pred_region
    %vm19 = vcmask 64512
    %20 = vst.msk [vmem:[#allocation2] sm:$0xff] %vm19, 0.0
  $region17: #{e_densenet_forward.40} parent=0 // pred_fallthru
    _
  %v21 = vld [vmem:[%s0] sm:$0xff]
  %v22 = vld [vmem:[%s0 + $0x8] sm:$0xf]
  %v23 = vld [vmem:[#allocation2] sm:$0xff]
  %v24 = vld [vmem:[%s1] sm:$0xf]
  %v25 = vld [vmem:[%s1 + $0x4] sm:$0xf]
  %v26 = vld [vmem:[%s1 + $0x8] sm:$0xf]
  %v27 = vld [vmem:[%s1 + $0xc] sm:$0xf]
  %v28 = vld [vmem:[%s1 + $0x10] sm:$0xf]
  %v29 = vld [vmem:[%s1 + $0x14] sm:$0xf]
  %v30 = vld [vmem:[%s1 + $0x18] sm:$0xf]
  %v31 = vld [vmem:[%s1 + $0x1c] sm:$0xf]
  %v32 = vld [vmem:[%s1 + $0x20] sm:$0xf]
  %v33 = vld [vmem:[%s1 + $0x24] sm:$0xf]
  %v34 = vld [vmem:[%s1 + $0x28] sm:$0xf]
  %v35 = vld [vmem:[%s1 + $0x2c] sm:$0xf]
  %v36 = vld [vmem:[%s1 + $0x30] sm:$0xf]
  %v37 = vld [vmem:[%s1 + $0x34] sm:$0xf]
  %v38 = vld [vmem:[%s1 + $0x38] sm:$0xf]
  %v39 = vld [vmem:[%s1 + $0x3c] sm:$0xf]
  %v40 = vld [vmem:[%s1 + $0x40] sm:$0xf]
  %v41 = vld [vmem:[%s1 + $0x44] sm:$0xf]
  %v42 = vld [vmem:[%s1 + $0x48] sm:$0xf]
  %v43 = vld [vmem:[%s1 + $0x4c] sm:$0xf]
  %v44 = vld [vmem:[%s1 + $0x50] sm:$0xf]
  %v45 = vld [vmem:[%s1 + $0x54] sm:$0xf]
  %v46 = vld [vmem:[%s1 + $0x58] sm:$0xf]
  %v47 = vld [vmem:[%s1 + $0x5c] sm:$0xf]
  %v48 = vld [vmem:[%s1 + $0x60] sm:$0xf]
  %v49 = vld [vmem:[%s1 + $0x64] sm:$0xf]
  %v50 = vld [vmem:[%s1 + $0x68] sm:$0xf]
  %v51 = vld [vmem:[%s1 + $0x6c] sm:$0xf]
  %v52 = vld [vmem:[%s1 + $0x70] sm:$0xf]
  %v53 = vld [vmem:[%s1 + $0x74] sm:$0xf]
  %v54 = vld [vmem:[%s1 + $0x78] sm:$0xf]
  %v55 = vld [vmem:[%s1 + $0x7c] sm:$0xf]
  %v56 = vld [vmem:[%s1 + $0x80] sm:$0xf]
  %v57 = vld [vmem:[%s1 + $0x84] sm:$0xf]
  %v58 = vld [vmem:[%s1 + $0x88] sm:$0xf]
  %v59 = vld [vmem:[%s1 + $0x8c] sm:$0xf]
  %v62 = vunpack.c.l.b16 %v21
  %v63 = vunpack.c.h.b16 %v21
  %v64 = vunpack.c.l.b16 %v22
  %v65 = vpack.c.b16 %v62, %v62
  %v66 = vpack.c.b16 %v63, %v63
  %v67 = vpack.c.b16 %v64, %v64
  %v106 = vunpack.c.l.b16 %v24
  %v107 = vunpack.c.l.b16 %v25
  %v108 = vunpack.c.l.b16 %v26
  %v109 = vunpack.c.l.b16 %v27
  %v110 = vunpack.c.l.b16 %v28
  %v111 = vunpack.c.l.b16 %v29
  %v112 = vunpack.c.l.b16 %v30
  %v113 = vunpack.c.l.b16 %v31
  %v114 = vunpack.c.l.b16 %v32
  %v115 = vunpack.c.l.b16 %v33
  %v116 = vunpack.c.l.b16 %v34
  %v117 = vunpack.c.l.b16 %v35
  %v118 = vunpack.c.l.b16 %v36
  %v119 = vunpack.c.l.b16 %v37
  %v120 = vunpack.c.l.b16 %v38
  %v121 = vunpack.c.l.b16 %v39
  %v122 = vunpack.c.l.b16 %v40
  %v123 = vunpack.c.l.b16 %v41
  %v124 = vunpack.c.l.b16 %v42
  %v125 = vunpack.c.l.b16 %v43
  %v126 = vunpack.c.l.b16 %v44
  %v127 = vunpack.c.l.b16 %v45
  %v128 = vunpack.c.l.b16 %v46
  %v129 = vunpack.c.l.b16 %v47
  %v130 = vunpack.c.l.b16 %v48
  %v131 = vunpack.c.l.b16 %v49
  %v132 = vunpack.c.l.b16 %v50
  %v133 = vunpack.c.l.b16 %v51
  %v134 = vunpack.c.l.b16 %v52
  %v135 = vunpack.c.l.b16 %v53
  %v136 = vunpack.c.l.b16 %v54
  %v137 = vunpack.c.l.b16 %v55
  %v138 = vunpack.c.l.b16 %v56
  %v139 = vunpack.c.l.b16 %v57
  %v140 = vunpack.c.l.b16 %v58
  %v141 = vunpack.c.l.b16 %v59
  %v142 = vpack.c.b16 %v107, %v106
  %v143 = vpack.c.b16 %v109, %v108
  %v144 = vpack.c.b16 %v111, %v110
  %v145 = vpack.c.b16 %v113, %v112
  %v146 = vpack.c.b16 %v115, %v114
  %v147 = vpack.c.b16 %v117, %v116
  %v148 = vpack.c.b16 %v119, %v118
  %v149 = vpack.c.b16 %v121, %v120
  %v150 = vpack.c.b16 %v123, %v122
  %v151 = vpack.c.b16 %v125, %v124
  %v152 = vpack.c.b16 %v127, %v126
  %v153 = vpack.c.b16 %v129, %v128
  %v154 = vpack.c.b16 %v131, %v130
  %v155 = vpack.c.b16 %v133, %v132
  %v156 = vpack.c.b16 %v135, %v134
  %v157 = vpack.c.b16 %v137, %v136
  %v158 = vpack.c.b16 %v139, %v138
  %v159 = vpack.c.b16 %v141, %v140
  %vm178 = vcmask 261120
  %v180 = vsel %vm178, %v67, 0
  %182 = vmatprep.subr.bf16.mxu0 0
  %183 = vmatpush1.bf16.msra.mxu0 %v149
  %184 = vmatprep.subr.bf16.mxu0 0
  %185 = vmatpush1.bf16.msra.mxu0 %v148
  %186 = vmatprep.subr.bf16.mxu0 0
  %187 = vmatpush1.bf16.msra.mxu0 %v147
  %188 = vmatprep.subr.bf16.mxu0 0
  %189 = vmatpush1.bf16.msra.mxu0 %v146
  %190 = vmatprep.subr.bf16.mxu0 0
  %191 = vmatpush1.bf16.msra.mxu0 %v145
  %192 = vmatprep.subr.bf16.mxu0 0
  %193 = vmatpush1.bf16.msra.mxu0 %v144
  %194 = vmatprep.subr.bf16.mxu0 0
  %195 = vmatpush1.bf16.msra.mxu0 %v143
  %196 = vmatprep.subr.bf16.mxu0 0
  %197 = vmatpush1.bf16.msra.mxu0 %v142
  %198 = vmatprep.subr.bf16.mxu0 0
  %199 = vmatpush2.bf16.msra.mxu0 %v157
  %200 = vmatprep.subr.bf16.mxu0 0
  %201 = vmatpush2.bf16.msra.mxu0 %v156
  %202 = vmatprep.subr.bf16.mxu0 0
  %203 = vmatpush2.bf16.msra.mxu0 %v155
  %204 = vmatprep.subr.bf16.mxu0 0
  %205 = vmatpush2.bf16.msra.mxu0 %v154
  %206 = vmatprep.subr.bf16.mxu0 0
  %207 = vmatpush2.bf16.msra.mxu0 %v153
  %208 = vmatprep.subr.bf16.mxu0 0
  %209 = vmatpush2.bf16.msra.mxu0 %v152
  %210 = vmatprep.subr.bf16.mxu0 0
  %211 = vmatpush2.bf16.msra.mxu0 %v151
  %212 = vmatprep.subr.bf16.mxu0 0
  %213 = vmatpush2.bf16.msra.mxu0 %v150
  %214 = vmatprep.mubr.bf16.mxu0 %v66
  %215 = vmatmul.mubr.bf16.gmra.mxu0 %v65
  %v216 = vpop.f32.mrf.mxu0
  %v217 = vadd.f32 0.0, %v216
  %v218 = vpop.f32.mrf.mxu0
  %v219 = vpop.f32.mrf.mxu0
  %v220 = vpop.f32.mrf.mxu0
  %221 = vdwg.mxu0
  %222 = vmatprep.subr.bf16.mxu0 0
  %223 = vmatpush1.bf16.msra.mxu0 0
  %224 = vmatprep.subr.bf16.mxu0 0
  %225 = vmatpush1.bf16.msra.mxu0 0
  %226 = vmatprep.subr.bf16.mxu0 0
  %227 = vmatpush1.bf16.msra.mxu0 0
  %228 = vmatprep.subr.bf16.mxu0 0
  %229 = vmatpush1.bf16.msra.mxu0 0
  %230 = vmatprep.subr.bf16.mxu0 0
  %231 = vmatpush1.bf16.msra.mxu0 0
  %232 = vmatprep.subr.bf16.mxu0 0
  %233 = vmatpush1.bf16.msra.mxu0 0
  %234 = vmatprep.subr.bf16.mxu0 0
  %235 = vmatpush1.bf16.msra.mxu0 %v159
  %236 = vmatprep.subr.bf16.mxu0 0
  %237 = vmatpush1.bf16.msra.mxu0 %v158
  %238 = vmatprep.subr.bf16.mxu0 0
  %239 = vmatpush2.bf16.msra.mxu0 0
  %240 = vmatprep.subr.bf16.mxu0 0
  %241 = vmatpush2.bf16.msra.mxu0 0
  %242 = vmatprep.subr.bf16.mxu0 0
  %243 = vmatpush2.bf16.msra.mxu0 0
  %244 = vmatprep.subr.bf16.mxu0 0
  %245 = vmatpush2.bf16.msra.mxu0 0
  %246 = vmatprep.subr.bf16.mxu0 0
  %247 = vmatpush2.bf16.msra.mxu0 0
  %248 = vmatprep.subr.bf16.mxu0 0
  %249 = vmatpush2.bf16.msra.mxu0 0
  %250 = vmatprep.subr.bf16.mxu0 0
  %251 = vmatpush2.bf16.msra.mxu0 0
  %252 = vmatprep.subr.bf16.mxu0 0
  %253 = vmatpush2.bf16.msra.mxu0 0
  %254 = vmatprep.mubr.bf16.mxu0 0
  %255 = vmatmul.mubr.bf16.gmra.mxu0 %v180
  %v256 = vpop.f32.mrf.mxu0
  %v257 = vadd.f32 %v217, %v256
  %v258 = vpop.f32.mrf.mxu0
  %v259 = vpop.f32.mrf.mxu0
  %v260 = vpop.f32.mrf.mxu0
  %261 = vdwg.mxu0
  %v262 = vadd.f32 %v23, %v257
  %vm263 = vcmask 64512
  %264 = vst.msk [vmem:[#allocation2] sm:$0xff] %vm263, %v262
  // Predicated region
  $region18: #{e_densenet_forward.40} parent=0 // pred_check
    %p265 = pneg %p15
  $region19: #{e_densenet_forward.40} parent=0 // pred_check_branch
    %267 = sbr.rel (%p265) target = $region21
  $region20: #{e_densenet_forward.40} parent=0 // pred_region
    %v268 = vld [vmem:[#allocation2] sm:$0xff]
    %v269 = vld [vmem:[%s2] sm:$0xff]
    %vm270 = vcmask 130048
    %271 = vst.msk [vmem:[%s3] sm:$0xff] %vm270, %v269
    %273 = vrot.lane.b32.xlu0 %v268, 16
    %v274 = vpop.permute.xlu0 %273
    %vm276 = vcmask 195712
    %277 = vst.msk [vmem:[%s3] sm:$0xff] %vm276, %v274
  $region21: #{e_densenet_forward.40} parent=0 // pred_fallthru
    _
  // Predicated region
  $region22: #{e_densenet_forward.40} parent=0 // pred_check
    _
  $region23: #{e_densenet_forward.40} parent=0 // pred_check_branch
    %279 = sbr.rel (0) target = $region25
  $region24: #{e_densenet_forward.40} parent=0 // pred_region
    _
  $region25: #{e_densenet_forward.40} parent=0 // pred_fallthru
    _
  // Predicated region
  $region26: #{e_densenet_forward.40} parent=0 // pred_check
    _
  $region27: #{e_densenet_forward.40} parent=0 // pred_check_branch
    %281 = sbr.rel (0) target = $region29
  $region28: #{e_densenet_forward.40} parent=0 // pred_region
    _
  $region29: #{e_densenet_forward.40} parent=0 // pred_fallthru
    _

// kernel: e_densenet_forward.42
$region0: #{e_densenet_forward.42}
  #allocation0 [shape = 'u32[]', space=smem, size = 0x4, offset = 0x4, fixed_abs, tag = 'smem constant byte address 0x4 - core index']
  #allocation1 [shape = 'u32[144,128]{1,0:T(1,128)}', space=vmem, size = 0x12000, scoped, tag = 'internal scratch']
  #allocation2 [shape = 'f32[8,8]{1,0:T(8,128)}', space=vmem, size = 0x1000, scoped, tag = 'scratch operand']
  %s0 = inlined_call_operand.vmem [shape: bf16[8,288], index: 0, kind: input, shape index: {}]
  %s1 = inlined_call_operand.vmem [shape: bf16[288,8], index: 1, kind: input, shape index: {}]
  %s2 = inlined_call_operand.vmem [shape: f32[8,24], index: 2, kind: input, shape index: {}]
  %s3 = inlined_call_operand.vmem [shape: f32[8,32], index: 3, kind: output, shape index: {}]
  %s4 = sld [smem:[#allocation0]]
  $region30: #{e_densenet_forward.42} parent=0
    _
  %s6 = ssub.s32 1, %s4
  %s7 = scalar_select 0, %s6, %s4
  // Predicated region
  $region2: #{e_densenet_forward.42} parent=0 // pred_check
    _
  $region3: #{e_densenet_forward.42} parent=0 // pred_check_branch
    %9 = sbr.rel (0) target = $region5
  $region4: #{e_densenet_forward.42} parent=0 // pred_region
    _
  $region5: #{e_densenet_forward.42} parent=0 // pred_fallthru
    _
  // Predicated region
  $region6: #{e_densenet_forward.42} parent=0 // pred_check
    _
  $region7: #{e_densenet_forward.42} parent=0 // pred_check_branch
    %11 = sbr.rel (0) target = $region9
  $region8: #{e_densenet_forward.42} parent=0 // pred_region
    _
  $region9: #{e_densenet_forward.42} parent=0 // pred_fallthru
    _
  // Predicated region
  $region10: #{e_densenet_forward.42} parent=0 // pred_check
    _
  $region11: #{e_densenet_forward.42} parent=0 // pred_check_branch
    %13 = sbr.rel (0) target = $region13
  $region12: #{e_densenet_forward.42} parent=0 // pred_region
    _
  $region13: #{e_densenet_forward.42} parent=0 // pred_fallthru
    _
  %p15 = scmp.eq.s32.totalorder 0, 0
  // Predicated region
  $region14: #{e_densenet_forward.42} parent=0 // pred_check
    %p16 = pneg %p15
  $region15: #{e_densenet_forward.42} parent=0 // pred_check_branch
    %18 = sbr.rel (%p16) target = $region17
  $region16: #{e_densenet_forward.42} parent=0 // pred_region
    %vm19 = vcmask 64512
    %20 = vst.msk [vmem:[#allocation2] sm:$0xff] %vm19, 0.0
  $region17: #{e_densenet_forward.42} parent=0 // pred_fallthru
    _
  %v21 = vld [vmem:[%s0] sm:$0xff]
  %v22 = vld [vmem:[%s0 + $0x8] sm:$0xf]
  %v23 = vld [vmem:[#allocation2] sm:$0xff]
  %v24 = vld [vmem:[%s1] sm:$0xf]
  %v25 = vld [vmem:[%s1 + $0x4] sm:$0xf]
  %v26 = vld [vmem:[%s1 + $0x8] sm:$0xf]
  %v27 = vld [vmem:[%s1 + $0xc] sm:$0xf]
  %v28 = vld [vmem:[%s1 + $0x10] sm:$0xf]
  %v29 = vld [vmem:[%s1 + $0x14] sm:$0xf]
  %v30 = vld [vmem:[%s1 + $0x18] sm:$0xf]
  %v31 = vld [vmem:[%s1 + $0x1c] sm:$0xf]
  %v32 = vld [vmem:[%s1 + $0x20] sm:$0xf]
  %v33 = vld [vmem:[%s1 + $0x24] sm:$0xf]
  %v34 = vld [vmem:[%s1 + $0x28] sm:$0xf]
  %v35 = vld [vmem:[%s1 + $0x2c] sm:$0xf]
  %v36 = vld [vmem:[%s1 + $0x30] sm:$0xf]
  %v37 = vld [vmem:[%s1 + $0x34] sm:$0xf]
  %v38 = vld [vmem:[%s1 + $0x38] sm:$0xf]
  %v39 = vld [vmem:[%s1 + $0x3c] sm:$0xf]
  %v40 = vld [vmem:[%s1 + $0x40] sm:$0xf]
  %v41 = vld [vmem:[%s1 + $0x44] sm:$0xf]
  %v42 = vld [vmem:[%s1 + $0x48] sm:$0xf]
  %v43 = vld [vmem:[%s1 + $0x4c] sm:$0xf]
  %v44 = vld [vmem:[%s1 + $0x50] sm:$0xf]
  %v45 = vld [vmem:[%s1 + $0x54] sm:$0xf]
  %v46 = vld [vmem:[%s1 + $0x58] sm:$0xf]
  %v47 = vld [vmem:[%s1 + $0x5c] sm:$0xf]
  %v48 = vld [vmem:[%s1 + $0x60] sm:$0xf]
  %v49 = vld [vmem:[%s1 + $0x64] sm:$0xf]
  %v50 = vld [vmem:[%s1 + $0x68] sm:$0xf]
  %v51 = vld [vmem:[%s1 + $0x6c] sm:$0xf]
  %v52 = vld [vmem:[%s1 + $0x70] sm:$0xf]
  %v53 = vld [vmem:[%s1 + $0x74] sm:$0xf]
  %v54 = vld [vmem:[%s1 + $0x78] sm:$0xf]
  %v55 = vld [vmem:[%s1 + $0x7c] sm:$0xf]
  %v56 = vld [vmem:[%s1 + $0x80] sm:$0xf]
  %v57 = vld [vmem:[%s1 + $0x84] sm:$0xf]
  %v58 = vld [vmem:[%s1 + $0x88] sm:$0xf]
  %v59 = vld [vmem:[%s1 + $0x8c] sm:$0xf]
  %v62 = vunpack.c.l.b16 %v21
  %v63 = vunpack.c.h.b16 %v21
  %v64 = vunpack.c.l.b16 %v22
  %v65 = vpack.c.b16 %v62, %v62
  %v66 = vpack.c.b16 %v63, %v63
  %v67 = vpack.c.b16 %v64, %v64
  %v106 = vunpack.c.l.b16 %v24
  %v107 = vunpack.c.l.b16 %v25
  %v108 = vunpack.c.l.b16 %v26
  %v109 = vunpack.c.l.b16 %v27
  %v110 = vunpack.c.l.b16 %v28
  %v111 = vunpack.c.l.b16 %v29
  %v112 = vunpack.c.l.b16 %v30
  %v113 = vunpack.c.l.b16 %v31
  %v114 = vunpack.c.l.b16 %v32
  %v115 = vunpack.c.l.b16 %v33
  %v116 = vunpack.c.l.b16 %v34
  %v117 = vunpack.c.l.b16 %v35
  %v118 = vunpack.c.l.b16 %v36
  %v119 = vunpack.c.l.b16 %v37
  %v120 = vunpack.c.l.b16 %v38
  %v121 = vunpack.c.l.b16 %v39
  %v122 = vunpack.c.l.b16 %v40
  %v123 = vunpack.c.l.b16 %v41
  %v124 = vunpack.c.l.b16 %v42
  %v125 = vunpack.c.l.b16 %v43
  %v126 = vunpack.c.l.b16 %v44
  %v127 = vunpack.c.l.b16 %v45
  %v128 = vunpack.c.l.b16 %v46
  %v129 = vunpack.c.l.b16 %v47
  %v130 = vunpack.c.l.b16 %v48
  %v131 = vunpack.c.l.b16 %v49
  %v132 = vunpack.c.l.b16 %v50
  %v133 = vunpack.c.l.b16 %v51
  %v134 = vunpack.c.l.b16 %v52
  %v135 = vunpack.c.l.b16 %v53
  %v136 = vunpack.c.l.b16 %v54
  %v137 = vunpack.c.l.b16 %v55
  %v138 = vunpack.c.l.b16 %v56
  %v139 = vunpack.c.l.b16 %v57
  %v140 = vunpack.c.l.b16 %v58
  %v141 = vunpack.c.l.b16 %v59
  %v142 = vpack.c.b16 %v107, %v106
  %v143 = vpack.c.b16 %v109, %v108
  %v144 = vpack.c.b16 %v111, %v110
  %v145 = vpack.c.b16 %v113, %v112
  %v146 = vpack.c.b16 %v115, %v114
  %v147 = vpack.c.b16 %v117, %v116
  %v148 = vpack.c.b16 %v119, %v118
  %v149 = vpack.c.b16 %v121, %v120
  %v150 = vpack.c.b16 %v123, %v122
  %v151 = vpack.c.b16 %v125, %v124
  %v152 = vpack.c.b16 %v127, %v126
  %v153 = vpack.c.b16 %v129, %v128
  %v154 = vpack.c.b16 %v131, %v130
  %v155 = vpack.c.b16 %v133, %v132
  %v156 = vpack.c.b16 %v135, %v134
  %v157 = vpack.c.b16 %v137, %v136
  %v158 = vpack.c.b16 %v139, %v138
  %v159 = vpack.c.b16 %v141, %v140
  %vm178 = vcmask 261120
  %v180 = vsel %vm178, %v67, 0
  %182 = vmatprep.subr.bf16.mxu0 0
  %183 = vmatpush1.bf16.msra.mxu0 %v149
  %184 = vmatprep.subr.bf16.mxu0 0
  %185 = vmatpush1.bf16.msra.mxu0 %v148
  %186 = vmatprep.subr.bf16.mxu0 0
  %187 = vmatpush1.bf16.msra.mxu0 %v147
  %188 = vmatprep.subr.bf16.mxu0 0
  %189 = vmatpush1.bf16.msra.mxu0 %v146
  %190 = vmatprep.subr.bf16.mxu0 0
  %191 = vmatpush1.bf16.msra.mxu0 %v145
  %192 = vmatprep.subr.bf16.mxu0 0
  %193 = vmatpush1.bf16.msra.mxu0 %v144
  %194 = vmatprep.subr.bf16.mxu0 0
  %195 = vmatpush1.bf16.msra.mxu0 %v143
  %196 = vmatprep.subr.bf16.mxu0 0
  %197 = vmatpush1.bf16.msra.mxu0 %v142
  %198 = vmatprep.subr.bf16.mxu0 0
  %199 = vmatpush2.bf16.msra.mxu0 %v157
  %200 = vmatprep.subr.bf16.mxu0 0
  %201 = vmatpush2.bf16.msra.mxu0 %v156
  %202 = vmatprep.subr.bf16.mxu0 0
  %203 = vmatpush2.bf16.msra.mxu0 %v155
  %204 = vmatprep.subr.bf16.mxu0 0
  %205 = vmatpush2.bf16.msra.mxu0 %v154
  %206 = vmatprep.subr.bf16.mxu0 0
  %207 = vmatpush2.bf16.msra.mxu0 %v153
  %208 = vmatprep.subr.bf16.mxu0 0
  %209 = vmatpush2.bf16.msra.mxu0 %v152
  %210 = vmatprep.subr.bf16.mxu0 0
  %211 = vmatpush2.bf16.msra.mxu0 %v151
  %212 = vmatprep.subr.bf16.mxu0 0
  %213 = vmatpush2.bf16.msra.mxu0 %v150
  %214 = vmatprep.mubr.bf16.mxu0 %v66
  %215 = vmatmul.mubr.bf16.gmra.mxu0 %v65
  %v216 = vpop.f32.mrf.mxu0
  %v217 = vadd.f32 0.0, %v216
  %v218 = vpop.f32.mrf.mxu0
  %v219 = vpop.f32.mrf.mxu0
  %v220 = vpop.f32.mrf.mxu0
  %221 = vdwg.mxu0
  %222 = vmatprep.subr.bf16.mxu0 0
  %223 = vmatpush1.bf16.msra.mxu0 0
  %224 = vmatprep.subr.bf16.mxu0 0
  %225 = vmatpush1.bf16.msra.mxu0 0
  %226 = vmatprep.subr.bf16.mxu0 0
  %227 = vmatpush1.bf16.msra.mxu0 0
  %228 = vmatprep.subr.bf16.mxu0 0
  %229 = vmatpush1.bf16.msra.mxu0 0
  %230 = vmatprep.subr.bf16.mxu0 0
  %231 = vmatpush1.bf16.msra.mxu0 0
  %232 = vmatprep.subr.bf16.mxu0 0
  %233 = vmatpush1.bf16.msra.mxu0 0
  %234 = vmatprep.subr.bf16.mxu0 0
  %235 = vmatpush1.bf16.msra.mxu0 %v159
  %236 = vmatprep.subr.bf16.mxu0 0
  %237 = vmatpush1.bf16.msra.mxu0 %v158
  %238 = vmatprep.subr.bf16.mxu0 0
  %239 = vmatpush2.bf16.msra.mxu0 0
  %240 = vmatprep.subr.bf16.mxu0 0
  %241 = vmatpush2.bf16.msra.mxu0 0
  %242 = vmatprep.subr.bf16.mxu0 0
  %243 = vmatpush2.bf16.msra.mxu0 0
  %244 = vmatprep.subr.bf16.mxu0 0
  %245 = vmatpush2.bf16.msra.mxu0 0
  %246 = vmatprep.subr.bf16.mxu0 0
  %247 = vmatpush2.bf16.msra.mxu0 0
  %248 = vmatprep.subr.bf16.mxu0 0
  %249 = vmatpush2.bf16.msra.mxu0 0
  %250 = vmatprep.subr.bf16.mxu0 0
  %251 = vmatpush2.bf16.msra.mxu0 0
  %252 = vmatprep.subr.bf16.mxu0 0
  %253 = vmatpush2.bf16.msra.mxu0 0
  %254 = vmatprep.mubr.bf16.mxu0 0
  %255 = vmatmul.mubr.bf16.gmra.mxu0 %v180
  %v256 = vpop.f32.mrf.mxu0
  %v257 = vadd.f32 %v217, %v256
  %v258 = vpop.f32.mrf.mxu0
  %v259 = vpop.f32.mrf.mxu0
  %v260 = vpop.f32.mrf.mxu0
  %261 = vdwg.mxu0
  %v262 = vadd.f32 %v23, %v257
  %vm263 = vcmask 64512
  %264 = vst.msk [vmem:[#allocation2] sm:$0xff] %vm263, %v262
  // Predicated region
  $region18: #{e_densenet_forward.42} parent=0 // pred_check
    %p265 = pneg %p15
  $region19: #{e_densenet_forward.42} parent=0 // pred_check_branch
    %267 = sbr.rel (%p265) target = $region21
  $region20: #{e_densenet_forward.42} parent=0 // pred_region
    %v268 = vld [vmem:[#allocation2] sm:$0xff]
    %v269 = vld [vmem:[%s2] sm:$0xff]
    %vm270 = vcmask 195584
    %271 = vst.msk [vmem:[%s3] sm:$0xff] %vm270, %v269
    %273 = vrot.lane.b32.xlu0 %v268, 24
    %v274 = vpop.permute.xlu0 %273
    %vm276 = vcmask 261312
    %277 = vst.msk [vmem:[%s3] sm:$0xff] %vm276, %v274
  $region21: #{e_densenet_forward.42} parent=0 // pred_fallthru
    _
  // Predicated region
  $region22: #{e_densenet_forward.42} parent=0 // pred_check
    _
  $region23: #{e_densenet_forward.42} parent=0 // pred_check_branch
    %279 = sbr.rel (0) target = $region25
  $region24: #{e_densenet_forward.42} parent=0 // pred_region
    _
  $region25: #{e_densenet_forward.42} parent=0 // pred_fallthru
    _
  // Predicated region
  $region26: #{e_densenet_forward.42} parent=0 // pred_check
    _
  $region27: #{e_densenet_forward.42} parent=0 // pred_check_branch
    %281 = sbr.rel (0) target = $region29
  $region28: #{e_densenet_forward.42} parent=0 // pred_region
    _
  $region29: #{e_densenet_forward.42} parent=0 // pred_fallthru
    _

// kernel: e_densenet_forward.43
$region0: #{e_densenet_forward.43}
  #allocation0 [shape = 'u32[]', space=smem, size = 0x4, offset = 0x4, fixed_abs, tag = 'smem constant byte address 0x4 - core index']
  #allocation1 [shape = 'u32[144,128]{1,0:T(1,128)}', space=vmem, size = 0x12000, scoped, tag = 'internal scratch']
  #allocation2 [shape = 'f32[8,16]{1,0:T(8,128)}', space=vmem, size = 0x1000, scoped, tag = 'scratch operand']
  %s0 = inlined_call_operand.vmem [shape: f32[8,32], index: 0, kind: input, shape index: {}]
  %s1 = inlined_call_operand.vmem [shape: bf16[32,16], index: 1, kind: input, shape index: {}]
  %s2 = inlined_call_operand.vmem [shape: f32[1,32], index: 2, kind: input, shape index: {}]
  %s3 = inlined_call_operand.vmem [shape: f32[1,32], index: 3, kind: input, shape index: {}]
  %s4 = inlined_call_operand.vmem [shape: f32[8,16], index: 4, kind: output, shape index: {}]
  %s5 = sld [smem:[#allocation0]]
  $region34: #{e_densenet_forward.43} parent=0
    _
  %s7 = ssub.s32 1, %s5
  %s8 = scalar_select 0, %s7, %s5
  // Predicated region
  $region2: #{e_densenet_forward.43} parent=0 // pred_check
    _
  $region3: #{e_densenet_forward.43} parent=0 // pred_check_branch
    %10 = sbr.rel (0) target = $region5
  $region4: #{e_densenet_forward.43} parent=0 // pred_region
    _
  $region5: #{e_densenet_forward.43} parent=0 // pred_fallthru
    _
  // Predicated region
  $region6: #{e_densenet_forward.43} parent=0 // pred_check
    _
  $region7: #{e_densenet_forward.43} parent=0 // pred_check_branch
    %12 = sbr.rel (0) target = $region9
  $region8: #{e_densenet_forward.43} parent=0 // pred_region
    _
  $region9: #{e_densenet_forward.43} parent=0 // pred_fallthru
    _
  // Predicated region
  $region10: #{e_densenet_forward.43} parent=0 // pred_check
    _
  $region11: #{e_densenet_forward.43} parent=0 // pred_check_branch
    %14 = sbr.rel (0) target = $region13
  $region12: #{e_densenet_forward.43} parent=0 // pred_region
    _
  $region13: #{e_densenet_forward.43} parent=0 // pred_fallthru
    _
  // Predicated region
  $region14: #{e_densenet_forward.43} parent=0 // pred_check
    _
  $region15: #{e_densenet_forward.43} parent=0 // pred_check_branch
    %16 = sbr.rel (0) target = $region17
  $region16: #{e_densenet_forward.43} parent=0 // pred_region
    _
  $region17: #{e_densenet_forward.43} parent=0 // pred_fallthru
    _
  %p18 = scmp.eq.s32.totalorder 0, 0
  // Predicated region
  $region18: #{e_densenet_forward.43} parent=0 // pred_check
    %p19 = pneg %p18
  $region19: #{e_densenet_forward.43} parent=0 // pred_check_branch
    %21 = sbr.rel (%p19) target = $region21
  $region20: #{e_densenet_forward.43} parent=0 // pred_region
    %vm22 = vcmask 130048
    %23 = vst.msk [vmem:[#allocation2] sm:$0xff] %vm22, 0.0
  $region21: #{e_densenet_forward.43} parent=0 // pred_fallthru
    _
  %v24 = vld [vmem:[%s0] sm:$0xff]
  %v25 = vld [vmem:[%s2] sm:$0x1]
  %v27 = vlaneseq
  %v28 = vshrl.u32 %v27, 7
  %v29 = vsub.s32 0, %v28
  %v30 = vrot.slane %v25, %v29
  %v32 = vmul.f32 %v24, %v30
  %v33 = vld [vmem:[%s3] sm:$0x1]
  %v35 = vlaneseq
  %v36 = vshrl.u32 %v35, 7
  %v37 = vsub.s32 0, %v36
  %v38 = vrot.slane %v33, %v37
  %v40 = vadd.f32 %v32, %v38
  %v41 = vmax.f32 %v40, 0.0
  %v42 = vld [vmem:[#allocation2] sm:$0xff]
  %v43 = vpack.c.bf16 %v41, %v41
  %v44 = vld [vmem:[%s1] sm:$0xf]
  %v45 = vld [vmem:[%s1 + $0x4] sm:$0xf]
  %v46 = vld [vmem:[%s1 + $0x8] sm:$0xf]
  %v47 = vld [vmem:[%s1 + $0xc] sm:$0xf]
  %v52 = vunpack.c.l.b16 %v44
  %v53 = vunpack.c.l.b16 %v45
  %v54 = vunpack.c.l.b16 %v46
  %v55 = vunpack.c.l.b16 %v47
  %v56 = vpack.c.b16 %v53, %v52
  %v57 = vpack.c.b16 %v55, %v54
  %vm60 = vcmask 261120
  %v62 = vsel %vm60, %v43, 0
  %64 = vmatprep.subr.bf16.mxu0 0
  %65 = vmatpush1.bf16.msra.mxu0 0
  %66 = vmatprep.subr.bf16.mxu0 0
  %67 = vmatpush1.bf16.msra.mxu0 0
  %68 = vmatprep.subr.bf16.mxu0 0
  %69 = vmatpush1.bf16.msra.mxu0 0
  %70 = vmatprep.subr.bf16.mxu0 0
  %71 = vmatpush1.bf16.msra.mxu0 0
  %72 = vmatprep.subr.bf16.mxu0 0
  %73 = vmatpush1.bf16.msra.mxu0 0
  %74 = vmatprep.subr.bf16.mxu0 0
  %75 = vmatpush1.bf16.msra.mxu0 0
  %76 = vmatprep.subr.bf16.mxu0 0
  %77 = vmatpush1.bf16.msra.mxu0 %v57
  %78 = vmatprep.subr.bf16.mxu0 0
  %79 = vmatpush1.bf16.msra.mxu0 %v56
  %80 = vmatprep.subr.bf16.mxu0 0
  %81 = vmatpush2.bf16.msra.mxu0 0
  %82 = vmatprep.subr.bf16.mxu0 0
  %83 = vmatpush2.bf16.msra.mxu0 0
  %84 = vmatprep.subr.bf16.mxu0 0
  %85 = vmatpush2.bf16.msra.mxu0 0
  %86 = vmatprep.subr.bf16.mxu0 0
  %87 = vmatpush2.bf16.msra.mxu0 0
  %88 = vmatprep.subr.bf16.mxu0 0
  %89 = vmatpush2.bf16.msra.mxu0 0
  %90 = vmatprep.subr.bf16.mxu0 0
  %91 = vmatpush2.bf16.msra.mxu0 0
  %92 = vmatprep.subr.bf16.mxu0 0
  %93 = vmatpush2.bf16.msra.mxu0 0
  %94 = vmatprep.subr.bf16.mxu0 0
  %95 = vmatpush2.bf16.msra.mxu0 0
  %96 = vmatprep.mubr.bf16.mxu0 0
  %97 = vmatmul.mubr.bf16.gmra.mxu0 %v62
  %v98 = vpop.f32.mrf.mxu0
  %v99 = vadd.f32 0.0, %v98
  %v100 = vpop.f32.mrf.mxu0
  %v101 = vpop.f32.mrf.mxu0
  %v102 = vpop.f32.mrf.mxu0
  %103 = vdwg.mxu0
  %v104 = vadd.f32 %v42, %v99
  %vm105 = vcmask 130048
  %106 = vst.msk [vmem:[#allocation2] sm:$0xff] %vm105, %v104
  // Predicated region
  $region22: #{e_densenet_forward.43} parent=0 // pred_check
    %p107 = pneg %p18
  $region23: #{e_densenet_forward.43} parent=0 // pred_check_branch
    %109 = sbr.rel (%p107) target = $region25
  $region24: #{e_densenet_forward.43} parent=0 // pred_region
    %v110 = vld [vmem:[#allocation2] sm:$0xff]
    %111 = vst.msk [vmem:[%s4] sm:$0xff] %vm105, %v110
  $region25: #{e_densenet_forward.43} parent=0 // pred_fallthru
    _
  // Predicated region
  $region26: #{e_densenet_forward.43} parent=0 // pred_check
    _
  $region27: #{e_densenet_forward.43} parent=0 // pred_check_branch
    %113 = sbr.rel (0) target = $region29
  $region28: #{e_densenet_forward.43} parent=0 // pred_region
    _
  $region29: #{e_densenet_forward.43} parent=0 // pred_fallthru
    _
  // Predicated region
  $region30: #{e_densenet_forward.43} parent=0 // pred_check
    _
  $region31: #{e_densenet_forward.43} parent=0 // pred_check_branch
    %115 = sbr.rel (0) target = $region33
  $region32: #{e_densenet_forward.43} parent=0 // pred_region
    _
  $region33: #{e_densenet_forward.43} parent=0 // pred_fallthru
    _

// kernel: e_densenet_forward.49
$region0: #{e_densenet_forward.49}
  #allocation0 [shape = 'u32[]', space=smem, size = 0x4, offset = 0x4, fixed_abs, tag = 'smem constant byte address 0x4 - core index']
  #allocation1 [shape = 'u32[144,128]{1,0:T(1,128)}', space=vmem, size = 0x12000, scoped, tag = 'internal scratch']
  %s0 = inlined_call_operand.vmem [shape: f32[8,32], index: 0, kind: input, shape index: {}]
  %s1 = inlined_call_operand.vmem [shape: f32[1,32], index: 1, kind: input, shape index: {}]
  %s2 = inlined_call_operand.vmem [shape: f32[1,32], index: 2, kind: input, shape index: {}]
  %s3 = inlined_call_operand.vmem [shape: f32[8,32], index: 3, kind: output, shape index: {}]
  %s4 = sld [smem:[#allocation0]]
  $region22: #{e_densenet_forward.49} parent=0
    _
  %s6 = ssub.s32 1, %s4
  %s7 = scalar_select 0, %s6, %s4
  // Predicated region
  $region2: #{e_densenet_forward.49} parent=0 // pred_check
    _
  $region3: #{e_densenet_forward.49} parent=0 // pred_check_branch
    %9 = sbr.rel (0) target = $region5
  $region4: #{e_densenet_forward.49} parent=0 // pred_region
    _
  $region5: #{e_densenet_forward.49} parent=0 // pred_fallthru
    _
  // Predicated region
  $region6: #{e_densenet_forward.49} parent=0 // pred_check
    _
  $region7: #{e_densenet_forward.49} parent=0 // pred_check_branch
    %11 = sbr.rel (0) target = $region9
  $region8: #{e_densenet_forward.49} parent=0 // pred_region
    _
  $region9: #{e_densenet_forward.49} parent=0 // pred_fallthru
    _
  // Predicated region
  $region10: #{e_densenet_forward.49} parent=0 // pred_check
    _
  $region11: #{e_densenet_forward.49} parent=0 // pred_check_branch
    %13 = sbr.rel (0) target = $region13
  $region12: #{e_densenet_forward.49} parent=0 // pred_region
    _
  $region13: #{e_densenet_forward.49} parent=0 // pred_fallthru
    _
  %v14 = vld [vmem:[%s0] sm:$0xff]
  %v15 = vld [vmem:[%s1] sm:$0x1]
  %v17 = vlaneseq
  %v18 = vshrl.u32 %v17, 7
  %v19 = vsub.s32 0, %v18
  %v20 = vrot.slane %v15, %v19
  %v22 = vmul.f32 %v14, %v20
  %v23 = vld [vmem:[%s2] sm:$0x1]
  %v25 = vlaneseq
  %v26 = vshrl.u32 %v25, 7
  %v27 = vsub.s32 0, %v26
  %v28 = vrot.slane %v23, %v27
  %v30 = vadd.f32 %v22, %v28
  %v31 = vmax.f32 %v30, 0.0
  %vm32 = vcmask 261120
  %33 = vst.msk [vmem:[%s3] sm:$0xff] %vm32, %v31
  // Predicated region
  $region14: #{e_densenet_forward.49} parent=0 // pred_check
    _
  $region15: #{e_densenet_forward.49} parent=0 // pred_check_branch
    %35 = sbr.rel (0) target = $region17
  $region16: #{e_densenet_forward.49} parent=0 // pred_region
    _
  $region17: #{e_densenet_forward.49} parent=0 // pred_fallthru
    _
  // Predicated region
  $region18: #{e_densenet_forward.49} parent=0 // pred_check
    _
  $region19: #{e_densenet_forward.49} parent=0 // pred_check_branch
    %37 = sbr.rel (0) target = $region21
  $region20: #{e_densenet_forward.49} parent=0 // pred_region
    _
  $region21: #{e_densenet_forward.49} parent=0 // pred_fallthru
    _

</llo_original>
